<compile_context>
chip_gen: v7x
topology: tpu7x:2x2x1
jax: 0.10.0
libtpu: 0.0.40
codegen_flags: <defaults>
</compile_context>

<pallas_src>
import functools

import jax
import jax.numpy as jnp
from jax.experimental import pallas as pl
from jax.experimental.pallas import tpu as pltpu


_VMEM_LIMIT = 32 * 1024 * 1024
_VMEM = pl.BlockSpec(memory_space=pltpu.MemorySpace.VMEM)


def _round_up(x, m):
    return (x + m - 1) // m * m


def _apply_act(x, act):
    if act == "none":
        return x
    if act == "relu6":
        return jnp.clip(x, 0.0, 6.0)
    if act == "leaky_relu":                      # PyTorch nn.LeakyReLU default
        return jnp.where(x >= 0, x, 0.01 * x)
    if act == "tanh":
        return jnp.tanh(x)
    raise ValueError(act)


# --------------------------------------------------------------------------
# Gridded fused matmul (+bias +activation) kernel
# --------------------------------------------------------------------------

def _dense_kernel(a_ref, b_ref, bias_ref, o_ref, acc_ref, *, act):
    @pl.when(pl.program_id(2) == 0)
    def _():
        acc_ref[...] = jnp.zeros_like(acc_ref)

    acc_ref[...] += jnp.dot(a_ref[...], b_ref[...],
                            preferred_element_type=jnp.float32)

    @pl.when(pl.program_id(2) == pl.num_programs(2) - 1)
    def _():
        o_ref[...] = _apply_act(acc_ref[...] + bias_ref[...], act
                                ).astype(o_ref.dtype)


def dense(a, w, bias, act="none", tm_cap=256, tn_cap=512, tk_cap=512):
    """(M,K)@(K,N) + bias + act.  bf16 MXU operands, f32 accumulation."""
    M, K = a.shape
    K2, N = w.shape
    assert K == K2

    def _tile(dim, cap):
        if dim <= cap:                 # full-dim block (always a legal block)
            return dim, dim
        return cap, _round_up(dim, cap)

    tm, Mp = _tile(M, tm_cap)
    tk, Kp = _tile(K, tk_cap)
    tn, Np = _tile(N, tn_cap)

    a_p = a if (Mp == M and Kp == K) else jnp.pad(a, ((0, Mp - M), (0, Kp - K)))
    w_p = w if (Kp == K and Np == N) else jnp.pad(w, ((0, Kp - K), (0, Np - N)))
    b2 = jnp.reshape(bias, (1, N)).astype(jnp.float32)
    b_p = b2 if Np == N else jnp.pad(b2, ((0, 0), (0, Np - N)))

    out = pl.pallas_call(
        functools.partial(_dense_kernel, act=act),
        out_shape=jax.ShapeDtypeStruct((Mp, Np), jnp.float32),
        grid=(Mp // tm, Np // tn, Kp // tk),
        in_specs=[pl.BlockSpec((tm, tk), lambda i, j, k: (i, k)),
                  pl.BlockSpec((tk, tn), lambda i, j, k: (k, j)),
                  pl.BlockSpec((1, tn), lambda i, j, k: (0, j))],
        out_specs=pl.BlockSpec((tm, tn), lambda i, j, k: (i, j)),
        scratch_shapes=[pltpu.VMEM((tm, tn), jnp.float32)],
        compiler_params=pltpu.CompilerParams(
            dimension_semantics=("parallel", "parallel", "arbitrary"),
            vmem_limit_bytes=_VMEM_LIMIT),
    )(a_p.astype(jnp.bfloat16), w_p.astype(jnp.bfloat16), b_p)

    if Mp != M or Np != N:
        out = out[:M, :N]
    return out


# --------------------------------------------------------------------------
# Fused multi-tap conv GEMM (in-kernel tap accumulation, no HBM im2col)
# --------------------------------------------------------------------------
# The padded image is spatially flattened to (Hp*Wp, C); tap (di,dj) is the
# row-window starting at di*Wp+dj.  Rows whose column index >= Wo are garbage
# and get sliced away outside the kernel.

_STD3X3_TAPS = tuple((di, dj, 0) for di in range(3) for dj in range(3))

# Sub-pixel decomposition of ConvTranspose2d(k=3, stride=2, pad=1, out_pad=1):
# (di, dj, slot, ky, kx); slot index = 2*a + b for output pixel (2m+a, 2n+b).
_SUBPIX = (
    (0, 0, 0, 1, 1),
    (0, 0, 1, 1, 2), (0, 1, 1, 1, 0),
    (0, 0, 2, 2, 1), (1, 0, 2, 0, 1),
    (0, 0, 3, 2, 2), (0, 1, 3, 2, 0), (1, 0, 3, 0, 2), (1, 1, 3, 0, 0),
)
_SUBPIX_TAPS = tuple((di, dj, s) for (di, dj, s, _, _) in _SUBPIX)


def _conv_taps_kernel(x_ref, w_ref, b_ref, o_ref, *, taps, n_slots, wp, lout,
                      act):
    accs = [None] * n_slots
    for t, (di, dj, slot) in enumerate(taps):
        off = di * wp + dj
        patch = x_ref[off:off + lout, :].astype(jnp.bfloat16)
        part = jnp.dot(patch, w_ref[t], preferred_element_type=jnp.float32)
        accs[slot] = part if accs[slot] is None else accs[slot] + part
    out = accs[0] if n_slots == 1 else jnp.concatenate(accs, axis=-1)
    o_ref[...] = _apply_act(out + b_ref[...], act).astype(o_ref.dtype)


def conv_taps(x_nhwc, w_taps, bias, taps, n_slots, pad, act="none"):
    """Generic fused conv: x (B,H,W,C), w_taps (T,C,Cout), bias (1, n_slots*Cout).

    Returns (B, Ho, Wo, n_slots*Cout).  NOTE: assumes one padded image fits in
    VMEM (true for these shapes); for large images this would need a spatial
    grid axis as well.
    """
    B, H, W, C = x_nhwc.shape
    T, _, Cout = w_taps.shape
    pt, pb, pl_, pr = pad
    Hp, Wp = H + pt + pb, W + pl_ + pr
    max_di = max(t[0] for t in taps)
    max_dj = max(t[1] for t in taps)
    Ho, Wo = Hp - max_di, Wp - max_dj
    Lout = (Ho - 1) * Wp + Wo
    Nc = n_slots * Cout

    xp = jnp.pad(x_nhwc.astype(jnp.float32),
                 ((0, 0), (pt, pb), (pl_, pr), (0, 0)))
    xf = xp.reshape(B, Hp * Wp, C)
    w_bf = w_taps.astype(jnp.bfloat16)
    b_f = jnp.reshape(bias, (1, Nc)).astype(jnp.float32)

    out = pl.pallas_call(
        functools.partial(_conv_taps_kernel, taps=tuple(taps),
                          n_slots=n_slots, wp=Wp, lout=Lout, act=act),
        out_shape=jax.ShapeDtypeStruct((B, Lout, Nc), jnp.float32),
        grid=(B,),
        in_specs=[pl.BlockSpec((None, Hp * Wp, C), lambda b: (b, 0, 0)),
                  pl.BlockSpec((T, C, Cout), lambda b: (0, 0, 0)),
                  pl.BlockSpec((1, Nc), lambda b: (0, 0))],
        out_specs=pl.BlockSpec((None, Lout, Nc), lambda b: (b, 0, 0)),
        compiler_params=pltpu.CompilerParams(
            dimension_semantics=("parallel",),
            vmem_limit_bytes=_VMEM_LIMIT),
    )(xf, w_bf, b_f)

    out = jnp.pad(out, ((0, 0), (0, Ho * Wp - Lout), (0, 0)))
    out = out.reshape(B, Ho, Wp, Nc)[:, :, :Wo, :]
    return out


def conv3x3_same(x, w_taps, bias, act="none"):
    return conv_taps(x, w_taps, bias, _STD3X3_TAPS, 1, (1, 1, 1, 1), act)


def conv_transpose3x3_s2(x, w_taps, bias4, act="none"):
    """ConvTranspose2d(k=3, s=2, p=1, op=1) via sub-pixel decomposition."""
    B, H, W, _ = x.shape
    Cout = w_taps.shape[-1]
    o = conv_taps(x, w_taps, bias4, _SUBPIX_TAPS, 4, (0, 1, 0, 1), act)
    o = o.reshape(B, H, W, 2, 2, Cout).transpose(0, 1, 3, 2, 4, 5)
    return o.reshape(B, 2 * H, 2 * W, Cout)


# --------------------------------------------------------------------------
# Fused encode head: shared mu/var conv GEMM + softplus + reparameterize
# --------------------------------------------------------------------------

def _encode_kernel(x_ref, w_ref, b_ref, eps_ref, o_ref, *, taps, wp, lout, cz):
    acc = None
    for t, (di, dj, _) in enumerate(taps):
        off = di * wp + dj
        patch = x_ref[off:off + lout, :].astype(jnp.bfloat16)
        part = jnp.dot(patch, w_ref[t], preferred_element_type=jnp.float32)
        acc = part if acc is None else acc + part
    acc = acc + b_ref[...]
    mu = acc[:, :cz]
    lv_raw = acc[:, cz:]
    # softplus(conv+BN output) + 1e-8, then z = eps*exp(0.5*log_var) + mu
    log_var = jnp.maximum(lv_raw, 0.0) + jnp.log1p(jnp.exp(-jnp.abs(lv_raw))) \
        + 1e-8
    z = eps_ref[...] * jnp.exp(0.5 * log_var) + mu
    o_ref[...] = jnp.concatenate([mu, log_var, z], axis=-1)


def encode_reparam(feat_nhwc, w_taps, bias, rng, cz):
    B, H, W, F = feat_nhwc.shape
    Hp, Wp = H + 2, W + 2
    Lout = (H - 1) * Wp + W
    xp = jnp.pad(feat_nhwc.astype(jnp.float32),
                 ((0, 0), (1, 1), (1, 1), (0, 0))).reshape(B, Hp * Wp, F)
    eps = jax.random.normal(rng, (B, Lout, cz), jnp.float32)
    w_bf = w_taps.astype(jnp.bfloat16)
    b_f = jnp.reshape(bias, (1, 2 * cz)).astype(jnp.float32)

    out = pl.pallas_call(
        functools.partial(_encode_kernel, taps=_STD3X3_TAPS, wp=Wp, lout=Lout,
                          cz=cz),
        out_shape=jax.ShapeDtypeStruct((B, Lout, 3 * cz), jnp.float32),
        grid=(B,),
        in_specs=[pl.BlockSpec((None, Hp * Wp, F), lambda b: (b, 0, 0)),
                  pl.BlockSpec((9, F, 2 * cz), lambda b: (0, 0, 0)),
                  pl.BlockSpec((1, 2 * cz), lambda b: (0, 0)),
                  pl.BlockSpec((None, Lout, cz), lambda b: (b, 0, 0))],
        out_specs=pl.BlockSpec((None, Lout, 3 * cz), lambda b: (b, 0, 0)),
        compiler_params=pltpu.CompilerParams(
            dimension_semantics=("parallel",),
            vmem_limit_bytes=_VMEM_LIMIT),
    )(xp, w_bf, b_f, eps)

    out = jnp.pad(out, ((0, 0), (0, H * Wp - Lout), (0, 0)))
    out = out.reshape(B, H, Wp, 3 * cz)[:, :, :W, :]
    return out[..., :cz], out[..., cz:2 * cz], out[..., 2 * cz:]


# --------------------------------------------------------------------------
# Fused classifier head: |fc - fi| -> 4x (Linear + ReLU6) -> Softmax
# --------------------------------------------------------------------------

def _classifier_kernel(fi_ref, fc_ref, w1, b1, w2, b2, w3, b3, w4, b4, o_ref):
    diff = jnp.abs(fc_ref[...] - fi_ref[...])

    def layer(h, w_ref, b_ref, act):
        y = jnp.dot(h.astype(jnp.bfloat16), w_ref[...],
                    preferred_element_type=jnp.float32) + b_ref[...]
        return _apply_act(y, act)

    h = layer(diff, w1, b1, "relu6")
    h = layer(h, w2, b2, "relu6")
    h = layer(h, w3, b3, "relu6")
    logits = layer(h, w4, b4, "none")
    m = jnp.max(logits, axis=-1, keepdims=True)
    e = jnp.exp(logits - m)
    o_ref[...] = e / jnp.sum(e, axis=-1, keepdims=True)


def classify(fi, fc, prep):
    B = fi.shape[0]
    ncls = prep["cls_b4"].shape[-1]
    return pl.pallas_call(
        _classifier_kernel,
        out_shape=jax.ShapeDtypeStruct((B, ncls), jnp.float32),
        in_specs=[_VMEM] * 10,
        out_specs=_VMEM,
        compiler_params=pltpu.CompilerParams(vmem_limit_bytes=_VMEM_LIMIT),
    )(fi, fc,
      prep["cls_w1"], prep["cls_b1"], prep["cls_w2"], prep["cls_b2"],
      prep["cls_w3"], prep["cls_b3"], prep["cls_w4"], prep["cls_b4"])


# --------------------------------------------------------------------------
# Parameters: raw (PyTorch-layout) init + one-time inference preprocessing
# --------------------------------------------------------------------------

def bn_fold(gamma, beta, mean=0.0, var=1.0, eps=1e-5):
    scale = gamma / jnp.sqrt(var + eps)
    shift = beta - mean * scale
    return scale, shift


def _conv_to_taps(w_oihw):
    """(Cout, Cin, kh, kw) -> (kh*kw, Cin, Cout), tap order (di, dj)."""
    Cout, Cin, kh, kw = w_oihw.shape
    return jnp.transpose(w_oihw, (2, 3, 1, 0)).reshape(kh * kw, Cin, Cout)


def _convT_s1_to_taps(w_iohw):
    """ConvTranspose2d stride-1 == regular conv with flipped kernel."""
    Cin, Cout, kh, kw = w_iohw.shape
    return jnp.transpose(w_iohw[:, :, ::-1, ::-1],
                         (2, 3, 0, 1)).reshape(kh * kw, Cin, Cout)


def _convT_s2_to_taps(w_iohw):
    """ConvTranspose2d stride-2 -> sub-pixel tap stack in _SUBPIX order."""
    mats = [w_iohw[:, :, ky, kx] for (_, _, _, ky, kx) in _SUBPIX]
    return jnp.stack(mats, axis=0)          # (9, Cin, Cout)


def init_params(key, cfg):
    lat, Cin, F = cfg["latent_dim"], cfg["in_channels"], cfg["filters"]
    div, ns, ncls = cfg["div"], cfg["new_image_size"], cfg["num_class"]
    hd = cfg["hidden_dims"]

    keys = iter(jax.random.split(key, 64))

    def nrm(shape, s=0.05):
        return s * jax.random.normal(next(keys), shape, jnp.float32)

    p = {}
    p["emb_w"] = nrm((Cin, 2 * Cin, 1, 1)); p["emb_b"] = jnp.zeros((Cin,))
    p["backbone_w"] = nrm((F, Cin, div, div)); p["backbone_b"] = jnp.zeros((F,))
    p["embc_w"] = nrm((lat // 2, Cin, 1, 1)); p["embc_b"] = jnp.zeros((lat // 2,))

    cls_dims = [(F * ns * ns, 512), (512, 128), (128, 32), (32, ncls)]
    for i, (din, dout) in enumerate(cls_dims, 1):
        p[f"cls_w{i}"] = nrm((dout, din))          # PyTorch Linear: (out, in)
        p[f"cls_b{i}"] = jnp.zeros((dout,))

    p["mu_w"] = nrm((lat // 2, F, 3, 3)); p["mu_b"] = jnp.zeros((lat // 2,))
    p["mu_gamma"] = jnp.ones((lat // 2,)); p["mu_beta"] = jnp.zeros((lat // 2,))
    p["var_w"] = nrm((lat // 2, F, 3, 3)); p["var_b"] = jnp.zeros((lat // 2,))
    p["var_gamma"] = jnp.ones((lat // 2,)); p["var_beta"] = jnp.zeros((lat // 2,))

    p["dec_in_w"] = nrm((lat, hd[0], 3, 3)); p["dec_in_b"] = jnp.zeros((hd[0],))
    gen = []
    in_ch = hd[0]
    for h in hd:
        gen.append({"w": nrm((in_ch, h, 3, 3)), "b": jnp.zeros((h,)),
                    "gamma": jnp.ones((h,)), "beta": jnp.zeros((h,))})
        in_ch = h
    p["gen"] = gen
    p["fin_ct_w"] = nrm((hd[-1], hd[-1], 3, 3)); p["fin_ct_b"] = jnp.zeros((hd[-1],))
    p["fin_gamma"] = jnp.ones((hd[-1],)); p["fin_beta"] = jnp.zeros((hd[-1],))
    p["fin_conv_w"] = nrm((3, hd[-1], 3, 3)); p["fin_conv_b"] = jnp.zeros((3,))
    return p


def prepare_params(p, cfg):
    """One-time hoisted preprocessing: transposes, BN eval-mode folding,
    tap-stacking, NCHW->NHWC column permutation, bf16 weight casts."""
    lat, Cin, F = cfg["latent_dim"], cfg["in_channels"], cfg["filters"]
    div, ns = cfg["div"], cfg["new_image_size"]
    cz = lat // 2
    bf16, f32 = jnp.bfloat16, jnp.float32
    q = {}

    # 1x1 embedding conv (2*Cin -> Cin)
    q["emb_w"] = p["emb_w"][:, :, 0, 0].T.astype(bf16)
    q["emb_b"] = p["emb_b"].reshape(1, -1).astype(f32)
    # backbone stride==kernel conv as a patch GEMM (div*div*Cin -> F)
    q["backbone_w"] = jnp.transpose(p["backbone_w"], (2, 3, 1, 0)).reshape(
        div * div * Cin, F).astype(bf16)
    q["backbone_b"] = p["backbone_b"].reshape(1, -1).astype(f32)
    # conditional embedding 1x1 stride-div conv (Cin -> cz)
    q["embc_w"] = p["embc_w"][:, :, 0, 0].T.astype(bf16)
    q["embc_b"] = p["embc_b"].reshape(1, -1).astype(f32)

    # classifier: transpose + permute w1 rows so NHWC-flat features can be
    # used directly (reference flattens features in NCHW order).
    idx = (jnp.arange(F)[None, :] * (ns * ns)
           + jnp.arange(ns * ns)[:, None]).reshape(-1)
    q["cls_w1"] = p["cls_w1"].T[idx].astype(bf16)
    for i in (2, 3, 4):
        q[f"cls_w{i}"] = p[f"cls_w{i}"].T.astype(bf16)
    for i in (1, 2, 3, 4):
        q[f"cls_b{i}"] = p[f"cls_b{i}"].reshape(1, -1).astype(f32)

    # fused mu/var conv head (BN folded, outputs concatenated along N)
    mu_s, mu_t = bn_fold(p["mu_gamma"], p["mu_beta"])
    v_s, v_t = bn_fold(p["var_gamma"], p["var_beta"])
    w_mu = _conv_to_taps(p["mu_w"]) * mu_s[None, None, :]
    w_v = _conv_to_taps(p["var_w"]) * v_s[None, None, :]
    q["enc_w"] = jnp.concatenate([w_mu, w_v], axis=-1).astype(bf16)
    q["enc_b"] = jnp.concatenate([p["mu_b"] * mu_s + mu_t,
                                  p["var_b"] * v_s + v_t]).reshape(1, -1
                                                                   ).astype(f32)

    # decoder input (stride-1 transposed conv == flipped regular conv)
    q["dec_in_w"] = _convT_s1_to_taps(p["dec_in_w"]).astype(bf16)
    q["dec_in_b"] = p["dec_in_b"].reshape(1, -1).astype(f32)

    # generator blocks + final transposed conv: sub-pixel taps, BN folded,
    # bias tiled over the 4 sub-pixel slots.
    gen = []
    for blk in p["gen"]:
        s, t = bn_fold(blk["gamma"], blk["beta"])
        w = _convT_s2_to_taps(blk["w"]) * s[None, None, :]
        b = jnp.tile(blk["b"] * s + t, 4).reshape(1, -1)
        gen.append({"w": w.astype(bf16), "b": b.astype(f32)})
    q["gen"] = gen
    s, t = bn_fold(p["fin_gamma"], p["fin_beta"])
    q["fin_ct_w"] = (_convT_s2_to_taps(p["fin_ct_w"])
                     * s[None, None, :]).astype(bf16)
    q["fin_ct_b"] = jnp.tile(p["fin_ct_b"] * s + t, 4).reshape(1, -1).astype(f32)
    q["fin_conv_w"] = _conv_to_taps(p["fin_conv_w"]).astype(bf16)
    q["fin_conv_b"] = p["fin_conv_b"].reshape(1, -1).astype(f32)
    return q


# --------------------------------------------------------------------------
# Forward pass
# --------------------------------------------------------------------------

def jetnet_forward(prep, cfg, input_nchw, labels_nchw, rng):
    B, Cin, H, W = input_nchw.shape
    lat, F, ns, div = (cfg["latent_dim"], cfg["filters"],
                       cfg["new_image_size"], cfg["div"])
    cz = lat // 2
    assert H == ns * div and W == ns * div

    x = jnp.transpose(input_nchw, (0, 2, 3, 1)).astype(jnp.float32)   # NHWC
    c = jnp.transpose(labels_nchw, (0, 2, 3, 1)).astype(jnp.float32)  # NHWC

    # ---------------- embedding_layer (1x1 conv on channel-concat) ----------
    concat_x = jnp.concatenate([x, c], axis=-1)
    emb = dense(concat_x.reshape(B * H * W, 2 * Cin),
                prep["emb_w"], prep["emb_b"]).reshape(B, H, W, Cin)

    # ---------------- batched backbone over [input, condition, embedded] ----
    # TODO(synk): pretrained mobilenet_v2 feature extractor has no in-script
    # equivalent; replaced by one stride-`div` conv + ReLU6 matching the
    # backbone's output shape/stride semantics.
    stacked = jnp.concatenate([x, c, emb], axis=0)                    # (3B,...)
    patches = stacked.reshape(3 * B, ns, div, ns, div, Cin)
    patches = patches.transpose(0, 1, 3, 2, 4, 5).reshape(
        3 * B * ns * ns, div * div * Cin)
    feats = dense(patches, prep["backbone_w"], prep["backbone_b"], act="relu6")
    feats = feats.reshape(3, B, ns * ns * F)          # NHWC-flat per image
    fi, fc, femb = feats[0], feats[1], feats[2]
    feat = femb.reshape(B, ns, ns, F)

    # ---------------- match_class (single fused kernel) ---------------------
    class_label = classify(fi, fc, prep)

    # ---------------- encode + reparameterize (single fused kernel) ---------
    mu, log_var, z = encode_reparam(feat, prep["enc_w"], prep["enc_b"], rng, cz)

    # ---------------- conditional embedding (1x1 stride-div conv) -----------
    c_sub = c[:, ::div, ::div, :]
    emb_cond = dense(c_sub.reshape(B * ns * ns, Cin),
                     prep["embc_w"], prep["embc_b"]).reshape(B, ns, ns, cz)

    concat_z = jnp.concatenate([z, emb_cond], axis=-1)                # latent

    # ---------------- decode -------------------------------------------------
    y = conv3x3_same(concat_z, prep["dec_in_w"], prep["dec_in_b"], act="none")
    for blk in prep["gen"]:
        y = conv_transpose3x3_s2(y, blk["w"], blk["b"], act="leaky_relu")
    y = conv_transpose3x3_s2(y, prep["fin_ct_w"], prep["fin_ct_b"],
                             act="leaky_relu")
    fake = conv3x3_same(y, prep["fin_conv_w"], prep["fin_conv_b"], act="tanh")

    fake_nchw = jnp.transpose(fake, (0, 3, 1, 2))
    mu_nchw = jnp.transpose(mu, (0, 3, 1, 2))
    lv_nchw = jnp.transpose(log_var, (0, 3, 1, 2))
    return [fake_nchw, input_nchw, mu_nchw, lv_nchw, class_label]


# --------------------------------------------------------------------------
# Main
# --------------------------------------------------------------------------

if __name__ == "__main__":
    # Small synthetic configuration consistent with the module's structure:
    # div=8 backbone downsampling, two stride-2 generator blocks plus the
    # final stride-2 block => output spatial == input spatial.
    cfg = dict(
        latent_dim=16,
        in_channels=3,
        image_size=16,
        num_class=3,
        filters=32,          # synthetic backbone channel count
        div=8,
        hidden_dims=[16, 8],
    )
    cfg["new_image_size"] = (
        int(cfg["image_size"] / cfg["div"]) + 1
        if cfg["image_size"] / cfg["div"] > int(cfg["image_size"] / cfg["div"])
        else int(cfg["image_size"] / cfg["div"]))

    key = jax.random.PRNGKey(0)
    k_params, k_x, k_c, k_eps = jax.random.split(key, 4)

    params = init_params(k_params, cfg)
    prep = prepare_params(params, cfg)

    x = jax.random.normal(k_x, (2, cfg["in_channels"], cfg["image_size"],
                                cfg["image_size"]), jnp.float32)
    cond = jax.random.normal(k_c, (2, cfg["in_channels"], cfg["image_size"],
                                   cfg["image_size"]), jnp.float32)

    fwd = jax.jit(lambda p, a, b, r: jetnet_forward(p, cfg, a, b, r))
    fake, inp, mu, log_var, class_label = fwd(prep, x, cond, k_eps)
    for o in (fake, inp, mu, log_var, class_label):
        jax.block_until_ready(o)

    assert fake.shape == (2, 3, cfg["image_size"], cfg["image_size"])
    assert inp.shape == x.shape
    assert mu.shape == (2, cfg["latent_dim"] // 2, cfg["new_image_size"],
                        cfg["new_image_size"])
    assert log_var.shape == mu.shape
    assert class_label.shape == (2, cfg["num_class"])
    assert bool(jnp.all(jnp.isfinite(fake)))
    assert bool(jnp.allclose(jnp.sum(class_label, axis=-1), 1.0, atol=1e-5))

    print("KERNEL_OK")
</pallas_src>

<mosaic_0001>
module attributes {stable_mosaic.version = 11 : i64} {
  func.func @_dense_kernel(%arg0: i32, %arg1: i32, %arg2: i32, %arg3: memref<256x6xbf16, #tpu.memory_space<vmem>>, %arg4: memref<6x3xbf16, #tpu.memory_space<vmem>>, %arg5: memref<1x3xf32, #tpu.memory_space<vmem>>, %arg6: memref<256x3xf32, #tpu.memory_space<vmem>>, %arg7: memref<256x3xf32, #tpu.memory_space<vmem>>) attributes {dimension_semantics = [#tpu.dimension_semantics<parallel>, #tpu.dimension_semantics<parallel>, #tpu.dimension_semantics<arbitrary>], iteration_bounds = array<i64: 2, 1, 1>, scalar_prefetch = 0 : i64, scratch_operands = 1 : i64, tpu.core_type = #tpu.core_type<tc>, window_params = [{transform_indices = @transform_0, window_bounds = array<i64: 256, 6>}, {transform_indices = @transform_1, window_bounds = array<i64: 6, 3>}, {transform_indices = @transform_2, window_bounds = array<i64: 1, 3>}, {transform_indices = @transform_3, window_bounds = array<i64: 256, 3>}]} {
    %c0_i32 = arith.constant 0 : i32
    %0 = arith.cmpi eq, %arg2, %c0_i32 : i32
    %1 = arith.extui %0 : i1 to i32
    %c0_i32_0 = arith.constant 0 : i32
    %2 = arith.cmpi ne, %1, %c0_i32_0 : i32
    scf.if %2 {
      %cst_10 = arith.constant 0.000000e+00 : f32
      %12 = vector.broadcast %cst_10 : f32 to vector<256x3xf32>
      %c0_11 = arith.constant 0 : index
      %c0_12 = arith.constant 0 : index
      %13 = vector.load %arg7[%c0_11, %c0_12] : memref<256x3xf32, #tpu.memory_space<vmem>>, vector<256x3xf32>
      tpu.vector_store %arg7[%c0_11, %c0_12], %12 {strides = array<i32>} : memref<256x3xf32, #tpu.memory_space<vmem>>, vector<256x3xf32>,
    } else {
    }
    %c0 = arith.constant 0 : index
    %c0_1 = arith.constant 0 : index
    %3 = vector.load %arg7[%c0, %c0_1] : memref<256x3xf32, #tpu.memory_space<vmem>>, vector<256x3xf32>
    %c0_2 = arith.constant 0 : index
    %c0_3 = arith.constant 0 : index
    %4 = vector.load %arg3[%c0_2, %c0_3] : memref<256x6xbf16, #tpu.memory_space<vmem>>, vector<256x6xbf16>
    %c0_4 = arith.constant 0 : index
    %c0_5 = arith.constant 0 : index
    %5 = vector.load %arg4[%c0_4, %c0_5] : memref<6x3xbf16, #tpu.memory_space<vmem>>, vector<6x3xbf16>
    %cst = arith.constant dense<0.000000e+00> : vector<256x3xf32>
    %6 = tpu.matmul %4, %5, %cst {dimension_numbers = #tpu.dot_dimension_numbers<[1], [0], [0], [1], [0, 0, 1, 1], [], []>} : vector<256x6xbf16>, vector<6x3xbf16>, vector<256x3xf32> -> vector<256x3xf32>
    %7 = arith.addf %3, %6 : vector<256x3xf32>
    %c0_6 = arith.constant 0 : index
    %c0_7 = arith.constant 0 : index
    %8 = vector.load %arg7[%c0_6, %c0_7] : memref<256x3xf32, #tpu.memory_space<vmem>>, vector<256x3xf32>
    tpu.vector_store %arg7[%c0_6, %c0_7], %7 {strides = array<i32>} : memref<256x3xf32, #tpu.memory_space<vmem>>, vector<256x3xf32>,
    %c0_i32_8 = arith.constant 0 : i32
    %9 = arith.cmpi eq, %arg2, %c0_i32_8 : i32
    %10 = arith.extui %9 : i1 to i32
    %c0_i32_9 = arith.constant 0 : i32
    %11 = arith.cmpi ne, %10, %c0_i32_9 : i32
    scf.if %11 {
      %c0_10 = arith.constant 0 : index
      %c0_11 = arith.constant 0 : index
      %12 = vector.load %arg7[%c0_10, %c0_11] : memref<256x3xf32, #tpu.memory_space<vmem>>, vector<256x3xf32>
      %c0_12 = arith.constant 0 : index
      %c0_13 = arith.constant 0 : index
      %13 = vector.load %arg5[%c0_12, %c0_13] : memref<1x3xf32, #tpu.memory_space<vmem>>, vector<1x3xf32>
      %14 = vector.broadcast %13 : vector<1x3xf32> to vector<256x3xf32>
      %15 = arith.addf %12, %14 : vector<256x3xf32>
      %c0_14 = arith.constant 0 : index
      %c0_15 = arith.constant 0 : index
      %16 = vector.load %arg6[%c0_14, %c0_15] : memref<256x3xf32, #tpu.memory_space<vmem>>, vector<256x3xf32>
      tpu.vector_store %arg6[%c0_14, %c0_15], %15 {strides = array<i32>} : memref<256x3xf32, #tpu.memory_space<vmem>>, vector<256x3xf32>,
    } else {
    }
    return
  }
  func.func @transform_0(%arg0: i32, %arg1: i32, %arg2: i32) -> (i32, i32) {
    %c0_i32 = arith.constant 0 : i32
    return %arg0, %arg2 : i32, i32
  }
  func.func @transform_1(%arg0: i32, %arg1: i32, %arg2: i32) -> (i32, i32) {
    %c0_i32 = arith.constant 0 : i32
    return %arg2, %arg1 : i32, i32
  }
  func.func @transform_2(%arg0: i32, %arg1: i32, %arg2: i32) -> (i32, i32) {
    %c0_i32 = arith.constant 0 : i32
    %c0_i32_0 = arith.constant 0 : i32
    return %c0_i32, %arg1 : i32, i32
  }
  func.func @transform_3(%arg0: i32, %arg1: i32, %arg2: i32) -> (i32, i32) {
    %c0_i32 = arith.constant 0 : i32
    return %arg0, %arg1 : i32, i32
  }
}

module attributes {stable_mosaic.version = 11 : i64} {
  func.func @_dense_kernel(%arg0: i32, %arg1: i32, %arg2: i32, %arg3: memref<24x192xbf16, #tpu.memory_space<vmem>>, %arg4: memref<192x32xbf16, #tpu.memory_space<vmem>>, %arg5: memref<1x32xf32, #tpu.memory_space<vmem>>, %arg6: memref<24x32xf32, #tpu.memory_space<vmem>>, %arg7: memref<24x32xf32, #tpu.memory_space<vmem>>) attributes {dimension_semantics = [#tpu.dimension_semantics<parallel>, #tpu.dimension_semantics<parallel>, #tpu.dimension_semantics<arbitrary>], iteration_bounds = array<i64: 1, 1, 1>, scalar_prefetch = 0 : i64, scratch_operands = 1 : i64, tpu.core_type = #tpu.core_type<tc>, window_params = [{transform_indices = @transform_0, window_bounds = array<i64: 24, 192>}, {transform_indices = @transform_1, window_bounds = array<i64: 192, 32>}, {transform_indices = @transform_2, window_bounds = array<i64: 1, 32>}, {transform_indices = @transform_3, window_bounds = array<i64: 24, 32>}]} {
    %c0_i32 = arith.constant 0 : i32
    %0 = arith.cmpi eq, %arg2, %c0_i32 : i32
    %1 = arith.extui %0 : i1 to i32
    %c0_i32_0 = arith.constant 0 : i32
    %2 = arith.cmpi ne, %1, %c0_i32_0 : i32
    scf.if %2 {
      %cst_10 = arith.constant 0.000000e+00 : f32
      %12 = vector.broadcast %cst_10 : f32 to vector<24x32xf32>
      %c0_11 = arith.constant 0 : index
      %c0_12 = arith.constant 0 : index
      %13 = vector.load %arg7[%c0_11, %c0_12] : memref<24x32xf32, #tpu.memory_space<vmem>>, vector<24x32xf32>
      tpu.vector_store %arg7[%c0_11, %c0_12], %12 {strides = array<i32>} : memref<24x32xf32, #tpu.memory_space<vmem>>, vector<24x32xf32>,
    } else {
    }
    %c0 = arith.constant 0 : index
    %c0_1 = arith.constant 0 : index
    %3 = vector.load %arg7[%c0, %c0_1] : memref<24x32xf32, #tpu.memory_space<vmem>>, vector<24x32xf32>
    %c0_2 = arith.constant 0 : index
    %c0_3 = arith.constant 0 : index
    %4 = vector.load %arg3[%c0_2, %c0_3] : memref<24x192xbf16, #tpu.memory_space<vmem>>, vector<24x192xbf16>
    %c0_4 = arith.constant 0 : index
    %c0_5 = arith.constant 0 : index
    %5 = vector.load %arg4[%c0_4, %c0_5] : memref<192x32xbf16, #tpu.memory_space<vmem>>, vector<192x32xbf16>
    %cst = arith.constant dense<0.000000e+00> : vector<24x32xf32>
    %6 = tpu.matmul %4, %5, %cst {dimension_numbers = #tpu.dot_dimension_numbers<[1], [0], [0], [1], [0, 0, 1, 1], [], []>} : vector<24x192xbf16>, vector<192x32xbf16>, vector<24x32xf32> -> vector<24x32xf32>
    %7 = arith.addf %3, %6 : vector<24x32xf32>
    %c0_6 = arith.constant 0 : index
    %c0_7 = arith.constant 0 : index
    %8 = vector.load %arg7[%c0_6, %c0_7] : memref<24x32xf32, #tpu.memory_space<vmem>>, vector<24x32xf32>
    tpu.vector_store %arg7[%c0_6, %c0_7], %7 {strides = array<i32>} : memref<24x32xf32, #tpu.memory_space<vmem>>, vector<24x32xf32>,
    %c0_i32_8 = arith.constant 0 : i32
    %9 = arith.cmpi eq, %arg2, %c0_i32_8 : i32
    %10 = arith.extui %9 : i1 to i32
    %c0_i32_9 = arith.constant 0 : i32
    %11 = arith.cmpi ne, %10, %c0_i32_9 : i32
    scf.if %11 {
      %c0_10 = arith.constant 0 : index
      %c0_11 = arith.constant 0 : index
      %12 = vector.load %arg7[%c0_10, %c0_11] : memref<24x32xf32, #tpu.memory_space<vmem>>, vector<24x32xf32>
      %c0_12 = arith.constant 0 : index
      %c0_13 = arith.constant 0 : index
      %13 = vector.load %arg5[%c0_12, %c0_13] : memref<1x32xf32, #tpu.memory_space<vmem>>, vector<1x32xf32>
      %14 = vector.broadcast %13 : vector<1x32xf32> to vector<24x32xf32>
      %15 = arith.addf %12, %14 : vector<24x32xf32>
      %cst_14 = arith.constant 0.000000e+00 : f32
      %cst_15 = arith.constant 6.000000e+00 : f32
      %16 = vector.broadcast %cst_14 : f32 to vector<24x32xf32>
      %17 = arith.maximumf %16, %15 : vector<24x32xf32>
      %18 = vector.broadcast %cst_15 : f32 to vector<24x32xf32>
      %19 = arith.minimumf %18, %17 : vector<24x32xf32>
      %c0_16 = arith.constant 0 : index
      %c0_17 = arith.constant 0 : index
      %20 = vector.load %arg6[%c0_16, %c0_17] : memref<24x32xf32, #tpu.memory_space<vmem>>, vector<24x32xf32>
      tpu.vector_store %arg6[%c0_16, %c0_17], %19 {strides = array<i32>} : memref<24x32xf32, #tpu.memory_space<vmem>>, vector<24x32xf32>,
    } else {
    }
    return
  }
  func.func @transform_0(%arg0: i32, %arg1: i32, %arg2: i32) -> (i32, i32) {
    %c0_i32 = arith.constant 0 : i32
    return %arg0, %arg2 : i32, i32
  }
  func.func @transform_1(%arg0: i32, %arg1: i32, %arg2: i32) -> (i32, i32) {
    %c0_i32 = arith.constant 0 : i32
    return %arg2, %arg1 : i32, i32
  }
  func.func @transform_2(%arg0: i32, %arg1: i32, %arg2: i32) -> (i32, i32) {
    %c0_i32 = arith.constant 0 : i32
    %c0_i32_0 = arith.constant 0 : i32
    return %c0_i32, %arg1 : i32, i32
  }
  func.func @transform_3(%arg0: i32, %arg1: i32, %arg2: i32) -> (i32, i32) {
    %c0_i32 = arith.constant 0 : i32
    return %arg0, %arg1 : i32, i32
  }
}

module attributes {stable_mosaic.version = 11 : i64} {
  func.func @_dense_kernel(%arg0: i32, %arg1: i32, %arg2: i32, %arg3: memref<8x3xbf16, #tpu.memory_space<vmem>>, %arg4: memref<3x8xbf16, #tpu.memory_space<vmem>>, %arg5: memref<1x8xf32, #tpu.memory_space<vmem>>, %arg6: memref<8x8xf32, #tpu.memory_space<vmem>>, %arg7: memref<8x8xf32, #tpu.memory_space<vmem>>) attributes {dimension_semantics = [#tpu.dimension_semantics<parallel>, #tpu.dimension_semantics<parallel>, #tpu.dimension_semantics<arbitrary>], iteration_bounds = array<i64: 1, 1, 1>, scalar_prefetch = 0 : i64, scratch_operands = 1 : i64, tpu.core_type = #tpu.core_type<tc>, window_params = [{transform_indices = @transform_0, window_bounds = array<i64: 8, 3>}, {transform_indices = @transform_1, window_bounds = array<i64: 3, 8>}, {transform_indices = @transform_2, window_bounds = array<i64: 1, 8>}, {transform_indices = @transform_3, window_bounds = array<i64: 8, 8>}]} {
    %c0_i32 = arith.constant 0 : i32
    %0 = arith.cmpi eq, %arg2, %c0_i32 : i32
    %1 = arith.extui %0 : i1 to i32
    %c0_i32_0 = arith.constant 0 : i32
    %2 = arith.cmpi ne, %1, %c0_i32_0 : i32
    scf.if %2 {
      %cst_10 = arith.constant 0.000000e+00 : f32
      %12 = vector.broadcast %cst_10 : f32 to vector<8x8xf32>
      %c0_11 = arith.constant 0 : index
      %c0_12 = arith.constant 0 : index
      %13 = vector.load %arg7[%c0_11, %c0_12] : memref<8x8xf32, #tpu.memory_space<vmem>>, vector<8x8xf32>
      tpu.vector_store %arg7[%c0_11, %c0_12], %12 {strides = array<i32>} : memref<8x8xf32, #tpu.memory_space<vmem>>, vector<8x8xf32>,
    } else {
    }
    %c0 = arith.constant 0 : index
    %c0_1 = arith.constant 0 : index
    %3 = vector.load %arg7[%c0, %c0_1] : memref<8x8xf32, #tpu.memory_space<vmem>>, vector<8x8xf32>
    %c0_2 = arith.constant 0 : index
    %c0_3 = arith.constant 0 : index
    %4 = vector.load %arg3[%c0_2, %c0_3] : memref<8x3xbf16, #tpu.memory_space<vmem>>, vector<8x3xbf16>
    %c0_4 = arith.constant 0 : index
    %c0_5 = arith.constant 0 : index
    %5 = vector.load %arg4[%c0_4, %c0_5] : memref<3x8xbf16, #tpu.memory_space<vmem>>, vector<3x8xbf16>
    %cst = arith.constant dense<0.000000e+00> : vector<8x8xf32>
    %6 = tpu.matmul %4, %5, %cst {dimension_numbers = #tpu.dot_dimension_numbers<[1], [0], [0], [1], [0, 0, 1, 1], [], []>} : vector<8x3xbf16>, vector<3x8xbf16>, vector<8x8xf32> -> vector<8x8xf32>
    %7 = arith.addf %3, %6 : vector<8x8xf32>
    %c0_6 = arith.constant 0 : index
    %c0_7 = arith.constant 0 : index
    %8 = vector.load %arg7[%c0_6, %c0_7] : memref<8x8xf32, #tpu.memory_space<vmem>>, vector<8x8xf32>
    tpu.vector_store %arg7[%c0_6, %c0_7], %7 {strides = array<i32>} : memref<8x8xf32, #tpu.memory_space<vmem>>, vector<8x8xf32>,
    %c0_i32_8 = arith.constant 0 : i32
    %9 = arith.cmpi eq, %arg2, %c0_i32_8 : i32
    %10 = arith.extui %9 : i1 to i32
    %c0_i32_9 = arith.constant 0 : i32
    %11 = arith.cmpi ne, %10, %c0_i32_9 : i32
    scf.if %11 {
      %c0_10 = arith.constant 0 : index
      %c0_11 = arith.constant 0 : index
      %12 = vector.load %arg7[%c0_10, %c0_11] : memref<8x8xf32, #tpu.memory_space<vmem>>, vector<8x8xf32>
      %c0_12 = arith.constant 0 : index
      %c0_13 = arith.constant 0 : index
      %13 = vector.load %arg5[%c0_12, %c0_13] : memref<1x8xf32, #tpu.memory_space<vmem>>, vector<1x8xf32>
      %14 = vector.broadcast %13 : vector<1x8xf32> to vector<8x8xf32>
      %15 = arith.addf %12, %14 : vector<8x8xf32>
      %c0_14 = arith.constant 0 : index
      %c0_15 = arith.constant 0 : index
      %16 = vector.load %arg6[%c0_14, %c0_15] : memref<8x8xf32, #tpu.memory_space<vmem>>, vector<8x8xf32>
      tpu.vector_store %arg6[%c0_14, %c0_15], %15 {strides = array<i32>} : memref<8x8xf32, #tpu.memory_space<vmem>>, vector<8x8xf32>,
    } else {
    }
    return
  }
  func.func @transform_0(%arg0: i32, %arg1: i32, %arg2: i32) -> (i32, i32) {
    %c0_i32 = arith.constant 0 : i32
    return %arg0, %arg2 : i32, i32
  }
  func.func @transform_1(%arg0: i32, %arg1: i32, %arg2: i32) -> (i32, i32) {
    %c0_i32 = arith.constant 0 : i32
    return %arg2, %arg1 : i32, i32
  }
  func.func @transform_2(%arg0: i32, %arg1: i32, %arg2: i32) -> (i32, i32) {
    %c0_i32 = arith.constant 0 : i32
    %c0_i32_0 = arith.constant 0 : i32
    return %c0_i32, %arg1 : i32, i32
  }
  func.func @transform_3(%arg0: i32, %arg1: i32, %arg2: i32) -> (i32, i32) {
    %c0_i32 = arith.constant 0 : i32
    return %arg0, %arg1 : i32, i32
  }
}

module attributes {stable_mosaic.version = 11 : i64} {
  func.func @_encode_kernel(%arg0: i32, %arg1: memref<1x16x32xf32, #tpu.memory_space<vmem>>, %arg2: memref<9x32x16xbf16, #tpu.memory_space<vmem>>, %arg3: memref<1x16xf32, #tpu.memory_space<vmem>>, %arg4: memref<1x6x8xf32, #tpu.memory_space<vmem>>, %arg5: memref<1x6x24xf32, #tpu.memory_space<vmem>>) attributes {dimension_semantics = [#tpu.dimension_semantics<parallel>], iteration_bounds = array<i64: 2>, scalar_prefetch = 0 : i64, scratch_operands = 0 : i64, tpu.core_type = #tpu.core_type<tc>, window_params = [{transform_indices = @transform_0, window_bounds = array<i64: 1, 16, 32>}, {pipeline_mode = #tpu.pipeline_mode<synchronous>, transform_indices = @transform_1, window_bounds = array<i64: 9, 32, 16>}, {pipeline_mode = #tpu.pipeline_mode<synchronous>, transform_indices = @transform_2, window_bounds = array<i64: 1, 16>}, {transform_indices = @transform_3, window_bounds = array<i64: 1, 6, 8>}, {transform_indices = @transform_4, window_bounds = array<i64: 1, 6, 24>}]} {
    %c0 = arith.constant 0 : index
    %c0_0 = arith.constant 0 : index
    %c0_1 = arith.constant 0 : index
    %0 = vector.load %arg1[%c0, %c0_0, %c0_1] : memref<1x16x32xf32, #tpu.memory_space<vmem>>, vector<1x6x32xf32>
    %1 = vector.shape_cast %0 : vector<1x6x32xf32> to vector<6x32xf32>
    %2 = arith.truncf %1 : vector<6x32xf32> to vector<6x32xbf16>
    %c0_2 = arith.constant 0 : index
    %c0_3 = arith.constant 0 : index
    %c0_4 = arith.constant 0 : index
    %3 = vector.load %arg2[%c0_2, %c0_3, %c0_4] : memref<9x32x16xbf16, #tpu.memory_space<vmem>>, vector<1x32x16xbf16>
    %4 = vector.shape_cast %3 : vector<1x32x16xbf16> to vector<32x16xbf16>
    %cst = arith.constant dense<0.000000e+00> : vector<6x16xf32>
    %5 = tpu.matmul %2, %4, %cst {dimension_numbers = #tpu.dot_dimension_numbers<[1], [0], [0], [1], [0, 0, 1, 1], [], []>} : vector<6x32xbf16>, vector<32x16xbf16>, vector<6x16xf32> -> vector<6x16xf32>
    %c0_5 = arith.constant 0 : index
    %c1 = arith.constant 1 : index
    %c0_6 = arith.constant 0 : index
    %6 = vector.load %arg1[%c0_5, %c1, %c0_6] : memref<1x16x32xf32, #tpu.memory_space<vmem>>, vector<1x6x32xf32>
    %7 = vector.shape_cast %6 : vector<1x6x32xf32> to vector<6x32xf32>
    %8 = arith.truncf %7 : vector<6x32xf32> to vector<6x32xbf16>
    %c1_7 = arith.constant 1 : index
    %c0_8 = arith.constant 0 : index
    %c0_9 = arith.constant 0 : index
    %9 = vector.load %arg2[%c1_7, %c0_8, %c0_9] : memref<9x32x16xbf16, #tpu.memory_space<vmem>>, vector<1x32x16xbf16>
    %10 = vector.shape_cast %9 : vector<1x32x16xbf16> to vector<32x16xbf16>
    %cst_10 = arith.constant dense<0.000000e+00> : vector<6x16xf32>
    %11 = tpu.matmul %8, %10, %cst_10 {dimension_numbers = #tpu.dot_dimension_numbers<[1], [0], [0], [1], [0, 0, 1, 1], [], []>} : vector<6x32xbf16>, vector<32x16xbf16>, vector<6x16xf32> -> vector<6x16xf32>
    %12 = arith.addf %5, %11 : vector<6x16xf32>
    %c0_11 = arith.constant 0 : index
    %c2 = arith.constant 2 : index
    %c0_12 = arith.constant 0 : index
    %13 = vector.load %arg1[%c0_11, %c2, %c0_12] : memref<1x16x32xf32, #tpu.memory_space<vmem>>, vector<1x6x32xf32>
    %14 = vector.shape_cast %13 : vector<1x6x32xf32> to vector<6x32xf32>
    %15 = arith.truncf %14 : vector<6x32xf32> to vector<6x32xbf16>
    %c2_13 = arith.constant 2 : index
    %c0_14 = arith.constant 0 : index
    %c0_15 = arith.constant 0 : index
    %16 = vector.load %arg2[%c2_13, %c0_14, %c0_15] : memref<9x32x16xbf16, #tpu.memory_space<vmem>>, vector<1x32x16xbf16>
    %17 = vector.shape_cast %16 : vector<1x32x16xbf16> to vector<32x16xbf16>
    %cst_16 = arith.constant dense<0.000000e+00> : vector<6x16xf32>
    %18 = tpu.matmul %15, %17, %cst_16 {dimension_numbers = #tpu.dot_dimension_numbers<[1], [0], [0], [1], [0, 0, 1, 1], [], []>} : vector<6x32xbf16>, vector<32x16xbf16>, vector<6x16xf32> -> vector<6x16xf32>
    %19 = arith.addf %12, %18 : vector<6x16xf32>
    %c0_17 = arith.constant 0 : index
    %c4 = arith.constant 4 : index
    %c0_18 = arith.constant 0 : index
    %20 = vector.load %arg1[%c0_17, %c4, %c0_18] : memref<1x16x32xf32, #tpu.memory_space<vmem>>, vector<1x6x32xf32>
    %21 = vector.shape_cast %20 : vector<1x6x32xf32> to vector<6x32xf32>
    %22 = arith.truncf %21 : vector<6x32xf32> to vector<6x32xbf16>
    %c3 = arith.constant 3 : index
    %c0_19 = arith.constant 0 : index
    %c0_20 = arith.constant 0 : index
    %23 = vector.load %arg2[%c3, %c0_19, %c0_20] : memref<9x32x16xbf16, #tpu.memory_space<vmem>>, vector<1x32x16xbf16>
    %24 = vector.shape_cast %23 : vector<1x32x16xbf16> to vector<32x16xbf16>
    %cst_21 = arith.constant dense<0.000000e+00> : vector<6x16xf32>
    %25 = tpu.matmul %22, %24, %cst_21 {dimension_numbers = #tpu.dot_dimension_numbers<[1], [0], [0], [1], [0, 0, 1, 1], [], []>} : vector<6x32xbf16>, vector<32x16xbf16>, vector<6x16xf32> -> vector<6x16xf32>
    %26 = arith.addf %19, %25 : vector<6x16xf32>
    %c0_22 = arith.constant 0 : index
    %c5 = arith.constant 5 : index
    %c0_23 = arith.constant 0 : index
    %27 = vector.load %arg1[%c0_22, %c5, %c0_23] : memref<1x16x32xf32, #tpu.memory_space<vmem>>, vector<1x6x32xf32>
    %28 = vector.shape_cast %27 : vector<1x6x32xf32> to vector<6x32xf32>
    %29 = arith.truncf %28 : vector<6x32xf32> to vector<6x32xbf16>
    %c4_24 = arith.constant 4 : index
    %c0_25 = arith.constant 0 : index
    %c0_26 = arith.constant 0 : index
    %30 = vector.load %arg2[%c4_24, %c0_25, %c0_26] : memref<9x32x16xbf16, #tpu.memory_space<vmem>>, vector<1x32x16xbf16>
    %31 = vector.shape_cast %30 : vector<1x32x16xbf16> to vector<32x16xbf16>
    %cst_27 = arith.constant dense<0.000000e+00> : vector<6x16xf32>
    %32 = tpu.matmul %29, %31, %cst_27 {dimension_numbers = #tpu.dot_dimension_numbers<[1], [0], [0], [1], [0, 0, 1, 1], [], []>} : vector<6x32xbf16>, vector<32x16xbf16>, vector<6x16xf32> -> vector<6x16xf32>
    %33 = arith.addf %26, %32 : vector<6x16xf32>
    %c0_28 = arith.constant 0 : index
    %c6 = arith.constant 6 : index
    %c0_29 = arith.constant 0 : index
    %34 = vector.load %arg1[%c0_28, %c6, %c0_29] : memref<1x16x32xf32, #tpu.memory_space<vmem>>, vector<1x6x32xf32>
    %35 = vector.shape_cast %34 : vector<1x6x32xf32> to vector<6x32xf32>
    %36 = arith.truncf %35 : vector<6x32xf32> to vector<6x32xbf16>
    %c5_30 = arith.constant 5 : index
    %c0_31 = arith.constant 0 : index
    %c0_32 = arith.constant 0 : index
    %37 = vector.load %arg2[%c5_30, %c0_31, %c0_32] : memref<9x32x16xbf16, #tpu.memory_space<vmem>>, vector<1x32x16xbf16>
    %38 = vector.shape_cast %37 : vector<1x32x16xbf16> to vector<32x16xbf16>
    %cst_33 = arith.constant dense<0.000000e+00> : vector<6x16xf32>
    %39 = tpu.matmul %36, %38, %cst_33 {dimension_numbers = #tpu.dot_dimension_numbers<[1], [0], [0], [1], [0, 0, 1, 1], [], []>} : vector<6x32xbf16>, vector<32x16xbf16>, vector<6x16xf32> -> vector<6x16xf32>
    %40 = arith.addf %33, %39 : vector<6x16xf32>
    %c0_34 = arith.constant 0 : index
    %c8 = arith.constant 8 : index
    %c0_35 = arith.constant 0 : index
    %41 = vector.load %arg1[%c0_34, %c8, %c0_35] : memref<1x16x32xf32, #tpu.memory_space<vmem>>, vector<1x6x32xf32>
    %42 = vector.shape_cast %41 : vector<1x6x32xf32> to vector<6x32xf32>
    %43 = arith.truncf %42 : vector<6x32xf32> to vector<6x32xbf16>
    %c6_36 = arith.constant 6 : index
    %c0_37 = arith.constant 0 : index
    %c0_38 = arith.constant 0 : index
    %44 = vector.load %arg2[%c6_36, %c0_37, %c0_38] : memref<9x32x16xbf16, #tpu.memory_space<vmem>>, vector<1x32x16xbf16>
    %45 = vector.shape_cast %44 : vector<1x32x16xbf16> to vector<32x16xbf16>
    %cst_39 = arith.constant dense<0.000000e+00> : vector<6x16xf32>
    %46 = tpu.matmul %43, %45, %cst_39 {dimension_numbers = #tpu.dot_dimension_numbers<[1], [0], [0], [1], [0, 0, 1, 1], [], []>} : vector<6x32xbf16>, vector<32x16xbf16>, vector<6x16xf32> -> vector<6x16xf32>
    %47 = arith.addf %40, %46 : vector<6x16xf32>
    %c0_40 = arith.constant 0 : index
    %c9 = arith.constant 9 : index
    %c0_41 = arith.constant 0 : index
    %48 = vector.load %arg1[%c0_40, %c9, %c0_41] : memref<1x16x32xf32, #tpu.memory_space<vmem>>, vector<1x6x32xf32>
    %49 = vector.shape_cast %48 : vector<1x6x32xf32> to vector<6x32xf32>
    %50 = arith.truncf %49 : vector<6x32xf32> to vector<6x32xbf16>
    %c7 = arith.constant 7 : index
    %c0_42 = arith.constant 0 : index
    %c0_43 = arith.constant 0 : index
    %51 = vector.load %arg2[%c7, %c0_42, %c0_43] : memref<9x32x16xbf16, #tpu.memory_space<vmem>>, vector<1x32x16xbf16>
    %52 = vector.shape_cast %51 : vector<1x32x16xbf16> to vector<32x16xbf16>
    %cst_44 = arith.constant dense<0.000000e+00> : vector<6x16xf32>
    %53 = tpu.matmul %50, %52, %cst_44 {dimension_numbers = #tpu.dot_dimension_numbers<[1], [0], [0], [1], [0, 0, 1, 1], [], []>} : vector<6x32xbf16>, vector<32x16xbf16>, vector<6x16xf32> -> vector<6x16xf32>
    %54 = arith.addf %47, %53 : vector<6x16xf32>
    %c0_45 = arith.constant 0 : index
    %c10 = arith.constant 10 : index
    %c0_46 = arith.constant 0 : index
    %55 = vector.load %arg1[%c0_45, %c10, %c0_46] : memref<1x16x32xf32, #tpu.memory_space<vmem>>, vector<1x6x32xf32>
    %56 = vector.shape_cast %55 : vector<1x6x32xf32> to vector<6x32xf32>
    %57 = arith.truncf %56 : vector<6x32xf32> to vector<6x32xbf16>
    %c8_47 = arith.constant 8 : index
    %c0_48 = arith.constant 0 : index
    %c0_49 = arith.constant 0 : index
    %58 = vector.load %arg2[%c8_47, %c0_48, %c0_49] : memref<9x32x16xbf16, #tpu.memory_space<vmem>>, vector<1x32x16xbf16>
    %59 = vector.shape_cast %58 : vector<1x32x16xbf16> to vector<32x16xbf16>
    %cst_50 = arith.constant dense<0.000000e+00> : vector<6x16xf32>
    %60 = tpu.matmul %57, %59, %cst_50 {dimension_numbers = #tpu.dot_dimension_numbers<[1], [0], [0], [1], [0, 0, 1, 1], [], []>} : vector<6x32xbf16>, vector<32x16xbf16>, vector<6x16xf32> -> vector<6x16xf32>
    %61 = arith.addf %54, %60 : vector<6x16xf32>
    %c0_51 = arith.constant 0 : index
    %c0_52 = arith.constant 0 : index
    %62 = vector.load %arg3[%c0_51, %c0_52] : memref<1x16xf32, #tpu.memory_space<vmem>>, vector<1x16xf32>
    %63 = vector.broadcast %62 : vector<1x16xf32> to vector<6x16xf32>
    %64 = arith.addf %61, %63 : vector<6x16xf32>
    %65 = vector.extract_strided_slice %64 {offsets = [0, 0], sizes = [6, 8], strides = [1, 1]} : vector<6x16xf32> to vector<6x8xf32>
    %66 = vector.extract_strided_slice %64 {offsets = [0, 8], sizes = [6, 8], strides = [1, 1]} : vector<6x16xf32> to vector<6x8xf32>
    %cst_53 = arith.constant 0.000000e+00 : f32
    %67 = vector.broadcast %cst_53 : f32 to vector<6x8xf32>
    %68 = arith.maximumf %66, %67 : vector<6x8xf32>
    %69 = math.absf %66 : vector<6x8xf32>
    %cst_54 = arith.constant 0.000000e+00 : f32
    %70 = vector.broadcast %cst_54 : f32 to vector<6x8xf32>
    %71 = arith.subf %70, %69 : vector<6x8xf32>
    %72 = math.exp %71 : vector<6x8xf32>
    %73 = math.log1p %72 : vector<6x8xf32>
    %74 = arith.addf %68, %73 : vector<6x8xf32>
    %cst_55 = arith.constant 9.99999993E-9 : f32
    %75 = vector.broadcast %cst_55 : f32 to vector<6x8xf32>
    %76 = arith.addf %74, %75 : vector<6x8xf32>
    %c0_56 = arith.constant 0 : index
    %c0_57 = arith.constant 0 : index
    %c0_58 = arith.constant 0 : index
    %77 = vector.load %arg4[%c0_56, %c0_57, %c0_58] : memref<1x6x8xf32, #tpu.memory_space<vmem>>, vector<1x6x8xf32>
    %78 = vector.shape_cast %77 : vector<1x6x8xf32> to vector<6x8xf32>
    %cst_59 = arith.constant 5.000000e-01 : f32
    %79 = vector.broadcast %cst_59 : f32 to vector<6x8xf32>
    %80 = arith.mulf %79, %76 : vector<6x8xf32>
    %81 = math.exp %80 : vector<6x8xf32>
    %82 = arith.mulf %78, %81 : vector<6x8xf32>
    %83 = arith.addf %82, %65 : vector<6x8xf32>
    %84 = tpu.concatenate %65, %76, %83 in 1 : vector<6x8xf32>, vector<6x8xf32>, vector<6x8xf32> -> vector<6x24xf32>
    %c0_60 = arith.constant 0 : index
    %c0_61 = arith.constant 0 : index
    %c0_62 = arith.constant 0 : index
    %85 = vector.load %arg5[%c0_60, %c0_61, %c0_62] : memref<1x6x24xf32, #tpu.memory_space<vmem>>, vector<1x6x24xf32>
    %86 = vector.shape_cast %85 : vector<1x6x24xf32> to vector<6x24xf32>
    %87 = vector.shape_cast %84 : vector<6x24xf32> to vector<1x6x24xf32>
    tpu.vector_store %arg5[%c0_60, %c0_61, %c0_62], %87 {strides = array<i32>} : memref<1x6x24xf32, #tpu.memory_space<vmem>>, vector<1x6x24xf32>,
    return
  }
  func.func @transform_0(%arg0: i32) -> (i32, i32, i32) {
    %c0_i32 = arith.constant 0 : i32
    %c0_i32_0 = arith.constant 0 : i32
    %c0_i32_1 = arith.constant 0 : i32
    return %arg0, %c0_i32, %c0_i32_0 : i32, i32, i32
  }
  func.func @transform_1(%arg0: i32) -> (i32, i32, i32) {
    %c0_i32 = arith.constant 0 : i32
    %c0_i32_0 = arith.constant 0 : i32
    %c0_i32_1 = arith.constant 0 : i32
    %c0_i32_2 = arith.constant 0 : i32
    return %c0_i32, %c0_i32_0, %c0_i32_1 : i32, i32, i32
  }
  func.func @transform_2(%arg0: i32) -> (i32, i32) {
    %c0_i32 = arith.constant 0 : i32
    %c0_i32_0 = arith.constant 0 : i32
    %c0_i32_1 = arith.constant 0 : i32
    return %c0_i32, %c0_i32_0 : i32, i32
  }
  func.func @transform_3(%arg0: i32) -> (i32, i32, i32) {
    %c0_i32 = arith.constant 0 : i32
    %c0_i32_0 = arith.constant 0 : i32
    %c0_i32_1 = arith.constant 0 : i32
    return %arg0, %c0_i32, %c0_i32_0 : i32, i32, i32
  }
  func.func @transform_4(%arg0: i32) -> (i32, i32, i32) {
    %c0_i32 = arith.constant 0 : i32
    %c0_i32_0 = arith.constant 0 : i32
    %c0_i32_1 = arith.constant 0 : i32
    return %arg0, %c0_i32, %c0_i32_0 : i32, i32, i32
  }
}

module attributes {stable_mosaic.version = 11 : i64} {
  func.func @_conv_taps_kernel(%arg0: i32, %arg1: memref<1x16x16xf32, #tpu.memory_space<vmem>>, %arg2: memref<9x16x16xbf16, #tpu.memory_space<vmem>>, %arg3: memref<1x16xf32, #tpu.memory_space<vmem>>, %arg4: memref<1x6x16xf32, #tpu.memory_space<vmem>>) attributes {dimension_semantics = [#tpu.dimension_semantics<parallel>], iteration_bounds = array<i64: 2>, scalar_prefetch = 0 : i64, scratch_operands = 0 : i64, tpu.core_type = #tpu.core_type<tc>, window_params = [{transform_indices = @transform_0, window_bounds = array<i64: 1, 16, 16>}, {pipeline_mode = #tpu.pipeline_mode<synchronous>, transform_indices = @transform_1, window_bounds = array<i64: 9, 16, 16>}, {pipeline_mode = #tpu.pipeline_mode<synchronous>, transform_indices = @transform_2, window_bounds = array<i64: 1, 16>}, {transform_indices = @transform_3, window_bounds = array<i64: 1, 6, 16>}]} {
    %c0 = arith.constant 0 : index
    %c0_0 = arith.constant 0 : index
    %c0_1 = arith.constant 0 : index
    %0 = vector.load %arg1[%c0, %c0_0, %c0_1] : memref<1x16x16xf32, #tpu.memory_space<vmem>>, vector<1x6x16xf32>
    %1 = vector.shape_cast %0 : vector<1x6x16xf32> to vector<6x16xf32>
    %2 = arith.truncf %1 : vector<6x16xf32> to vector<6x16xbf16>
    %c0_2 = arith.constant 0 : index
    %c0_3 = arith.constant 0 : index
    %c0_4 = arith.constant 0 : index
    %3 = vector.load %arg2[%c0_2, %c0_3, %c0_4] : memref<9x16x16xbf16, #tpu.memory_space<vmem>>, vector<1x16x16xbf16>
    %4 = vector.shape_cast %3 : vector<1x16x16xbf16> to vector<16x16xbf16>
    %cst = arith.constant dense<0.000000e+00> : vector<6x16xf32>
    %5 = tpu.matmul %2, %4, %cst {dimension_numbers = #tpu.dot_dimension_numbers<[1], [0], [0], [1], [0, 0, 1, 1], [], []>} : vector<6x16xbf16>, vector<16x16xbf16>, vector<6x16xf32> -> vector<6x16xf32>
    %c0_5 = arith.constant 0 : index
    %c1 = arith.constant 1 : index
    %c0_6 = arith.constant 0 : index
    %6 = vector.load %arg1[%c0_5, %c1, %c0_6] : memref<1x16x16xf32, #tpu.memory_space<vmem>>, vector<1x6x16xf32>
    %7 = vector.shape_cast %6 : vector<1x6x16xf32> to vector<6x16xf32>
    %8 = arith.truncf %7 : vector<6x16xf32> to vector<6x16xbf16>
    %c1_7 = arith.constant 1 : index
    %c0_8 = arith.constant 0 : index
    %c0_9 = arith.constant 0 : index
    %9 = vector.load %arg2[%c1_7, %c0_8, %c0_9] : memref<9x16x16xbf16, #tpu.memory_space<vmem>>, vector<1x16x16xbf16>
    %10 = vector.shape_cast %9 : vector<1x16x16xbf16> to vector<16x16xbf16>
    %cst_10 = arith.constant dense<0.000000e+00> : vector<6x16xf32>
    %11 = tpu.matmul %8, %10, %cst_10 {dimension_numbers = #tpu.dot_dimension_numbers<[1], [0], [0], [1], [0, 0, 1, 1], [], []>} : vector<6x16xbf16>, vector<16x16xbf16>, vector<6x16xf32> -> vector<6x16xf32>
    %12 = arith.addf %5, %11 : vector<6x16xf32>
    %c0_11 = arith.constant 0 : index
    %c2 = arith.constant 2 : index
    %c0_12 = arith.constant 0 : index
    %13 = vector.load %arg1[%c0_11, %c2, %c0_12] : memref<1x16x16xf32, #tpu.memory_space<vmem>>, vector<1x6x16xf32>
    %14 = vector.shape_cast %13 : vector<1x6x16xf32> to vector<6x16xf32>
    %15 = arith.truncf %14 : vector<6x16xf32> to vector<6x16xbf16>
    %c2_13 = arith.constant 2 : index
    %c0_14 = arith.constant 0 : index
    %c0_15 = arith.constant 0 : index
    %16 = vector.load %arg2[%c2_13, %c0_14, %c0_15] : memref<9x16x16xbf16, #tpu.memory_space<vmem>>, vector<1x16x16xbf16>
    %17 = vector.shape_cast %16 : vector<1x16x16xbf16> to vector<16x16xbf16>
    %cst_16 = arith.constant dense<0.000000e+00> : vector<6x16xf32>
    %18 = tpu.matmul %15, %17, %cst_16 {dimension_numbers = #tpu.dot_dimension_numbers<[1], [0], [0], [1], [0, 0, 1, 1], [], []>} : vector<6x16xbf16>, vector<16x16xbf16>, vector<6x16xf32> -> vector<6x16xf32>
    %19 = arith.addf %12, %18 : vector<6x16xf32>
    %c0_17 = arith.constant 0 : index
    %c4 = arith.constant 4 : index
    %c0_18 = arith.constant 0 : index
    %20 = vector.load %arg1[%c0_17, %c4, %c0_18] : memref<1x16x16xf32, #tpu.memory_space<vmem>>, vector<1x6x16xf32>
    %21 = vector.shape_cast %20 : vector<1x6x16xf32> to vector<6x16xf32>
    %22 = arith.truncf %21 : vector<6x16xf32> to vector<6x16xbf16>
    %c3 = arith.constant 3 : index
    %c0_19 = arith.constant 0 : index
    %c0_20 = arith.constant 0 : index
    %23 = vector.load %arg2[%c3, %c0_19, %c0_20] : memref<9x16x16xbf16, #tpu.memory_space<vmem>>, vector<1x16x16xbf16>
    %24 = vector.shape_cast %23 : vector<1x16x16xbf16> to vector<16x16xbf16>
    %cst_21 = arith.constant dense<0.000000e+00> : vector<6x16xf32>
    %25 = tpu.matmul %22, %24, %cst_21 {dimension_numbers = #tpu.dot_dimension_numbers<[1], [0], [0], [1], [0, 0, 1, 1], [], []>} : vector<6x16xbf16>, vector<16x16xbf16>, vector<6x16xf32> -> vector<6x16xf32>
    %26 = arith.addf %19, %25 : vector<6x16xf32>
    %c0_22 = arith.constant 0 : index
    %c5 = arith.constant 5 : index
    %c0_23 = arith.constant 0 : index
    %27 = vector.load %arg1[%c0_22, %c5, %c0_23] : memref<1x16x16xf32, #tpu.memory_space<vmem>>, vector<1x6x16xf32>
    %28 = vector.shape_cast %27 : vector<1x6x16xf32> to vector<6x16xf32>
    %29 = arith.truncf %28 : vector<6x16xf32> to vector<6x16xbf16>
    %c4_24 = arith.constant 4 : index
    %c0_25 = arith.constant 0 : index
    %c0_26 = arith.constant 0 : index
    %30 = vector.load %arg2[%c4_24, %c0_25, %c0_26] : memref<9x16x16xbf16, #tpu.memory_space<vmem>>, vector<1x16x16xbf16>
    %31 = vector.shape_cast %30 : vector<1x16x16xbf16> to vector<16x16xbf16>
    %cst_27 = arith.constant dense<0.000000e+00> : vector<6x16xf32>
    %32 = tpu.matmul %29, %31, %cst_27 {dimension_numbers = #tpu.dot_dimension_numbers<[1], [0], [0], [1], [0, 0, 1, 1], [], []>} : vector<6x16xbf16>, vector<16x16xbf16>, vector<6x16xf32> -> vector<6x16xf32>
    %33 = arith.addf %26, %32 : vector<6x16xf32>
    %c0_28 = arith.constant 0 : index
    %c6 = arith.constant 6 : index
    %c0_29 = arith.constant 0 : index
    %34 = vector.load %arg1[%c0_28, %c6, %c0_29] : memref<1x16x16xf32, #tpu.memory_space<vmem>>, vector<1x6x16xf32>
    %35 = vector.shape_cast %34 : vector<1x6x16xf32> to vector<6x16xf32>
    %36 = arith.truncf %35 : vector<6x16xf32> to vector<6x16xbf16>
    %c5_30 = arith.constant 5 : index
    %c0_31 = arith.constant 0 : index
    %c0_32 = arith.constant 0 : index
    %37 = vector.load %arg2[%c5_30, %c0_31, %c0_32] : memref<9x16x16xbf16, #tpu.memory_space<vmem>>, vector<1x16x16xbf16>
    %38 = vector.shape_cast %37 : vector<1x16x16xbf16> to vector<16x16xbf16>
    %cst_33 = arith.constant dense<0.000000e+00> : vector<6x16xf32>
    %39 = tpu.matmul %36, %38, %cst_33 {dimension_numbers = #tpu.dot_dimension_numbers<[1], [0], [0], [1], [0, 0, 1, 1], [], []>} : vector<6x16xbf16>, vector<16x16xbf16>, vector<6x16xf32> -> vector<6x16xf32>
    %40 = arith.addf %33, %39 : vector<6x16xf32>
    %c0_34 = arith.constant 0 : index
    %c8 = arith.constant 8 : index
    %c0_35 = arith.constant 0 : index
    %41 = vector.load %arg1[%c0_34, %c8, %c0_35] : memref<1x16x16xf32, #tpu.memory_space<vmem>>, vector<1x6x16xf32>
    %42 = vector.shape_cast %41 : vector<1x6x16xf32> to vector<6x16xf32>
    %43 = arith.truncf %42 : vector<6x16xf32> to vector<6x16xbf16>
    %c6_36 = arith.constant 6 : index
    %c0_37 = arith.constant 0 : index
    %c0_38 = arith.constant 0 : index
    %44 = vector.load %arg2[%c6_36, %c0_37, %c0_38] : memref<9x16x16xbf16, #tpu.memory_space<vmem>>, vector<1x16x16xbf16>
    %45 = vector.shape_cast %44 : vector<1x16x16xbf16> to vector<16x16xbf16>
    %cst_39 = arith.constant dense<0.000000e+00> : vector<6x16xf32>
    %46 = tpu.matmul %43, %45, %cst_39 {dimension_numbers = #tpu.dot_dimension_numbers<[1], [0], [0], [1], [0, 0, 1, 1], [], []>} : vector<6x16xbf16>, vector<16x16xbf16>, vector<6x16xf32> -> vector<6x16xf32>
    %47 = arith.addf %40, %46 : vector<6x16xf32>
    %c0_40 = arith.constant 0 : index
    %c9 = arith.constant 9 : index
    %c0_41 = arith.constant 0 : index
    %48 = vector.load %arg1[%c0_40, %c9, %c0_41] : memref<1x16x16xf32, #tpu.memory_space<vmem>>, vector<1x6x16xf32>
    %49 = vector.shape_cast %48 : vector<1x6x16xf32> to vector<6x16xf32>
    %50 = arith.truncf %49 : vector<6x16xf32> to vector<6x16xbf16>
    %c7 = arith.constant 7 : index
    %c0_42 = arith.constant 0 : index
    %c0_43 = arith.constant 0 : index
    %51 = vector.load %arg2[%c7, %c0_42, %c0_43] : memref<9x16x16xbf16, #tpu.memory_space<vmem>>, vector<1x16x16xbf16>
    %52 = vector.shape_cast %51 : vector<1x16x16xbf16> to vector<16x16xbf16>
    %cst_44 = arith.constant dense<0.000000e+00> : vector<6x16xf32>
    %53 = tpu.matmul %50, %52, %cst_44 {dimension_numbers = #tpu.dot_dimension_numbers<[1], [0], [0], [1], [0, 0, 1, 1], [], []>} : vector<6x16xbf16>, vector<16x16xbf16>, vector<6x16xf32> -> vector<6x16xf32>
    %54 = arith.addf %47, %53 : vector<6x16xf32>
    %c0_45 = arith.constant 0 : index
    %c10 = arith.constant 10 : index
    %c0_46 = arith.constant 0 : index
    %55 = vector.load %arg1[%c0_45, %c10, %c0_46] : memref<1x16x16xf32, #tpu.memory_space<vmem>>, vector<1x6x16xf32>
    %56 = vector.shape_cast %55 : vector<1x6x16xf32> to vector<6x16xf32>
    %57 = arith.truncf %56 : vector<6x16xf32> to vector<6x16xbf16>
    %c8_47 = arith.constant 8 : index
    %c0_48 = arith.constant 0 : index
    %c0_49 = arith.constant 0 : index
    %58 = vector.load %arg2[%c8_47, %c0_48, %c0_49] : memref<9x16x16xbf16, #tpu.memory_space<vmem>>, vector<1x16x16xbf16>
    %59 = vector.shape_cast %58 : vector<1x16x16xbf16> to vector<16x16xbf16>
    %cst_50 = arith.constant dense<0.000000e+00> : vector<6x16xf32>
    %60 = tpu.matmul %57, %59, %cst_50 {dimension_numbers = #tpu.dot_dimension_numbers<[1], [0], [0], [1], [0, 0, 1, 1], [], []>} : vector<6x16xbf16>, vector<16x16xbf16>, vector<6x16xf32> -> vector<6x16xf32>
    %61 = arith.addf %54, %60 : vector<6x16xf32>
    %c0_51 = arith.constant 0 : index
    %c0_52 = arith.constant 0 : index
    %62 = vector.load %arg3[%c0_51, %c0_52] : memref<1x16xf32, #tpu.memory_space<vmem>>, vector<1x16xf32>
    %63 = vector.broadcast %62 : vector<1x16xf32> to vector<6x16xf32>
    %64 = arith.addf %61, %63 : vector<6x16xf32>
    %c0_53 = arith.constant 0 : index
    %c0_54 = arith.constant 0 : index
    %c0_55 = arith.constant 0 : index
    %65 = vector.load %arg4[%c0_53, %c0_54, %c0_55] : memref<1x6x16xf32, #tpu.memory_space<vmem>>, vector<1x6x16xf32>
    %66 = vector.shape_cast %65 : vector<1x6x16xf32> to vector<6x16xf32>
    %67 = vector.shape_cast %64 : vector<6x16xf32> to vector<1x6x16xf32>
    tpu.vector_store %arg4[%c0_53, %c0_54, %c0_55], %67 {strides = array<i32>} : memref<1x6x16xf32, #tpu.memory_space<vmem>>, vector<1x6x16xf32>,
    return
  }
  func.func @transform_0(%arg0: i32) -> (i32, i32, i32) {
    %c0_i32 = arith.constant 0 : i32
    %c0_i32_0 = arith.constant 0 : i32
    %c0_i32_1 = arith.constant 0 : i32
    return %arg0, %c0_i32, %c0_i32_0 : i32, i32, i32
  }
  func.func @transform_1(%arg0: i32) -> (i32, i32, i32) {
    %c0_i32 = arith.constant 0 : i32
    %c0_i32_0 = arith.constant 0 : i32
    %c0_i32_1 = arith.constant 0 : i32
    %c0_i32_2 = arith.constant 0 : i32
    return %c0_i32, %c0_i32_0, %c0_i32_1 : i32, i32, i32
  }
  func.func @transform_2(%arg0: i32) -> (i32, i32) {
    %c0_i32 = arith.constant 0 : i32
    %c0_i32_0 = arith.constant 0 : i32
    %c0_i32_1 = arith.constant 0 : i32
    return %c0_i32, %c0_i32_0 : i32, i32
  }
  func.func @transform_3(%arg0: i32) -> (i32, i32, i32) {
    %c0_i32 = arith.constant 0 : i32
    %c0_i32_0 = arith.constant 0 : i32
    %c0_i32_1 = arith.constant 0 : i32
    return %arg0, %c0_i32, %c0_i32_0 : i32, i32, i32
  }
}

module attributes {stable_mosaic.version = 11 : i64} {
  func.func @_conv_taps_kernel(%arg0: i32, %arg1: memref<1x9x16xf32, #tpu.memory_space<vmem>>, %arg2: memref<9x16x16xbf16, #tpu.memory_space<vmem>>, %arg3: memref<1x64xf32, #tpu.memory_space<vmem>>, %arg4: memref<1x5x64xf32, #tpu.memory_space<vmem>>) attributes {dimension_semantics = [#tpu.dimension_semantics<parallel>], iteration_bounds = array<i64: 2>, scalar_prefetch = 0 : i64, scratch_operands = 0 : i64, tpu.core_type = #tpu.core_type<tc>, window_params = [{transform_indices = @transform_0, window_bounds = array<i64: 1, 9, 16>}, {pipeline_mode = #tpu.pipeline_mode<synchronous>, transform_indices = @transform_1, window_bounds = array<i64: 9, 16, 16>}, {pipeline_mode = #tpu.pipeline_mode<synchronous>, transform_indices = @transform_2, window_bounds = array<i64: 1, 64>}, {transform_indices = @transform_3, window_bounds = array<i64: 1, 5, 64>}]} {
    %c0 = arith.constant 0 : index
    %c0_0 = arith.constant 0 : index
    %c0_1 = arith.constant 0 : index
    %0 = vector.load %arg1[%c0, %c0_0, %c0_1] : memref<1x9x16xf32, #tpu.memory_space<vmem>>, vector<1x5x16xf32>
    %1 = vector.shape_cast %0 : vector<1x5x16xf32> to vector<5x16xf32>
    %2 = arith.truncf %1 : vector<5x16xf32> to vector<5x16xbf16>
    %c0_2 = arith.constant 0 : index
    %c0_3 = arith.constant 0 : index
    %c0_4 = arith.constant 0 : index
    %3 = vector.load %arg2[%c0_2, %c0_3, %c0_4] : memref<9x16x16xbf16, #tpu.memory_space<vmem>>, vector<1x16x16xbf16>
    %4 = vector.shape_cast %3 : vector<1x16x16xbf16> to vector<16x16xbf16>
    %cst = arith.constant dense<0.000000e+00> : vector<5x16xf32>
    %5 = tpu.matmul %2, %4, %cst {dimension_numbers = #tpu.dot_dimension_numbers<[1], [0], [0], [1], [0, 0, 1, 1], [], []>} : vector<5x16xbf16>, vector<16x16xbf16>, vector<5x16xf32> -> vector<5x16xf32>
    %c0_5 = arith.constant 0 : index
    %c0_6 = arith.constant 0 : index
    %c0_7 = arith.constant 0 : index
    %6 = vector.load %arg1[%c0_5, %c0_6, %c0_7] : memref<1x9x16xf32, #tpu.memory_space<vmem>>, vector<1x5x16xf32>
    %7 = vector.shape_cast %6 : vector<1x5x16xf32> to vector<5x16xf32>
    %8 = arith.truncf %7 : vector<5x16xf32> to vector<5x16xbf16>
    %c1 = arith.constant 1 : index
    %c0_8 = arith.constant 0 : index
    %c0_9 = arith.constant 0 : index
    %9 = vector.load %arg2[%c1, %c0_8, %c0_9] : memref<9x16x16xbf16, #tpu.memory_space<vmem>>, vector<1x16x16xbf16>
    %10 = vector.shape_cast %9 : vector<1x16x16xbf16> to vector<16x16xbf16>
    %cst_10 = arith.constant dense<0.000000e+00> : vector<5x16xf32>
    %11 = tpu.matmul %8, %10, %cst_10 {dimension_numbers = #tpu.dot_dimension_numbers<[1], [0], [0], [1], [0, 0, 1, 1], [], []>} : vector<5x16xbf16>, vector<16x16xbf16>, vector<5x16xf32> -> vector<5x16xf32>
    %c0_11 = arith.constant 0 : index
    %c1_12 = arith.constant 1 : index
    %c0_13 = arith.constant 0 : index
    %12 = vector.load %arg1[%c0_11, %c1_12, %c0_13] : memref<1x9x16xf32, #tpu.memory_space<vmem>>, vector<1x5x16xf32>
    %13 = vector.shape_cast %12 : vector<1x5x16xf32> to vector<5x16xf32>
    %14 = arith.truncf %13 : vector<5x16xf32> to vector<5x16xbf16>
    %c2 = arith.constant 2 : index
    %c0_14 = arith.constant 0 : index
    %c0_15 = arith.constant 0 : index
    %15 = vector.load %arg2[%c2, %c0_14, %c0_15] : memref<9x16x16xbf16, #tpu.memory_space<vmem>>, vector<1x16x16xbf16>
    %16 = vector.shape_cast %15 : vector<1x16x16xbf16> to vector<16x16xbf16>
    %cst_16 = arith.constant dense<0.000000e+00> : vector<5x16xf32>
    %17 = tpu.matmul %14, %16, %cst_16 {dimension_numbers = #tpu.dot_dimension_numbers<[1], [0], [0], [1], [0, 0, 1, 1], [], []>} : vector<5x16xbf16>, vector<16x16xbf16>, vector<5x16xf32> -> vector<5x16xf32>
    %18 = arith.addf %11, %17 : vector<5x16xf32>
    %c0_17 = arith.constant 0 : index
    %c0_18 = arith.constant 0 : index
    %c0_19 = arith.constant 0 : index
    %19 = vector.load %arg1[%c0_17, %c0_18, %c0_19] : memref<1x9x16xf32, #tpu.memory_space<vmem>>, vector<1x5x16xf32>
    %20 = vector.shape_cast %19 : vector<1x5x16xf32> to vector<5x16xf32>
    %21 = arith.truncf %20 : vector<5x16xf32> to vector<5x16xbf16>
    %c3 = arith.constant 3 : index
    %c0_20 = arith.constant 0 : index
    %c0_21 = arith.constant 0 : index
    %22 = vector.load %arg2[%c3, %c0_20, %c0_21] : memref<9x16x16xbf16, #tpu.memory_space<vmem>>, vector<1x16x16xbf16>
    %23 = vector.shape_cast %22 : vector<1x16x16xbf16> to vector<16x16xbf16>
    %cst_22 = arith.constant dense<0.000000e+00> : vector<5x16xf32>
    %24 = tpu.matmul %21, %23, %cst_22 {dimension_numbers = #tpu.dot_dimension_numbers<[1], [0], [0], [1], [0, 0, 1, 1], [], []>} : vector<5x16xbf16>, vector<16x16xbf16>, vector<5x16xf32> -> vector<5x16xf32>
    %c0_23 = arith.constant 0 : index
    %c3_24 = arith.constant 3 : index
    %c0_25 = arith.constant 0 : index
    %25 = vector.load %arg1[%c0_23, %c3_24, %c0_25] : memref<1x9x16xf32, #tpu.memory_space<vmem>>, vector<1x5x16xf32>
    %26 = vector.shape_cast %25 : vector<1x5x16xf32> to vector<5x16xf32>
    %27 = arith.truncf %26 : vector<5x16xf32> to vector<5x16xbf16>
    %c4 = arith.constant 4 : index
    %c0_26 = arith.constant 0 : index
    %c0_27 = arith.constant 0 : index
    %28 = vector.load %arg2[%c4, %c0_26, %c0_27] : memref<9x16x16xbf16, #tpu.memory_space<vmem>>, vector<1x16x16xbf16>
    %29 = vector.shape_cast %28 : vector<1x16x16xbf16> to vector<16x16xbf16>
    %cst_28 = arith.constant dense<0.000000e+00> : vector<5x16xf32>
    %30 = tpu.matmul %27, %29, %cst_28 {dimension_numbers = #tpu.dot_dimension_numbers<[1], [0], [0], [1], [0, 0, 1, 1], [], []>} : vector<5x16xbf16>, vector<16x16xbf16>, vector<5x16xf32> -> vector<5x16xf32>
    %31 = arith.addf %24, %30 : vector<5x16xf32>
    %c0_29 = arith.constant 0 : index
    %c0_30 = arith.constant 0 : index
    %c0_31 = arith.constant 0 : index
    %32 = vector.load %arg1[%c0_29, %c0_30, %c0_31] : memref<1x9x16xf32, #tpu.memory_space<vmem>>, vector<1x5x16xf32>
    %33 = vector.shape_cast %32 : vector<1x5x16xf32> to vector<5x16xf32>
    %34 = arith.truncf %33 : vector<5x16xf32> to vector<5x16xbf16>
    %c5 = arith.constant 5 : index
    %c0_32 = arith.constant 0 : index
    %c0_33 = arith.constant 0 : index
    %35 = vector.load %arg2[%c5, %c0_32, %c0_33] : memref<9x16x16xbf16, #tpu.memory_space<vmem>>, vector<1x16x16xbf16>
    %36 = vector.shape_cast %35 : vector<1x16x16xbf16> to vector<16x16xbf16>
    %cst_34 = arith.constant dense<0.000000e+00> : vector<5x16xf32>
    %37 = tpu.matmul %34, %36, %cst_34 {dimension_numbers = #tpu.dot_dimension_numbers<[1], [0], [0], [1], [0, 0, 1, 1], [], []>} : vector<5x16xbf16>, vector<16x16xbf16>, vector<5x16xf32> -> vector<5x16xf32>
    %c0_35 = arith.constant 0 : index
    %c1_36 = arith.constant 1 : index
    %c0_37 = arith.constant 0 : index
    %38 = vector.load %arg1[%c0_35, %c1_36, %c0_37] : memref<1x9x16xf32, #tpu.memory_space<vmem>>, vector<1x5x16xf32>
    %39 = vector.shape_cast %38 : vector<1x5x16xf32> to vector<5x16xf32>
    %40 = arith.truncf %39 : vector<5x16xf32> to vector<5x16xbf16>
    %c6 = arith.constant 6 : index
    %c0_38 = arith.constant 0 : index
    %c0_39 = arith.constant 0 : index
    %41 = vector.load %arg2[%c6, %c0_38, %c0_39] : memref<9x16x16xbf16, #tpu.memory_space<vmem>>, vector<1x16x16xbf16>
    %42 = vector.shape_cast %41 : vector<1x16x16xbf16> to vector<16x16xbf16>
    %cst_40 = arith.constant dense<0.000000e+00> : vector<5x16xf32>
    %43 = tpu.matmul %40, %42, %cst_40 {dimension_numbers = #tpu.dot_dimension_numbers<[1], [0], [0], [1], [0, 0, 1, 1], [], []>} : vector<5x16xbf16>, vector<16x16xbf16>, vector<5x16xf32> -> vector<5x16xf32>
    %44 = arith.addf %37, %43 : vector<5x16xf32>
    %c0_41 = arith.constant 0 : index
    %c3_42 = arith.constant 3 : index
    %c0_43 = arith.constant 0 : index
    %45 = vector.load %arg1[%c0_41, %c3_42, %c0_43] : memref<1x9x16xf32, #tpu.memory_space<vmem>>, vector<1x5x16xf32>
    %46 = vector.shape_cast %45 : vector<1x5x16xf32> to vector<5x16xf32>
    %47 = arith.truncf %46 : vector<5x16xf32> to vector<5x16xbf16>
    %c7 = arith.constant 7 : index
    %c0_44 = arith.constant 0 : index
    %c0_45 = arith.constant 0 : index
    %48 = vector.load %arg2[%c7, %c0_44, %c0_45] : memref<9x16x16xbf16, #tpu.memory_space<vmem>>, vector<1x16x16xbf16>
    %49 = vector.shape_cast %48 : vector<1x16x16xbf16> to vector<16x16xbf16>
    %cst_46 = arith.constant dense<0.000000e+00> : vector<5x16xf32>
    %50 = tpu.matmul %47, %49, %cst_46 {dimension_numbers = #tpu.dot_dimension_numbers<[1], [0], [0], [1], [0, 0, 1, 1], [], []>} : vector<5x16xbf16>, vector<16x16xbf16>, vector<5x16xf32> -> vector<5x16xf32>
    %51 = arith.addf %44, %50 : vector<5x16xf32>
    %c0_47 = arith.constant 0 : index
    %c4_48 = arith.constant 4 : index
    %c0_49 = arith.constant 0 : index
    %52 = vector.load %arg1[%c0_47, %c4_48, %c0_49] : memref<1x9x16xf32, #tpu.memory_space<vmem>>, vector<1x5x16xf32>
    %53 = vector.shape_cast %52 : vector<1x5x16xf32> to vector<5x16xf32>
    %54 = arith.truncf %53 : vector<5x16xf32> to vector<5x16xbf16>
    %c8 = arith.constant 8 : index
    %c0_50 = arith.constant 0 : index
    %c0_51 = arith.constant 0 : index
    %55 = vector.load %arg2[%c8, %c0_50, %c0_51] : memref<9x16x16xbf16, #tpu.memory_space<vmem>>, vector<1x16x16xbf16>
    %56 = vector.shape_cast %55 : vector<1x16x16xbf16> to vector<16x16xbf16>
    %cst_52 = arith.constant dense<0.000000e+00> : vector<5x16xf32>
    %57 = tpu.matmul %54, %56, %cst_52 {dimension_numbers = #tpu.dot_dimension_numbers<[1], [0], [0], [1], [0, 0, 1, 1], [], []>} : vector<5x16xbf16>, vector<16x16xbf16>, vector<5x16xf32> -> vector<5x16xf32>
    %58 = arith.addf %51, %57 : vector<5x16xf32>
    %59 = tpu.concatenate %5, %18, %31, %58 in 1 : vector<5x16xf32>, vector<5x16xf32>, vector<5x16xf32>, vector<5x16xf32> -> vector<5x64xf32>
    %c0_53 = arith.constant 0 : index
    %c0_54 = arith.constant 0 : index
    %60 = vector.load %arg3[%c0_53, %c0_54] : memref<1x64xf32, #tpu.memory_space<vmem>>, vector<1x64xf32>
    %61 = vector.broadcast %60 : vector<1x64xf32> to vector<5x64xf32>
    %62 = arith.addf %59, %61 : vector<5x64xf32>
    %cst_55 = arith.constant 0.000000e+00 : f32
    %63 = vector.broadcast %cst_55 : f32 to vector<5x64xf32>
    %64 = arith.cmpf oge, %62, %63 : vector<5x64xf32>
    %cst_56 = arith.constant 0.00999999977 : f32
    %65 = vector.broadcast %cst_56 : f32 to vector<5x64xf32>
    %66 = arith.mulf %65, %62 : vector<5x64xf32>
    %67 = arith.select %64, %62, %66 : vector<5x64xi1>, vector<5x64xf32>
    %c0_57 = arith.constant 0 : index
    %c0_58 = arith.constant 0 : index
    %c0_59 = arith.constant 0 : index
    %68 = vector.load %arg4[%c0_57, %c0_58, %c0_59] : memref<1x5x64xf32, #tpu.memory_space<vmem>>, vector<1x5x64xf32>
    %69 = vector.shape_cast %68 : vector<1x5x64xf32> to vector<5x64xf32>
    %70 = vector.shape_cast %67 : vector<5x64xf32> to vector<1x5x64xf32>
    tpu.vector_store %arg4[%c0_57, %c0_58, %c0_59], %70 {strides = array<i32>} : memref<1x5x64xf32, #tpu.memory_space<vmem>>, vector<1x5x64xf32>,
    return
  }
  func.func @transform_0(%arg0: i32) -> (i32, i32, i32) {
    %c0_i32 = arith.constant 0 : i32
    %c0_i32_0 = arith.constant 0 : i32
    %c0_i32_1 = arith.constant 0 : i32
    return %arg0, %c0_i32, %c0_i32_0 : i32, i32, i32
  }
  func.func @transform_1(%arg0: i32) -> (i32, i32, i32) {
    %c0_i32 = arith.constant 0 : i32
    %c0_i32_0 = arith.constant 0 : i32
    %c0_i32_1 = arith.constant 0 : i32
    %c0_i32_2 = arith.constant 0 : i32
    return %c0_i32, %c0_i32_0, %c0_i32_1 : i32, i32, i32
  }
  func.func @transform_2(%arg0: i32) -> (i32, i32) {
    %c0_i32 = arith.constant 0 : i32
    %c0_i32_0 = arith.constant 0 : i32
    %c0_i32_1 = arith.constant 0 : i32
    return %c0_i32, %c0_i32_0 : i32, i32
  }
  func.func @transform_3(%arg0: i32) -> (i32, i32, i32) {
    %c0_i32 = arith.constant 0 : i32
    %c0_i32_0 = arith.constant 0 : i32
    %c0_i32_1 = arith.constant 0 : i32
    return %arg0, %c0_i32, %c0_i32_0 : i32, i32, i32
  }
}

module attributes {stable_mosaic.version = 11 : i64} {
  func.func @_conv_taps_kernel(%arg0: i32, %arg1: memref<1x25x16xf32, #tpu.memory_space<vmem>>, %arg2: memref<9x16x8xbf16, #tpu.memory_space<vmem>>, %arg3: memref<1x32xf32, #tpu.memory_space<vmem>>, %arg4: memref<1x19x32xf32, #tpu.memory_space<vmem>>) attributes {dimension_semantics = [#tpu.dimension_semantics<parallel>], iteration_bounds = array<i64: 2>, scalar_prefetch = 0 : i64, scratch_operands = 0 : i64, tpu.core_type = #tpu.core_type<tc>, window_params = [{transform_indices = @transform_0, window_bounds = array<i64: 1, 25, 16>}, {pipeline_mode = #tpu.pipeline_mode<synchronous>, transform_indices = @transform_1, window_bounds = array<i64: 9, 16, 8>}, {pipeline_mode = #tpu.pipeline_mode<synchronous>, transform_indices = @transform_2, window_bounds = array<i64: 1, 32>}, {transform_indices = @transform_3, window_bounds = array<i64: 1, 19, 32>}]} {
    %c0 = arith.constant 0 : index
    %c0_0 = arith.constant 0 : index
    %c0_1 = arith.constant 0 : index
    %0 = vector.load %arg1[%c0, %c0_0, %c0_1] : memref<1x25x16xf32, #tpu.memory_space<vmem>>, vector<1x19x16xf32>
    %1 = vector.shape_cast %0 : vector<1x19x16xf32> to vector<19x16xf32>
    %2 = arith.truncf %1 : vector<19x16xf32> to vector<19x16xbf16>
    %c0_2 = arith.constant 0 : index
    %c0_3 = arith.constant 0 : index
    %c0_4 = arith.constant 0 : index
    %3 = vector.load %arg2[%c0_2, %c0_3, %c0_4] : memref<9x16x8xbf16, #tpu.memory_space<vmem>>, vector<1x16x8xbf16>
    %4 = vector.shape_cast %3 : vector<1x16x8xbf16> to vector<16x8xbf16>
    %cst = arith.constant dense<0.000000e+00> : vector<19x8xf32>
    %5 = tpu.matmul %2, %4, %cst {dimension_numbers = #tpu.dot_dimension_numbers<[1], [0], [0], [1], [0, 0, 1, 1], [], []>} : vector<19x16xbf16>, vector<16x8xbf16>, vector<19x8xf32> -> vector<19x8xf32>
    %c0_5 = arith.constant 0 : index
    %c0_6 = arith.constant 0 : index
    %c0_7 = arith.constant 0 : index
    %6 = vector.load %arg1[%c0_5, %c0_6, %c0_7] : memref<1x25x16xf32, #tpu.memory_space<vmem>>, vector<1x19x16xf32>
    %7 = vector.shape_cast %6 : vector<1x19x16xf32> to vector<19x16xf32>
    %8 = arith.truncf %7 : vector<19x16xf32> to vector<19x16xbf16>
    %c1 = arith.constant 1 : index
    %c0_8 = arith.constant 0 : index
    %c0_9 = arith.constant 0 : index
    %9 = vector.load %arg2[%c1, %c0_8, %c0_9] : memref<9x16x8xbf16, #tpu.memory_space<vmem>>, vector<1x16x8xbf16>
    %10 = vector.shape_cast %9 : vector<1x16x8xbf16> to vector<16x8xbf16>
    %cst_10 = arith.constant dense<0.000000e+00> : vector<19x8xf32>
    %11 = tpu.matmul %8, %10, %cst_10 {dimension_numbers = #tpu.dot_dimension_numbers<[1], [0], [0], [1], [0, 0, 1, 1], [], []>} : vector<19x16xbf16>, vector<16x8xbf16>, vector<19x8xf32> -> vector<19x8xf32>
    %c0_11 = arith.constant 0 : index
    %c1_12 = arith.constant 1 : index
    %c0_13 = arith.constant 0 : index
    %12 = vector.load %arg1[%c0_11, %c1_12, %c0_13] : memref<1x25x16xf32, #tpu.memory_space<vmem>>, vector<1x19x16xf32>
    %13 = vector.shape_cast %12 : vector<1x19x16xf32> to vector<19x16xf32>
    %14 = arith.truncf %13 : vector<19x16xf32> to vector<19x16xbf16>
    %c2 = arith.constant 2 : index
    %c0_14 = arith.constant 0 : index
    %c0_15 = arith.constant 0 : index
    %15 = vector.load %arg2[%c2, %c0_14, %c0_15] : memref<9x16x8xbf16, #tpu.memory_space<vmem>>, vector<1x16x8xbf16>
    %16 = vector.shape_cast %15 : vector<1x16x8xbf16> to vector<16x8xbf16>
    %cst_16 = arith.constant dense<0.000000e+00> : vector<19x8xf32>
    %17 = tpu.matmul %14, %16, %cst_16 {dimension_numbers = #tpu.dot_dimension_numbers<[1], [0], [0], [1], [0, 0, 1, 1], [], []>} : vector<19x16xbf16>, vector<16x8xbf16>, vector<19x8xf32> -> vector<19x8xf32>
    %18 = arith.addf %11, %17 : vector<19x8xf32>
    %c0_17 = arith.constant 0 : index
    %c0_18 = arith.constant 0 : index
    %c0_19 = arith.constant 0 : index
    %19 = vector.load %arg1[%c0_17, %c0_18, %c0_19] : memref<1x25x16xf32, #tpu.memory_space<vmem>>, vector<1x19x16xf32>
    %20 = vector.shape_cast %19 : vector<1x19x16xf32> to vector<19x16xf32>
    %21 = arith.truncf %20 : vector<19x16xf32> to vector<19x16xbf16>
    %c3 = arith.constant 3 : index
    %c0_20 = arith.constant 0 : index
    %c0_21 = arith.constant 0 : index
    %22 = vector.load %arg2[%c3, %c0_20, %c0_21] : memref<9x16x8xbf16, #tpu.memory_space<vmem>>, vector<1x16x8xbf16>
    %23 = vector.shape_cast %22 : vector<1x16x8xbf16> to vector<16x8xbf16>
    %cst_22 = arith.constant dense<0.000000e+00> : vector<19x8xf32>
    %24 = tpu.matmul %21, %23, %cst_22 {dimension_numbers = #tpu.dot_dimension_numbers<[1], [0], [0], [1], [0, 0, 1, 1], [], []>} : vector<19x16xbf16>, vector<16x8xbf16>, vector<19x8xf32> -> vector<19x8xf32>
    %c0_23 = arith.constant 0 : index
    %c5 = arith.constant 5 : index
    %c0_24 = arith.constant 0 : index
    %25 = vector.load %arg1[%c0_23, %c5, %c0_24] : memref<1x25x16xf32, #tpu.memory_space<vmem>>, vector<1x19x16xf32>
    %26 = vector.shape_cast %25 : vector<1x19x16xf32> to vector<19x16xf32>
    %27 = arith.truncf %26 : vector<19x16xf32> to vector<19x16xbf16>
    %c4 = arith.constant 4 : index
    %c0_25 = arith.constant 0 : index
    %c0_26 = arith.constant 0 : index
    %28 = vector.load %arg2[%c4, %c0_25, %c0_26] : memref<9x16x8xbf16, #tpu.memory_space<vmem>>, vector<1x16x8xbf16>
    %29 = vector.shape_cast %28 : vector<1x16x8xbf16> to vector<16x8xbf16>
    %cst_27 = arith.constant dense<0.000000e+00> : vector<19x8xf32>
    %30 = tpu.matmul %27, %29, %cst_27 {dimension_numbers = #tpu.dot_dimension_numbers<[1], [0], [0], [1], [0, 0, 1, 1], [], []>} : vector<19x16xbf16>, vector<16x8xbf16>, vector<19x8xf32> -> vector<19x8xf32>
    %31 = arith.addf %24, %30 : vector<19x8xf32>
    %c0_28 = arith.constant 0 : index
    %c0_29 = arith.constant 0 : index
    %c0_30 = arith.constant 0 : index
    %32 = vector.load %arg1[%c0_28, %c0_29, %c0_30] : memref<1x25x16xf32, #tpu.memory_space<vmem>>, vector<1x19x16xf32>
    %33 = vector.shape_cast %32 : vector<1x19x16xf32> to vector<19x16xf32>
    %34 = arith.truncf %33 : vector<19x16xf32> to vector<19x16xbf16>
    %c5_31 = arith.constant 5 : index
    %c0_32 = arith.constant 0 : index
    %c0_33 = arith.constant 0 : index
    %35 = vector.load %arg2[%c5_31, %c0_32, %c0_33] : memref<9x16x8xbf16, #tpu.memory_space<vmem>>, vector<1x16x8xbf16>
    %36 = vector.shape_cast %35 : vector<1x16x8xbf16> to vector<16x8xbf16>
    %cst_34 = arith.constant dense<0.000000e+00> : vector<19x8xf32>
    %37 = tpu.matmul %34, %36, %cst_34 {dimension_numbers = #tpu.dot_dimension_numbers<[1], [0], [0], [1], [0, 0, 1, 1], [], []>} : vector<19x16xbf16>, vector<16x8xbf16>, vector<19x8xf32> -> vector<19x8xf32>
    %c0_35 = arith.constant 0 : index
    %c1_36 = arith.constant 1 : index
    %c0_37 = arith.constant 0 : index
    %38 = vector.load %arg1[%c0_35, %c1_36, %c0_37] : memref<1x25x16xf32, #tpu.memory_space<vmem>>, vector<1x19x16xf32>
    %39 = vector.shape_cast %38 : vector<1x19x16xf32> to vector<19x16xf32>
    %40 = arith.truncf %39 : vector<19x16xf32> to vector<19x16xbf16>
    %c6 = arith.constant 6 : index
    %c0_38 = arith.constant 0 : index
    %c0_39 = arith.constant 0 : index
    %41 = vector.load %arg2[%c6, %c0_38, %c0_39] : memref<9x16x8xbf16, #tpu.memory_space<vmem>>, vector<1x16x8xbf16>
    %42 = vector.shape_cast %41 : vector<1x16x8xbf16> to vector<16x8xbf16>
    %cst_40 = arith.constant dense<0.000000e+00> : vector<19x8xf32>
    %43 = tpu.matmul %40, %42, %cst_40 {dimension_numbers = #tpu.dot_dimension_numbers<[1], [0], [0], [1], [0, 0, 1, 1], [], []>} : vector<19x16xbf16>, vector<16x8xbf16>, vector<19x8xf32> -> vector<19x8xf32>
    %44 = arith.addf %37, %43 : vector<19x8xf32>
    %c0_41 = arith.constant 0 : index
    %c5_42 = arith.constant 5 : index
    %c0_43 = arith.constant 0 : index
    %45 = vector.load %arg1[%c0_41, %c5_42, %c0_43] : memref<1x25x16xf32, #tpu.memory_space<vmem>>, vector<1x19x16xf32>
    %46 = vector.shape_cast %45 : vector<1x19x16xf32> to vector<19x16xf32>
    %47 = arith.truncf %46 : vector<19x16xf32> to vector<19x16xbf16>
    %c7 = arith.constant 7 : index
    %c0_44 = arith.constant 0 : index
    %c0_45 = arith.constant 0 : index
    %48 = vector.load %arg2[%c7, %c0_44, %c0_45] : memref<9x16x8xbf16, #tpu.memory_space<vmem>>, vector<1x16x8xbf16>
    %49 = vector.shape_cast %48 : vector<1x16x8xbf16> to vector<16x8xbf16>
    %cst_46 = arith.constant dense<0.000000e+00> : vector<19x8xf32>
    %50 = tpu.matmul %47, %49, %cst_46 {dimension_numbers = #tpu.dot_dimension_numbers<[1], [0], [0], [1], [0, 0, 1, 1], [], []>} : vector<19x16xbf16>, vector<16x8xbf16>, vector<19x8xf32> -> vector<19x8xf32>
    %51 = arith.addf %44, %50 : vector<19x8xf32>
    %c0_47 = arith.constant 0 : index
    %c6_48 = arith.constant 6 : index
    %c0_49 = arith.constant 0 : index
    %52 = vector.load %arg1[%c0_47, %c6_48, %c0_49] : memref<1x25x16xf32, #tpu.memory_space<vmem>>, vector<1x19x16xf32>
    %53 = vector.shape_cast %52 : vector<1x19x16xf32> to vector<19x16xf32>
    %54 = arith.truncf %53 : vector<19x16xf32> to vector<19x16xbf16>
    %c8 = arith.constant 8 : index
    %c0_50 = arith.constant 0 : index
    %c0_51 = arith.constant 0 : index
    %55 = vector.load %arg2[%c8, %c0_50, %c0_51] : memref<9x16x8xbf16, #tpu.memory_space<vmem>>, vector<1x16x8xbf16>
    %56 = vector.shape_cast %55 : vector<1x16x8xbf16> to vector<16x8xbf16>
    %cst_52 = arith.constant dense<0.000000e+00> : vector<19x8xf32>
    %57 = tpu.matmul %54, %56, %cst_52 {dimension_numbers = #tpu.dot_dimension_numbers<[1], [0], [0], [1], [0, 0, 1, 1], [], []>} : vector<19x16xbf16>, vector<16x8xbf16>, vector<19x8xf32> -> vector<19x8xf32>
    %58 = arith.addf %51, %57 : vector<19x8xf32>
    %59 = tpu.concatenate %5, %18, %31, %58 in 1 : vector<19x8xf32>, vector<19x8xf32>, vector<19x8xf32>, vector<19x8xf32> -> vector<19x32xf32>
    %c0_53 = arith.constant 0 : index
    %c0_54 = arith.constant 0 : index
    %60 = vector.load %arg3[%c0_53, %c0_54] : memref<1x32xf32, #tpu.memory_space<vmem>>, vector<1x32xf32>
    %61 = vector.broadcast %60 : vector<1x32xf32> to vector<19x32xf32>
    %62 = arith.addf %59, %61 : vector<19x32xf32>
    %cst_55 = arith.constant 0.000000e+00 : f32
    %63 = vector.broadcast %cst_55 : f32 to vector<19x32xf32>
    %64 = arith.cmpf oge, %62, %63 : vector<19x32xf32>
    %cst_56 = arith.constant 0.00999999977 : f32
    %65 = vector.broadcast %cst_56 : f32 to vector<19x32xf32>
    %66 = arith.mulf %65, %62 : vector<19x32xf32>
    %67 = arith.select %64, %62, %66 : vector<19x32xi1>, vector<19x32xf32>
    %c0_57 = arith.constant 0 : index
    %c0_58 = arith.constant 0 : index
    %c0_59 = arith.constant 0 : index
    %68 = vector.load %arg4[%c0_57, %c0_58, %c0_59] : memref<1x19x32xf32, #tpu.memory_space<vmem>>, vector<1x19x32xf32>
    %69 = vector.shape_cast %68 : vector<1x19x32xf32> to vector<19x32xf32>
    %70 = vector.shape_cast %67 : vector<19x32xf32> to vector<1x19x32xf32>
    tpu.vector_store %arg4[%c0_57, %c0_58, %c0_59], %70 {strides = array<i32>} : memref<1x19x32xf32, #tpu.memory_space<vmem>>, vector<1x19x32xf32>,
    return
  }
  func.func @transform_0(%arg0: i32) -> (i32, i32, i32) {
    %c0_i32 = arith.constant 0 : i32
    %c0_i32_0 = arith.constant 0 : i32
    %c0_i32_1 = arith.constant 0 : i32
    return %arg0, %c0_i32, %c0_i32_0 : i32, i32, i32
  }
  func.func @transform_1(%arg0: i32) -> (i32, i32, i32) {
    %c0_i32 = arith.constant 0 : i32
    %c0_i32_0 = arith.constant 0 : i32
    %c0_i32_1 = arith.constant 0 : i32
    %c0_i32_2 = arith.constant 0 : i32
    return %c0_i32, %c0_i32_0, %c0_i32_1 : i32, i32, i32
  }
  func.func @transform_2(%arg0: i32) -> (i32, i32) {
    %c0_i32 = arith.constant 0 : i32
    %c0_i32_0 = arith.constant 0 : i32
    %c0_i32_1 = arith.constant 0 : i32
    return %c0_i32, %c0_i32_0 : i32, i32
  }
  func.func @transform_3(%arg0: i32) -> (i32, i32, i32) {
    %c0_i32 = arith.constant 0 : i32
    %c0_i32_0 = arith.constant 0 : i32
    %c0_i32_1 = arith.constant 0 : i32
    return %arg0, %c0_i32, %c0_i32_0 : i32, i32, i32
  }
}

module attributes {stable_mosaic.version = 11 : i64} {
  func.func @_conv_taps_kernel(%arg0: i32, %arg1: memref<1x81x8xf32, #tpu.memory_space<vmem>>, %arg2: memref<9x8x8xbf16, #tpu.memory_space<vmem>>, %arg3: memref<1x32xf32, #tpu.memory_space<vmem>>, %arg4: memref<1x71x32xf32, #tpu.memory_space<vmem>>) attributes {dimension_semantics = [#tpu.dimension_semantics<parallel>], iteration_bounds = array<i64: 2>, scalar_prefetch = 0 : i64, scratch_operands = 0 : i64, tpu.core_type = #tpu.core_type<tc>, window_params = [{transform_indices = @transform_0, window_bounds = array<i64: 1, 81, 8>}, {pipeline_mode = #tpu.pipeline_mode<synchronous>, transform_indices = @transform_1, window_bounds = array<i64: 9, 8, 8>}, {pipeline_mode = #tpu.pipeline_mode<synchronous>, transform_indices = @transform_2, window_bounds = array<i64: 1, 32>}, {transform_indices = @transform_3, window_bounds = array<i64: 1, 71, 32>}]} {
    %c0 = arith.constant 0 : index
    %c0_0 = arith.constant 0 : index
    %c0_1 = arith.constant 0 : index
    %0 = vector.load %arg1[%c0, %c0_0, %c0_1] : memref<1x81x8xf32, #tpu.memory_space<vmem>>, vector<1x71x8xf32>
    %1 = vector.shape_cast %0 : vector<1x71x8xf32> to vector<71x8xf32>
    %2 = arith.truncf %1 : vector<71x8xf32> to vector<71x8xbf16>
    %c0_2 = arith.constant 0 : index
    %c0_3 = arith.constant 0 : index
    %c0_4 = arith.constant 0 : index
    %3 = vector.load %arg2[%c0_2, %c0_3, %c0_4] : memref<9x8x8xbf16, #tpu.memory_space<vmem>>, vector<1x8x8xbf16>
    %4 = vector.shape_cast %3 : vector<1x8x8xbf16> to vector<8x8xbf16>
    %cst = arith.constant dense<0.000000e+00> : vector<71x8xf32>
    %5 = tpu.matmul %2, %4, %cst {dimension_numbers = #tpu.dot_dimension_numbers<[1], [0], [0], [1], [0, 0, 1, 1], [], []>} : vector<71x8xbf16>, vector<8x8xbf16>, vector<71x8xf32> -> vector<71x8xf32>
    %c0_5 = arith.constant 0 : index
    %c0_6 = arith.constant 0 : index
    %c0_7 = arith.constant 0 : index
    %6 = vector.load %arg1[%c0_5, %c0_6, %c0_7] : memref<1x81x8xf32, #tpu.memory_space<vmem>>, vector<1x71x8xf32>
    %7 = vector.shape_cast %6 : vector<1x71x8xf32> to vector<71x8xf32>
    %8 = arith.truncf %7 : vector<71x8xf32> to vector<71x8xbf16>
    %c1 = arith.constant 1 : index
    %c0_8 = arith.constant 0 : index
    %c0_9 = arith.constant 0 : index
    %9 = vector.load %arg2[%c1, %c0_8, %c0_9] : memref<9x8x8xbf16, #tpu.memory_space<vmem>>, vector<1x8x8xbf16>
    %10 = vector.shape_cast %9 : vector<1x8x8xbf16> to vector<8x8xbf16>
    %cst_10 = arith.constant dense<0.000000e+00> : vector<71x8xf32>
    %11 = tpu.matmul %8, %10, %cst_10 {dimension_numbers = #tpu.dot_dimension_numbers<[1], [0], [0], [1], [0, 0, 1, 1], [], []>} : vector<71x8xbf16>, vector<8x8xbf16>, vector<71x8xf32> -> vector<71x8xf32>
    %c0_11 = arith.constant 0 : index
    %c1_12 = arith.constant 1 : index
    %c0_13 = arith.constant 0 : index
    %12 = vector.load %arg1[%c0_11, %c1_12, %c0_13] : memref<1x81x8xf32, #tpu.memory_space<vmem>>, vector<1x71x8xf32>
    %13 = vector.shape_cast %12 : vector<1x71x8xf32> to vector<71x8xf32>
    %14 = arith.truncf %13 : vector<71x8xf32> to vector<71x8xbf16>
    %c2 = arith.constant 2 : index
    %c0_14 = arith.constant 0 : index
    %c0_15 = arith.constant 0 : index
    %15 = vector.load %arg2[%c2, %c0_14, %c0_15] : memref<9x8x8xbf16, #tpu.memory_space<vmem>>, vector<1x8x8xbf16>
    %16 = vector.shape_cast %15 : vector<1x8x8xbf16> to vector<8x8xbf16>
    %cst_16 = arith.constant dense<0.000000e+00> : vector<71x8xf32>
    %17 = tpu.matmul %14, %16, %cst_16 {dimension_numbers = #tpu.dot_dimension_numbers<[1], [0], [0], [1], [0, 0, 1, 1], [], []>} : vector<71x8xbf16>, vector<8x8xbf16>, vector<71x8xf32> -> vector<71x8xf32>
    %18 = arith.addf %11, %17 : vector<71x8xf32>
    %c0_17 = arith.constant 0 : index
    %c0_18 = arith.constant 0 : index
    %c0_19 = arith.constant 0 : index
    %19 = vector.load %arg1[%c0_17, %c0_18, %c0_19] : memref<1x81x8xf32, #tpu.memory_space<vmem>>, vector<1x71x8xf32>
    %20 = vector.shape_cast %19 : vector<1x71x8xf32> to vector<71x8xf32>
    %21 = arith.truncf %20 : vector<71x8xf32> to vector<71x8xbf16>
    %c3 = arith.constant 3 : index
    %c0_20 = arith.constant 0 : index
    %c0_21 = arith.constant 0 : index
    %22 = vector.load %arg2[%c3, %c0_20, %c0_21] : memref<9x8x8xbf16, #tpu.memory_space<vmem>>, vector<1x8x8xbf16>
    %23 = vector.shape_cast %22 : vector<1x8x8xbf16> to vector<8x8xbf16>
    %cst_22 = arith.constant dense<0.000000e+00> : vector<71x8xf32>
    %24 = tpu.matmul %21, %23, %cst_22 {dimension_numbers = #tpu.dot_dimension_numbers<[1], [0], [0], [1], [0, 0, 1, 1], [], []>} : vector<71x8xbf16>, vector<8x8xbf16>, vector<71x8xf32> -> vector<71x8xf32>
    %c0_23 = arith.constant 0 : index
    %c9 = arith.constant 9 : index
    %c0_24 = arith.constant 0 : index
    %25 = vector.load %arg1[%c0_23, %c9, %c0_24] : memref<1x81x8xf32, #tpu.memory_space<vmem>>, vector<1x71x8xf32>
    %26 = vector.shape_cast %25 : vector<1x71x8xf32> to vector<71x8xf32>
    %27 = arith.truncf %26 : vector<71x8xf32> to vector<71x8xbf16>
    %c4 = arith.constant 4 : index
    %c0_25 = arith.constant 0 : index
    %c0_26 = arith.constant 0 : index
    %28 = vector.load %arg2[%c4, %c0_25, %c0_26] : memref<9x8x8xbf16, #tpu.memory_space<vmem>>, vector<1x8x8xbf16>
    %29 = vector.shape_cast %28 : vector<1x8x8xbf16> to vector<8x8xbf16>
    %cst_27 = arith.constant dense<0.000000e+00> : vector<71x8xf32>
    %30 = tpu.matmul %27, %29, %cst_27 {dimension_numbers = #tpu.dot_dimension_numbers<[1], [0], [0], [1], [0, 0, 1, 1], [], []>} : vector<71x8xbf16>, vector<8x8xbf16>, vector<71x8xf32> -> vector<71x8xf32>
    %31 = arith.addf %24, %30 : vector<71x8xf32>
    %c0_28 = arith.constant 0 : index
    %c0_29 = arith.constant 0 : index
    %c0_30 = arith.constant 0 : index
    %32 = vector.load %arg1[%c0_28, %c0_29, %c0_30] : memref<1x81x8xf32, #tpu.memory_space<vmem>>, vector<1x71x8xf32>
    %33 = vector.shape_cast %32 : vector<1x71x8xf32> to vector<71x8xf32>
    %34 = arith.truncf %33 : vector<71x8xf32> to vector<71x8xbf16>
    %c5 = arith.constant 5 : index
    %c0_31 = arith.constant 0 : index
    %c0_32 = arith.constant 0 : index
    %35 = vector.load %arg2[%c5, %c0_31, %c0_32] : memref<9x8x8xbf16, #tpu.memory_space<vmem>>, vector<1x8x8xbf16>
    %36 = vector.shape_cast %35 : vector<1x8x8xbf16> to vector<8x8xbf16>
    %cst_33 = arith.constant dense<0.000000e+00> : vector<71x8xf32>
    %37 = tpu.matmul %34, %36, %cst_33 {dimension_numbers = #tpu.dot_dimension_numbers<[1], [0], [0], [1], [0, 0, 1, 1], [], []>} : vector<71x8xbf16>, vector<8x8xbf16>, vector<71x8xf32> -> vector<71x8xf32>
    %c0_34 = arith.constant 0 : index
    %c1_35 = arith.constant 1 : index
    %c0_36 = arith.constant 0 : index
    %38 = vector.load %arg1[%c0_34, %c1_35, %c0_36] : memref<1x81x8xf32, #tpu.memory_space<vmem>>, vector<1x71x8xf32>
    %39 = vector.shape_cast %38 : vector<1x71x8xf32> to vector<71x8xf32>
    %40 = arith.truncf %39 : vector<71x8xf32> to vector<71x8xbf16>
    %c6 = arith.constant 6 : index
    %c0_37 = arith.constant 0 : index
    %c0_38 = arith.constant 0 : index
    %41 = vector.load %arg2[%c6, %c0_37, %c0_38] : memref<9x8x8xbf16, #tpu.memory_space<vmem>>, vector<1x8x8xbf16>
    %42 = vector.shape_cast %41 : vector<1x8x8xbf16> to vector<8x8xbf16>
    %cst_39 = arith.constant dense<0.000000e+00> : vector<71x8xf32>
    %43 = tpu.matmul %40, %42, %cst_39 {dimension_numbers = #tpu.dot_dimension_numbers<[1], [0], [0], [1], [0, 0, 1, 1], [], []>} : vector<71x8xbf16>, vector<8x8xbf16>, vector<71x8xf32> -> vector<71x8xf32>
    %44 = arith.addf %37, %43 : vector<71x8xf32>
    %c0_40 = arith.constant 0 : index
    %c9_41 = arith.constant 9 : index
    %c0_42 = arith.constant 0 : index
    %45 = vector.load %arg1[%c0_40, %c9_41, %c0_42] : memref<1x81x8xf32, #tpu.memory_space<vmem>>, vector<1x71x8xf32>
    %46 = vector.shape_cast %45 : vector<1x71x8xf32> to vector<71x8xf32>
    %47 = arith.truncf %46 : vector<71x8xf32> to vector<71x8xbf16>
    %c7 = arith.constant 7 : index
    %c0_43 = arith.constant 0 : index
    %c0_44 = arith.constant 0 : index
    %48 = vector.load %arg2[%c7, %c0_43, %c0_44] : memref<9x8x8xbf16, #tpu.memory_space<vmem>>, vector<1x8x8xbf16>
    %49 = vector.shape_cast %48 : vector<1x8x8xbf16> to vector<8x8xbf16>
    %cst_45 = arith.constant dense<0.000000e+00> : vector<71x8xf32>
    %50 = tpu.matmul %47, %49, %cst_45 {dimension_numbers = #tpu.dot_dimension_numbers<[1], [0], [0], [1], [0, 0, 1, 1], [], []>} : vector<71x8xbf16>, vector<8x8xbf16>, vector<71x8xf32> -> vector<71x8xf32>
    %51 = arith.addf %44, %50 : vector<71x8xf32>
    %c0_46 = arith.constant 0 : index
    %c10 = arith.constant 10 : index
    %c0_47 = arith.constant 0 : index
    %52 = vector.load %arg1[%c0_46, %c10, %c0_47] : memref<1x81x8xf32, #tpu.memory_space<vmem>>, vector<1x71x8xf32>
    %53 = vector.shape_cast %52 : vector<1x71x8xf32> to vector<71x8xf32>
    %54 = arith.truncf %53 : vector<71x8xf32> to vector<71x8xbf16>
    %c8 = arith.constant 8 : index
    %c0_48 = arith.constant 0 : index
    %c0_49 = arith.constant 0 : index
    %55 = vector.load %arg2[%c8, %c0_48, %c0_49] : memref<9x8x8xbf16, #tpu.memory_space<vmem>>, vector<1x8x8xbf16>
    %56 = vector.shape_cast %55 : vector<1x8x8xbf16> to vector<8x8xbf16>
    %cst_50 = arith.constant dense<0.000000e+00> : vector<71x8xf32>
    %57 = tpu.matmul %54, %56, %cst_50 {dimension_numbers = #tpu.dot_dimension_numbers<[1], [0], [0], [1], [0, 0, 1, 1], [], []>} : vector<71x8xbf16>, vector<8x8xbf16>, vector<71x8xf32> -> vector<71x8xf32>
    %58 = arith.addf %51, %57 : vector<71x8xf32>
    %59 = tpu.concatenate %5, %18, %31, %58 in 1 : vector<71x8xf32>, vector<71x8xf32>, vector<71x8xf32>, vector<71x8xf32> -> vector<71x32xf32>
    %c0_51 = arith.constant 0 : index
    %c0_52 = arith.constant 0 : index
    %60 = vector.load %arg3[%c0_51, %c0_52] : memref<1x32xf32, #tpu.memory_space<vmem>>, vector<1x32xf32>
    %61 = vector.broadcast %60 : vector<1x32xf32> to vector<71x32xf32>
    %62 = arith.addf %59, %61 : vector<71x32xf32>
    %cst_53 = arith.constant 0.000000e+00 : f32
    %63 = vector.broadcast %cst_53 : f32 to vector<71x32xf32>
    %64 = arith.cmpf oge, %62, %63 : vector<71x32xf32>
    %cst_54 = arith.constant 0.00999999977 : f32
    %65 = vector.broadcast %cst_54 : f32 to vector<71x32xf32>
    %66 = arith.mulf %65, %62 : vector<71x32xf32>
    %67 = arith.select %64, %62, %66 : vector<71x32xi1>, vector<71x32xf32>
    %c0_55 = arith.constant 0 : index
    %c0_56 = arith.constant 0 : index
    %c0_57 = arith.constant 0 : index
    %68 = vector.load %arg4[%c0_55, %c0_56, %c0_57] : memref<1x71x32xf32, #tpu.memory_space<vmem>>, vector<1x71x32xf32>
    %69 = vector.shape_cast %68 : vector<1x71x32xf32> to vector<71x32xf32>
    %70 = vector.shape_cast %67 : vector<71x32xf32> to vector<1x71x32xf32>
    tpu.vector_store %arg4[%c0_55, %c0_56, %c0_57], %70 {strides = array<i32>} : memref<1x71x32xf32, #tpu.memory_space<vmem>>, vector<1x71x32xf32>,
    return
  }
  func.func @transform_0(%arg0: i32) -> (i32, i32, i32) {
    %c0_i32 = arith.constant 0 : i32
    %c0_i32_0 = arith.constant 0 : i32
    %c0_i32_1 = arith.constant 0 : i32
    return %arg0, %c0_i32, %c0_i32_0 : i32, i32, i32
  }
  func.func @transform_1(%arg0: i32) -> (i32, i32, i32) {
    %c0_i32 = arith.constant 0 : i32
    %c0_i32_0 = arith.constant 0 : i32
    %c0_i32_1 = arith.constant 0 : i32
    %c0_i32_2 = arith.constant 0 : i32
    return %c0_i32, %c0_i32_0, %c0_i32_1 : i32, i32, i32
  }
  func.func @transform_2(%arg0: i32) -> (i32, i32) {
    %c0_i32 = arith.constant 0 : i32
    %c0_i32_0 = arith.constant 0 : i32
    %c0_i32_1 = arith.constant 0 : i32
    return %c0_i32, %c0_i32_0 : i32, i32
  }
  func.func @transform_3(%arg0: i32) -> (i32, i32, i32) {
    %c0_i32 = arith.constant 0 : i32
    %c0_i32_0 = arith.constant 0 : i32
    %c0_i32_1 = arith.constant 0 : i32
    return %arg0, %c0_i32, %c0_i32_0 : i32, i32, i32
  }
}

module attributes {stable_mosaic.version = 11 : i64} {
  func.func @_conv_taps_kernel(%arg0: i32, %arg1: memref<1x324x8xf32, #tpu.memory_space<vmem>>, %arg2: memref<9x8x3xbf16, #tpu.memory_space<vmem>>, %arg3: memref<1x3xf32, #tpu.memory_space<vmem>>, %arg4: memref<1x286x3xf32, #tpu.memory_space<vmem>>) attributes {dimension_semantics = [#tpu.dimension_semantics<parallel>], iteration_bounds = array<i64: 2>, scalar_prefetch = 0 : i64, scratch_operands = 0 : i64, tpu.core_type = #tpu.core_type<tc>, window_params = [{transform_indices = @transform_0, window_bounds = array<i64: 1, 324, 8>}, {pipeline_mode = #tpu.pipeline_mode<synchronous>, transform_indices = @transform_1, window_bounds = array<i64: 9, 8, 3>}, {pipeline_mode = #tpu.pipeline_mode<synchronous>, transform_indices = @transform_2, window_bounds = array<i64: 1, 3>}, {transform_indices = @transform_3, window_bounds = array<i64: 1, 286, 3>}]} {
    %c0 = arith.constant 0 : index
    %c0_0 = arith.constant 0 : index
    %c0_1 = arith.constant 0 : index
    %0 = vector.load %arg1[%c0, %c0_0, %c0_1] : memref<1x324x8xf32, #tpu.memory_space<vmem>>, vector<1x286x8xf32>
    %1 = vector.shape_cast %0 : vector<1x286x8xf32> to vector<286x8xf32>
    %2 = arith.truncf %1 : vector<286x8xf32> to vector<286x8xbf16>
    %c0_2 = arith.constant 0 : index
    %c0_3 = arith.constant 0 : index
    %c0_4 = arith.constant 0 : index
    %3 = vector.load %arg2[%c0_2, %c0_3, %c0_4] : memref<9x8x3xbf16, #tpu.memory_space<vmem>>, vector<1x8x3xbf16>
    %4 = vector.shape_cast %3 : vector<1x8x3xbf16> to vector<8x3xbf16>
    %cst = arith.constant dense<0.000000e+00> : vector<286x3xf32>
    %5 = tpu.matmul %2, %4, %cst {dimension_numbers = #tpu.dot_dimension_numbers<[1], [0], [0], [1], [0, 0, 1, 1], [], []>} : vector<286x8xbf16>, vector<8x3xbf16>, vector<286x3xf32> -> vector<286x3xf32>
    %c0_5 = arith.constant 0 : index
    %c1 = arith.constant 1 : index
    %c0_6 = arith.constant 0 : index
    %6 = vector.load %arg1[%c0_5, %c1, %c0_6] : memref<1x324x8xf32, #tpu.memory_space<vmem>>, vector<1x286x8xf32>
    %7 = vector.shape_cast %6 : vector<1x286x8xf32> to vector<286x8xf32>
    %8 = arith.truncf %7 : vector<286x8xf32> to vector<286x8xbf16>
    %c1_7 = arith.constant 1 : index
    %c0_8 = arith.constant 0 : index
    %c0_9 = arith.constant 0 : index
    %9 = vector.load %arg2[%c1_7, %c0_8, %c0_9] : memref<9x8x3xbf16, #tpu.memory_space<vmem>>, vector<1x8x3xbf16>
    %10 = vector.shape_cast %9 : vector<1x8x3xbf16> to vector<8x3xbf16>
    %cst_10 = arith.constant dense<0.000000e+00> : vector<286x3xf32>
    %11 = tpu.matmul %8, %10, %cst_10 {dimension_numbers = #tpu.dot_dimension_numbers<[1], [0], [0], [1], [0, 0, 1, 1], [], []>} : vector<286x8xbf16>, vector<8x3xbf16>, vector<286x3xf32> -> vector<286x3xf32>
    %12 = arith.addf %5, %11 : vector<286x3xf32>
    %c0_11 = arith.constant 0 : index
    %c2 = arith.constant 2 : index
    %c0_12 = arith.constant 0 : index
    %13 = vector.load %arg1[%c0_11, %c2, %c0_12] : memref<1x324x8xf32, #tpu.memory_space<vmem>>, vector<1x286x8xf32>
    %14 = vector.shape_cast %13 : vector<1x286x8xf32> to vector<286x8xf32>
    %15 = arith.truncf %14 : vector<286x8xf32> to vector<286x8xbf16>
    %c2_13 = arith.constant 2 : index
    %c0_14 = arith.constant 0 : index
    %c0_15 = arith.constant 0 : index
    %16 = vector.load %arg2[%c2_13, %c0_14, %c0_15] : memref<9x8x3xbf16, #tpu.memory_space<vmem>>, vector<1x8x3xbf16>
    %17 = vector.shape_cast %16 : vector<1x8x3xbf16> to vector<8x3xbf16>
    %cst_16 = arith.constant dense<0.000000e+00> : vector<286x3xf32>
    %18 = tpu.matmul %15, %17, %cst_16 {dimension_numbers = #tpu.dot_dimension_numbers<[1], [0], [0], [1], [0, 0, 1, 1], [], []>} : vector<286x8xbf16>, vector<8x3xbf16>, vector<286x3xf32> -> vector<286x3xf32>
    %19 = arith.addf %12, %18 : vector<286x3xf32>
    %c0_17 = arith.constant 0 : index
    %c18 = arith.constant 18 : index
    %c0_18 = arith.constant 0 : index
    %20 = vector.load %arg1[%c0_17, %c18, %c0_18] : memref<1x324x8xf32, #tpu.memory_space<vmem>>, vector<1x286x8xf32>
    %21 = vector.shape_cast %20 : vector<1x286x8xf32> to vector<286x8xf32>
    %22 = arith.truncf %21 : vector<286x8xf32> to vector<286x8xbf16>
    %c3 = arith.constant 3 : index
    %c0_19 = arith.constant 0 : index
    %c0_20 = arith.constant 0 : index
    %23 = vector.load %arg2[%c3, %c0_19, %c0_20] : memref<9x8x3xbf16, #tpu.memory_space<vmem>>, vector<1x8x3xbf16>
    %24 = vector.shape_cast %23 : vector<1x8x3xbf16> to vector<8x3xbf16>
    %cst_21 = arith.constant dense<0.000000e+00> : vector<286x3xf32>
    %25 = tpu.matmul %22, %24, %cst_21 {dimension_numbers = #tpu.dot_dimension_numbers<[1], [0], [0], [1], [0, 0, 1, 1], [], []>} : vector<286x8xbf16>, vector<8x3xbf16>, vector<286x3xf32> -> vector<286x3xf32>
    %26 = arith.addf %19, %25 : vector<286x3xf32>
    %c0_22 = arith.constant 0 : index
    %c19 = arith.constant 19 : index
    %c0_23 = arith.constant 0 : index
    %27 = vector.load %arg1[%c0_22, %c19, %c0_23] : memref<1x324x8xf32, #tpu.memory_space<vmem>>, vector<1x286x8xf32>
    %28 = vector.shape_cast %27 : vector<1x286x8xf32> to vector<286x8xf32>
    %29 = arith.truncf %28 : vector<286x8xf32> to vector<286x8xbf16>
    %c4 = arith.constant 4 : index
    %c0_24 = arith.constant 0 : index
    %c0_25 = arith.constant 0 : index
    %30 = vector.load %arg2[%c4, %c0_24, %c0_25] : memref<9x8x3xbf16, #tpu.memory_space<vmem>>, vector<1x8x3xbf16>
    %31 = vector.shape_cast %30 : vector<1x8x3xbf16> to vector<8x3xbf16>
    %cst_26 = arith.constant dense<0.000000e+00> : vector<286x3xf32>
    %32 = tpu.matmul %29, %31, %cst_26 {dimension_numbers = #tpu.dot_dimension_numbers<[1], [0], [0], [1], [0, 0, 1, 1], [], []>} : vector<286x8xbf16>, vector<8x3xbf16>, vector<286x3xf32> -> vector<286x3xf32>
    %33 = arith.addf %26, %32 : vector<286x3xf32>
    %c0_27 = arith.constant 0 : index
    %c20 = arith.constant 20 : index
    %c0_28 = arith.constant 0 : index
    %34 = vector.load %arg1[%c0_27, %c20, %c0_28] : memref<1x324x8xf32, #tpu.memory_space<vmem>>, vector<1x286x8xf32>
    %35 = vector.shape_cast %34 : vector<1x286x8xf32> to vector<286x8xf32>
    %36 = arith.truncf %35 : vector<286x8xf32> to vector<286x8xbf16>
    %c5 = arith.constant 5 : index
    %c0_29 = arith.constant 0 : index
    %c0_30 = arith.constant 0 : index
    %37 = vector.load %arg2[%c5, %c0_29, %c0_30] : memref<9x8x3xbf16, #tpu.memory_space<vmem>>, vector<1x8x3xbf16>
    %38 = vector.shape_cast %37 : vector<1x8x3xbf16> to vector<8x3xbf16>
    %cst_31 = arith.constant dense<0.000000e+00> : vector<286x3xf32>
    %39 = tpu.matmul %36, %38, %cst_31 {dimension_numbers = #tpu.dot_dimension_numbers<[1], [0], [0], [1], [0, 0, 1, 1], [], []>} : vector<286x8xbf16>, vector<8x3xbf16>, vector<286x3xf32> -> vector<286x3xf32>
    %40 = arith.addf %33, %39 : vector<286x3xf32>
    %c0_32 = arith.constant 0 : index
    %c36 = arith.constant 36 : index
    %c0_33 = arith.constant 0 : index
    %41 = vector.load %arg1[%c0_32, %c36, %c0_33] : memref<1x324x8xf32, #tpu.memory_space<vmem>>, vector<1x286x8xf32>
    %42 = vector.shape_cast %41 : vector<1x286x8xf32> to vector<286x8xf32>
    %43 = arith.truncf %42 : vector<286x8xf32> to vector<286x8xbf16>
    %c6 = arith.constant 6 : index
    %c0_34 = arith.constant 0 : index
    %c0_35 = arith.constant 0 : index
    %44 = vector.load %arg2[%c6, %c0_34, %c0_35] : memref<9x8x3xbf16, #tpu.memory_space<vmem>>, vector<1x8x3xbf16>
    %45 = vector.shape_cast %44 : vector<1x8x3xbf16> to vector<8x3xbf16>
    %cst_36 = arith.constant dense<0.000000e+00> : vector<286x3xf32>
    %46 = tpu.matmul %43, %45, %cst_36 {dimension_numbers = #tpu.dot_dimension_numbers<[1], [0], [0], [1], [0, 0, 1, 1], [], []>} : vector<286x8xbf16>, vector<8x3xbf16>, vector<286x3xf32> -> vector<286x3xf32>
    %47 = arith.addf %40, %46 : vector<286x3xf32>
    %c0_37 = arith.constant 0 : index
    %c37 = arith.constant 37 : index
    %c0_38 = arith.constant 0 : index
    %48 = vector.load %arg1[%c0_37, %c37, %c0_38] : memref<1x324x8xf32, #tpu.memory_space<vmem>>, vector<1x286x8xf32>
    %49 = vector.shape_cast %48 : vector<1x286x8xf32> to vector<286x8xf32>
    %50 = arith.truncf %49 : vector<286x8xf32> to vector<286x8xbf16>
    %c7 = arith.constant 7 : index
    %c0_39 = arith.constant 0 : index
    %c0_40 = arith.constant 0 : index
    %51 = vector.load %arg2[%c7, %c0_39, %c0_40] : memref<9x8x3xbf16, #tpu.memory_space<vmem>>, vector<1x8x3xbf16>
    %52 = vector.shape_cast %51 : vector<1x8x3xbf16> to vector<8x3xbf16>
    %cst_41 = arith.constant dense<0.000000e+00> : vector<286x3xf32>
    %53 = tpu.matmul %50, %52, %cst_41 {dimension_numbers = #tpu.dot_dimension_numbers<[1], [0], [0], [1], [0, 0, 1, 1], [], []>} : vector<286x8xbf16>, vector<8x3xbf16>, vector<286x3xf32> -> vector<286x3xf32>
    %54 = arith.addf %47, %53 : vector<286x3xf32>
    %c0_42 = arith.constant 0 : index
    %c38 = arith.constant 38 : index
    %c0_43 = arith.constant 0 : index
    %55 = vector.load %arg1[%c0_42, %c38, %c0_43] : memref<1x324x8xf32, #tpu.memory_space<vmem>>, vector<1x286x8xf32>
    %56 = vector.shape_cast %55 : vector<1x286x8xf32> to vector<286x8xf32>
    %57 = arith.truncf %56 : vector<286x8xf32> to vector<286x8xbf16>
    %c8 = arith.constant 8 : index
    %c0_44 = arith.constant 0 : index
    %c0_45 = arith.constant 0 : index
    %58 = vector.load %arg2[%c8, %c0_44, %c0_45] : memref<9x8x3xbf16, #tpu.memory_space<vmem>>, vector<1x8x3xbf16>
    %59 = vector.shape_cast %58 : vector<1x8x3xbf16> to vector<8x3xbf16>
    %cst_46 = arith.constant dense<0.000000e+00> : vector<286x3xf32>
    %60 = tpu.matmul %57, %59, %cst_46 {dimension_numbers = #tpu.dot_dimension_numbers<[1], [0], [0], [1], [0, 0, 1, 1], [], []>} : vector<286x8xbf16>, vector<8x3xbf16>, vector<286x3xf32> -> vector<286x3xf32>
    %61 = arith.addf %54, %60 : vector<286x3xf32>
    %c0_47 = arith.constant 0 : index
    %c0_48 = arith.constant 0 : index
    %62 = vector.load %arg3[%c0_47, %c0_48] : memref<1x3xf32, #tpu.memory_space<vmem>>, vector<1x3xf32>
    %63 = vector.broadcast %62 : vector<1x3xf32> to vector<286x3xf32>
    %64 = arith.addf %61, %63 : vector<286x3xf32>
    %65 = math.tanh %64 : vector<286x3xf32>
    %c0_49 = arith.constant 0 : index
    %c0_50 = arith.constant 0 : index
    %c0_51 = arith.constant 0 : index
    %66 = vector.load %arg4[%c0_49, %c0_50, %c0_51] : memref<1x286x3xf32, #tpu.memory_space<vmem>>, vector<1x286x3xf32>
    %67 = vector.shape_cast %66 : vector<1x286x3xf32> to vector<286x3xf32>
    %68 = vector.shape_cast %65 : vector<286x3xf32> to vector<1x286x3xf32>
    tpu.vector_store %arg4[%c0_49, %c0_50, %c0_51], %68 {strides = array<i32>} : memref<1x286x3xf32, #tpu.memory_space<vmem>>, vector<1x286x3xf32>,
    return
  }
  func.func @transform_0(%arg0: i32) -> (i32, i32, i32) {
    %c0_i32 = arith.constant 0 : i32
    %c0_i32_0 = arith.constant 0 : i32
    %c0_i32_1 = arith.constant 0 : i32
    return %arg0, %c0_i32, %c0_i32_0 : i32, i32, i32
  }
  func.func @transform_1(%arg0: i32) -> (i32, i32, i32) {
    %c0_i32 = arith.constant 0 : i32
    %c0_i32_0 = arith.constant 0 : i32
    %c0_i32_1 = arith.constant 0 : i32
    %c0_i32_2 = arith.constant 0 : i32
    return %c0_i32, %c0_i32_0, %c0_i32_1 : i32, i32, i32
  }
  func.func @transform_2(%arg0: i32) -> (i32, i32) {
    %c0_i32 = arith.constant 0 : i32
    %c0_i32_0 = arith.constant 0 : i32
    %c0_i32_1 = arith.constant 0 : i32
    return %c0_i32, %c0_i32_0 : i32, i32
  }
  func.func @transform_3(%arg0: i32) -> (i32, i32, i32) {
    %c0_i32 = arith.constant 0 : i32
    %c0_i32_0 = arith.constant 0 : i32
    %c0_i32_1 = arith.constant 0 : i32
    return %arg0, %c0_i32, %c0_i32_0 : i32, i32, i32
  }
}

module attributes {stable_mosaic.version = 11 : i64} {
  func.func @_classifier_kernel(%arg0: memref<2x128xf32, #tpu.memory_space<vmem>>, %arg1: memref<2x128xf32, #tpu.memory_space<vmem>>, %arg2: memref<128x512xbf16, #tpu.memory_space<vmem>>, %arg3: memref<1x512xf32, #tpu.memory_space<vmem>>, %arg4: memref<512x128xbf16, #tpu.memory_space<vmem>>, %arg5: memref<1x128xf32, #tpu.memory_space<vmem>>, %arg6: memref<128x32xbf16, #tpu.memory_space<vmem>>, %arg7: memref<1x32xf32, #tpu.memory_space<vmem>>, %arg8: memref<32x3xbf16, #tpu.memory_space<vmem>>, %arg9: memref<1x3xf32, #tpu.memory_space<vmem>>, %arg10: memref<2x3xf32, #tpu.memory_space<vmem>>) attributes {dimension_semantics = [], scalar_prefetch = 0 : i64, scratch_operands = 0 : i64, tpu.core_type = #tpu.core_type<tc>} {
    %c0 = arith.constant 0 : index
    %c0_0 = arith.constant 0 : index
    %0 = vector.load %arg1[%c0, %c0_0] : memref<2x128xf32, #tpu.memory_space<vmem>>, vector<2x128xf32>
    %c0_1 = arith.constant 0 : index
    %c0_2 = arith.constant 0 : index
    %1 = vector.load %arg0[%c0_1, %c0_2] : memref<2x128xf32, #tpu.memory_space<vmem>>, vector<2x128xf32>
    %2 = arith.subf %0, %1 : vector<2x128xf32>
    %3 = math.absf %2 : vector<2x128xf32>
    %4 = arith.truncf %3 : vector<2x128xf32> to vector<2x128xbf16>
    %c0_3 = arith.constant 0 : index
    %c0_4 = arith.constant 0 : index
    %5 = vector.load %arg2[%c0_3, %c0_4] : memref<128x512xbf16, #tpu.memory_space<vmem>>, vector<128x512xbf16>
    %cst = arith.constant dense<0.000000e+00> : vector<2x512xf32>
    %6 = tpu.matmul %4, %5, %cst {dimension_numbers = #tpu.dot_dimension_numbers<[1], [0], [0], [1], [0, 0, 1, 1], [], []>} : vector<2x128xbf16>, vector<128x512xbf16>, vector<2x512xf32> -> vector<2x512xf32>
    %c0_5 = arith.constant 0 : index
    %c0_6 = arith.constant 0 : index
    %7 = vector.load %arg3[%c0_5, %c0_6] : memref<1x512xf32, #tpu.memory_space<vmem>>, vector<1x512xf32>
    %8 = vector.broadcast %7 : vector<1x512xf32> to vector<2x512xf32>
    %9 = arith.addf %6, %8 : vector<2x512xf32>
    %cst_7 = arith.constant 0.000000e+00 : f32
    %cst_8 = arith.constant 6.000000e+00 : f32
    %10 = vector.broadcast %cst_7 : f32 to vector<2x512xf32>
    %11 = arith.maximumf %10, %9 : vector<2x512xf32>
    %12 = vector.broadcast %cst_8 : f32 to vector<2x512xf32>
    %13 = arith.minimumf %12, %11 : vector<2x512xf32>
    %14 = arith.truncf %13 : vector<2x512xf32> to vector<2x512xbf16>
    %c0_9 = arith.constant 0 : index
    %c0_10 = arith.constant 0 : index
    %15 = vector.load %arg4[%c0_9, %c0_10] : memref<512x128xbf16, #tpu.memory_space<vmem>>, vector<512x128xbf16>
    %cst_11 = arith.constant dense<0.000000e+00> : vector<2x128xf32>
    %16 = tpu.matmul %14, %15, %cst_11 {dimension_numbers = #tpu.dot_dimension_numbers<[1], [0], [0], [1], [0, 0, 1, 1], [], []>} : vector<2x512xbf16>, vector<512x128xbf16>, vector<2x128xf32> -> vector<2x128xf32>
    %c0_12 = arith.constant 0 : index
    %c0_13 = arith.constant 0 : index
    %17 = vector.load %arg5[%c0_12, %c0_13] : memref<1x128xf32, #tpu.memory_space<vmem>>, vector<1x128xf32>
    %18 = vector.broadcast %17 : vector<1x128xf32> to vector<2x128xf32>
    %19 = arith.addf %16, %18 : vector<2x128xf32>
    %cst_14 = arith.constant 0.000000e+00 : f32
    %cst_15 = arith.constant 6.000000e+00 : f32
    %20 = vector.broadcast %cst_14 : f32 to vector<2x128xf32>
    %21 = arith.maximumf %20, %19 : vector<2x128xf32>
    %22 = vector.broadcast %cst_15 : f32 to vector<2x128xf32>
    %23 = arith.minimumf %22, %21 : vector<2x128xf32>
    %24 = arith.truncf %23 : vector<2x128xf32> to vector<2x128xbf16>
    %c0_16 = arith.constant 0 : index
    %c0_17 = arith.constant 0 : index
    %25 = vector.load %arg6[%c0_16, %c0_17] : memref<128x32xbf16, #tpu.memory_space<vmem>>, vector<128x32xbf16>
    %cst_18 = arith.constant dense<0.000000e+00> : vector<2x32xf32>
    %26 = tpu.matmul %24, %25, %cst_18 {dimension_numbers = #tpu.dot_dimension_numbers<[1], [0], [0], [1], [0, 0, 1, 1], [], []>} : vector<2x128xbf16>, vector<128x32xbf16>, vector<2x32xf32> -> vector<2x32xf32>
    %c0_19 = arith.constant 0 : index
    %c0_20 = arith.constant 0 : index
    %27 = vector.load %arg7[%c0_19, %c0_20] : memref<1x32xf32, #tpu.memory_space<vmem>>, vector<1x32xf32>
    %28 = vector.broadcast %27 : vector<1x32xf32> to vector<2x32xf32>
    %29 = arith.addf %26, %28 : vector<2x32xf32>
    %cst_21 = arith.constant 0.000000e+00 : f32
    %cst_22 = arith.constant 6.000000e+00 : f32
    %30 = vector.broadcast %cst_21 : f32 to vector<2x32xf32>
    %31 = arith.maximumf %30, %29 : vector<2x32xf32>
    %32 = vector.broadcast %cst_22 : f32 to vector<2x32xf32>
    %33 = arith.minimumf %32, %31 : vector<2x32xf32>
    %34 = arith.truncf %33 : vector<2x32xf32> to vector<2x32xbf16>
    %c0_23 = arith.constant 0 : index
    %c0_24 = arith.constant 0 : index
    %35 = vector.load %arg8[%c0_23, %c0_24] : memref<32x3xbf16, #tpu.memory_space<vmem>>, vector<32x3xbf16>
    %cst_25 = arith.constant dense<0.000000e+00> : vector<2x3xf32>
    %36 = tpu.matmul %34, %35, %cst_25 {dimension_numbers = #tpu.dot_dimension_numbers<[1], [0], [0], [1], [0, 0, 1, 1], [], []>} : vector<2x32xbf16>, vector<32x3xbf16>, vector<2x3xf32> -> vector<2x3xf32>
    %c0_26 = arith.constant 0 : index
    %c0_27 = arith.constant 0 : index
    %37 = vector.load %arg9[%c0_26, %c0_27] : memref<1x3xf32, #tpu.memory_space<vmem>>, vector<1x3xf32>
    %38 = vector.broadcast %37 : vector<1x3xf32> to vector<2x3xf32>
    %39 = arith.addf %36, %38 : vector<2x3xf32>
    %cst_28 = arith.constant dense<0xFF800000> : vector<2xf32>
    %40 = vector.multi_reduction <maximumf>, %39, %cst_28 [1] : vector<2x3xf32> to vector<2xf32>
    %41 = vector.shape_cast %40 : vector<2xf32> to vector<2x1xf32>
    %42 = vector.broadcast %41 : vector<2x1xf32> to vector<2x3xf32>
    %43 = arith.subf %39, %42 : vector<2x3xf32>
    %44 = math.exp %43 : vector<2x3xf32>
    %cst_29 = arith.constant dense<0.000000e+00> : vector<2xf32>
    %45 = vector.multi_reduction <add>, %44, %cst_29 [1] : vector<2x3xf32> to vector<2xf32>
    %46 = vector.shape_cast %45 : vector<2xf32> to vector<2x1xf32>
    %47 = vector.broadcast %46 : vector<2x1xf32> to vector<2x3xf32>
    %48 = arith.divf %44, %47 : vector<2x3xf32>
    %c0_30 = arith.constant 0 : index
    %c0_31 = arith.constant 0 : index
    %49 = vector.load %arg10[%c0_30, %c0_31] : memref<2x3xf32, #tpu.memory_space<vmem>>, vector<2x3xf32>
    tpu.vector_store %arg10[%c0_30, %c0_31], %48 {strides = array<i32>} : memref<2x3xf32, #tpu.memory_space<vmem>>, vector<2x3xf32>,
    return
  }
}

</mosaic_0001>

<llo_original>
// kernel: _lambda_.10
$region0: #{_lambda_.10}
  #allocation0 [shape = 'u32[]', space=smem, size = 0x4, offset = 0x4, fixed_abs, tag = 'smem constant byte address 0x4 - core index']
  #allocation1 [shape = 'u32[144,128]{1,0:T(1,128)}', space=vmem, size = 0x12000, scoped, tag = 'internal scratch']
  #allocation2 [shape = 'f32[256,3]{1,0:T(8,128)}', space=vmem, size = 0x20000, scoped, tag = 'scratch operand']
  %s0 = inlined_call_operand.vmem [shape: bf16[512,6], index: 0, kind: input, shape index: {}]
  %s1 = inlined_call_operand.vmem [shape: bf16[6,3], index: 1, kind: input, shape index: {}]
  %s2 = inlined_call_operand.vmem [shape: f32[1,3], index: 2, kind: input, shape index: {}]
  %s3 = inlined_call_operand.vmem [shape: f32[512,3], index: 3, kind: output, shape index: {}]
  %s4 = sld [smem:[#allocation0]]
  $region53: #{_lambda_.10} parent=0
    _
  %s6 = ssub.s32 1, %s4
  %s7 = scalar_select 0, %s6, %s4
  loop: start=0, step=1, limit=4
  $region2: #{_lambda_.10} parent=0 // loop_pre_header
    _
  $region3: #{_lambda_.10} parent=0 // loop_header
    %s9 = sphi 0, %s13
    %p10 = scmp.ge.s32.totalorder %s9, 4
    %s16 = sphi 0, %s35
    %s17 = sphi 0, %s31
    %s18 = sphi 0, %s27
    %s19 = sphi 0, %s16
    %s20 = sphi 0, %s17
    %s21 = sphi 0, %s18
    %s22 = sphi 0, %s19
    %s23 = sphi 0, %s20
    %s24 = sphi 0, %s21
    %s40 = sphi 0, %s42
    %s43 = sphi 0, %s40
    %s44 = sphi 0, %s43
    %s60 = sphi 0, %s44
    %s68 = sphi 0, %s70
    %s71 = sphi 0, %s68
    %s72 = sphi 0, %s71
    %s88 = sphi 0, %s72
    %s94 = sphi 0, %s96
    %s97 = sphi 0, %s94
    %s98 = sphi 0, %s97
    %s114 = sphi 0, %s98
    %s122 = sphi 0, %s124
    %s125 = sphi 0, %s122
    %s126 = sphi 0, %s125
    %s142 = sphi 0, %s126
  $region4: #{_lambda_.10} parent=0 // loop_header_branch
    %12 = sbr.rel (%p10) target = $region8
  $region5: #{_lambda_.10} parent=0 // loop_body
    %s14 = ssub.s32 %s9, 1
    %s15 = ssub.s32 %s9, 2
    %s25 = sadd.s32 1, %s18
    %p26 = scmp.ge.s32.totalorder %s25, 1
    %s27 = scalar_select %p26, 0, %s25
    %s28 = sadd.s32 1, %s17
    %s29 = scalar_select %p26, %s28, %s17
    %p30 = scmp.ge.s32.totalorder %s29, 1
    %s31 = scalar_select %p30, 0, %s29
    %s32 = sadd.s32 1, %s16
    %s33 = scalar_select %p30, %s32, %s16
    %p34 = scmp.ge.s32.totalorder %s33, 2
    %s35 = scalar_select %p34, 0, %s33
    %s36 = ssub.s32 %s16, %s35
    %s37 = ssub.s32 %s18, %s27
    %s38 = sor.u32 %s36, %s37
    %p39 = scmp.eq.s32.totalorder %s38, 0
    %s41 = sadd.s32 %s40, 1
    %s42 = scalar_select %p39, %s40, %s41
    %p45 = pneg %p39
    %p46 = scmp.eq.s32.totalorder %s9, 1
    %p47 = por %p45, %p46
    %p48 = scmp.ne.s32.totalorder %s40, %s43
    %p49 = scmp.eq.s32.totalorder %s9, 0
    %p50 = por %p48, %p49
    %p51 = scmp.ne.s32.totalorder %s40, %s43
    %p52 = scmp.eq.s32.totalorder %s14, 1
    %p53 = por %p51, %p52
    %p54 = scmp.ne.s32.totalorder %s43, %s44
    %p55 = scmp.eq.s32.totalorder %s14, 0
    %p56 = por %p54, %p55
    %p57 = scmp.ne.s32.totalorder %s43, %s44
    %p58 = scmp.eq.s32.totalorder %s15, 1
    %p59 = por %p57, %p58
    %p61 = scmp.ne.s32.totalorder %s44, %s60
    %p62 = scmp.eq.s32.totalorder %s15, 0
    %p63 = por %p61, %p62
    %s64 = ssub.s32 %s18, %s27
    %s65 = ssub.s32 %s17, %s31
    %s66 = sor.u32 %s64, %s65
    %p67 = scmp.eq.s32.totalorder %s66, 0
    %s69 = sadd.s32 %s68, 1
    %s70 = scalar_select %p67, %s68, %s69
    %p73 = pneg %p67
    %p74 = scmp.eq.s32.totalorder %s9, 1
    %p75 = por %p73, %p74
    %p76 = scmp.ne.s32.totalorder %s68, %s71
    %p77 = scmp.eq.s32.totalorder %s9, 0
    %p78 = por %p76, %p77
    %p79 = scmp.ne.s32.totalorder %s68, %s71
    %p80 = scmp.eq.s32.totalorder %s14, 1
    %p81 = por %p79, %p80
    %p82 = scmp.ne.s32.totalorder %s71, %s72
    %p83 = scmp.eq.s32.totalorder %s14, 0
    %p84 = por %p82, %p83
    %p85 = scmp.ne.s32.totalorder %s71, %s72
    %p86 = scmp.eq.s32.totalorder %s15, 1
    %p87 = por %p85, %p86
    %p89 = scmp.ne.s32.totalorder %s72, %s88
    %p90 = scmp.eq.s32.totalorder %s15, 0
    %p91 = por %p89, %p90
    %s92 = ssub.s32 %s17, %s31
    %p93 = scmp.eq.s32.totalorder %s92, 0
    %s95 = sadd.s32 %s94, 1
    %s96 = scalar_select %p93, %s94, %s95
    %p99 = pneg %p93
    %p100 = scmp.eq.s32.totalorder %s9, 1
    %p101 = por %p99, %p100
    %p102 = scmp.ne.s32.totalorder %s94, %s97
    %p103 = scmp.eq.s32.totalorder %s9, 0
    %p104 = por %p102, %p103
    %p105 = scmp.ne.s32.totalorder %s94, %s97
    %p106 = scmp.eq.s32.totalorder %s14, 1
    %p107 = por %p105, %p106
    %p108 = scmp.ne.s32.totalorder %s97, %s98
    %p109 = scmp.eq.s32.totalorder %s14, 0
    %p110 = por %p108, %p109
    %p111 = scmp.ne.s32.totalorder %s97, %s98
    %p112 = scmp.eq.s32.totalorder %s15, 1
    %p113 = por %p111, %p112
    %p115 = scmp.ne.s32.totalorder %s98, %s114
    %p116 = scmp.eq.s32.totalorder %s15, 0
    %p117 = por %p115, %p116
    %s118 = ssub.s32 %s16, %s35
    %s119 = ssub.s32 %s17, %s31
    %s120 = sor.u32 %s118, %s119
    %p121 = scmp.eq.s32.totalorder %s120, 0
    %s123 = sadd.s32 %s122, 1
    %s124 = scalar_select %p121, %s122, %s123
    %p127 = pneg %p121
    %p128 = scmp.eq.s32.totalorder %s9, 1
    %p129 = por %p127, %p128
    %p130 = scmp.ne.s32.totalorder %s122, %s125
    %p131 = scmp.eq.s32.totalorder %s9, 0
    %p132 = por %p130, %p131
    %p133 = scmp.ne.s32.totalorder %s122, %s125
    %p134 = scmp.eq.s32.totalorder %s14, 1
    %p135 = por %p133, %p134
    %p136 = scmp.ne.s32.totalorder %s125, %s126
    %p137 = scmp.eq.s32.totalorder %s14, 0
    %p138 = por %p136, %p137
    %p139 = scmp.ne.s32.totalorder %s125, %s126
    %p140 = scmp.eq.s32.totalorder %s15, 1
    %p141 = por %p139, %p140
    %p143 = scmp.ne.s32.totalorder %s126, %s142
    %p144 = scmp.eq.s32.totalorder %s15, 0
    %p145 = por %p143, %p144
    %p146 = scmp.le.s32.totalorder 1, %s9
    %p147 = scmp.lt.s32.totalorder %s9, 3
    %p148 = pnand %p146, %p147
    %p149 = pneg %p148
    // Predicated region
    $region9: #{_lambda_.10} parent=5 // pred_check
      _
    $region10: #{_lambda_.10} parent=5 // pred_check_branch
      %151 = sbr.rel (%p148) target = $region12
    $region11: #{_lambda_.10} parent=5 // pred_region
      %s152 = ssub.s32 %s9, 1
      // Predicated region
      $region13: #{_lambda_.10} parent=11 // pred_check
        %p153 = pneg %p84
      $region14: #{_lambda_.10} parent=11 // pred_check_branch
        %155 = sbr.rel (%p153) target = $region16
      $region15: #{_lambda_.10} parent=11 // pred_region
        %p156 = scmp.lt.s32.totalorder %s21, 0
        %s157 = scalar_select %p156, %s21, 0
        %p158 = scmp.lt.s32.totalorder %s20, 0
        %s159 = scalar_select %p158, %s20, 0
        %s160 = sadd.s32 %s159, %s157
        %s161 = smul.addr %s160, 4
        %s162 = scalar_lea.vmem %s1, %s161
      $region16: #{_lambda_.10} parent=11 // pred_fallthru
        _
      // Predicated region
      $region17: #{_lambda_.10} parent=11 // pred_check
        %p163 = pneg %p110
      $region18: #{_lambda_.10} parent=11 // pred_check_branch
        %165 = sbr.rel (%p163) target = $region20
      $region19: #{_lambda_.10} parent=11 // pred_region
        %p166 = scmp.lt.s32.totalorder %s20, 0
        %s167 = scalar_select %p166, %s20, 0
        %s168 = scalar_lea.vmem %s2, %s167
      $region20: #{_lambda_.10} parent=11 // pred_fallthru
        _
    $region12: #{_lambda_.10} parent=5 // pred_fallthru
      _
    %p169 = scmp.lt.s32.totalorder %s9, 2
    // Predicated region
    $region21: #{_lambda_.10} parent=5 // pred_check
      %p170 = pneg %p169
    $region22: #{_lambda_.10} parent=5 // pred_check_branch
      %172 = sbr.rel (%p170) target = $region24
    $region23: #{_lambda_.10} parent=5 // pred_region
      // Predicated region
      $region25: #{_lambda_.10} parent=23 // pred_check
        %p173 = pneg %p50
      $region26: #{_lambda_.10} parent=23 // pred_check_branch
        %175 = sbr.rel (%p173) target = $region28
      $region27: #{_lambda_.10} parent=23 // pred_region
        %s176 = smul.u32 32, %s16
        %p177 = scmp.lt.s32.totalorder %s176, 63
        %s178 = scalar_select %p177, %s176, 63
        %p179 = scmp.lt.s32.totalorder %s18, 0
        %s180 = scalar_select %p179, %s18, 0
        %s181 = sadd.s32 %s180, %s178
        %s182 = smul.addr %s181, 4
        %s183 = scalar_lea.vmem %s0, %s182
        %s184 = smul.u32 32, %s16
      $region28: #{_lambda_.10} parent=23 // pred_fallthru
        _
    $region24: #{_lambda_.10} parent=5 // pred_fallthru
      _
    %p185 = scmp.le.s32.totalorder 1, %s9
    %p186 = scmp.lt.s32.totalorder %s9, 3
    %p187 = pnand %p185, %p186
    %p188 = pneg %p187
    // Predicated region
    $region29: #{_lambda_.10} parent=5 // pred_check
      _
    $region30: #{_lambda_.10} parent=5 // pred_check_branch
      %190 = sbr.rel (%p187) target = $region32
    $region31: #{_lambda_.10} parent=5 // pred_region
      %s191 = ssub.s32 %s9, 1
      %s192 = smul.u32 32, %s19
      %p193 = scmp.lt.s32.totalorder %s192, 63
      %s194 = scalar_select %p193, %s192, 63
      %p195 = scmp.lt.s32.totalorder %s21, 0
      %s196 = scalar_select %p195, %s21, 0
      %s197 = sadd.s32 %s196, %s194
      %s198 = smul.addr %s197, 4
      %s199 = scalar_lea.vmem %s0, %s198
      %p200 = pneg %p56
      %p201 = pneg %p53
      %p202 = scmp.lt.s32.totalorder %s21, 0
      %s203 = scalar_select %p202, %s21, 0
      %p204 = scmp.lt.s32.totalorder %s20, 0
      %s205 = scalar_select %p204, %s20, 0
      %s206 = sadd.s32 %s205, %s203
      %s207 = smul.addr %s206, 4
      %s208 = scalar_lea.vmem %s1, %s207
      %p209 = pneg %p84
      %p210 = pneg %p81
      %p211 = scmp.lt.s32.totalorder %s20, 0
      %s212 = scalar_select %p211, %s20, 0
      %s213 = scalar_lea.vmem %s2, %s212
      %p214 = pneg %p110
      %p215 = pneg %p107
      %p216 = pneg %p138
      %p217 = pneg %p135
      %s218 = smul.u32 32, %s19
      %p219 = scmp.lt.s32.totalorder %s218, 63
      %s220 = scalar_select %p219, %s218, 63
      %p221 = scmp.lt.s32.totalorder %s20, 0
      %s222 = scalar_select %p221, %s20, 0
      %s223 = sadd.s32 %s222, %s220
      %s224 = smul.addr %s223, 8
      %s225 = scalar_lea.vmem %s3, %s224
      %s226 = smul.u32 32, %s19
      %p227 = scmp.lt.s32.totalorder %s226, 63
      %s228 = scalar_select %p227, %s226, 63
      %p229 = scmp.lt.s32.totalorder %s21, 0
      %s230 = scalar_select %p229, %s21, 0
      %s231 = sadd.s32 %s230, %s228
      %s232 = smul.addr %s231, 4
      %s233 = scalar_lea.vmem %s0, %s232
      %s234 = smul.u32 32, %s19
      %p235 = scmp.lt.s32.totalorder %s21, 0
      %s236 = scalar_select %p235, %s21, 0
      %p237 = scmp.lt.s32.totalorder %s20, 0
      %s238 = scalar_select %p237, %s20, 0
      %s239 = sadd.s32 %s238, %s236
      %s240 = smul.addr %s239, 4
      %s241 = scalar_lea.vmem %s1, %s240
      %p242 = scmp.lt.s32.totalorder %s20, 0
      %s243 = scalar_select %p242, %s20, 0
      %s244 = scalar_lea.vmem %s2, %s243
      %s245 = smul.u32 32, %s19
      %p246 = scmp.lt.s32.totalorder %s245, 63
      %s247 = scalar_select %p246, %s245, 63
      %p248 = scmp.lt.s32.totalorder %s20, 0
      %s249 = scalar_select %p248, %s20, 0
      %s250 = sadd.s32 %s249, %s247
      %s251 = smul.addr %s250, 8
      %s252 = scalar_lea.vmem %s3, %s251
      %s253 = smul.u32 32, %s19
      %p255 = scmp.eq.s32.totalorder %s21, 0
      // Predicated region
      $region33: #{_lambda_.10} parent=31 // pred_check
        %p256 = pneg %p255
      $region34: #{_lambda_.10} parent=31 // pred_check_branch
        %258 = sbr.rel (%p256) target = $region36
      $region35: #{_lambda_.10} parent=31 // pred_region
        %vm259 = vcmask 23552
        %260 = vst.msk [vmem:[#allocation2] sm:$0xff] %vm259, 0.0
        %261 = vst.msk [vmem:[#allocation2 + $0x8] sm:$0xff] %vm259, 0.0
        %262 = vst.msk [vmem:[#allocation2 + $0x10] sm:$0xff] %vm259, 0.0
        %263 = vst.msk [vmem:[#allocation2 + $0x18] sm:$0xff] %vm259, 0.0
        %264 = vst.msk [vmem:[#allocation2 + $0x20] sm:$0xff] %vm259, 0.0
        %265 = vst.msk [vmem:[#allocation2 + $0x28] sm:$0xff] %vm259, 0.0
        %266 = vst.msk [vmem:[#allocation2 + $0x30] sm:$0xff] %vm259, 0.0
        %267 = vst.msk [vmem:[#allocation2 + $0x38] sm:$0xff] %vm259, 0.0
        %268 = vst.msk [vmem:[#allocation2 + $0x40] sm:$0xff] %vm259, 0.0
        %269 = vst.msk [vmem:[#allocation2 + $0x48] sm:$0xff] %vm259, 0.0
        %270 = vst.msk [vmem:[#allocation2 + $0x50] sm:$0xff] %vm259, 0.0
        %271 = vst.msk [vmem:[#allocation2 + $0x58] sm:$0xff] %vm259, 0.0
        %272 = vst.msk [vmem:[#allocation2 + $0x60] sm:$0xff] %vm259, 0.0
        %273 = vst.msk [vmem:[#allocation2 + $0x68] sm:$0xff] %vm259, 0.0
        %274 = vst.msk [vmem:[#allocation2 + $0x70] sm:$0xff] %vm259, 0.0
        %275 = vst.msk [vmem:[#allocation2 + $0x78] sm:$0xff] %vm259, 0.0
        %276 = vst.msk [vmem:[#allocation2 + $0x80] sm:$0xff] %vm259, 0.0
        %277 = vst.msk [vmem:[#allocation2 + $0x88] sm:$0xff] %vm259, 0.0
        %278 = vst.msk [vmem:[#allocation2 + $0x90] sm:$0xff] %vm259, 0.0
        %279 = vst.msk [vmem:[#allocation2 + $0x98] sm:$0xff] %vm259, 0.0
        %280 = vst.msk [vmem:[#allocation2 + $0xa0] sm:$0xff] %vm259, 0.0
        %281 = vst.msk [vmem:[#allocation2 + $0xa8] sm:$0xff] %vm259, 0.0
        %282 = vst.msk [vmem:[#allocation2 + $0xb0] sm:$0xff] %vm259, 0.0
        %283 = vst.msk [vmem:[#allocation2 + $0xb8] sm:$0xff] %vm259, 0.0
        %284 = vst.msk [vmem:[#allocation2 + $0xc0] sm:$0xff] %vm259, 0.0
        %285 = vst.msk [vmem:[#allocation2 + $0xc8] sm:$0xff] %vm259, 0.0
        %286 = vst.msk [vmem:[#allocation2 + $0xd0] sm:$0xff] %vm259, 0.0
        %287 = vst.msk [vmem:[#allocation2 + $0xd8] sm:$0xff] %vm259, 0.0
        %288 = vst.msk [vmem:[#allocation2 + $0xe0] sm:$0xff] %vm259, 0.0
        %289 = vst.msk [vmem:[#allocation2 + $0xe8] sm:$0xff] %vm259, 0.0
        %290 = vst.msk [vmem:[#allocation2 + $0xf0] sm:$0xff] %vm259, 0.0
        %291 = vst.msk [vmem:[#allocation2 + $0xf8] sm:$0xff] %vm259, 0.0
      $region36: #{_lambda_.10} parent=31 // pred_fallthru
        _
      %v292 = vld [vmem:[#allocation2] sm:$0xff]
      %v293 = vld [vmem:[#allocation2 + $0x8] sm:$0xff]
      %v294 = vld [vmem:[#allocation2 + $0x10] sm:$0xff]
      %v295 = vld [vmem:[#allocation2 + $0x18] sm:$0xff]
      %v296 = vld [vmem:[#allocation2 + $0x20] sm:$0xff]
      %v297 = vld [vmem:[#allocation2 + $0x28] sm:$0xff]
      %v298 = vld [vmem:[#allocation2 + $0x30] sm:$0xff]
      %v299 = vld [vmem:[#allocation2 + $0x38] sm:$0xff]
      %v300 = vld [vmem:[#allocation2 + $0x40] sm:$0xff]
      %v301 = vld [vmem:[#allocation2 + $0x48] sm:$0xff]
      %v302 = vld [vmem:[#allocation2 + $0x50] sm:$0xff]
      %v303 = vld [vmem:[#allocation2 + $0x58] sm:$0xff]
      %v304 = vld [vmem:[#allocation2 + $0x60] sm:$0xff]
      %v305 = vld [vmem:[#allocation2 + $0x68] sm:$0xff]
      %v306 = vld [vmem:[#allocation2 + $0x70] sm:$0xff]
      %v307 = vld [vmem:[#allocation2 + $0x78] sm:$0xff]
      %v308 = vld [vmem:[#allocation2 + $0x80] sm:$0xff]
      %v309 = vld [vmem:[#allocation2 + $0x88] sm:$0xff]
      %v310 = vld [vmem:[#allocation2 + $0x90] sm:$0xff]
      %v311 = vld [vmem:[#allocation2 + $0x98] sm:$0xff]
      %v312 = vld [vmem:[#allocation2 + $0xa0] sm:$0xff]
      %v313 = vld [vmem:[#allocation2 + $0xa8] sm:$0xff]
      %v314 = vld [vmem:[#allocation2 + $0xb0] sm:$0xff]
      %v315 = vld [vmem:[#allocation2 + $0xb8] sm:$0xff]
      %v316 = vld [vmem:[#allocation2 + $0xc0] sm:$0xff]
      %v317 = vld [vmem:[#allocation2 + $0xc8] sm:$0xff]
      %v318 = vld [vmem:[#allocation2 + $0xd0] sm:$0xff]
      %v319 = vld [vmem:[#allocation2 + $0xd8] sm:$0xff]
      %v320 = vld [vmem:[#allocation2 + $0xe0] sm:$0xff]
      %v321 = vld [vmem:[#allocation2 + $0xe8] sm:$0xff]
      %v322 = vld [vmem:[#allocation2 + $0xf0] sm:$0xff]
      %v323 = vld [vmem:[#allocation2 + $0xf8] sm:$0xff]
      %v324 = vld [vmem:[%s233] sm:$0xf]
      %v325 = vld [vmem:[%s233 + $0x4] sm:$0xf]
      %v326 = vld [vmem:[%s233 + $0x8] sm:$0xf]
      %v327 = vld [vmem:[%s233 + $0xc] sm:$0xf]
      %v328 = vld [vmem:[%s233 + $0x10] sm:$0xf]
      %v329 = vld [vmem:[%s233 + $0x14] sm:$0xf]
      %v330 = vld [vmem:[%s233 + $0x18] sm:$0xf]
      %v331 = vld [vmem:[%s233 + $0x1c] sm:$0xf]
      %v332 = vld [vmem:[%s233 + $0x20] sm:$0xf]
      %v333 = vld [vmem:[%s233 + $0x24] sm:$0xf]
      %v334 = vld [vmem:[%s233 + $0x28] sm:$0xf]
      %v335 = vld [vmem:[%s233 + $0x2c] sm:$0xf]
      %v336 = vld [vmem:[%s233 + $0x30] sm:$0xf]
      %v337 = vld [vmem:[%s233 + $0x34] sm:$0xf]
      %v338 = vld [vmem:[%s233 + $0x38] sm:$0xf]
      %v339 = vld [vmem:[%s233 + $0x3c] sm:$0xf]
      %v340 = vld [vmem:[%s233 + $0x40] sm:$0xf]
      %v341 = vld [vmem:[%s233 + $0x44] sm:$0xf]
      %v342 = vld [vmem:[%s233 + $0x48] sm:$0xf]
      %v343 = vld [vmem:[%s233 + $0x4c] sm:$0xf]
      %v344 = vld [vmem:[%s233 + $0x50] sm:$0xf]
      %v345 = vld [vmem:[%s233 + $0x54] sm:$0xf]
      %v346 = vld [vmem:[%s233 + $0x58] sm:$0xf]
      %v347 = vld [vmem:[%s233 + $0x5c] sm:$0xf]
      %v348 = vld [vmem:[%s233 + $0x60] sm:$0xf]
      %v349 = vld [vmem:[%s233 + $0x64] sm:$0xf]
      %v350 = vld [vmem:[%s233 + $0x68] sm:$0xf]
      %v351 = vld [vmem:[%s233 + $0x6c] sm:$0xf]
      %v352 = vld [vmem:[%s233 + $0x70] sm:$0xf]
      %v353 = vld [vmem:[%s233 + $0x74] sm:$0xf]
      %v354 = vld [vmem:[%s233 + $0x78] sm:$0xf]
      %v355 = vld [vmem:[%s233 + $0x7c] sm:$0xf]
      %v356 = vld [vmem:[%s241] sm:$0x7]
      %v389 = vunpack.c.l.b16 %v324
      %v390 = vunpack.c.l.b16 %v325
      %v391 = vunpack.c.l.b16 %v326
      %v392 = vunpack.c.l.b16 %v327
      %v393 = vunpack.c.l.b16 %v328
      %v394 = vunpack.c.l.b16 %v329
      %v395 = vunpack.c.l.b16 %v330
      %v396 = vunpack.c.l.b16 %v331
      %v397 = vunpack.c.l.b16 %v332
      %v398 = vunpack.c.l.b16 %v333
      %v399 = vunpack.c.l.b16 %v334
      %v400 = vunpack.c.l.b16 %v335
      %v401 = vunpack.c.l.b16 %v336
      %v402 = vunpack.c.l.b16 %v337
      %v403 = vunpack.c.l.b16 %v338
      %v404 = vunpack.c.l.b16 %v339
      %v405 = vunpack.c.l.b16 %v340
      %v406 = vunpack.c.l.b16 %v341
      %v407 = vunpack.c.l.b16 %v342
      %v408 = vunpack.c.l.b16 %v343
      %v409 = vunpack.c.l.b16 %v344
      %v410 = vunpack.c.l.b16 %v345
      %v411 = vunpack.c.l.b16 %v346
      %v412 = vunpack.c.l.b16 %v347
      %v413 = vunpack.c.l.b16 %v348
      %v414 = vunpack.c.l.b16 %v349
      %v415 = vunpack.c.l.b16 %v350
      %v416 = vunpack.c.l.b16 %v351
      %v417 = vunpack.c.l.b16 %v352
      %v418 = vunpack.c.l.b16 %v353
      %v419 = vunpack.c.l.b16 %v354
      %v420 = vunpack.c.l.b16 %v355
      %v421 = vpack.c.b16 %v390, %v389
      %v422 = vpack.c.b16 %v392, %v391
      %v423 = vpack.c.b16 %v394, %v393
      %v424 = vpack.c.b16 %v396, %v395
      %v425 = vpack.c.b16 %v398, %v397
      %v426 = vpack.c.b16 %v400, %v399
      %v427 = vpack.c.b16 %v402, %v401
      %v428 = vpack.c.b16 %v404, %v403
      %v429 = vpack.c.b16 %v406, %v405
      %v430 = vpack.c.b16 %v408, %v407
      %v431 = vpack.c.b16 %v410, %v409
      %v432 = vpack.c.b16 %v412, %v411
      %v433 = vpack.c.b16 %v414, %v413
      %v434 = vpack.c.b16 %v416, %v415
      %v435 = vpack.c.b16 %v418, %v417
      %v436 = vpack.c.b16 %v420, %v419
      %vm437 = vcmask 48128
      %v439 = vsel %vm437, %v421, 0
      %v442 = vsel %vm437, %v422, 0
      %v445 = vsel %vm437, %v423, 0
      %v448 = vsel %vm437, %v424, 0
      %v451 = vsel %vm437, %v425, 0
      %v454 = vsel %vm437, %v426, 0
      %v457 = vsel %vm437, %v427, 0
      %v460 = vsel %vm437, %v428, 0
      %v463 = vsel %vm437, %v429, 0
      %v466 = vsel %vm437, %v430, 0
      %v469 = vsel %vm437, %v431, 0
      %v472 = vsel %vm437, %v432, 0
      %v475 = vsel %vm437, %v433, 0
      %v478 = vsel %vm437, %v434, 0
      %v481 = vsel %vm437, %v435, 0
      %v484 = vsel %vm437, %v436, 0
      %vm486 = vcmask 1042432
      %v488 = vsel %vm486, %v356, 0
      %490 = vmatprep.subr.bf16.mxu0 0
      %491 = vmatpush1.bf16.msra.mxu0 %v488
      %492 = vmatprep.subr.bf16.mxu0 0
      %493 = vmatpush1.bf16.msra.mxu0 0
      %494 = vmatprep.subr.bf16.mxu0 0
      %495 = vmatpush1.bf16.msra.mxu0 0
      %496 = vmatprep.subr.bf16.mxu0 0
      %497 = vmatpush1.bf16.msra.mxu0 0
      %498 = vmatprep.subr.bf16.mxu0 0
      %499 = vmatpush1.bf16.msra.mxu0 0
      %500 = vmatprep.subr.bf16.mxu0 0
      %501 = vmatpush1.bf16.msra.mxu0 0
      %502 = vmatprep.subr.bf16.mxu0 0
      %503 = vmatpush1.bf16.msra.mxu0 0
      %504 = vmatprep.subr.bf16.mxu0 0
      %505 = vmatpush1.bf16.msra.mxu0 0
      %506 = vmatprep.subr.bf16.mxu0 0
      %507 = vmatpush1.bf16.msra.mxu0 0
      %508 = vmatprep.subr.bf16.mxu0 0
      %509 = vmatpush1.bf16.msra.mxu0 0
      %510 = vmatprep.subr.bf16.mxu0 0
      %511 = vmatpush1.bf16.msra.mxu0 0
      %512 = vmatprep.subr.bf16.mxu0 0
      %513 = vmatpush1.bf16.msra.mxu0 0
      %514 = vmatprep.subr.bf16.mxu0 0
      %515 = vmatpush1.bf16.msra.mxu0 0
      %516 = vmatprep.subr.bf16.mxu0 0
      %517 = vmatpush1.bf16.msra.mxu0 0
      %518 = vmatprep.subr.bf16.mxu0 0
      %519 = vmatpush1.bf16.msra.mxu0 0
      %520 = vmatprep.subr.bf16.mxu0 0
      %521 = vmatpush1.bf16.msra.mxu0 0
      %522 = vmatprep.mubr.bf16.mxu0 0
      %523 = vmatmul.mubr.bf16.gmra.mrb[0].mxu0 %v439
      %v524 = vpop.f32.mrb[0].mxu0
      %v525 = vadd.f32 0.0, %v524
      %v526 = vpop.f32.mrb[0].mxu0
      %v527 = vpop.f32.mrb[0].mxu0
      %v528 = vadd.f32 0.0, %v527
      %v529 = vpop.f32.mrb[0].mxu0
      %530 = vmatprep.mubr.bf16.mxu0 0
      %531 = vmatmul.mubr.bf16.gmra.mrb[0].mxu0 %v442
      %v532 = vpop.f32.mrb[0].mxu0
      %v533 = vadd.f32 0.0, %v532
      %v534 = vpop.f32.mrb[0].mxu0
      %v535 = vpop.f32.mrb[0].mxu0
      %v536 = vadd.f32 0.0, %v535
      %v537 = vpop.f32.mrb[0].mxu0
      %538 = vmatprep.mubr.bf16.mxu0 0
      %539 = vmatmul.mubr.bf16.gmra.mrb[0].mxu0 %v445
      %v540 = vpop.f32.mrb[0].mxu0
      %v541 = vadd.f32 0.0, %v540
      %v542 = vpop.f32.mrb[0].mxu0
      %v543 = vpop.f32.mrb[0].mxu0
      %v544 = vadd.f32 0.0, %v543
      %v545 = vpop.f32.mrb[0].mxu0
      %546 = vmatprep.mubr.bf16.mxu0 0
      %547 = vmatmul.mubr.bf16.gmra.mrb[0].mxu0 %v448
      %v548 = vpop.f32.mrb[0].mxu0
      %v549 = vadd.f32 0.0, %v548
      %v550 = vpop.f32.mrb[0].mxu0
      %v551 = vpop.f32.mrb[0].mxu0
      %v552 = vadd.f32 0.0, %v551
      %v553 = vpop.f32.mrb[0].mxu0
      %554 = vmatprep.mubr.bf16.mxu0 0
      %555 = vmatmul.mubr.bf16.gmra.mrb[0].mxu0 %v451
      %v556 = vpop.f32.mrb[0].mxu0
      %v557 = vadd.f32 0.0, %v556
      %v558 = vpop.f32.mrb[0].mxu0
      %v559 = vpop.f32.mrb[0].mxu0
      %v560 = vadd.f32 0.0, %v559
      %v561 = vpop.f32.mrb[0].mxu0
      %562 = vmatprep.mubr.bf16.mxu0 0
      %563 = vmatmul.mubr.bf16.gmra.mrb[0].mxu0 %v454
      %v564 = vpop.f32.mrb[0].mxu0
      %v565 = vadd.f32 0.0, %v564
      %v566 = vpop.f32.mrb[0].mxu0
      %v567 = vpop.f32.mrb[0].mxu0
      %v568 = vadd.f32 0.0, %v567
      %v569 = vpop.f32.mrb[0].mxu0
      %570 = vmatprep.mubr.bf16.mxu0 0
      %571 = vmatmul.mubr.bf16.gmra.mrb[0].mxu0 %v457
      %v572 = vpop.f32.mrb[0].mxu0
      %v573 = vadd.f32 0.0, %v572
      %v574 = vpop.f32.mrb[0].mxu0
      %v575 = vpop.f32.mrb[0].mxu0
      %v576 = vadd.f32 0.0, %v575
      %v577 = vpop.f32.mrb[0].mxu0
      %578 = vmatprep.mubr.bf16.mxu0 0
      %579 = vmatmul.mubr.bf16.gmra.mrb[0].mxu0 %v460
      %v580 = vpop.f32.mrb[0].mxu0
      %v581 = vadd.f32 0.0, %v580
      %v582 = vpop.f32.mrb[0].mxu0
      %v583 = vpop.f32.mrb[0].mxu0
      %v584 = vadd.f32 0.0, %v583
      %v585 = vpop.f32.mrb[0].mxu0
      %586 = vmatprep.mubr.bf16.mxu0 0
      %587 = vmatmul.mubr.bf16.gmra.mrb[0].mxu0 %v463
      %v588 = vpop.f32.mrb[0].mxu0
      %v589 = vadd.f32 0.0, %v588
      %v590 = vpop.f32.mrb[0].mxu0
      %v591 = vpop.f32.mrb[0].mxu0
      %v592 = vadd.f32 0.0, %v591
      %v593 = vpop.f32.mrb[0].mxu0
      %594 = vmatprep.mubr.bf16.mxu0 0
      %595 = vmatmul.mubr.bf16.gmra.mrb[0].mxu0 %v466
      %v596 = vpop.f32.mrb[0].mxu0
      %v597 = vadd.f32 0.0, %v596
      %v598 = vpop.f32.mrb[0].mxu0
      %v599 = vpop.f32.mrb[0].mxu0
      %v600 = vadd.f32 0.0, %v599
      %v601 = vpop.f32.mrb[0].mxu0
      %602 = vmatprep.mubr.bf16.mxu0 0
      %603 = vmatmul.mubr.bf16.gmra.mrb[0].mxu0 %v469
      %v604 = vpop.f32.mrb[0].mxu0
      %v605 = vadd.f32 0.0, %v604
      %v606 = vpop.f32.mrb[0].mxu0
      %v607 = vpop.f32.mrb[0].mxu0
      %v608 = vadd.f32 0.0, %v607
      %v609 = vpop.f32.mrb[0].mxu0
      %610 = vmatprep.mubr.bf16.mxu0 0
      %611 = vmatmul.mubr.bf16.gmra.mrb[0].mxu0 %v472
      %v612 = vpop.f32.mrb[0].mxu0
      %v613 = vadd.f32 0.0, %v612
      %v614 = vpop.f32.mrb[0].mxu0
      %v615 = vpop.f32.mrb[0].mxu0
      %v616 = vadd.f32 0.0, %v615
      %v617 = vpop.f32.mrb[0].mxu0
      %618 = vmatprep.mubr.bf16.mxu0 0
      %619 = vmatmul.mubr.bf16.gmra.mrb[0].mxu0 %v475
      %v620 = vpop.f32.mrb[0].mxu0
      %v621 = vadd.f32 0.0, %v620
      %v622 = vpop.f32.mrb[0].mxu0
      %v623 = vpop.f32.mrb[0].mxu0
      %v624 = vadd.f32 0.0, %v623
      %v625 = vpop.f32.mrb[0].mxu0
      %626 = vmatprep.mubr.bf16.mxu0 0
      %627 = vmatmul.mubr.bf16.gmra.mrb[0].mxu0 %v478
      %v628 = vpop.f32.mrb[0].mxu0
      %v629 = vadd.f32 0.0, %v628
      %v630 = vpop.f32.mrb[0].mxu0
      %v631 = vpop.f32.mrb[0].mxu0
      %v632 = vadd.f32 0.0, %v631
      %v633 = vpop.f32.mrb[0].mxu0
      %634 = vmatprep.mubr.bf16.mxu0 0
      %635 = vmatmul.mubr.bf16.gmra.mrb[0].mxu0 %v481
      %v636 = vpop.f32.mrb[0].mxu0
      %v637 = vadd.f32 0.0, %v636
      %v638 = vpop.f32.mrb[0].mxu0
      %v639 = vpop.f32.mrb[0].mxu0
      %v640 = vadd.f32 0.0, %v639
      %v641 = vpop.f32.mrb[0].mxu0
      %642 = vmatprep.mubr.bf16.mxu0 0
      %643 = vmatmul.mubr.bf16.gmra.mrb[0].mxu0 %v484
      %v644 = vpop.f32.mrb[0].mxu0
      %v645 = vadd.f32 0.0, %v644
      %v646 = vpop.f32.mrb[0].mxu0
      %v647 = vpop.f32.mrb[0].mxu0
      %v648 = vadd.f32 0.0, %v647
      %v649 = vpop.f32.mrb[0].mxu0
      %650 = vdwg.mxu0
      %v651 = vadd.f32 %v292, %v525
      %v652 = vadd.f32 %v293, %v528
      %v653 = vadd.f32 %v294, %v533
      %v654 = vadd.f32 %v295, %v536
      %v655 = vadd.f32 %v296, %v541
      %v656 = vadd.f32 %v297, %v544
      %v657 = vadd.f32 %v298, %v549
      %v658 = vadd.f32 %v299, %v552
      %v659 = vadd.f32 %v300, %v557
      %v660 = vadd.f32 %v301, %v560
      %v661 = vadd.f32 %v302, %v565
      %v662 = vadd.f32 %v303, %v568
      %v663 = vadd.f32 %v304, %v573
      %v664 = vadd.f32 %v305, %v576
      %v665 = vadd.f32 %v306, %v581
      %v666 = vadd.f32 %v307, %v584
      %v667 = vadd.f32 %v308, %v589
      %v668 = vadd.f32 %v309, %v592
      %v669 = vadd.f32 %v310, %v597
      %v670 = vadd.f32 %v311, %v600
      %v671 = vadd.f32 %v312, %v605
      %v672 = vadd.f32 %v313, %v608
      %v673 = vadd.f32 %v314, %v613
      %v674 = vadd.f32 %v315, %v616
      %v675 = vadd.f32 %v316, %v621
      %v676 = vadd.f32 %v317, %v624
      %v677 = vadd.f32 %v318, %v629
      %v678 = vadd.f32 %v319, %v632
      %v679 = vadd.f32 %v320, %v637
      %v680 = vadd.f32 %v321, %v640
      %v681 = vadd.f32 %v322, %v645
      %v682 = vadd.f32 %v323, %v648
      %vm683 = vcmask 23552
      %684 = vst.msk [vmem:[#allocation2] sm:$0xff] %vm683, %v651
      %685 = vst.msk [vmem:[#allocation2 + $0x8] sm:$0xff] %vm683, %v652
      %686 = vst.msk [vmem:[#allocation2 + $0x10] sm:$0xff] %vm683, %v653
      %687 = vst.msk [vmem:[#allocation2 + $0x18] sm:$0xff] %vm683, %v654
      %688 = vst.msk [vmem:[#allocation2 + $0x20] sm:$0xff] %vm683, %v655
      %689 = vst.msk [vmem:[#allocation2 + $0x28] sm:$0xff] %vm683, %v656
      %690 = vst.msk [vmem:[#allocation2 + $0x30] sm:$0xff] %vm683, %v657
      %691 = vst.msk [vmem:[#allocation2 + $0x38] sm:$0xff] %vm683, %v658
      %692 = vst.msk [vmem:[#allocation2 + $0x40] sm:$0xff] %vm683, %v659
      %693 = vst.msk [vmem:[#allocation2 + $0x48] sm:$0xff] %vm683, %v660
      %694 = vst.msk [vmem:[#allocation2 + $0x50] sm:$0xff] %vm683, %v661
      %695 = vst.msk [vmem:[#allocation2 + $0x58] sm:$0xff] %vm683, %v662
      %696 = vst.msk [vmem:[#allocation2 + $0x60] sm:$0xff] %vm683, %v663
      %697 = vst.msk [vmem:[#allocation2 + $0x68] sm:$0xff] %vm683, %v664
      %698 = vst.msk [vmem:[#allocation2 + $0x70] sm:$0xff] %vm683, %v665
      %699 = vst.msk [vmem:[#allocation2 + $0x78] sm:$0xff] %vm683, %v666
      %700 = vst.msk [vmem:[#allocation2 + $0x80] sm:$0xff] %vm683, %v667
      %701 = vst.msk [vmem:[#allocation2 + $0x88] sm:$0xff] %vm683, %v668
      %702 = vst.msk [vmem:[#allocation2 + $0x90] sm:$0xff] %vm683, %v669
      %703 = vst.msk [vmem:[#allocation2 + $0x98] sm:$0xff] %vm683, %v670
      %704 = vst.msk [vmem:[#allocation2 + $0xa0] sm:$0xff] %vm683, %v671
      %705 = vst.msk [vmem:[#allocation2 + $0xa8] sm:$0xff] %vm683, %v672
      %706 = vst.msk [vmem:[#allocation2 + $0xb0] sm:$0xff] %vm683, %v673
      %707 = vst.msk [vmem:[#allocation2 + $0xb8] sm:$0xff] %vm683, %v674
      %708 = vst.msk [vmem:[#allocation2 + $0xc0] sm:$0xff] %vm683, %v675
      %709 = vst.msk [vmem:[#allocation2 + $0xc8] sm:$0xff] %vm683, %v676
      %710 = vst.msk [vmem:[#allocation2 + $0xd0] sm:$0xff] %vm683, %v677
      %711 = vst.msk [vmem:[#allocation2 + $0xd8] sm:$0xff] %vm683, %v678
      %712 = vst.msk [vmem:[#allocation2 + $0xe0] sm:$0xff] %vm683, %v679
      %713 = vst.msk [vmem:[#allocation2 + $0xe8] sm:$0xff] %vm683, %v680
      %714 = vst.msk [vmem:[#allocation2 + $0xf0] sm:$0xff] %vm683, %v681
      %715 = vst.msk [vmem:[#allocation2 + $0xf8] sm:$0xff] %vm683, %v682
      // Predicated region
      $region37: #{_lambda_.10} parent=31 // pred_check
        %p716 = pneg %p255
      $region38: #{_lambda_.10} parent=31 // pred_check_branch
        %718 = sbr.rel (%p716) target = $region40
      $region39: #{_lambda_.10} parent=31 // pred_region
        %v719 = vld [vmem:[#allocation2] sm:$0xff]
        %v720 = vld [vmem:[#allocation2 + $0x8] sm:$0xff]
        %v721 = vld [vmem:[#allocation2 + $0x10] sm:$0xff]
        %v722 = vld [vmem:[#allocation2 + $0x18] sm:$0xff]
        %v723 = vld [vmem:[#allocation2 + $0x20] sm:$0xff]
        %v724 = vld [vmem:[#allocation2 + $0x28] sm:$0xff]
        %v725 = vld [vmem:[#allocation2 + $0x30] sm:$0xff]
        %v726 = vld [vmem:[#allocation2 + $0x38] sm:$0xff]
        %v727 = vld [vmem:[#allocation2 + $0x40] sm:$0xff]
        %v728 = vld [vmem:[#allocation2 + $0x48] sm:$0xff]
        %v729 = vld [vmem:[#allocation2 + $0x50] sm:$0xff]
        %v730 = vld [vmem:[#allocation2 + $0x58] sm:$0xff]
        %v731 = vld [vmem:[#allocation2 + $0x60] sm:$0xff]
        %v732 = vld [vmem:[#allocation2 + $0x68] sm:$0xff]
        %v733 = vld [vmem:[#allocation2 + $0x70] sm:$0xff]
        %v734 = vld [vmem:[#allocation2 + $0x78] sm:$0xff]
        %v735 = vld [vmem:[#allocation2 + $0x80] sm:$0xff]
        %v736 = vld [vmem:[#allocation2 + $0x88] sm:$0xff]
        %v737 = vld [vmem:[#allocation2 + $0x90] sm:$0xff]
        %v738 = vld [vmem:[#allocation2 + $0x98] sm:$0xff]
        %v739 = vld [vmem:[#allocation2 + $0xa0] sm:$0xff]
        %v740 = vld [vmem:[#allocation2 + $0xa8] sm:$0xff]
        %v741 = vld [vmem:[#allocation2 + $0xb0] sm:$0xff]
        %v742 = vld [vmem:[#allocation2 + $0xb8] sm:$0xff]
        %v743 = vld [vmem:[#allocation2 + $0xc0] sm:$0xff]
        %v744 = vld [vmem:[#allocation2 + $0xc8] sm:$0xff]
        %v745 = vld [vmem:[#allocation2 + $0xd0] sm:$0xff]
        %v746 = vld [vmem:[#allocation2 + $0xd8] sm:$0xff]
        %v747 = vld [vmem:[#allocation2 + $0xe0] sm:$0xff]
        %v748 = vld [vmem:[#allocation2 + $0xe8] sm:$0xff]
        %v749 = vld [vmem:[#allocation2 + $0xf0] sm:$0xff]
        %v750 = vld [vmem:[#allocation2 + $0xf8] sm:$0xff]
        %v751 = vld [vmem:[%s244] sm:$0x1]
        %v753 = vlaneseq
        %v754 = vshrl.u32 %v753, 7
        %v755 = vsub.s32 0, %v754
        %v756 = vrot.slane %v751, %v755
        %v758 = vadd.f32 %v719, %v756
        %v759 = vadd.f32 %v720, %v756
        %v760 = vadd.f32 %v721, %v756
        %v761 = vadd.f32 %v722, %v756
        %v762 = vadd.f32 %v723, %v756
        %v763 = vadd.f32 %v724, %v756
        %v764 = vadd.f32 %v725, %v756
        %v765 = vadd.f32 %v726, %v756
        %v766 = vadd.f32 %v727, %v756
        %v767 = vadd.f32 %v728, %v756
        %v768 = vadd.f32 %v729, %v756
        %v769 = vadd.f32 %v730, %v756
        %v770 = vadd.f32 %v731, %v756
        %v771 = vadd.f32 %v732, %v756
        %v772 = vadd.f32 %v733, %v756
        %v773 = vadd.f32 %v734, %v756
        %v774 = vadd.f32 %v735, %v756
        %v775 = vadd.f32 %v736, %v756
        %v776 = vadd.f32 %v737, %v756
        %v777 = vadd.f32 %v738, %v756
        %v778 = vadd.f32 %v739, %v756
        %v779 = vadd.f32 %v740, %v756
        %v780 = vadd.f32 %v741, %v756
        %v781 = vadd.f32 %v742, %v756
        %v782 = vadd.f32 %v743, %v756
        %v783 = vadd.f32 %v744, %v756
        %v784 = vadd.f32 %v745, %v756
        %v785 = vadd.f32 %v746, %v756
        %v786 = vadd.f32 %v747, %v756
        %v787 = vadd.f32 %v748, %v756
        %v788 = vadd.f32 %v749, %v756
        %v789 = vadd.f32 %v750, %v756
        %790 = vst.msk [vmem:[%s252] sm:$0xff] %vm683, %v758
        %791 = vst.msk [vmem:[%s252 + $0x8] sm:$0xff] %vm683, %v759
        %792 = vst.msk [vmem:[%s252 + $0x10] sm:$0xff] %vm683, %v760
        %793 = vst.msk [vmem:[%s252 + $0x18] sm:$0xff] %vm683, %v761
        %794 = vst.msk [vmem:[%s252 + $0x20] sm:$0xff] %vm683, %v762
        %795 = vst.msk [vmem:[%s252 + $0x28] sm:$0xff] %vm683, %v763
        %796 = vst.msk [vmem:[%s252 + $0x30] sm:$0xff] %vm683, %v764
        %797 = vst.msk [vmem:[%s252 + $0x38] sm:$0xff] %vm683, %v765
        %798 = vst.msk [vmem:[%s252 + $0x40] sm:$0xff] %vm683, %v766
        %799 = vst.msk [vmem:[%s252 + $0x48] sm:$0xff] %vm683, %v767
        %800 = vst.msk [vmem:[%s252 + $0x50] sm:$0xff] %vm683, %v768
        %801 = vst.msk [vmem:[%s252 + $0x58] sm:$0xff] %vm683, %v769
        %802 = vst.msk [vmem:[%s252 + $0x60] sm:$0xff] %vm683, %v770
        %803 = vst.msk [vmem:[%s252 + $0x68] sm:$0xff] %vm683, %v771
        %804 = vst.msk [vmem:[%s252 + $0x70] sm:$0xff] %vm683, %v772
        %805 = vst.msk [vmem:[%s252 + $0x78] sm:$0xff] %vm683, %v773
        %806 = vst.msk [vmem:[%s252 + $0x80] sm:$0xff] %vm683, %v774
        %807 = vst.msk [vmem:[%s252 + $0x88] sm:$0xff] %vm683, %v775
        %808 = vst.msk [vmem:[%s252 + $0x90] sm:$0xff] %vm683, %v776
        %809 = vst.msk [vmem:[%s252 + $0x98] sm:$0xff] %vm683, %v777
        %810 = vst.msk [vmem:[%s252 + $0xa0] sm:$0xff] %vm683, %v778
        %811 = vst.msk [vmem:[%s252 + $0xa8] sm:$0xff] %vm683, %v779
        %812 = vst.msk [vmem:[%s252 + $0xb0] sm:$0xff] %vm683, %v780
        %813 = vst.msk [vmem:[%s252 + $0xb8] sm:$0xff] %vm683, %v781
        %814 = vst.msk [vmem:[%s252 + $0xc0] sm:$0xff] %vm683, %v782
        %815 = vst.msk [vmem:[%s252 + $0xc8] sm:$0xff] %vm683, %v783
        %816 = vst.msk [vmem:[%s252 + $0xd0] sm:$0xff] %vm683, %v784
        %817 = vst.msk [vmem:[%s252 + $0xd8] sm:$0xff] %vm683, %v785
        %818 = vst.msk [vmem:[%s252 + $0xe0] sm:$0xff] %vm683, %v786
        %819 = vst.msk [vmem:[%s252 + $0xe8] sm:$0xff] %vm683, %v787
        %820 = vst.msk [vmem:[%s252 + $0xf0] sm:$0xff] %vm683, %v788
        %821 = vst.msk [vmem:[%s252 + $0xf8] sm:$0xff] %vm683, %v789
      $region40: #{_lambda_.10} parent=31 // pred_fallthru
        _
      %s822 = smul.u32 32, %s19
      %p823 = scmp.lt.s32.totalorder %s822, 63
      %s824 = scalar_select %p823, %s822, 63
      %p825 = scmp.lt.s32.totalorder %s20, 0
      %s826 = scalar_select %p825, %s20, 0
      %s827 = sadd.s32 %s826, %s824
      %s828 = smul.addr %s827, 8
      %s829 = scalar_lea.vmem %s3, %s828
      // Predicated region
      $region41: #{_lambda_.10} parent=31 // pred_check
        %p830 = pneg %p135
      $region42: #{_lambda_.10} parent=31 // pred_check_branch
        %832 = sbr.rel (%p830) target = $region44
      $region43: #{_lambda_.10} parent=31 // pred_region
        %s833 = smul.u32 32, %s19
      $region44: #{_lambda_.10} parent=31 // pred_fallthru
        _
    $region32: #{_lambda_.10} parent=5 // pred_fallthru
      _
    %p834 = scmp.le.s32.totalorder 2, %s9
    // Predicated region
    $region45: #{_lambda_.10} parent=5 // pred_check
      %p835 = pneg %p834
    $region46: #{_lambda_.10} parent=5 // pred_check_branch
      %837 = sbr.rel (%p835) target = $region48
    $region47: #{_lambda_.10} parent=5 // pred_region
      %s838 = ssub.s32 %s9, 2
      // Predicated region
      $region49: #{_lambda_.10} parent=47 // pred_check
        %p839 = pneg %p141
      $region50: #{_lambda_.10} parent=47 // pred_check_branch
        %841 = sbr.rel (%p839) target = $region52
      $region51: #{_lambda_.10} parent=47 // pred_region
        %s842 = smul.u32 32, %s22
        %p843 = scmp.lt.s32.totalorder %s842, 63
        %s844 = scalar_select %p843, %s842, 63
        %p845 = scmp.lt.s32.totalorder %s23, 0
        %s846 = scalar_select %p845, %s23, 0
        %s847 = sadd.s32 %s846, %s844
        %s848 = smul.addr %s847, 8
        %s849 = scalar_lea.vmem %s3, %s848
      $region52: #{_lambda_.10} parent=47 // pred_fallthru
        _
    $region48: #{_lambda_.10} parent=5 // pred_fallthru
      _
  $region6: #{_lambda_.10} parent=0 // loop_footer
    %s13 = sadd.s32 1, %s9
  $region7: #{_lambda_.10} parent=0 // loop_footer_branch
    %8 = sbr.rel target = $region3
  $region8: #{_lambda_.10} parent=0 // loop_exit
    _

// kernel: _lambda_.11
$region0: #{_lambda_.11}
  #allocation0 [shape = 'u32[]', space=smem, size = 0x4, offset = 0x4, fixed_abs, tag = 'smem constant byte address 0x4 - core index']
  #allocation1 [shape = 'u32[144,128]{1,0:T(1,128)}', space=vmem, size = 0x12000, scoped, tag = 'internal scratch']
  #allocation2 [shape = 'f32[24,32]{1,0:T(8,128)}', space=vmem, size = 0x3000, scoped, tag = 'scratch operand']
  %s0 = inlined_call_operand.vmem [shape: bf16[24,192], index: 0, kind: input, shape index: {}]
  %s1 = inlined_call_operand.vmem [shape: bf16[192,32], index: 1, kind: input, shape index: {}]
  %s2 = inlined_call_operand.vmem [shape: f32[1,32], index: 2, kind: input, shape index: {}]
  %s3 = inlined_call_operand.vmem [shape: f32[24,32], index: 3, kind: output, shape index: {}]
  %s4 = sld [smem:[#allocation0]]
  $region30: #{_lambda_.11} parent=0
    _
  %s6 = ssub.s32 1, %s4
  %s7 = scalar_select 0, %s6, %s4
  // Predicated region
  $region2: #{_lambda_.11} parent=0 // pred_check
    _
  $region3: #{_lambda_.11} parent=0 // pred_check_branch
    %9 = sbr.rel (0) target = $region5
  $region4: #{_lambda_.11} parent=0 // pred_region
    _
  $region5: #{_lambda_.11} parent=0 // pred_fallthru
    _
  // Predicated region
  $region6: #{_lambda_.11} parent=0 // pred_check
    _
  $region7: #{_lambda_.11} parent=0 // pred_check_branch
    %11 = sbr.rel (0) target = $region9
  $region8: #{_lambda_.11} parent=0 // pred_region
    _
  $region9: #{_lambda_.11} parent=0 // pred_fallthru
    _
  // Predicated region
  $region10: #{_lambda_.11} parent=0 // pred_check
    _
  $region11: #{_lambda_.11} parent=0 // pred_check_branch
    %13 = sbr.rel (0) target = $region13
  $region12: #{_lambda_.11} parent=0 // pred_region
    _
  $region13: #{_lambda_.11} parent=0 // pred_fallthru
    _
  %p15 = scmp.eq.s32.totalorder 0, 0
  // Predicated region
  $region14: #{_lambda_.11} parent=0 // pred_check
    %p16 = pneg %p15
  $region15: #{_lambda_.11} parent=0 // pred_check_branch
    %18 = sbr.rel (%p16) target = $region17
  $region16: #{_lambda_.11} parent=0 // pred_region
    %vm19 = vcmask 261120
    %20 = vst.msk [vmem:[#allocation2] sm:$0xff] %vm19, 0.0
    %21 = vst.msk [vmem:[#allocation2 + $0x8] sm:$0xff] %vm19, 0.0
    %22 = vst.msk [vmem:[#allocation2 + $0x10] sm:$0xff] %vm19, 0.0
  $region17: #{_lambda_.11} parent=0 // pred_fallthru
    _
  %v23 = vld [vmem:[#allocation2] sm:$0xff]
  %v24 = vld [vmem:[#allocation2 + $0x8] sm:$0xff]
  %v25 = vld [vmem:[#allocation2 + $0x10] sm:$0xff]
  %v26 = vld [vmem:[%s0] sm:$0xff]
  %v27 = vld [vmem:[%s0 + $0x8] sm:$0xff]
  %v28 = vld [vmem:[%s0 + $0x10] sm:$0xff]
  %v29 = vld [vmem:[%s1] sm:$0xf]
  %v30 = vld [vmem:[%s1 + $0x4] sm:$0xf]
  %v31 = vld [vmem:[%s1 + $0x8] sm:$0xf]
  %v32 = vld [vmem:[%s1 + $0xc] sm:$0xf]
  %v33 = vld [vmem:[%s1 + $0x10] sm:$0xf]
  %v34 = vld [vmem:[%s1 + $0x14] sm:$0xf]
  %v35 = vld [vmem:[%s1 + $0x18] sm:$0xf]
  %v36 = vld [vmem:[%s1 + $0x1c] sm:$0xf]
  %v37 = vld [vmem:[%s1 + $0x20] sm:$0xf]
  %v38 = vld [vmem:[%s1 + $0x24] sm:$0xf]
  %v39 = vld [vmem:[%s1 + $0x28] sm:$0xf]
  %v40 = vld [vmem:[%s1 + $0x2c] sm:$0xf]
  %v41 = vld [vmem:[%s1 + $0x30] sm:$0xf]
  %v42 = vld [vmem:[%s1 + $0x34] sm:$0xf]
  %v43 = vld [vmem:[%s1 + $0x38] sm:$0xf]
  %v44 = vld [vmem:[%s1 + $0x3c] sm:$0xf]
  %v45 = vld [vmem:[%s1 + $0x40] sm:$0xf]
  %v46 = vld [vmem:[%s1 + $0x44] sm:$0xf]
  %v47 = vld [vmem:[%s1 + $0x48] sm:$0xf]
  %v48 = vld [vmem:[%s1 + $0x4c] sm:$0xf]
  %v49 = vld [vmem:[%s1 + $0x50] sm:$0xf]
  %v50 = vld [vmem:[%s1 + $0x54] sm:$0xf]
  %v51 = vld [vmem:[%s1 + $0x58] sm:$0xf]
  %v52 = vld [vmem:[%s1 + $0x5c] sm:$0xf]
  %v56 = vunpack.c.l.b16 %v26
  %v57 = vunpack.c.h.b16 %v26
  %v58 = vunpack.c.l.b16 %v27
  %v59 = vunpack.c.h.b16 %v27
  %v60 = vunpack.c.l.b16 %v28
  %v61 = vunpack.c.h.b16 %v28
  %v62 = vpack.c.b16 %v58, %v56
  %v63 = vpack.c.b16 %v59, %v57
  %v64 = vpack.c.b16 %v60, %v60
  %v65 = vpack.c.b16 %v61, %v61
  %v92 = vunpack.c.l.b16 %v29
  %v93 = vunpack.c.l.b16 %v30
  %v94 = vunpack.c.l.b16 %v31
  %v95 = vunpack.c.l.b16 %v32
  %v96 = vunpack.c.l.b16 %v33
  %v97 = vunpack.c.l.b16 %v34
  %v98 = vunpack.c.l.b16 %v35
  %v99 = vunpack.c.l.b16 %v36
  %v100 = vunpack.c.l.b16 %v37
  %v101 = vunpack.c.l.b16 %v38
  %v102 = vunpack.c.l.b16 %v39
  %v103 = vunpack.c.l.b16 %v40
  %v104 = vunpack.c.l.b16 %v41
  %v105 = vunpack.c.l.b16 %v42
  %v106 = vunpack.c.l.b16 %v43
  %v107 = vunpack.c.l.b16 %v44
  %v108 = vunpack.c.l.b16 %v45
  %v109 = vunpack.c.l.b16 %v46
  %v110 = vunpack.c.l.b16 %v47
  %v111 = vunpack.c.l.b16 %v48
  %v112 = vunpack.c.l.b16 %v49
  %v113 = vunpack.c.l.b16 %v50
  %v114 = vunpack.c.l.b16 %v51
  %v115 = vunpack.c.l.b16 %v52
  %v116 = vpack.c.b16 %v93, %v92
  %v117 = vpack.c.b16 %v95, %v94
  %v118 = vpack.c.b16 %v97, %v96
  %v119 = vpack.c.b16 %v99, %v98
  %v120 = vpack.c.b16 %v101, %v100
  %v121 = vpack.c.b16 %v103, %v102
  %v122 = vpack.c.b16 %v105, %v104
  %v123 = vpack.c.b16 %v107, %v106
  %v124 = vpack.c.b16 %v109, %v108
  %v125 = vpack.c.b16 %v111, %v110
  %v126 = vpack.c.b16 %v113, %v112
  %v127 = vpack.c.b16 %v115, %v114
  %vm140 = vcmask 523264
  %v142 = vsel %vm140, %v63, 0
  %v145 = vsel %vm140, %v65, 0
  %147 = vmatprep.subr.bf16.mxu0 0
  %148 = vmatpush1.bf16.msra.mxu0 %v116
  %149 = vmatprep.subr.bf16.mxu0 0
  %150 = vmatpush1.bf16.msra.mxu0 %v117
  %151 = vmatprep.subr.bf16.mxu0 0
  %152 = vmatpush1.bf16.msra.mxu0 %v118
  %153 = vmatprep.subr.bf16.mxu0 0
  %154 = vmatpush1.bf16.msra.mxu0 %v119
  %155 = vmatprep.subr.bf16.mxu0 0
  %156 = vmatpush1.bf16.msra.mxu0 %v120
  %157 = vmatprep.subr.bf16.mxu0 0
  %158 = vmatpush1.bf16.msra.mxu0 %v121
  %159 = vmatprep.subr.bf16.mxu0 0
  %160 = vmatpush1.bf16.msra.mxu0 %v122
  %161 = vmatprep.subr.bf16.mxu0 0
  %162 = vmatpush1.bf16.msra.mxu0 %v123
  %163 = vmatprep.subr.bf16.mxu0 0
  %164 = vmatpush1.bf16.msra.mxu0 %v124
  %165 = vmatprep.subr.bf16.mxu0 0
  %166 = vmatpush1.bf16.msra.mxu0 %v125
  %167 = vmatprep.subr.bf16.mxu0 0
  %168 = vmatpush1.bf16.msra.mxu0 %v126
  %169 = vmatprep.subr.bf16.mxu0 0
  %170 = vmatpush1.bf16.msra.mxu0 %v127
  %171 = vmatprep.subr.bf16.mxu0 0
  %172 = vmatpush1.bf16.msra.mxu0 0
  %173 = vmatprep.subr.bf16.mxu0 0
  %174 = vmatpush1.bf16.msra.mxu0 0
  %175 = vmatprep.subr.bf16.mxu0 0
  %176 = vmatpush1.bf16.msra.mxu0 0
  %177 = vmatprep.subr.bf16.mxu0 0
  %178 = vmatpush1.bf16.msra.mxu0 0
  %179 = vmatprep.mubr.bf16.mxu0 %v142
  %180 = vmatmul.mubr.bf16.gmra.mrb[0].mxu0 %v62
  %v181 = vpop.f32.mrb[0].mxu0
  %v182 = vadd.f32 0.0, %v181
  %v183 = vpop.f32.mrb[0].mxu0
  %v184 = vpop.f32.mrb[0].mxu0
  %v185 = vadd.f32 0.0, %v184
  %v186 = vpop.f32.mrb[0].mxu0
  %187 = vmatprep.mubr.bf16.mxu0 %v145
  %188 = vmatmul.mubr.bf16.gmra.mrb[0].mxu0 %v64
  %v189 = vpop.f32.mrb[0].mxu0
  %v190 = vadd.f32 0.0, %v189
  %v191 = vpop.f32.mrb[0].mxu0
  %v192 = vpop.f32.mrb[0].mxu0
  %v193 = vpop.f32.mrb[0].mxu0
  %194 = vdwg.mxu0
  %v195 = vadd.f32 %v23, %v182
  %v196 = vadd.f32 %v24, %v185
  %v197 = vadd.f32 %v25, %v190
  %vm198 = vcmask 261120
  %199 = vst.msk [vmem:[#allocation2] sm:$0xff] %vm198, %v195
  %200 = vst.msk [vmem:[#allocation2 + $0x8] sm:$0xff] %vm198, %v196
  %201 = vst.msk [vmem:[#allocation2 + $0x10] sm:$0xff] %vm198, %v197
  // Predicated region
  $region18: #{_lambda_.11} parent=0 // pred_check
    %p202 = pneg %p15
  $region19: #{_lambda_.11} parent=0 // pred_check_branch
    %204 = sbr.rel (%p202) target = $region21
  $region20: #{_lambda_.11} parent=0 // pred_region
    %v205 = vld [vmem:[#allocation2] sm:$0xff]
    %v206 = vld [vmem:[#allocation2 + $0x8] sm:$0xff]
    %v207 = vld [vmem:[#allocation2 + $0x10] sm:$0xff]
    %v208 = vld [vmem:[%s2] sm:$0x1]
    %v210 = vlaneseq
    %v211 = vshrl.u32 %v210, 7
    %v212 = vsub.s32 0, %v211
    %v213 = vrot.slane %v208, %v212
    %v215 = vadd.f32 %v205, %v213
    %v216 = vadd.f32 %v206, %v213
    %v217 = vadd.f32 %v207, %v213
    %v218 = vmax.f32 %v215, 0.0
    %v219 = vmax.f32 %v216, 0.0
    %v220 = vmax.f32 %v217, 0.0
    %v221 = vmin.f32 %v218, 6.0
    %v222 = vmin.f32 %v219, 6.0
    %v223 = vmin.f32 %v220, 6.0
    %224 = vst.msk [vmem:[%s3] sm:$0xff] %vm198, %v221
    %225 = vst.msk [vmem:[%s3 + $0x8] sm:$0xff] %vm198, %v222
    %226 = vst.msk [vmem:[%s3 + $0x10] sm:$0xff] %vm198, %v223
  $region21: #{_lambda_.11} parent=0 // pred_fallthru
    _
  // Predicated region
  $region22: #{_lambda_.11} parent=0 // pred_check
    _
  $region23: #{_lambda_.11} parent=0 // pred_check_branch
    %228 = sbr.rel (0) target = $region25
  $region24: #{_lambda_.11} parent=0 // pred_region
    _
  $region25: #{_lambda_.11} parent=0 // pred_fallthru
    _
  // Predicated region
  $region26: #{_lambda_.11} parent=0 // pred_check
    _
  $region27: #{_lambda_.11} parent=0 // pred_check_branch
    %230 = sbr.rel (0) target = $region29
  $region28: #{_lambda_.11} parent=0 // pred_region
    _
  $region29: #{_lambda_.11} parent=0 // pred_fallthru
    _

// kernel: squeeze.9
$region0: #{squeeze.9}
  %s0 = inlined_call_operand.vmem [shape: f32[1,2,128], index: 0, kind: input, shape index: {}]
  %s1 = inlined_call_operand.vmem [shape: f32[2,2,2,32], index: 1, kind: output, shape index: {}]
  $region1: #{squeeze.9} parent=0
    #allocation0 [shape = 'u8[16384]{0}', space=vmem, size = 0x4000, scoped, tag = 'scoped mem for output reshape']
    #allocation1 [shape = 'u8[4096]{0}', space=vmem, size = 0x1000, scoped, tag = 'scoped mem for input reshape']
    %s3 = sshllo.u32 0, 2
    %v4 = vld [vmem:[%s0] sm:%s3]
    %5 = vst [vmem:[#allocation1] sm:%s3] %v4
    %v6 = vld [vmem:[#allocation1] sm:$0x3]
    %vm7 = vcmask 261120
    %8 = vst.msk [vmem:[#allocation0] ss:$16 sm:$0x3] %vm7, %v6
    %v9 = vld [vmem:[#allocation1] sm:$0x3]
    %10 = vrot.lane.b32.xlu0 %v9, 96
    %v11 = vpop.permute.xlu0 %10
    %vm12 = vcmask 261120
    %s13 = scalar_lea.vmem [#allocation0], 1
    %14 = vst.msk [vmem:[%s13] ss:$16 sm:$0x3] %vm12, %v11
    %v15 = vld [vmem:[#allocation1] sm:$0x3]
    %16 = vrot.lane.b32.xlu0 %v15, 64
    %v17 = vpop.permute.xlu0 %16
    %vm18 = vcmask 261120
    %s19 = scalar_lea.vmem [#allocation0], 8
    %20 = vst.msk [vmem:[%s19] ss:$16 sm:$0x3] %vm18, %v17
    %v21 = vld [vmem:[#allocation1] sm:$0x3]
    %22 = vrot.lane.b32.xlu0 %v21, 32
    %v23 = vpop.permute.xlu0 %22
    %vm24 = vcmask 261120
    %s25 = scalar_lea.vmem [#allocation0], 9
    %26 = vst.msk [vmem:[%s25] ss:$16 sm:$0x3] %vm24, %v23
    %s28 = sshllo.u32 0, 2
    %v30 = vld [vmem:[#allocation0] sm:%s28]
    %s31 = sshllo.u32 0, 2
    %32 = vst [vmem:[%s1] sm:%s31] %v30
    %s33 = scalar_lea.vmem [#allocation0], 8
    %v34 = vld [vmem:[%s33] sm:%s28]
    %s35 = sshllo.u32 0, 2
    %s36 = scalar_lea.vmem %s1, 2
    %37 = vst [vmem:[%s36] sm:%s35] %v34
    %s38 = scalar_lea.vmem [#allocation0], 16
    %v39 = vld [vmem:[%s38] sm:%s28]
    %s40 = sshllo.u32 0, 2
    %s41 = smul.addr 2, 2
    %s42 = scalar_lea.vmem %s1, %s41
    %43 = vst [vmem:[%s42] sm:%s40] %v39
    %s44 = scalar_lea.vmem [#allocation0], 24
    %v45 = vld [vmem:[%s44] sm:%s28]
    %s46 = sshllo.u32 0, 2
    %s47 = smul.addr 2, 3
    %s48 = scalar_lea.vmem %s1, %s47
    %49 = vst [vmem:[%s48] sm:%s46] %v45

// kernel: _lambda_.13
$region0: #{_lambda_.13}
  #allocation0 [shape = 'u32[]', space=smem, size = 0x4, offset = 0x4, fixed_abs, tag = 'smem constant byte address 0x4 - core index']
  #allocation1 [shape = 'u32[144,128]{1,0:T(1,128)}', space=vmem, size = 0x12000, scoped, tag = 'internal scratch']
  #allocation2 [shape = 'f32[8,8]{1,0:T(8,128)}', space=vmem, size = 0x1000, scoped, tag = 'scratch operand']
  %s0 = inlined_call_operand.vmem [shape: bf16[8,3], index: 0, kind: input, shape index: {}]
  %s1 = inlined_call_operand.vmem [shape: bf16[3,8], index: 1, kind: input, shape index: {}]
  %s2 = inlined_call_operand.vmem [shape: f32[1,8], index: 2, kind: input, shape index: {}]
  %s3 = inlined_call_operand.vmem [shape: f32[8,8], index: 3, kind: output, shape index: {}]
  %s4 = sld [smem:[#allocation0]]
  $region30: #{_lambda_.13} parent=0
    _
  %s6 = ssub.s32 1, %s4
  %s7 = scalar_select 0, %s6, %s4
  // Predicated region
  $region2: #{_lambda_.13} parent=0 // pred_check
    _
  $region3: #{_lambda_.13} parent=0 // pred_check_branch
    %9 = sbr.rel (0) target = $region5
  $region4: #{_lambda_.13} parent=0 // pred_region
    _
  $region5: #{_lambda_.13} parent=0 // pred_fallthru
    _
  // Predicated region
  $region6: #{_lambda_.13} parent=0 // pred_check
    _
  $region7: #{_lambda_.13} parent=0 // pred_check_branch
    %11 = sbr.rel (0) target = $region9
  $region8: #{_lambda_.13} parent=0 // pred_region
    _
  $region9: #{_lambda_.13} parent=0 // pred_fallthru
    _
  // Predicated region
  $region10: #{_lambda_.13} parent=0 // pred_check
    _
  $region11: #{_lambda_.13} parent=0 // pred_check_branch
    %13 = sbr.rel (0) target = $region13
  $region12: #{_lambda_.13} parent=0 // pred_region
    _
  $region13: #{_lambda_.13} parent=0 // pred_fallthru
    _
  %p15 = scmp.eq.s32.totalorder 0, 0
  // Predicated region
  $region14: #{_lambda_.13} parent=0 // pred_check
    %p16 = pneg %p15
  $region15: #{_lambda_.13} parent=0 // pred_check_branch
    %18 = sbr.rel (%p16) target = $region17
  $region16: #{_lambda_.13} parent=0 // pred_region
    %vm19 = vcmask 64512
    %20 = vst.msk [vmem:[#allocation2] sm:$0xff] %vm19, 0.0
  $region17: #{_lambda_.13} parent=0 // pred_fallthru
    _
  %v21 = vld [vmem:[#allocation2] sm:$0xff]
  %v22 = vld [vmem:[%s0] sm:$0xf]
  %v23 = vld [vmem:[%s1] sm:$0x3]
  %vm24 = vcmask 23552
  %v26 = vsel %vm24, %v22, 0
  %vm28 = vcmask 1040384
  %vm29 = vcmask 1041408
  %v30 = vsel %vm28, 4294967295, 65535
  %v31 = vsel %vm29, %v30, 0
  %v33 = vand.u32 %v23, %v31
  %35 = vmatprep.subr.bf16.mxu0 0
  %36 = vmatpush1.bf16.msra.mxu0 %v33
  %37 = vmatprep.subr.bf16.mxu0 0
  %38 = vmatpush1.bf16.msra.mxu0 0
  %39 = vmatprep.subr.bf16.mxu0 0
  %40 = vmatpush1.bf16.msra.mxu0 0
  %41 = vmatprep.subr.bf16.mxu0 0
  %42 = vmatpush1.bf16.msra.mxu0 0
  %43 = vmatprep.subr.bf16.mxu0 0
  %44 = vmatpush1.bf16.msra.mxu0 0
  %45 = vmatprep.subr.bf16.mxu0 0
  %46 = vmatpush1.bf16.msra.mxu0 0
  %47 = vmatprep.subr.bf16.mxu0 0
  %48 = vmatpush1.bf16.msra.mxu0 0
  %49 = vmatprep.subr.bf16.mxu0 0
  %50 = vmatpush1.bf16.msra.mxu0 0
  %51 = vmatprep.subr.bf16.mxu0 0
  %52 = vmatpush1.bf16.msra.mxu0 0
  %53 = vmatprep.subr.bf16.mxu0 0
  %54 = vmatpush1.bf16.msra.mxu0 0
  %55 = vmatprep.subr.bf16.mxu0 0
  %56 = vmatpush1.bf16.msra.mxu0 0
  %57 = vmatprep.subr.bf16.mxu0 0
  %58 = vmatpush1.bf16.msra.mxu0 0
  %59 = vmatprep.subr.bf16.mxu0 0
  %60 = vmatpush1.bf16.msra.mxu0 0
  %61 = vmatprep.subr.bf16.mxu0 0
  %62 = vmatpush1.bf16.msra.mxu0 0
  %63 = vmatprep.subr.bf16.mxu0 0
  %64 = vmatpush1.bf16.msra.mxu0 0
  %65 = vmatprep.subr.bf16.mxu0 0
  %66 = vmatpush1.bf16.msra.mxu0 0
  %67 = vmatprep.mubr.bf16.mxu0 0
  %68 = vmatmul.mubr.bf16.gmra.mrb[0].mxu0 %v26
  %v69 = vpop.f32.mrb[0].mxu0
  %v70 = vadd.f32 0.0, %v69
  %v71 = vpop.f32.mrb[0].mxu0
  %v72 = vpop.f32.mrb[0].mxu0
  %v73 = vpop.f32.mrb[0].mxu0
  %74 = vdwg.mxu0
  %v75 = vadd.f32 %v21, %v70
  %vm76 = vcmask 64512
  %77 = vst.msk [vmem:[#allocation2] sm:$0xff] %vm76, %v75
  // Predicated region
  $region18: #{_lambda_.13} parent=0 // pred_check
    %p78 = pneg %p15
  $region19: #{_lambda_.13} parent=0 // pred_check_branch
    %80 = sbr.rel (%p78) target = $region21
  $region20: #{_lambda_.13} parent=0 // pred_region
    %v81 = vld [vmem:[#allocation2] sm:$0xff]
    %v82 = vld [vmem:[%s2] sm:$0x1]
    %v84 = vlaneseq
    %v85 = vshrl.u32 %v84, 7
    %v86 = vsub.s32 0, %v85
    %v87 = vrot.slane %v82, %v86
    %v89 = vadd.f32 %v81, %v87
    %90 = vst.msk [vmem:[%s3] sm:$0xff] %vm76, %v89
  $region21: #{_lambda_.13} parent=0 // pred_fallthru
    _
  // Predicated region
  $region22: #{_lambda_.13} parent=0 // pred_check
    _
  $region23: #{_lambda_.13} parent=0 // pred_check_branch
    %92 = sbr.rel (0) target = $region25
  $region24: #{_lambda_.13} parent=0 // pred_region
    _
  $region25: #{_lambda_.13} parent=0 // pred_fallthru
    _
  // Predicated region
  $region26: #{_lambda_.13} parent=0 // pred_check
    _
  $region27: #{_lambda_.13} parent=0 // pred_check_branch
    %94 = sbr.rel (0) target = $region29
  $region28: #{_lambda_.13} parent=0 // pred_region
    _
  $region29: #{_lambda_.13} parent=0 // pred_fallthru
    _

// kernel: _lambda_.12
$region0: #{_lambda_.12}
  #allocation0 [shape = 'u32[]', space=smem, size = 0x4, offset = 0x4, fixed_abs, tag = 'smem constant byte address 0x4 - core index']
  #allocation1 [shape = 'u32[144,128]{1,0:T(1,128)}', space=vmem, size = 0x12000, scoped, tag = 'internal scratch']
  %s0 = inlined_call_operand.vmem [shape: f32[2,16,32], index: 0, kind: input, shape index: {}]
  %s1 = inlined_call_operand.vmem [shape: bf16[9,32,16], index: 1, kind: input, shape index: {}]
  %s2 = inlined_call_operand.vmem [shape: f32[1,16], index: 2, kind: input, shape index: {}]
  %s3 = inlined_call_operand.vmem [shape: f32[2,6,8], index: 3, kind: input, shape index: {}]
  %s4 = inlined_call_operand.vmem [shape: f32[2,6,24], index: 4, kind: output, shape index: {}]
  %s5 = sld [smem:[#allocation0]]
  $region49: #{_lambda_.12} parent=0
    _
  %s7 = ssub.s32 1, %s5
  %s8 = scalar_select 0, %s7, %s5
  loop: start=0, step=1, limit=4
  $region2: #{_lambda_.12} parent=0 // loop_pre_header
    _
  $region3: #{_lambda_.12} parent=0 // loop_header
    %s10 = sphi 0, %s14
    %p11 = scmp.ge.s32.totalorder %s10, 4
    %s20 = sphi 0, %s22
    %s23 = sphi 0, %s20
    %s24 = sphi 0, %s23
    %s40 = sphi 0, %s24
    %s44 = sphi 0, %s44
    %s46 = sphi 0, %s44
    %s47 = sphi 0, %s46
    %s61 = sphi 0, %s47
    %s65 = sphi 0, %s65
    %s67 = sphi 0, %s65
    %s68 = sphi 0, %s67
    %s82 = sphi 0, %s68
    %s88 = sphi 0, %s90
    %s91 = sphi 0, %s88
    %s92 = sphi 0, %s91
    %s108 = sphi 0, %s92
    %s114 = sphi 0, %s116
    %s117 = sphi 0, %s114
    %s118 = sphi 0, %s117
    %s134 = sphi 0, %s118
  $region4: #{_lambda_.12} parent=0 // loop_header_branch
    %13 = sbr.rel (%p11) target = $region8
  $region5: #{_lambda_.12} parent=0 // loop_body
    %s15 = ssub.s32 %s10, 1
    %s16 = ssub.s32 %s10, 2
    %s17 = sadd.s32 %s10, 1
    %s18 = ssub.s32 %s10, %s17
    %p19 = scmp.eq.s32.totalorder %s18, 0
    %s21 = sadd.s32 %s20, 1
    %s22 = scalar_select %p19, %s20, %s21
    %p25 = pneg %p19
    %p26 = scmp.eq.s32.totalorder %s10, 1
    %p27 = por %p25, %p26
    %p28 = scmp.ne.s32.totalorder %s20, %s23
    %p29 = scmp.eq.s32.totalorder %s10, 0
    %p30 = por %p28, %p29
    %p31 = scmp.ne.s32.totalorder %s20, %s23
    %p32 = scmp.eq.s32.totalorder %s15, 1
    %p33 = por %p31, %p32
    %p34 = scmp.ne.s32.totalorder %s23, %s24
    %p35 = scmp.eq.s32.totalorder %s15, 0
    %p36 = por %p34, %p35
    %p37 = scmp.ne.s32.totalorder %s23, %s24
    %p38 = scmp.eq.s32.totalorder %s16, 1
    %p39 = por %p37, %p38
    %p41 = scmp.ne.s32.totalorder %s24, %s40
    %p42 = scmp.eq.s32.totalorder %s16, 0
    %p43 = por %p41, %p42
    %s45 = sadd.s32 %s44, 1
    %p48 = scmp.eq.s32.totalorder %s10, 1
    %p49 = scmp.ne.s32.totalorder %s44, %s46
    %p50 = scmp.eq.s32.totalorder %s10, 0
    %p51 = por %p49, %p50
    %p52 = scmp.ne.s32.totalorder %s44, %s46
    %p53 = scmp.eq.s32.totalorder %s15, 1
    %p54 = por %p52, %p53
    %p55 = scmp.ne.s32.totalorder %s46, %s47
    %p56 = scmp.eq.s32.totalorder %s15, 0
    %p57 = por %p55, %p56
    %p58 = scmp.ne.s32.totalorder %s46, %s47
    %p59 = scmp.eq.s32.totalorder %s16, 1
    %p60 = por %p58, %p59
    %p62 = scmp.ne.s32.totalorder %s47, %s61
    %p63 = scmp.eq.s32.totalorder %s16, 0
    %p64 = por %p62, %p63
    %s66 = sadd.s32 %s65, 1
    %p69 = scmp.eq.s32.totalorder %s10, 1
    %p70 = scmp.ne.s32.totalorder %s65, %s67
    %p71 = scmp.eq.s32.totalorder %s10, 0
    %p72 = por %p70, %p71
    %p73 = scmp.ne.s32.totalorder %s65, %s67
    %p74 = scmp.eq.s32.totalorder %s15, 1
    %p75 = por %p73, %p74
    %p76 = scmp.ne.s32.totalorder %s67, %s68
    %p77 = scmp.eq.s32.totalorder %s15, 0
    %p78 = por %p76, %p77
    %p79 = scmp.ne.s32.totalorder %s67, %s68
    %p80 = scmp.eq.s32.totalorder %s16, 1
    %p81 = por %p79, %p80
    %p83 = scmp.ne.s32.totalorder %s68, %s82
    %p84 = scmp.eq.s32.totalorder %s16, 0
    %p85 = por %p83, %p84
    %s86 = ssub.s32 %s10, %s17
    %p87 = scmp.eq.s32.totalorder %s86, 0
    %s89 = sadd.s32 %s88, 1
    %s90 = scalar_select %p87, %s88, %s89
    %p93 = pneg %p87
    %p94 = scmp.eq.s32.totalorder %s10, 1
    %p95 = por %p93, %p94
    %p96 = scmp.ne.s32.totalorder %s88, %s91
    %p97 = scmp.eq.s32.totalorder %s10, 0
    %p98 = por %p96, %p97
    %p99 = scmp.ne.s32.totalorder %s88, %s91
    %p100 = scmp.eq.s32.totalorder %s15, 1
    %p101 = por %p99, %p100
    %p102 = scmp.ne.s32.totalorder %s91, %s92
    %p103 = scmp.eq.s32.totalorder %s15, 0
    %p104 = por %p102, %p103
    %p105 = scmp.ne.s32.totalorder %s91, %s92
    %p106 = scmp.eq.s32.totalorder %s16, 1
    %p107 = por %p105, %p106
    %p109 = scmp.ne.s32.totalorder %s92, %s108
    %p110 = scmp.eq.s32.totalorder %s16, 0
    %p111 = por %p109, %p110
    %s112 = ssub.s32 %s10, %s17
    %p113 = scmp.eq.s32.totalorder %s112, 0
    %s115 = sadd.s32 %s114, 1
    %s116 = scalar_select %p113, %s114, %s115
    %p119 = pneg %p113
    %p120 = scmp.eq.s32.totalorder %s10, 1
    %p121 = por %p119, %p120
    %p122 = scmp.ne.s32.totalorder %s114, %s117
    %p123 = scmp.eq.s32.totalorder %s10, 0
    %p124 = por %p122, %p123
    %p125 = scmp.ne.s32.totalorder %s114, %s117
    %p126 = scmp.eq.s32.totalorder %s15, 1
    %p127 = por %p125, %p126
    %p128 = scmp.ne.s32.totalorder %s117, %s118
    %p129 = scmp.eq.s32.totalorder %s15, 0
    %p130 = por %p128, %p129
    %p131 = scmp.ne.s32.totalorder %s117, %s118
    %p132 = scmp.eq.s32.totalorder %s16, 1
    %p133 = por %p131, %p132
    %p135 = scmp.ne.s32.totalorder %s118, %s134
    %p136 = scmp.eq.s32.totalorder %s16, 0
    %p137 = por %p135, %p136
    %p138 = scmp.le.s32.totalorder 1, %s10
    %p139 = scmp.lt.s32.totalorder %s10, 3
    %p140 = pnand %p138, %p139
    %p141 = pneg %p140
    // Predicated region
    $region9: #{_lambda_.12} parent=5 // pred_check
      _
    $region10: #{_lambda_.12} parent=5 // pred_check_branch
      %143 = sbr.rel (%p140) target = $region12
    $region11: #{_lambda_.12} parent=5 // pred_region
      %s144 = ssub.s32 %s10, 1
      // Predicated region
      $region13: #{_lambda_.12} parent=11 // pred_check
        %p145 = pneg %p57
      $region14: #{_lambda_.12} parent=11 // pred_check_branch
        %147 = sbr.rel (%p145) target = $region16
      $region15: #{_lambda_.12} parent=11 // pred_region
        _
      $region16: #{_lambda_.12} parent=11 // pred_fallthru
        _
      // Predicated region
      $region17: #{_lambda_.12} parent=11 // pred_check
        %p148 = pneg %p78
      $region18: #{_lambda_.12} parent=11 // pred_check_branch
        %150 = sbr.rel (%p148) target = $region20
      $region19: #{_lambda_.12} parent=11 // pred_region
        _
      $region20: #{_lambda_.12} parent=11 // pred_fallthru
        _
    $region12: #{_lambda_.12} parent=5 // pred_fallthru
      _
    %p151 = scmp.lt.s32.totalorder %s10, 2
    // Predicated region
    $region21: #{_lambda_.12} parent=5 // pred_check
      %p152 = pneg %p151
    $region22: #{_lambda_.12} parent=5 // pred_check_branch
      %154 = sbr.rel (%p152) target = $region24
    $region23: #{_lambda_.12} parent=5 // pred_region
      // Predicated region
      $region25: #{_lambda_.12} parent=23 // pred_check
        %p155 = pneg %p30
      $region26: #{_lambda_.12} parent=23 // pred_check_branch
        %157 = sbr.rel (%p155) target = $region28
      $region27: #{_lambda_.12} parent=23 // pred_region
        %p158 = scmp.lt.s32.totalorder %s10, 1
        %s159 = scalar_select %p158, %s10, 1
        %s160 = smul.addr %s159, 2
        %s161 = smul.addr %s160, 8
        %s162 = scalar_lea.vmem %s0, %s161
      $region28: #{_lambda_.12} parent=23 // pred_fallthru
        _
      // Predicated region
      $region29: #{_lambda_.12} parent=23 // pred_check
        %p163 = pneg %p98
      $region30: #{_lambda_.12} parent=23 // pred_check_branch
        %165 = sbr.rel (%p163) target = $region32
      $region31: #{_lambda_.12} parent=23 // pred_region
        %p166 = scmp.lt.s32.totalorder %s10, 1
        %s167 = scalar_select %p166, %s10, 1
        %s168 = smul.addr %s167, 8
        %s169 = scalar_lea.vmem %s3, %s168
      $region32: #{_lambda_.12} parent=23 // pred_fallthru
        _
    $region24: #{_lambda_.12} parent=5 // pred_fallthru
      _
    %p170 = scmp.le.s32.totalorder 1, %s10
    %p171 = scmp.lt.s32.totalorder %s10, 3
    %p172 = pnand %p170, %p171
    %p173 = pneg %p172
    // Predicated region
    $region33: #{_lambda_.12} parent=5 // pred_check
      _
    $region34: #{_lambda_.12} parent=5 // pred_check_branch
      %175 = sbr.rel (%p172) target = $region36
    $region35: #{_lambda_.12} parent=5 // pred_region
      %s176 = ssub.s32 %s10, 1
      %p177 = scmp.lt.s32.totalorder %s15, 1
      %s178 = scalar_select %p177, %s15, 1
      %s179 = smul.addr %s178, 2
      %s180 = smul.addr %s179, 8
      %s181 = scalar_lea.vmem %s0, %s180
      %p182 = pneg %p36
      %p183 = pneg %p33
      %p184 = pneg %p57
      %p185 = pneg %p54
      %p186 = pneg %p78
      %p187 = pneg %p75
      %p188 = scmp.lt.s32.totalorder %s15, 1
      %s189 = scalar_select %p188, %s15, 1
      %s190 = smul.addr %s189, 8
      %s191 = scalar_lea.vmem %s3, %s190
      %p192 = pneg %p104
      %p193 = pneg %p101
      %p194 = pneg %p130
      %p195 = pneg %p127
      %p196 = scmp.lt.s32.totalorder %s15, 1
      %s197 = scalar_select %p196, %s15, 1
      %s198 = smul.addr %s197, 8
      %s199 = scalar_lea.vmem %s4, %s198
      %p200 = scmp.lt.s32.totalorder %s15, 1
      %s201 = scalar_select %p200, %s15, 1
      %s202 = smul.addr %s201, 2
      %s203 = smul.addr %s202, 8
      %s204 = scalar_lea.vmem %s0, %s203
      %p205 = scmp.lt.s32.totalorder %s15, 1
      %s206 = scalar_select %p205, %s15, 1
      %s207 = smul.addr %s206, 8
      %s208 = scalar_lea.vmem %s3, %s207
      %p209 = scmp.lt.s32.totalorder %s15, 1
      %s210 = scalar_select %p209, %s15, 1
      %s211 = smul.addr %s210, 8
      %s212 = scalar_lea.vmem %s4, %s211
      %v214 = vld [vmem:[%s204] sm:$0x3f]
      %v215 = vpack.c.bf16 %v214, %v214
      %v216 = vld [vmem:[%s1] sm:$0xf]
      %v217 = vld [vmem:[%s1 + $0x4] sm:$0xf]
      %v218 = vld [vmem:[%s1 + $0x8] sm:$0xf]
      %v219 = vld [vmem:[%s1 + $0xc] sm:$0xf]
      %v220 = vld [vmem:[%s204 + $0x1] sm:$0x3f]
      %v221 = vpack.c.bf16 %v220, %v220
      %s222 = scalar_lea.vmem %s1, 16
      %v223 = vld [vmem:[%s222] sm:$0xf]
      %v224 = vld [vmem:[%s222 + $0x4] sm:$0xf]
      %v225 = vld [vmem:[%s222 + $0x8] sm:$0xf]
      %v226 = vld [vmem:[%s222 + $0xc] sm:$0xf]
      %v231 = vunpack.c.l.b16 %v223
      %v232 = vunpack.c.l.b16 %v224
      %v233 = vunpack.c.l.b16 %v225
      %v234 = vunpack.c.l.b16 %v226
      %v235 = vpack.c.b16 %v232, %v231
      %v236 = vpack.c.b16 %v234, %v233
      %vm239 = vcmask 261120
      %v241 = vsel %vm239, %v221, 0
      %243 = vmatprep.subr.bf16.mxu0 0
      %244 = vmatpush1.bf16.msra.mxu0 %v235
      %245 = vmatprep.subr.bf16.mxu0 0
      %246 = vmatpush1.bf16.msra.mxu0 %v236
      %247 = vmatprep.subr.bf16.mxu0 0
      %248 = vmatpush1.bf16.msra.mxu0 0
      %249 = vmatprep.subr.bf16.mxu0 0
      %250 = vmatpush1.bf16.msra.mxu0 0
      %251 = vmatprep.subr.bf16.mxu0 0
      %252 = vmatpush1.bf16.msra.mxu0 0
      %253 = vmatprep.subr.bf16.mxu0 0
      %254 = vmatpush1.bf16.msra.mxu0 0
      %255 = vmatprep.subr.bf16.mxu0 0
      %256 = vmatpush1.bf16.msra.mxu0 0
      %257 = vmatprep.subr.bf16.mxu0 0
      %258 = vmatpush1.bf16.msra.mxu0 0
      %259 = vmatprep.subr.bf16.mxu0 0
      %260 = vmatpush1.bf16.msra.mxu0 0
      %261 = vmatprep.subr.bf16.mxu0 0
      %262 = vmatpush1.bf16.msra.mxu0 0
      %263 = vmatprep.subr.bf16.mxu0 0
      %264 = vmatpush1.bf16.msra.mxu0 0
      %265 = vmatprep.subr.bf16.mxu0 0
      %266 = vmatpush1.bf16.msra.mxu0 0
      %267 = vmatprep.subr.bf16.mxu0 0
      %268 = vmatpush1.bf16.msra.mxu0 0
      %269 = vmatprep.subr.bf16.mxu0 0
      %270 = vmatpush1.bf16.msra.mxu0 0
      %271 = vmatprep.subr.bf16.mxu0 0
      %272 = vmatpush1.bf16.msra.mxu0 0
      %273 = vmatprep.subr.bf16.mxu0 0
      %274 = vmatpush1.bf16.msra.mxu0 0
      %275 = vmatprep.mubr.bf16.mxu0 0
      %276 = vmatmul.mubr.bf16.gmra.mrb[0].mxu0 %v241
      %v277 = vpop.f32.mrb[0].mxu0
      %v278 = vadd.f32 0.0, %v277
      %v279 = vpop.f32.mrb[0].mxu0
      %v280 = vpop.f32.mrb[0].mxu0
      %v281 = vpop.f32.mrb[0].mxu0
      %282 = vdwg.mxu0
      %v287 = vunpack.c.l.b16 %v216
      %v288 = vunpack.c.l.b16 %v217
      %v289 = vunpack.c.l.b16 %v218
      %v290 = vunpack.c.l.b16 %v219
      %v291 = vpack.c.b16 %v288, %v287
      %v292 = vpack.c.b16 %v290, %v289
      %v296 = vsel %vm239, %v215, 0
      %298 = vmatprep.subr.bf16.mxu0 0
      %299 = vmatpush1.bf16.msra.mxu0 %v291
      %300 = vmatprep.subr.bf16.mxu0 0
      %301 = vmatpush1.bf16.msra.mxu0 %v292
      %302 = vmatprep.subr.bf16.mxu0 0
      %303 = vmatpush1.bf16.msra.mxu0 0
      %304 = vmatprep.subr.bf16.mxu0 0
      %305 = vmatpush1.bf16.msra.mxu0 0
      %306 = vmatprep.subr.bf16.mxu0 0
      %307 = vmatpush1.bf16.msra.mxu0 0
      %308 = vmatprep.subr.bf16.mxu0 0
      %309 = vmatpush1.bf16.msra.mxu0 0
      %310 = vmatprep.subr.bf16.mxu0 0
      %311 = vmatpush1.bf16.msra.mxu0 0
      %312 = vmatprep.subr.bf16.mxu0 0
      %313 = vmatpush1.bf16.msra.mxu0 0
      %314 = vmatprep.subr.bf16.mxu0 0
      %315 = vmatpush1.bf16.msra.mxu0 0
      %316 = vmatprep.subr.bf16.mxu0 0
      %317 = vmatpush1.bf16.msra.mxu0 0
      %318 = vmatprep.subr.bf16.mxu0 0
      %319 = vmatpush1.bf16.msra.mxu0 0
      %320 = vmatprep.subr.bf16.mxu0 0
      %321 = vmatpush1.bf16.msra.mxu0 0
      %322 = vmatprep.subr.bf16.mxu0 0
      %323 = vmatpush1.bf16.msra.mxu0 0
      %324 = vmatprep.subr.bf16.mxu0 0
      %325 = vmatpush1.bf16.msra.mxu0 0
      %326 = vmatprep.subr.bf16.mxu0 0
      %327 = vmatpush1.bf16.msra.mxu0 0
      %328 = vmatprep.subr.bf16.mxu0 0
      %329 = vmatpush1.bf16.msra.mxu0 0
      %330 = vmatprep.mubr.bf16.mxu0 0
      %331 = vmatmul.mubr.bf16.gmra.mrb[0].mxu0 %v296
      %v332 = vpop.f32.mrb[0].mxu0
      %v333 = vadd.f32 %v278, %v332
      %v334 = vpop.f32.mrb[0].mxu0
      %v335 = vpop.f32.mrb[0].mxu0
      %v336 = vpop.f32.mrb[0].mxu0
      %337 = vdwg.mxu0
      %v338 = vld [vmem:[%s204 + $0x2] sm:$0x3f]
      %v339 = vpack.c.bf16 %v338, %v338
      %s340 = scalar_lea.vmem %s1, 32
      %v341 = vld [vmem:[%s340] sm:$0xf]
      %v342 = vld [vmem:[%s340 + $0x4] sm:$0xf]
      %v343 = vld [vmem:[%s340 + $0x8] sm:$0xf]
      %v344 = vld [vmem:[%s340 + $0xc] sm:$0xf]
      %v349 = vunpack.c.l.b16 %v341
      %v350 = vunpack.c.l.b16 %v342
      %v351 = vunpack.c.l.b16 %v343
      %v352 = vunpack.c.l.b16 %v344
      %v353 = vpack.c.b16 %v350, %v349
      %v354 = vpack.c.b16 %v352, %v351
      %v358 = vsel %vm239, %v339, 0
      %360 = vmatprep.subr.bf16.mxu0 0
      %361 = vmatpush1.bf16.msra.mxu0 %v353
      %362 = vmatprep.subr.bf16.mxu0 0
      %363 = vmatpush1.bf16.msra.mxu0 %v354
      %364 = vmatprep.subr.bf16.mxu0 0
      %365 = vmatpush1.bf16.msra.mxu0 0
      %366 = vmatprep.subr.bf16.mxu0 0
      %367 = vmatpush1.bf16.msra.mxu0 0
      %368 = vmatprep.subr.bf16.mxu0 0
      %369 = vmatpush1.bf16.msra.mxu0 0
      %370 = vmatprep.subr.bf16.mxu0 0
      %371 = vmatpush1.bf16.msra.mxu0 0
      %372 = vmatprep.subr.bf16.mxu0 0
      %373 = vmatpush1.bf16.msra.mxu0 0
      %374 = vmatprep.subr.bf16.mxu0 0
      %375 = vmatpush1.bf16.msra.mxu0 0
      %376 = vmatprep.subr.bf16.mxu0 0
      %377 = vmatpush1.bf16.msra.mxu0 0
      %378 = vmatprep.subr.bf16.mxu0 0
      %379 = vmatpush1.bf16.msra.mxu0 0
      %380 = vmatprep.subr.bf16.mxu0 0
      %381 = vmatpush1.bf16.msra.mxu0 0
      %382 = vmatprep.subr.bf16.mxu0 0
      %383 = vmatpush1.bf16.msra.mxu0 0
      %384 = vmatprep.subr.bf16.mxu0 0
      %385 = vmatpush1.bf16.msra.mxu0 0
      %386 = vmatprep.subr.bf16.mxu0 0
      %387 = vmatpush1.bf16.msra.mxu0 0
      %388 = vmatprep.subr.bf16.mxu0 0
      %389 = vmatpush1.bf16.msra.mxu0 0
      %390 = vmatprep.subr.bf16.mxu0 0
      %391 = vmatpush1.bf16.msra.mxu0 0
      %392 = vmatprep.mubr.bf16.mxu0 0
      %393 = vmatmul.mubr.bf16.gmra.mrb[0].mxu0 %v358
      %v394 = vpop.f32.mrb[0].mxu0
      %v395 = vadd.f32 0.0, %v394
      %v396 = vpop.f32.mrb[0].mxu0
      %v397 = vpop.f32.mrb[0].mxu0
      %v398 = vpop.f32.mrb[0].mxu0
      %399 = vdwg.mxu0
      %v400 = vadd.f32 %v333, %v395
      %v401 = vld [vmem:[%s204 + $0x4] sm:$0x3f]
      %v402 = vpack.c.bf16 %v401, %v401
      %s403 = scalar_lea.vmem %s1, 48
      %v404 = vld [vmem:[%s403] sm:$0xf]
      %v405 = vld [vmem:[%s403 + $0x4] sm:$0xf]
      %v406 = vld [vmem:[%s403 + $0x8] sm:$0xf]
      %v407 = vld [vmem:[%s403 + $0xc] sm:$0xf]
      %v412 = vunpack.c.l.b16 %v404
      %v413 = vunpack.c.l.b16 %v405
      %v414 = vunpack.c.l.b16 %v406
      %v415 = vunpack.c.l.b16 %v407
      %v416 = vpack.c.b16 %v413, %v412
      %v417 = vpack.c.b16 %v415, %v414
      %v421 = vsel %vm239, %v402, 0
      %423 = vmatprep.subr.bf16.mxu0 0
      %424 = vmatpush1.bf16.msra.mxu0 %v416
      %425 = vmatprep.subr.bf16.mxu0 0
      %426 = vmatpush1.bf16.msra.mxu0 %v417
      %427 = vmatprep.subr.bf16.mxu0 0
      %428 = vmatpush1.bf16.msra.mxu0 0
      %429 = vmatprep.subr.bf16.mxu0 0
      %430 = vmatpush1.bf16.msra.mxu0 0
      %431 = vmatprep.subr.bf16.mxu0 0
      %432 = vmatpush1.bf16.msra.mxu0 0
      %433 = vmatprep.subr.bf16.mxu0 0
      %434 = vmatpush1.bf16.msra.mxu0 0
      %435 = vmatprep.subr.bf16.mxu0 0
      %436 = vmatpush1.bf16.msra.mxu0 0
      %437 = vmatprep.subr.bf16.mxu0 0
      %438 = vmatpush1.bf16.msra.mxu0 0
      %439 = vmatprep.subr.bf16.mxu0 0
      %440 = vmatpush1.bf16.msra.mxu0 0
      %441 = vmatprep.subr.bf16.mxu0 0
      %442 = vmatpush1.bf16.msra.mxu0 0
      %443 = vmatprep.subr.bf16.mxu0 0
      %444 = vmatpush1.bf16.msra.mxu0 0
      %445 = vmatprep.subr.bf16.mxu0 0
      %446 = vmatpush1.bf16.msra.mxu0 0
      %447 = vmatprep.subr.bf16.mxu0 0
      %448 = vmatpush1.bf16.msra.mxu0 0
      %449 = vmatprep.subr.bf16.mxu0 0
      %450 = vmatpush1.bf16.msra.mxu0 0
      %451 = vmatprep.subr.bf16.mxu0 0
      %452 = vmatpush1.bf16.msra.mxu0 0
      %453 = vmatprep.subr.bf16.mxu0 0
      %454 = vmatpush1.bf16.msra.mxu0 0
      %455 = vmatprep.mubr.bf16.mxu0 0
      %456 = vmatmul.mubr.bf16.gmra.mrb[0].mxu0 %v421
      %v457 = vpop.f32.mrb[0].mxu0
      %v458 = vadd.f32 0.0, %v457
      %v459 = vpop.f32.mrb[0].mxu0
      %v460 = vpop.f32.mrb[0].mxu0
      %v461 = vpop.f32.mrb[0].mxu0
      %462 = vdwg.mxu0
      %v463 = vadd.f32 %v400, %v458
      %v464 = vld [vmem:[%s204 + $0x5] sm:$0x3f]
      %v465 = vpack.c.bf16 %v464, %v464
      %s466 = scalar_lea.vmem %s1, 64
      %v467 = vld [vmem:[%s466] sm:$0xf]
      %v468 = vld [vmem:[%s466 + $0x4] sm:$0xf]
      %v469 = vld [vmem:[%s466 + $0x8] sm:$0xf]
      %v470 = vld [vmem:[%s466 + $0xc] sm:$0xf]
      %v475 = vunpack.c.l.b16 %v467
      %v476 = vunpack.c.l.b16 %v468
      %v477 = vunpack.c.l.b16 %v469
      %v478 = vunpack.c.l.b16 %v470
      %v479 = vpack.c.b16 %v476, %v475
      %v480 = vpack.c.b16 %v478, %v477
      %v484 = vsel %vm239, %v465, 0
      %486 = vmatprep.subr.bf16.mxu0 0
      %487 = vmatpush1.bf16.msra.mxu0 %v479
      %488 = vmatprep.subr.bf16.mxu0 0
      %489 = vmatpush1.bf16.msra.mxu0 %v480
      %490 = vmatprep.subr.bf16.mxu0 0
      %491 = vmatpush1.bf16.msra.mxu0 0
      %492 = vmatprep.subr.bf16.mxu0 0
      %493 = vmatpush1.bf16.msra.mxu0 0
      %494 = vmatprep.subr.bf16.mxu0 0
      %495 = vmatpush1.bf16.msra.mxu0 0
      %496 = vmatprep.subr.bf16.mxu0 0
      %497 = vmatpush1.bf16.msra.mxu0 0
      %498 = vmatprep.subr.bf16.mxu0 0
      %499 = vmatpush1.bf16.msra.mxu0 0
      %500 = vmatprep.subr.bf16.mxu0 0
      %501 = vmatpush1.bf16.msra.mxu0 0
      %502 = vmatprep.subr.bf16.mxu0 0
      %503 = vmatpush1.bf16.msra.mxu0 0
      %504 = vmatprep.subr.bf16.mxu0 0
      %505 = vmatpush1.bf16.msra.mxu0 0
      %506 = vmatprep.subr.bf16.mxu0 0
      %507 = vmatpush1.bf16.msra.mxu0 0
      %508 = vmatprep.subr.bf16.mxu0 0
      %509 = vmatpush1.bf16.msra.mxu0 0
      %510 = vmatprep.subr.bf16.mxu0 0
      %511 = vmatpush1.bf16.msra.mxu0 0
      %512 = vmatprep.subr.bf16.mxu0 0
      %513 = vmatpush1.bf16.msra.mxu0 0
      %514 = vmatprep.subr.bf16.mxu0 0
      %515 = vmatpush1.bf16.msra.mxu0 0
      %516 = vmatprep.subr.bf16.mxu0 0
      %517 = vmatpush1.bf16.msra.mxu0 0
      %518 = vmatprep.mubr.bf16.mxu0 0
      %519 = vmatmul.mubr.bf16.gmra.mrb[0].mxu0 %v484
      %v520 = vpop.f32.mrb[0].mxu0
      %v521 = vadd.f32 0.0, %v520
      %v522 = vpop.f32.mrb[0].mxu0
      %v523 = vpop.f32.mrb[0].mxu0
      %v524 = vpop.f32.mrb[0].mxu0
      %525 = vdwg.mxu0
      %v526 = vadd.f32 %v463, %v521
      %v527 = vld [vmem:[%s204 + $0x6] sm:$0x3f]
      %v528 = vpack.c.bf16 %v527, %v527
      %s529 = scalar_lea.vmem %s1, 80
      %v530 = vld [vmem:[%s529] sm:$0xf]
      %v531 = vld [vmem:[%s529 + $0x4] sm:$0xf]
      %v532 = vld [vmem:[%s529 + $0x8] sm:$0xf]
      %v533 = vld [vmem:[%s529 + $0xc] sm:$0xf]
      %v538 = vunpack.c.l.b16 %v530
      %v539 = vunpack.c.l.b16 %v531
      %v540 = vunpack.c.l.b16 %v532
      %v541 = vunpack.c.l.b16 %v533
      %v542 = vpack.c.b16 %v539, %v538
      %v543 = vpack.c.b16 %v541, %v540
      %v547 = vsel %vm239, %v528, 0
      %549 = vmatprep.subr.bf16.mxu0 0
      %550 = vmatpush1.bf16.msra.mxu0 %v542
      %551 = vmatprep.subr.bf16.mxu0 0
      %552 = vmatpush1.bf16.msra.mxu0 %v543
      %553 = vmatprep.subr.bf16.mxu0 0
      %554 = vmatpush1.bf16.msra.mxu0 0
      %555 = vmatprep.subr.bf16.mxu0 0
      %556 = vmatpush1.bf16.msra.mxu0 0
      %557 = vmatprep.subr.bf16.mxu0 0
      %558 = vmatpush1.bf16.msra.mxu0 0
      %559 = vmatprep.subr.bf16.mxu0 0
      %560 = vmatpush1.bf16.msra.mxu0 0
      %561 = vmatprep.subr.bf16.mxu0 0
      %562 = vmatpush1.bf16.msra.mxu0 0
      %563 = vmatprep.subr.bf16.mxu0 0
      %564 = vmatpush1.bf16.msra.mxu0 0
      %565 = vmatprep.subr.bf16.mxu0 0
      %566 = vmatpush1.bf16.msra.mxu0 0
      %567 = vmatprep.subr.bf16.mxu0 0
      %568 = vmatpush1.bf16.msra.mxu0 0
      %569 = vmatprep.subr.bf16.mxu0 0
      %570 = vmatpush1.bf16.msra.mxu0 0
      %571 = vmatprep.subr.bf16.mxu0 0
      %572 = vmatpush1.bf16.msra.mxu0 0
      %573 = vmatprep.subr.bf16.mxu0 0
      %574 = vmatpush1.bf16.msra.mxu0 0
      %575 = vmatprep.subr.bf16.mxu0 0
      %576 = vmatpush1.bf16.msra.mxu0 0
      %577 = vmatprep.subr.bf16.mxu0 0
      %578 = vmatpush1.bf16.msra.mxu0 0
      %579 = vmatprep.subr.bf16.mxu0 0
      %580 = vmatpush1.bf16.msra.mxu0 0
      %581 = vmatprep.mubr.bf16.mxu0 0
      %582 = vmatmul.mubr.bf16.gmra.mrb[0].mxu0 %v547
      %v583 = vpop.f32.mrb[0].mxu0
      %v584 = vadd.f32 0.0, %v583
      %v585 = vpop.f32.mrb[0].mxu0
      %v586 = vpop.f32.mrb[0].mxu0
      %v587 = vpop.f32.mrb[0].mxu0
      %588 = vdwg.mxu0
      %v589 = vadd.f32 %v526, %v584
      %v590 = vld [vmem:[%s204 + $0x8] sm:$0x3f]
      %v591 = vpack.c.bf16 %v590, %v590
      %s592 = scalar_lea.vmem %s1, 96
      %v593 = vld [vmem:[%s592] sm:$0xf]
      %v594 = vld [vmem:[%s592 + $0x4] sm:$0xf]
      %v595 = vld [vmem:[%s592 + $0x8] sm:$0xf]
      %v596 = vld [vmem:[%s592 + $0xc] sm:$0xf]
      %v601 = vunpack.c.l.b16 %v593
      %v602 = vunpack.c.l.b16 %v594
      %v603 = vunpack.c.l.b16 %v595
      %v604 = vunpack.c.l.b16 %v596
      %v605 = vpack.c.b16 %v602, %v601
      %v606 = vpack.c.b16 %v604, %v603
      %v610 = vsel %vm239, %v591, 0
      %612 = vmatprep.subr.bf16.mxu0 0
      %613 = vmatpush1.bf16.msra.mxu0 %v605
      %614 = vmatprep.subr.bf16.mxu0 0
      %615 = vmatpush1.bf16.msra.mxu0 %v606
      %616 = vmatprep.subr.bf16.mxu0 0
      %617 = vmatpush1.bf16.msra.mxu0 0
      %618 = vmatprep.subr.bf16.mxu0 0
      %619 = vmatpush1.bf16.msra.mxu0 0
      %620 = vmatprep.subr.bf16.mxu0 0
      %621 = vmatpush1.bf16.msra.mxu0 0
      %622 = vmatprep.subr.bf16.mxu0 0
      %623 = vmatpush1.bf16.msra.mxu0 0
      %624 = vmatprep.subr.bf16.mxu0 0
      %625 = vmatpush1.bf16.msra.mxu0 0
      %626 = vmatprep.subr.bf16.mxu0 0
      %627 = vmatpush1.bf16.msra.mxu0 0
      %628 = vmatprep.subr.bf16.mxu0 0
      %629 = vmatpush1.bf16.msra.mxu0 0
      %630 = vmatprep.subr.bf16.mxu0 0
      %631 = vmatpush1.bf16.msra.mxu0 0
      %632 = vmatprep.subr.bf16.mxu0 0
      %633 = vmatpush1.bf16.msra.mxu0 0
      %634 = vmatprep.subr.bf16.mxu0 0
      %635 = vmatpush1.bf16.msra.mxu0 0
      %636 = vmatprep.subr.bf16.mxu0 0
      %637 = vmatpush1.bf16.msra.mxu0 0
      %638 = vmatprep.subr.bf16.mxu0 0
      %639 = vmatpush1.bf16.msra.mxu0 0
      %640 = vmatprep.subr.bf16.mxu0 0
      %641 = vmatpush1.bf16.msra.mxu0 0
      %642 = vmatprep.subr.bf16.mxu0 0
      %643 = vmatpush1.bf16.msra.mxu0 0
      %644 = vmatprep.mubr.bf16.mxu0 0
      %645 = vmatmul.mubr.bf16.gmra.mrb[0].mxu0 %v610
      %v646 = vpop.f32.mrb[0].mxu0
      %v647 = vadd.f32 0.0, %v646
      %v648 = vpop.f32.mrb[0].mxu0
      %v649 = vpop.f32.mrb[0].mxu0
      %v650 = vpop.f32.mrb[0].mxu0
      %651 = vdwg.mxu0
      %v652 = vadd.f32 %v589, %v647
      %v653 = vld [vmem:[%s204 + $0x9] sm:$0x3f]
      %v654 = vpack.c.bf16 %v653, %v653
      %s655 = scalar_lea.vmem %s1, 112
      %v656 = vld [vmem:[%s655] sm:$0xf]
      %v657 = vld [vmem:[%s655 + $0x4] sm:$0xf]
      %v658 = vld [vmem:[%s655 + $0x8] sm:$0xf]
      %v659 = vld [vmem:[%s655 + $0xc] sm:$0xf]
      %v664 = vunpack.c.l.b16 %v656
      %v665 = vunpack.c.l.b16 %v657
      %v666 = vunpack.c.l.b16 %v658
      %v667 = vunpack.c.l.b16 %v659
      %v668 = vpack.c.b16 %v665, %v664
      %v669 = vpack.c.b16 %v667, %v666
      %v673 = vsel %vm239, %v654, 0
      %675 = vmatprep.subr.bf16.mxu0 0
      %676 = vmatpush1.bf16.msra.mxu0 %v668
      %677 = vmatprep.subr.bf16.mxu0 0
      %678 = vmatpush1.bf16.msra.mxu0 %v669
      %679 = vmatprep.subr.bf16.mxu0 0
      %680 = vmatpush1.bf16.msra.mxu0 0
      %681 = vmatprep.subr.bf16.mxu0 0
      %682 = vmatpush1.bf16.msra.mxu0 0
      %683 = vmatprep.subr.bf16.mxu0 0
      %684 = vmatpush1.bf16.msra.mxu0 0
      %685 = vmatprep.subr.bf16.mxu0 0
      %686 = vmatpush1.bf16.msra.mxu0 0
      %687 = vmatprep.subr.bf16.mxu0 0
      %688 = vmatpush1.bf16.msra.mxu0 0
      %689 = vmatprep.subr.bf16.mxu0 0
      %690 = vmatpush1.bf16.msra.mxu0 0
      %691 = vmatprep.subr.bf16.mxu0 0
      %692 = vmatpush1.bf16.msra.mxu0 0
      %693 = vmatprep.subr.bf16.mxu0 0
      %694 = vmatpush1.bf16.msra.mxu0 0
      %695 = vmatprep.subr.bf16.mxu0 0
      %696 = vmatpush1.bf16.msra.mxu0 0
      %697 = vmatprep.subr.bf16.mxu0 0
      %698 = vmatpush1.bf16.msra.mxu0 0
      %699 = vmatprep.subr.bf16.mxu0 0
      %700 = vmatpush1.bf16.msra.mxu0 0
      %701 = vmatprep.subr.bf16.mxu0 0
      %702 = vmatpush1.bf16.msra.mxu0 0
      %703 = vmatprep.subr.bf16.mxu0 0
      %704 = vmatpush1.bf16.msra.mxu0 0
      %705 = vmatprep.subr.bf16.mxu0 0
      %706 = vmatpush1.bf16.msra.mxu0 0
      %707 = vmatprep.mubr.bf16.mxu0 0
      %708 = vmatmul.mubr.bf16.gmra.mrb[0].mxu0 %v673
      %v709 = vpop.f32.mrb[0].mxu0
      %v710 = vadd.f32 0.0, %v709
      %v711 = vpop.f32.mrb[0].mxu0
      %v712 = vpop.f32.mrb[0].mxu0
      %v713 = vpop.f32.mrb[0].mxu0
      %714 = vdwg.mxu0
      %v715 = vadd.f32 %v652, %v710
      %v716 = vld [vmem:[%s204 + $0xa] sm:$0x3f]
      %v717 = vpack.c.bf16 %v716, %v716
      %s718 = scalar_lea.vmem %s1, 128
      %v719 = vld [vmem:[%s718] sm:$0xf]
      %v720 = vld [vmem:[%s718 + $0x4] sm:$0xf]
      %v721 = vld [vmem:[%s718 + $0x8] sm:$0xf]
      %v722 = vld [vmem:[%s718 + $0xc] sm:$0xf]
      %v727 = vunpack.c.l.b16 %v719
      %v728 = vunpack.c.l.b16 %v720
      %v729 = vunpack.c.l.b16 %v721
      %v730 = vunpack.c.l.b16 %v722
      %v731 = vpack.c.b16 %v728, %v727
      %v732 = vpack.c.b16 %v730, %v729
      %v736 = vsel %vm239, %v717, 0
      %738 = vmatprep.subr.bf16.mxu0 0
      %739 = vmatpush1.bf16.msra.mxu0 %v731
      %740 = vmatprep.subr.bf16.mxu0 0
      %741 = vmatpush1.bf16.msra.mxu0 %v732
      %742 = vmatprep.subr.bf16.mxu0 0
      %743 = vmatpush1.bf16.msra.mxu0 0
      %744 = vmatprep.subr.bf16.mxu0 0
      %745 = vmatpush1.bf16.msra.mxu0 0
      %746 = vmatprep.subr.bf16.mxu0 0
      %747 = vmatpush1.bf16.msra.mxu0 0
      %748 = vmatprep.subr.bf16.mxu0 0
      %749 = vmatpush1.bf16.msra.mxu0 0
      %750 = vmatprep.subr.bf16.mxu0 0
      %751 = vmatpush1.bf16.msra.mxu0 0
      %752 = vmatprep.subr.bf16.mxu0 0
      %753 = vmatpush1.bf16.msra.mxu0 0
      %754 = vmatprep.subr.bf16.mxu0 0
      %755 = vmatpush1.bf16.msra.mxu0 0
      %756 = vmatprep.subr.bf16.mxu0 0
      %757 = vmatpush1.bf16.msra.mxu0 0
      %758 = vmatprep.subr.bf16.mxu0 0
      %759 = vmatpush1.bf16.msra.mxu0 0
      %760 = vmatprep.subr.bf16.mxu0 0
      %761 = vmatpush1.bf16.msra.mxu0 0
      %762 = vmatprep.subr.bf16.mxu0 0
      %763 = vmatpush1.bf16.msra.mxu0 0
      %764 = vmatprep.subr.bf16.mxu0 0
      %765 = vmatpush1.bf16.msra.mxu0 0
      %766 = vmatprep.subr.bf16.mxu0 0
      %767 = vmatpush1.bf16.msra.mxu0 0
      %768 = vmatprep.subr.bf16.mxu0 0
      %769 = vmatpush1.bf16.msra.mxu0 0
      %770 = vmatprep.mubr.bf16.mxu0 0
      %771 = vmatmul.mubr.bf16.gmra.mrb[0].mxu0 %v736
      %v772 = vpop.f32.mrb[0].mxu0
      %v773 = vadd.f32 0.0, %v772
      %v774 = vpop.f32.mrb[0].mxu0
      %v775 = vpop.f32.mrb[0].mxu0
      %v776 = vpop.f32.mrb[0].mxu0
      %777 = vdwg.mxu0
      %v778 = vadd.f32 %v715, %v773
      %v779 = vld [vmem:[%s2] sm:$0x1]
      %v781 = vlaneseq
      %v782 = vshrl.u32 %v781, 7
      %v783 = vsub.s32 0, %v782
      %v784 = vrot.slane %v779, %v783
      %v786 = vadd.f32 %v778, %v784
      %v787 = vmax.f32 %v786, 0.0
      %v788 = vand.u32 2147483647, %v786
      %v789 = vsub.f32 0.0, %v788
      %v790 = vmul.f32 %v789, 1.442695
      %v791 = vpow.pop %v790
      %v792 = vadd.f32 %v791, 1.0
      %v793 = vlog2.pop %v792
      %v794 = vmul.f32 %v793, 0.6931472
      %v795 = vmul.f32 -0.5, %v791
      %v796 = vadd.f32 %v795, 1.0
      %v797 = vmul.f32 %v796, %v791
      %v798 = vand.u32 2147483647, %v791
      %vm799 = vcmp.lt.f32.partialorder %v798, 0.0004427343
      %v800 = vsel %vm799, %v797, %v794
      %v801 = vadd.f32 %v787, %v800
      %v802 = vadd.f32 %v801, 1e-08
      %v803 = vld [vmem:[%s208] sm:$0x3f]
      %v804 = vmul.f32 %v802, 0.5
      %v805 = vmul.f32 %v804, 1.442695
      %v806 = vpow.pop %v805
      %808 = vrot.lane.b32.xlu0 %v806, 120
      %v809 = vpop.permute.xlu0 %808
      %v811 = vmul.f32 %v803, %v809
      %v812 = vadd.f32 %v811, %v786
      %814 = vrot.lane.b32.xlu0 %v812, 16
      %v815 = vpop.permute.xlu0 %814
      %vm817 = vcmask 64512
      %v818 = vsel %vm817, %v786, %v802
      %vm819 = vcmask 130048
      %v820 = vsel %vm819, %v818, %v815
      %vm821 = vcmask 193536
      %822 = vst.msk [vmem:[%s212] sm:$0x3f] %vm821, %v820
      %p823 = scmp.lt.s32.totalorder %s15, 1
      %s824 = scalar_select %p823, %s15, 1
      %s825 = smul.addr %s824, 8
      %s826 = scalar_lea.vmem %s4, %s825
      // Predicated region
      $region37: #{_lambda_.12} parent=35 // pred_check
        %p827 = pneg %p127
      $region38: #{_lambda_.12} parent=35 // pred_check_branch
        %829 = sbr.rel (%p827) target = $region40
      $region39: #{_lambda_.12} parent=35 // pred_region
        _
      $region40: #{_lambda_.12} parent=35 // pred_fallthru
        _
    $region36: #{_lambda_.12} parent=5 // pred_fallthru
      _
    %p830 = scmp.le.s32.totalorder 2, %s10
    // Predicated region
    $region41: #{_lambda_.12} parent=5 // pred_check
      %p831 = pneg %p830
    $region42: #{_lambda_.12} parent=5 // pred_check_branch
      %833 = sbr.rel (%p831) target = $region44
    $region43: #{_lambda_.12} parent=5 // pred_region
      %s834 = ssub.s32 %s10, 2
      // Predicated region
      $region45: #{_lambda_.12} parent=43 // pred_check
        %p835 = pneg %p133
      $region46: #{_lambda_.12} parent=43 // pred_check_branch
        %837 = sbr.rel (%p835) target = $region48
      $region47: #{_lambda_.12} parent=43 // pred_region
        %p838 = scmp.lt.s32.totalorder %s16, 1
        %s839 = scalar_select %p838, %s16, 1
        %s840 = smul.addr %s839, 8
        %s841 = scalar_lea.vmem %s4, %s840
      $region48: #{_lambda_.12} parent=43 // pred_fallthru
        _
    $region44: #{_lambda_.12} parent=5 // pred_fallthru
      _
  $region6: #{_lambda_.12} parent=0 // loop_footer
    %s14 = sadd.s32 1, %s10
  $region7: #{_lambda_.12} parent=0 // loop_footer_branch
    %9 = sbr.rel target = $region3
  $region8: #{_lambda_.12} parent=0 // loop_exit
    _

// kernel: _lambda_.15
$region0: #{_lambda_.15}
  #allocation0 [shape = 'u32[]', space=smem, size = 0x4, offset = 0x4, fixed_abs, tag = 'smem constant byte address 0x4 - core index']
  #allocation1 [shape = 'u32[144,128]{1,0:T(1,128)}', space=vmem, size = 0x12000, scoped, tag = 'internal scratch']
  %s0 = inlined_call_operand.vmem [shape: f32[2,9,16], index: 0, kind: input, shape index: {}]
  %s1 = inlined_call_operand.vmem [shape: bf16[9,16,16], index: 1, kind: input, shape index: {}]
  %s2 = inlined_call_operand.vmem [shape: f32[1,64], index: 2, kind: input, shape index: {}]
  %s3 = inlined_call_operand.vmem [shape: f32[2,5,64], index: 3, kind: output, shape index: {}]
  %s4 = sld [smem:[#allocation0]]
  $region45: #{_lambda_.15} parent=0
    _
  %s6 = ssub.s32 1, %s4
  %s7 = scalar_select 0, %s6, %s4
  loop: start=0, step=1, limit=4
  $region2: #{_lambda_.15} parent=0 // loop_pre_header
    _
  $region3: #{_lambda_.15} parent=0 // loop_header
    %s9 = sphi 0, %s13
    %p10 = scmp.ge.s32.totalorder %s9, 4
    %s19 = sphi 0, %s21
    %s22 = sphi 0, %s19
    %s23 = sphi 0, %s22
    %s39 = sphi 0, %s23
    %s43 = sphi 0, %s43
    %s45 = sphi 0, %s43
    %s46 = sphi 0, %s45
    %s60 = sphi 0, %s46
    %s64 = sphi 0, %s64
    %s66 = sphi 0, %s64
    %s67 = sphi 0, %s66
    %s81 = sphi 0, %s67
    %s87 = sphi 0, %s89
    %s90 = sphi 0, %s87
    %s91 = sphi 0, %s90
    %s107 = sphi 0, %s91
  $region4: #{_lambda_.15} parent=0 // loop_header_branch
    %12 = sbr.rel (%p10) target = $region8
  $region5: #{_lambda_.15} parent=0 // loop_body
    %s14 = ssub.s32 %s9, 1
    %s15 = ssub.s32 %s9, 2
    %s16 = sadd.s32 %s9, 1
    %s17 = ssub.s32 %s9, %s16
    %p18 = scmp.eq.s32.totalorder %s17, 0
    %s20 = sadd.s32 %s19, 1
    %s21 = scalar_select %p18, %s19, %s20
    %p24 = pneg %p18
    %p25 = scmp.eq.s32.totalorder %s9, 1
    %p26 = por %p24, %p25
    %p27 = scmp.ne.s32.totalorder %s19, %s22
    %p28 = scmp.eq.s32.totalorder %s9, 0
    %p29 = por %p27, %p28
    %p30 = scmp.ne.s32.totalorder %s19, %s22
    %p31 = scmp.eq.s32.totalorder %s14, 1
    %p32 = por %p30, %p31
    %p33 = scmp.ne.s32.totalorder %s22, %s23
    %p34 = scmp.eq.s32.totalorder %s14, 0
    %p35 = por %p33, %p34
    %p36 = scmp.ne.s32.totalorder %s22, %s23
    %p37 = scmp.eq.s32.totalorder %s15, 1
    %p38 = por %p36, %p37
    %p40 = scmp.ne.s32.totalorder %s23, %s39
    %p41 = scmp.eq.s32.totalorder %s15, 0
    %p42 = por %p40, %p41
    %s44 = sadd.s32 %s43, 1
    %p47 = scmp.eq.s32.totalorder %s9, 1
    %p48 = scmp.ne.s32.totalorder %s43, %s45
    %p49 = scmp.eq.s32.totalorder %s9, 0
    %p50 = por %p48, %p49
    %p51 = scmp.ne.s32.totalorder %s43, %s45
    %p52 = scmp.eq.s32.totalorder %s14, 1
    %p53 = por %p51, %p52
    %p54 = scmp.ne.s32.totalorder %s45, %s46
    %p55 = scmp.eq.s32.totalorder %s14, 0
    %p56 = por %p54, %p55
    %p57 = scmp.ne.s32.totalorder %s45, %s46
    %p58 = scmp.eq.s32.totalorder %s15, 1
    %p59 = por %p57, %p58
    %p61 = scmp.ne.s32.totalorder %s46, %s60
    %p62 = scmp.eq.s32.totalorder %s15, 0
    %p63 = por %p61, %p62
    %s65 = sadd.s32 %s64, 1
    %p68 = scmp.eq.s32.totalorder %s9, 1
    %p69 = scmp.ne.s32.totalorder %s64, %s66
    %p70 = scmp.eq.s32.totalorder %s9, 0
    %p71 = por %p69, %p70
    %p72 = scmp.ne.s32.totalorder %s64, %s66
    %p73 = scmp.eq.s32.totalorder %s14, 1
    %p74 = por %p72, %p73
    %p75 = scmp.ne.s32.totalorder %s66, %s67
    %p76 = scmp.eq.s32.totalorder %s14, 0
    %p77 = por %p75, %p76
    %p78 = scmp.ne.s32.totalorder %s66, %s67
    %p79 = scmp.eq.s32.totalorder %s15, 1
    %p80 = por %p78, %p79
    %p82 = scmp.ne.s32.totalorder %s67, %s81
    %p83 = scmp.eq.s32.totalorder %s15, 0
    %p84 = por %p82, %p83
    %s85 = ssub.s32 %s9, %s16
    %p86 = scmp.eq.s32.totalorder %s85, 0
    %s88 = sadd.s32 %s87, 1
    %s89 = scalar_select %p86, %s87, %s88
    %p92 = pneg %p86
    %p93 = scmp.eq.s32.totalorder %s9, 1
    %p94 = por %p92, %p93
    %p95 = scmp.ne.s32.totalorder %s87, %s90
    %p96 = scmp.eq.s32.totalorder %s9, 0
    %p97 = por %p95, %p96
    %p98 = scmp.ne.s32.totalorder %s87, %s90
    %p99 = scmp.eq.s32.totalorder %s14, 1
    %p100 = por %p98, %p99
    %p101 = scmp.ne.s32.totalorder %s90, %s91
    %p102 = scmp.eq.s32.totalorder %s14, 0
    %p103 = por %p101, %p102
    %p104 = scmp.ne.s32.totalorder %s90, %s91
    %p105 = scmp.eq.s32.totalorder %s15, 1
    %p106 = por %p104, %p105
    %p108 = scmp.ne.s32.totalorder %s91, %s107
    %p109 = scmp.eq.s32.totalorder %s15, 0
    %p110 = por %p108, %p109
    %p111 = scmp.le.s32.totalorder 1, %s9
    %p112 = scmp.lt.s32.totalorder %s9, 3
    %p113 = pnand %p111, %p112
    %p114 = pneg %p113
    // Predicated region
    $region9: #{_lambda_.15} parent=5 // pred_check
      _
    $region10: #{_lambda_.15} parent=5 // pred_check_branch
      %116 = sbr.rel (%p113) target = $region12
    $region11: #{_lambda_.15} parent=5 // pred_region
      %s117 = ssub.s32 %s9, 1
      // Predicated region
      $region13: #{_lambda_.15} parent=11 // pred_check
        %p118 = pneg %p56
      $region14: #{_lambda_.15} parent=11 // pred_check_branch
        %120 = sbr.rel (%p118) target = $region16
      $region15: #{_lambda_.15} parent=11 // pred_region
        _
      $region16: #{_lambda_.15} parent=11 // pred_fallthru
        _
      // Predicated region
      $region17: #{_lambda_.15} parent=11 // pred_check
        %p121 = pneg %p77
      $region18: #{_lambda_.15} parent=11 // pred_check_branch
        %123 = sbr.rel (%p121) target = $region20
      $region19: #{_lambda_.15} parent=11 // pred_region
        _
      $region20: #{_lambda_.15} parent=11 // pred_fallthru
        _
    $region12: #{_lambda_.15} parent=5 // pred_fallthru
      _
    %p124 = scmp.lt.s32.totalorder %s9, 2
    // Predicated region
    $region21: #{_lambda_.15} parent=5 // pred_check
      %p125 = pneg %p124
    $region22: #{_lambda_.15} parent=5 // pred_check_branch
      %127 = sbr.rel (%p125) target = $region24
    $region23: #{_lambda_.15} parent=5 // pred_region
      // Predicated region
      $region25: #{_lambda_.15} parent=23 // pred_check
        %p128 = pneg %p29
      $region26: #{_lambda_.15} parent=23 // pred_check_branch
        %130 = sbr.rel (%p128) target = $region28
      $region27: #{_lambda_.15} parent=23 // pred_region
        %p131 = scmp.lt.s32.totalorder %s9, 1
        %s132 = scalar_select %p131, %s9, 1
        %s133 = smul.addr %s132, 2
        %s134 = smul.addr %s133, 8
        %s135 = scalar_lea.vmem %s0, %s134
      $region28: #{_lambda_.15} parent=23 // pred_fallthru
        _
    $region24: #{_lambda_.15} parent=5 // pred_fallthru
      _
    %p136 = scmp.le.s32.totalorder 1, %s9
    %p137 = scmp.lt.s32.totalorder %s9, 3
    %p138 = pnand %p136, %p137
    %p139 = pneg %p138
    // Predicated region
    $region29: #{_lambda_.15} parent=5 // pred_check
      _
    $region30: #{_lambda_.15} parent=5 // pred_check_branch
      %141 = sbr.rel (%p138) target = $region32
    $region31: #{_lambda_.15} parent=5 // pred_region
      %s142 = ssub.s32 %s9, 1
      %p143 = scmp.lt.s32.totalorder %s14, 1
      %s144 = scalar_select %p143, %s14, 1
      %s145 = smul.addr %s144, 2
      %s146 = smul.addr %s145, 8
      %s147 = scalar_lea.vmem %s0, %s146
      %p148 = pneg %p35
      %p149 = pneg %p32
      %p150 = pneg %p56
      %p151 = pneg %p53
      %p152 = pneg %p77
      %p153 = pneg %p74
      %p154 = pneg %p103
      %p155 = pneg %p100
      %p156 = scmp.lt.s32.totalorder %s14, 1
      %s157 = scalar_select %p156, %s14, 1
      %s158 = smul.addr %s157, 8
      %s159 = scalar_lea.vmem %s3, %s158
      %p160 = scmp.lt.s32.totalorder %s14, 1
      %s161 = scalar_select %p160, %s14, 1
      %s162 = smul.addr %s161, 2
      %s163 = smul.addr %s162, 8
      %s164 = scalar_lea.vmem %s0, %s163
      %p165 = scmp.lt.s32.totalorder %s14, 1
      %s166 = scalar_select %p165, %s14, 1
      %s167 = smul.addr %s166, 8
      %s168 = scalar_lea.vmem %s3, %s167
      %v170 = vld [vmem:[%s164] sm:$0x1f]
      %v171 = vpack.c.bf16 %v170, %v170
      %v172 = vld [vmem:[%s1] sm:$0xf]
      %v173 = vld [vmem:[%s1 + $0x4] sm:$0xf]
      %v176 = vunpack.c.l.b16 %v172
      %v177 = vunpack.c.l.b16 %v173
      %v178 = vpack.c.b16 %v177, %v176
      %vm180 = vcmask 130048
      %v182 = vsel %vm180, %v171, 0
      %184 = vmatprep.subr.bf16.mxu0 0
      %185 = vmatpush1.bf16.msra.mxu0 %v178
      %186 = vmatprep.subr.bf16.mxu0 0
      %187 = vmatpush1.bf16.msra.mxu0 0
      %188 = vmatprep.subr.bf16.mxu0 0
      %189 = vmatpush1.bf16.msra.mxu0 0
      %190 = vmatprep.subr.bf16.mxu0 0
      %191 = vmatpush1.bf16.msra.mxu0 0
      %192 = vmatprep.subr.bf16.mxu0 0
      %193 = vmatpush1.bf16.msra.mxu0 0
      %194 = vmatprep.subr.bf16.mxu0 0
      %195 = vmatpush1.bf16.msra.mxu0 0
      %196 = vmatprep.subr.bf16.mxu0 0
      %197 = vmatpush1.bf16.msra.mxu0 0
      %198 = vmatprep.subr.bf16.mxu0 0
      %199 = vmatpush1.bf16.msra.mxu0 0
      %200 = vmatprep.subr.bf16.mxu0 0
      %201 = vmatpush1.bf16.msra.mxu0 0
      %202 = vmatprep.subr.bf16.mxu0 0
      %203 = vmatpush1.bf16.msra.mxu0 0
      %204 = vmatprep.subr.bf16.mxu0 0
      %205 = vmatpush1.bf16.msra.mxu0 0
      %206 = vmatprep.subr.bf16.mxu0 0
      %207 = vmatpush1.bf16.msra.mxu0 0
      %208 = vmatprep.subr.bf16.mxu0 0
      %209 = vmatpush1.bf16.msra.mxu0 0
      %210 = vmatprep.subr.bf16.mxu0 0
      %211 = vmatpush1.bf16.msra.mxu0 0
      %212 = vmatprep.subr.bf16.mxu0 0
      %213 = vmatpush1.bf16.msra.mxu0 0
      %214 = vmatprep.subr.bf16.mxu0 0
      %215 = vmatpush1.bf16.msra.mxu0 0
      %216 = vmatprep.mubr.bf16.mxu0 0
      %217 = vmatmul.mubr.bf16.gmra.mrb[0].mxu0 %v182
      %v218 = vpop.f32.mrb[0].mxu0
      %v219 = vadd.f32 0.0, %v218
      %v220 = vpop.f32.mrb[0].mxu0
      %v221 = vpop.f32.mrb[0].mxu0
      %v222 = vpop.f32.mrb[0].mxu0
      %223 = vdwg.mxu0
      %s224 = scalar_lea.vmem %s1, 8
      %v225 = vld [vmem:[%s224] sm:$0xf]
      %v226 = vld [vmem:[%s224 + $0x4] sm:$0xf]
      %v227 = vld [vmem:[%s164 + $0x1] sm:$0x1f]
      %v228 = vpack.c.bf16 %v227, %v227
      %s229 = scalar_lea.vmem %s1, 16
      %v230 = vld [vmem:[%s229] sm:$0xf]
      %v231 = vld [vmem:[%s229 + $0x4] sm:$0xf]
      %v234 = vunpack.c.l.b16 %v230
      %v235 = vunpack.c.l.b16 %v231
      %v236 = vpack.c.b16 %v235, %v234
      %v239 = vsel %vm180, %v228, 0
      %241 = vmatprep.subr.bf16.mxu0 0
      %242 = vmatpush1.bf16.msra.mxu0 %v236
      %243 = vmatprep.subr.bf16.mxu0 0
      %244 = vmatpush1.bf16.msra.mxu0 0
      %245 = vmatprep.subr.bf16.mxu0 0
      %246 = vmatpush1.bf16.msra.mxu0 0
      %247 = vmatprep.subr.bf16.mxu0 0
      %248 = vmatpush1.bf16.msra.mxu0 0
      %249 = vmatprep.subr.bf16.mxu0 0
      %250 = vmatpush1.bf16.msra.mxu0 0
      %251 = vmatprep.subr.bf16.mxu0 0
      %252 = vmatpush1.bf16.msra.mxu0 0
      %253 = vmatprep.subr.bf16.mxu0 0
      %254 = vmatpush1.bf16.msra.mxu0 0
      %255 = vmatprep.subr.bf16.mxu0 0
      %256 = vmatpush1.bf16.msra.mxu0 0
      %257 = vmatprep.subr.bf16.mxu0 0
      %258 = vmatpush1.bf16.msra.mxu0 0
      %259 = vmatprep.subr.bf16.mxu0 0
      %260 = vmatpush1.bf16.msra.mxu0 0
      %261 = vmatprep.subr.bf16.mxu0 0
      %262 = vmatpush1.bf16.msra.mxu0 0
      %263 = vmatprep.subr.bf16.mxu0 0
      %264 = vmatpush1.bf16.msra.mxu0 0
      %265 = vmatprep.subr.bf16.mxu0 0
      %266 = vmatpush1.bf16.msra.mxu0 0
      %267 = vmatprep.subr.bf16.mxu0 0
      %268 = vmatpush1.bf16.msra.mxu0 0
      %269 = vmatprep.subr.bf16.mxu0 0
      %270 = vmatpush1.bf16.msra.mxu0 0
      %271 = vmatprep.subr.bf16.mxu0 0
      %272 = vmatpush1.bf16.msra.mxu0 0
      %273 = vmatprep.mubr.bf16.mxu0 0
      %274 = vmatmul.mubr.bf16.gmra.mrb[0].mxu0 %v239
      %v275 = vpop.f32.mrb[0].mxu0
      %v276 = vadd.f32 0.0, %v275
      %v277 = vpop.f32.mrb[0].mxu0
      %v278 = vpop.f32.mrb[0].mxu0
      %v279 = vpop.f32.mrb[0].mxu0
      %280 = vdwg.mxu0
      %v283 = vunpack.c.l.b16 %v225
      %v284 = vunpack.c.l.b16 %v226
      %v285 = vpack.c.b16 %v284, %v283
      %287 = vmatprep.subr.bf16.mxu0 0
      %288 = vmatpush1.bf16.msra.mxu0 %v285
      %289 = vmatprep.subr.bf16.mxu0 0
      %290 = vmatpush1.bf16.msra.mxu0 0
      %291 = vmatprep.subr.bf16.mxu0 0
      %292 = vmatpush1.bf16.msra.mxu0 0
      %293 = vmatprep.subr.bf16.mxu0 0
      %294 = vmatpush1.bf16.msra.mxu0 0
      %295 = vmatprep.subr.bf16.mxu0 0
      %296 = vmatpush1.bf16.msra.mxu0 0
      %297 = vmatprep.subr.bf16.mxu0 0
      %298 = vmatpush1.bf16.msra.mxu0 0
      %299 = vmatprep.subr.bf16.mxu0 0
      %300 = vmatpush1.bf16.msra.mxu0 0
      %301 = vmatprep.subr.bf16.mxu0 0
      %302 = vmatpush1.bf16.msra.mxu0 0
      %303 = vmatprep.subr.bf16.mxu0 0
      %304 = vmatpush1.bf16.msra.mxu0 0
      %305 = vmatprep.subr.bf16.mxu0 0
      %306 = vmatpush1.bf16.msra.mxu0 0
      %307 = vmatprep.subr.bf16.mxu0 0
      %308 = vmatpush1.bf16.msra.mxu0 0
      %309 = vmatprep.subr.bf16.mxu0 0
      %310 = vmatpush1.bf16.msra.mxu0 0
      %311 = vmatprep.subr.bf16.mxu0 0
      %312 = vmatpush1.bf16.msra.mxu0 0
      %313 = vmatprep.subr.bf16.mxu0 0
      %314 = vmatpush1.bf16.msra.mxu0 0
      %315 = vmatprep.subr.bf16.mxu0 0
      %316 = vmatpush1.bf16.msra.mxu0 0
      %317 = vmatprep.subr.bf16.mxu0 0
      %318 = vmatpush1.bf16.msra.mxu0 0
      %319 = vmatprep.mubr.bf16.mxu0 0
      %320 = vmatmul.mubr.bf16.gmra.mrb[0].mxu0 %v182
      %v321 = vpop.f32.mrb[0].mxu0
      %v322 = vadd.f32 %v276, %v321
      %v323 = vpop.f32.mrb[0].mxu0
      %v324 = vpop.f32.mrb[0].mxu0
      %v325 = vpop.f32.mrb[0].mxu0
      %326 = vdwg.mxu0
      %s327 = scalar_lea.vmem %s1, 24
      %v328 = vld [vmem:[%s327] sm:$0xf]
      %v329 = vld [vmem:[%s327 + $0x4] sm:$0xf]
      %v330 = vld [vmem:[%s164 + $0x3] sm:$0x1f]
      %v331 = vpack.c.bf16 %v330, %v330
      %s332 = scalar_lea.vmem %s1, 32
      %v333 = vld [vmem:[%s332] sm:$0xf]
      %v334 = vld [vmem:[%s332 + $0x4] sm:$0xf]
      %v337 = vunpack.c.l.b16 %v333
      %v338 = vunpack.c.l.b16 %v334
      %v339 = vpack.c.b16 %v338, %v337
      %v342 = vsel %vm180, %v331, 0
      %344 = vmatprep.subr.bf16.mxu0 0
      %345 = vmatpush1.bf16.msra.mxu0 %v339
      %346 = vmatprep.subr.bf16.mxu0 0
      %347 = vmatpush1.bf16.msra.mxu0 0
      %348 = vmatprep.subr.bf16.mxu0 0
      %349 = vmatpush1.bf16.msra.mxu0 0
      %350 = vmatprep.subr.bf16.mxu0 0
      %351 = vmatpush1.bf16.msra.mxu0 0
      %352 = vmatprep.subr.bf16.mxu0 0
      %353 = vmatpush1.bf16.msra.mxu0 0
      %354 = vmatprep.subr.bf16.mxu0 0
      %355 = vmatpush1.bf16.msra.mxu0 0
      %356 = vmatprep.subr.bf16.mxu0 0
      %357 = vmatpush1.bf16.msra.mxu0 0
      %358 = vmatprep.subr.bf16.mxu0 0
      %359 = vmatpush1.bf16.msra.mxu0 0
      %360 = vmatprep.subr.bf16.mxu0 0
      %361 = vmatpush1.bf16.msra.mxu0 0
      %362 = vmatprep.subr.bf16.mxu0 0
      %363 = vmatpush1.bf16.msra.mxu0 0
      %364 = vmatprep.subr.bf16.mxu0 0
      %365 = vmatpush1.bf16.msra.mxu0 0
      %366 = vmatprep.subr.bf16.mxu0 0
      %367 = vmatpush1.bf16.msra.mxu0 0
      %368 = vmatprep.subr.bf16.mxu0 0
      %369 = vmatpush1.bf16.msra.mxu0 0
      %370 = vmatprep.subr.bf16.mxu0 0
      %371 = vmatpush1.bf16.msra.mxu0 0
      %372 = vmatprep.subr.bf16.mxu0 0
      %373 = vmatpush1.bf16.msra.mxu0 0
      %374 = vmatprep.subr.bf16.mxu0 0
      %375 = vmatpush1.bf16.msra.mxu0 0
      %376 = vmatprep.mubr.bf16.mxu0 0
      %377 = vmatmul.mubr.bf16.gmra.mrb[0].mxu0 %v342
      %v378 = vpop.f32.mrb[0].mxu0
      %v379 = vadd.f32 0.0, %v378
      %v380 = vpop.f32.mrb[0].mxu0
      %v381 = vpop.f32.mrb[0].mxu0
      %v382 = vpop.f32.mrb[0].mxu0
      %383 = vdwg.mxu0
      %v386 = vunpack.c.l.b16 %v328
      %v387 = vunpack.c.l.b16 %v329
      %v388 = vpack.c.b16 %v387, %v386
      %390 = vmatprep.subr.bf16.mxu0 0
      %391 = vmatpush1.bf16.msra.mxu0 %v388
      %392 = vmatprep.subr.bf16.mxu0 0
      %393 = vmatpush1.bf16.msra.mxu0 0
      %394 = vmatprep.subr.bf16.mxu0 0
      %395 = vmatpush1.bf16.msra.mxu0 0
      %396 = vmatprep.subr.bf16.mxu0 0
      %397 = vmatpush1.bf16.msra.mxu0 0
      %398 = vmatprep.subr.bf16.mxu0 0
      %399 = vmatpush1.bf16.msra.mxu0 0
      %400 = vmatprep.subr.bf16.mxu0 0
      %401 = vmatpush1.bf16.msra.mxu0 0
      %402 = vmatprep.subr.bf16.mxu0 0
      %403 = vmatpush1.bf16.msra.mxu0 0
      %404 = vmatprep.subr.bf16.mxu0 0
      %405 = vmatpush1.bf16.msra.mxu0 0
      %406 = vmatprep.subr.bf16.mxu0 0
      %407 = vmatpush1.bf16.msra.mxu0 0
      %408 = vmatprep.subr.bf16.mxu0 0
      %409 = vmatpush1.bf16.msra.mxu0 0
      %410 = vmatprep.subr.bf16.mxu0 0
      %411 = vmatpush1.bf16.msra.mxu0 0
      %412 = vmatprep.subr.bf16.mxu0 0
      %413 = vmatpush1.bf16.msra.mxu0 0
      %414 = vmatprep.subr.bf16.mxu0 0
      %415 = vmatpush1.bf16.msra.mxu0 0
      %416 = vmatprep.subr.bf16.mxu0 0
      %417 = vmatpush1.bf16.msra.mxu0 0
      %418 = vmatprep.subr.bf16.mxu0 0
      %419 = vmatpush1.bf16.msra.mxu0 0
      %420 = vmatprep.subr.bf16.mxu0 0
      %421 = vmatpush1.bf16.msra.mxu0 0
      %422 = vmatprep.mubr.bf16.mxu0 0
      %423 = vmatmul.mubr.bf16.gmra.mrb[0].mxu0 %v182
      %v424 = vpop.f32.mrb[0].mxu0
      %v425 = vadd.f32 %v379, %v424
      %v426 = vpop.f32.mrb[0].mxu0
      %v427 = vpop.f32.mrb[0].mxu0
      %v428 = vpop.f32.mrb[0].mxu0
      %429 = vdwg.mxu0
      %s430 = scalar_lea.vmem %s1, 40
      %v431 = vld [vmem:[%s430] sm:$0xf]
      %v432 = vld [vmem:[%s430 + $0x4] sm:$0xf]
      %s433 = scalar_lea.vmem %s1, 48
      %v434 = vld [vmem:[%s433] sm:$0xf]
      %v435 = vld [vmem:[%s433 + $0x4] sm:$0xf]
      %v438 = vunpack.c.l.b16 %v434
      %v439 = vunpack.c.l.b16 %v435
      %v440 = vpack.c.b16 %v439, %v438
      %442 = vmatprep.subr.bf16.mxu0 0
      %443 = vmatpush1.bf16.msra.mxu0 %v440
      %444 = vmatprep.subr.bf16.mxu0 0
      %445 = vmatpush1.bf16.msra.mxu0 0
      %446 = vmatprep.subr.bf16.mxu0 0
      %447 = vmatpush1.bf16.msra.mxu0 0
      %448 = vmatprep.subr.bf16.mxu0 0
      %449 = vmatpush1.bf16.msra.mxu0 0
      %450 = vmatprep.subr.bf16.mxu0 0
      %451 = vmatpush1.bf16.msra.mxu0 0
      %452 = vmatprep.subr.bf16.mxu0 0
      %453 = vmatpush1.bf16.msra.mxu0 0
      %454 = vmatprep.subr.bf16.mxu0 0
      %455 = vmatpush1.bf16.msra.mxu0 0
      %456 = vmatprep.subr.bf16.mxu0 0
      %457 = vmatpush1.bf16.msra.mxu0 0
      %458 = vmatprep.subr.bf16.mxu0 0
      %459 = vmatpush1.bf16.msra.mxu0 0
      %460 = vmatprep.subr.bf16.mxu0 0
      %461 = vmatpush1.bf16.msra.mxu0 0
      %462 = vmatprep.subr.bf16.mxu0 0
      %463 = vmatpush1.bf16.msra.mxu0 0
      %464 = vmatprep.subr.bf16.mxu0 0
      %465 = vmatpush1.bf16.msra.mxu0 0
      %466 = vmatprep.subr.bf16.mxu0 0
      %467 = vmatpush1.bf16.msra.mxu0 0
      %468 = vmatprep.subr.bf16.mxu0 0
      %469 = vmatpush1.bf16.msra.mxu0 0
      %470 = vmatprep.subr.bf16.mxu0 0
      %471 = vmatpush1.bf16.msra.mxu0 0
      %472 = vmatprep.subr.bf16.mxu0 0
      %473 = vmatpush1.bf16.msra.mxu0 0
      %474 = vmatprep.mubr.bf16.mxu0 0
      %475 = vmatmul.mubr.bf16.gmra.mrb[0].mxu0 %v239
      %v476 = vpop.f32.mrb[0].mxu0
      %v477 = vadd.f32 0.0, %v476
      %v478 = vpop.f32.mrb[0].mxu0
      %v479 = vpop.f32.mrb[0].mxu0
      %v480 = vpop.f32.mrb[0].mxu0
      %481 = vdwg.mxu0
      %v484 = vunpack.c.l.b16 %v431
      %v485 = vunpack.c.l.b16 %v432
      %v486 = vpack.c.b16 %v485, %v484
      %488 = vmatprep.subr.bf16.mxu0 0
      %489 = vmatpush1.bf16.msra.mxu0 %v486
      %490 = vmatprep.subr.bf16.mxu0 0
      %491 = vmatpush1.bf16.msra.mxu0 0
      %492 = vmatprep.subr.bf16.mxu0 0
      %493 = vmatpush1.bf16.msra.mxu0 0
      %494 = vmatprep.subr.bf16.mxu0 0
      %495 = vmatpush1.bf16.msra.mxu0 0
      %496 = vmatprep.subr.bf16.mxu0 0
      %497 = vmatpush1.bf16.msra.mxu0 0
      %498 = vmatprep.subr.bf16.mxu0 0
      %499 = vmatpush1.bf16.msra.mxu0 0
      %500 = vmatprep.subr.bf16.mxu0 0
      %501 = vmatpush1.bf16.msra.mxu0 0
      %502 = vmatprep.subr.bf16.mxu0 0
      %503 = vmatpush1.bf16.msra.mxu0 0
      %504 = vmatprep.subr.bf16.mxu0 0
      %505 = vmatpush1.bf16.msra.mxu0 0
      %506 = vmatprep.subr.bf16.mxu0 0
      %507 = vmatpush1.bf16.msra.mxu0 0
      %508 = vmatprep.subr.bf16.mxu0 0
      %509 = vmatpush1.bf16.msra.mxu0 0
      %510 = vmatprep.subr.bf16.mxu0 0
      %511 = vmatpush1.bf16.msra.mxu0 0
      %512 = vmatprep.subr.bf16.mxu0 0
      %513 = vmatpush1.bf16.msra.mxu0 0
      %514 = vmatprep.subr.bf16.mxu0 0
      %515 = vmatpush1.bf16.msra.mxu0 0
      %516 = vmatprep.subr.bf16.mxu0 0
      %517 = vmatpush1.bf16.msra.mxu0 0
      %518 = vmatprep.subr.bf16.mxu0 0
      %519 = vmatpush1.bf16.msra.mxu0 0
      %520 = vmatprep.mubr.bf16.mxu0 0
      %521 = vmatmul.mubr.bf16.gmra.mrb[0].mxu0 %v182
      %v522 = vpop.f32.mrb[0].mxu0
      %v523 = vadd.f32 %v477, %v522
      %v524 = vpop.f32.mrb[0].mxu0
      %v525 = vpop.f32.mrb[0].mxu0
      %v526 = vpop.f32.mrb[0].mxu0
      %527 = vdwg.mxu0
      %s528 = scalar_lea.vmem %s1, 56
      %v529 = vld [vmem:[%s528] sm:$0xf]
      %v530 = vld [vmem:[%s528 + $0x4] sm:$0xf]
      %v533 = vunpack.c.l.b16 %v529
      %v534 = vunpack.c.l.b16 %v530
      %v535 = vpack.c.b16 %v534, %v533
      %537 = vmatprep.subr.bf16.mxu0 0
      %538 = vmatpush1.bf16.msra.mxu0 %v535
      %539 = vmatprep.subr.bf16.mxu0 0
      %540 = vmatpush1.bf16.msra.mxu0 0
      %541 = vmatprep.subr.bf16.mxu0 0
      %542 = vmatpush1.bf16.msra.mxu0 0
      %543 = vmatprep.subr.bf16.mxu0 0
      %544 = vmatpush1.bf16.msra.mxu0 0
      %545 = vmatprep.subr.bf16.mxu0 0
      %546 = vmatpush1.bf16.msra.mxu0 0
      %547 = vmatprep.subr.bf16.mxu0 0
      %548 = vmatpush1.bf16.msra.mxu0 0
      %549 = vmatprep.subr.bf16.mxu0 0
      %550 = vmatpush1.bf16.msra.mxu0 0
      %551 = vmatprep.subr.bf16.mxu0 0
      %552 = vmatpush1.bf16.msra.mxu0 0
      %553 = vmatprep.subr.bf16.mxu0 0
      %554 = vmatpush1.bf16.msra.mxu0 0
      %555 = vmatprep.subr.bf16.mxu0 0
      %556 = vmatpush1.bf16.msra.mxu0 0
      %557 = vmatprep.subr.bf16.mxu0 0
      %558 = vmatpush1.bf16.msra.mxu0 0
      %559 = vmatprep.subr.bf16.mxu0 0
      %560 = vmatpush1.bf16.msra.mxu0 0
      %561 = vmatprep.subr.bf16.mxu0 0
      %562 = vmatpush1.bf16.msra.mxu0 0
      %563 = vmatprep.subr.bf16.mxu0 0
      %564 = vmatpush1.bf16.msra.mxu0 0
      %565 = vmatprep.subr.bf16.mxu0 0
      %566 = vmatpush1.bf16.msra.mxu0 0
      %567 = vmatprep.subr.bf16.mxu0 0
      %568 = vmatpush1.bf16.msra.mxu0 0
      %569 = vmatprep.mubr.bf16.mxu0 0
      %570 = vmatmul.mubr.bf16.gmra.mrb[0].mxu0 %v342
      %v571 = vpop.f32.mrb[0].mxu0
      %v572 = vadd.f32 0.0, %v571
      %v573 = vpop.f32.mrb[0].mxu0
      %v574 = vpop.f32.mrb[0].mxu0
      %v575 = vpop.f32.mrb[0].mxu0
      %576 = vdwg.mxu0
      %v577 = vadd.f32 %v523, %v572
      %v578 = vld [vmem:[%s164 + $0x4] sm:$0x1f]
      %v579 = vpack.c.bf16 %v578, %v578
      %s580 = scalar_lea.vmem %s1, 64
      %v581 = vld [vmem:[%s580] sm:$0xf]
      %v582 = vld [vmem:[%s580 + $0x4] sm:$0xf]
      %v585 = vunpack.c.l.b16 %v581
      %v586 = vunpack.c.l.b16 %v582
      %v587 = vpack.c.b16 %v586, %v585
      %v590 = vsel %vm180, %v579, 0
      %592 = vmatprep.subr.bf16.mxu0 0
      %593 = vmatpush1.bf16.msra.mxu0 %v587
      %594 = vmatprep.subr.bf16.mxu0 0
      %595 = vmatpush1.bf16.msra.mxu0 0
      %596 = vmatprep.subr.bf16.mxu0 0
      %597 = vmatpush1.bf16.msra.mxu0 0
      %598 = vmatprep.subr.bf16.mxu0 0
      %599 = vmatpush1.bf16.msra.mxu0 0
      %600 = vmatprep.subr.bf16.mxu0 0
      %601 = vmatpush1.bf16.msra.mxu0 0
      %602 = vmatprep.subr.bf16.mxu0 0
      %603 = vmatpush1.bf16.msra.mxu0 0
      %604 = vmatprep.subr.bf16.mxu0 0
      %605 = vmatpush1.bf16.msra.mxu0 0
      %606 = vmatprep.subr.bf16.mxu0 0
      %607 = vmatpush1.bf16.msra.mxu0 0
      %608 = vmatprep.subr.bf16.mxu0 0
      %609 = vmatpush1.bf16.msra.mxu0 0
      %610 = vmatprep.subr.bf16.mxu0 0
      %611 = vmatpush1.bf16.msra.mxu0 0
      %612 = vmatprep.subr.bf16.mxu0 0
      %613 = vmatpush1.bf16.msra.mxu0 0
      %614 = vmatprep.subr.bf16.mxu0 0
      %615 = vmatpush1.bf16.msra.mxu0 0
      %616 = vmatprep.subr.bf16.mxu0 0
      %617 = vmatpush1.bf16.msra.mxu0 0
      %618 = vmatprep.subr.bf16.mxu0 0
      %619 = vmatpush1.bf16.msra.mxu0 0
      %620 = vmatprep.subr.bf16.mxu0 0
      %621 = vmatpush1.bf16.msra.mxu0 0
      %622 = vmatprep.subr.bf16.mxu0 0
      %623 = vmatpush1.bf16.msra.mxu0 0
      %624 = vmatprep.mubr.bf16.mxu0 0
      %625 = vmatmul.mubr.bf16.gmra.mrb[0].mxu0 %v590
      %v626 = vpop.f32.mrb[0].mxu0
      %v627 = vadd.f32 0.0, %v626
      %v628 = vpop.f32.mrb[0].mxu0
      %v629 = vpop.f32.mrb[0].mxu0
      %v630 = vpop.f32.mrb[0].mxu0
      %631 = vdwg.mxu0
      %v632 = vadd.f32 %v577, %v627
      %634 = vrot.lane.b32.xlu0 %v322, 16
      %v635 = vpop.permute.xlu0 %634
      %638 = vrot.lane.b32.xlu0 %v425, 32
      %v639 = vpop.permute.xlu0 %638
      %642 = vrot.lane.b32.xlu0 %v632, 48
      %v643 = vpop.permute.xlu0 %642
      %v645 = vsel %vm180, %v219, %v635
      %vm646 = vcmask 261120
      %v647 = vsel %vm646, %v645, %v639
      %vm648 = vcmask 392192
      %v649 = vsel %vm648, %v647, %v643
      %v650 = vld [vmem:[%s2] sm:$0x1]
      %v652 = vlaneseq
      %v653 = vshrl.u32 %v652, 7
      %v654 = vsub.s32 0, %v653
      %v655 = vrot.slane %v650, %v654
      %v657 = vadd.f32 %v649, %v655
      %vm658 = vcmp.ge.f32.partialorder %v657, 0.0
      %v659 = vmul.f32 %v657, 0.01
      %v660 = vsel %vm658, %v657, %v659
      %vm661 = vcmask 520192
      %662 = vst.msk [vmem:[%s168] sm:$0x1f] %vm661, %v660
      %p663 = scmp.lt.s32.totalorder %s14, 1
      %s664 = scalar_select %p663, %s14, 1
      %s665 = smul.addr %s664, 8
      %s666 = scalar_lea.vmem %s3, %s665
      // Predicated region
      $region33: #{_lambda_.15} parent=31 // pred_check
        %p667 = pneg %p100
      $region34: #{_lambda_.15} parent=31 // pred_check_branch
        %669 = sbr.rel (%p667) target = $region36
      $region35: #{_lambda_.15} parent=31 // pred_region
        _
      $region36: #{_lambda_.15} parent=31 // pred_fallthru
        _
    $region32: #{_lambda_.15} parent=5 // pred_fallthru
      _
    %p670 = scmp.le.s32.totalorder 2, %s9
    // Predicated region
    $region37: #{_lambda_.15} parent=5 // pred_check
      %p671 = pneg %p670
    $region38: #{_lambda_.15} parent=5 // pred_check_branch
      %673 = sbr.rel (%p671) target = $region40
    $region39: #{_lambda_.15} parent=5 // pred_region
      %s674 = ssub.s32 %s9, 2
      // Predicated region
      $region41: #{_lambda_.15} parent=39 // pred_check
        %p675 = pneg %p106
      $region42: #{_lambda_.15} parent=39 // pred_check_branch
        %677 = sbr.rel (%p675) target = $region44
      $region43: #{_lambda_.15} parent=39 // pred_region
        %p678 = scmp.lt.s32.totalorder %s15, 1
        %s679 = scalar_select %p678, %s15, 1
        %s680 = smul.addr %s679, 8
        %s681 = scalar_lea.vmem %s3, %s680
      $region44: #{_lambda_.15} parent=39 // pred_fallthru
        _
    $region40: #{_lambda_.15} parent=5 // pred_fallthru
      _
  $region6: #{_lambda_.15} parent=0 // loop_footer
    %s13 = sadd.s32 1, %s9
  $region7: #{_lambda_.15} parent=0 // loop_footer_branch
    %8 = sbr.rel target = $region3
  $region8: #{_lambda_.15} parent=0 // loop_exit
    _

// kernel: _lambda_.14
$region0: #{_lambda_.14}
  #allocation0 [shape = 'u32[]', space=smem, size = 0x4, offset = 0x4, fixed_abs, tag = 'smem constant byte address 0x4 - core index']
  #allocation1 [shape = 'u32[144,128]{1,0:T(1,128)}', space=vmem, size = 0x12000, scoped, tag = 'internal scratch']
  %s0 = inlined_call_operand.vmem [shape: f32[2,16,16], index: 0, kind: input, shape index: {}]
  %s1 = inlined_call_operand.vmem [shape: bf16[9,16,16], index: 1, kind: input, shape index: {}]
  %s2 = inlined_call_operand.vmem [shape: f32[1,16], index: 2, kind: input, shape index: {}]
  %s3 = inlined_call_operand.vmem [shape: f32[2,6,16], index: 3, kind: output, shape index: {}]
  %s4 = sld [smem:[#allocation0]]
  $region45: #{_lambda_.14} parent=0
    _
  %s6 = ssub.s32 1, %s4
  %s7 = scalar_select 0, %s6, %s4
  loop: start=0, step=1, limit=4
  $region2: #{_lambda_.14} parent=0 // loop_pre_header
    _
  $region3: #{_lambda_.14} parent=0 // loop_header
    %s9 = sphi 0, %s13
    %p10 = scmp.ge.s32.totalorder %s9, 4
    %s19 = sphi 0, %s21
    %s22 = sphi 0, %s19
    %s23 = sphi 0, %s22
    %s39 = sphi 0, %s23
    %s43 = sphi 0, %s43
    %s45 = sphi 0, %s43
    %s46 = sphi 0, %s45
    %s60 = sphi 0, %s46
    %s64 = sphi 0, %s64
    %s66 = sphi 0, %s64
    %s67 = sphi 0, %s66
    %s81 = sphi 0, %s67
    %s87 = sphi 0, %s89
    %s90 = sphi 0, %s87
    %s91 = sphi 0, %s90
    %s107 = sphi 0, %s91
  $region4: #{_lambda_.14} parent=0 // loop_header_branch
    %12 = sbr.rel (%p10) target = $region8
  $region5: #{_lambda_.14} parent=0 // loop_body
    %s14 = ssub.s32 %s9, 1
    %s15 = ssub.s32 %s9, 2
    %s16 = sadd.s32 %s9, 1
    %s17 = ssub.s32 %s9, %s16
    %p18 = scmp.eq.s32.totalorder %s17, 0
    %s20 = sadd.s32 %s19, 1
    %s21 = scalar_select %p18, %s19, %s20
    %p24 = pneg %p18
    %p25 = scmp.eq.s32.totalorder %s9, 1
    %p26 = por %p24, %p25
    %p27 = scmp.ne.s32.totalorder %s19, %s22
    %p28 = scmp.eq.s32.totalorder %s9, 0
    %p29 = por %p27, %p28
    %p30 = scmp.ne.s32.totalorder %s19, %s22
    %p31 = scmp.eq.s32.totalorder %s14, 1
    %p32 = por %p30, %p31
    %p33 = scmp.ne.s32.totalorder %s22, %s23
    %p34 = scmp.eq.s32.totalorder %s14, 0
    %p35 = por %p33, %p34
    %p36 = scmp.ne.s32.totalorder %s22, %s23
    %p37 = scmp.eq.s32.totalorder %s15, 1
    %p38 = por %p36, %p37
    %p40 = scmp.ne.s32.totalorder %s23, %s39
    %p41 = scmp.eq.s32.totalorder %s15, 0
    %p42 = por %p40, %p41
    %s44 = sadd.s32 %s43, 1
    %p47 = scmp.eq.s32.totalorder %s9, 1
    %p48 = scmp.ne.s32.totalorder %s43, %s45
    %p49 = scmp.eq.s32.totalorder %s9, 0
    %p50 = por %p48, %p49
    %p51 = scmp.ne.s32.totalorder %s43, %s45
    %p52 = scmp.eq.s32.totalorder %s14, 1
    %p53 = por %p51, %p52
    %p54 = scmp.ne.s32.totalorder %s45, %s46
    %p55 = scmp.eq.s32.totalorder %s14, 0
    %p56 = por %p54, %p55
    %p57 = scmp.ne.s32.totalorder %s45, %s46
    %p58 = scmp.eq.s32.totalorder %s15, 1
    %p59 = por %p57, %p58
    %p61 = scmp.ne.s32.totalorder %s46, %s60
    %p62 = scmp.eq.s32.totalorder %s15, 0
    %p63 = por %p61, %p62
    %s65 = sadd.s32 %s64, 1
    %p68 = scmp.eq.s32.totalorder %s9, 1
    %p69 = scmp.ne.s32.totalorder %s64, %s66
    %p70 = scmp.eq.s32.totalorder %s9, 0
    %p71 = por %p69, %p70
    %p72 = scmp.ne.s32.totalorder %s64, %s66
    %p73 = scmp.eq.s32.totalorder %s14, 1
    %p74 = por %p72, %p73
    %p75 = scmp.ne.s32.totalorder %s66, %s67
    %p76 = scmp.eq.s32.totalorder %s14, 0
    %p77 = por %p75, %p76
    %p78 = scmp.ne.s32.totalorder %s66, %s67
    %p79 = scmp.eq.s32.totalorder %s15, 1
    %p80 = por %p78, %p79
    %p82 = scmp.ne.s32.totalorder %s67, %s81
    %p83 = scmp.eq.s32.totalorder %s15, 0
    %p84 = por %p82, %p83
    %s85 = ssub.s32 %s9, %s16
    %p86 = scmp.eq.s32.totalorder %s85, 0
    %s88 = sadd.s32 %s87, 1
    %s89 = scalar_select %p86, %s87, %s88
    %p92 = pneg %p86
    %p93 = scmp.eq.s32.totalorder %s9, 1
    %p94 = por %p92, %p93
    %p95 = scmp.ne.s32.totalorder %s87, %s90
    %p96 = scmp.eq.s32.totalorder %s9, 0
    %p97 = por %p95, %p96
    %p98 = scmp.ne.s32.totalorder %s87, %s90
    %p99 = scmp.eq.s32.totalorder %s14, 1
    %p100 = por %p98, %p99
    %p101 = scmp.ne.s32.totalorder %s90, %s91
    %p102 = scmp.eq.s32.totalorder %s14, 0
    %p103 = por %p101, %p102
    %p104 = scmp.ne.s32.totalorder %s90, %s91
    %p105 = scmp.eq.s32.totalorder %s15, 1
    %p106 = por %p104, %p105
    %p108 = scmp.ne.s32.totalorder %s91, %s107
    %p109 = scmp.eq.s32.totalorder %s15, 0
    %p110 = por %p108, %p109
    %p111 = scmp.le.s32.totalorder 1, %s9
    %p112 = scmp.lt.s32.totalorder %s9, 3
    %p113 = pnand %p111, %p112
    %p114 = pneg %p113
    // Predicated region
    $region9: #{_lambda_.14} parent=5 // pred_check
      _
    $region10: #{_lambda_.14} parent=5 // pred_check_branch
      %116 = sbr.rel (%p113) target = $region12
    $region11: #{_lambda_.14} parent=5 // pred_region
      %s117 = ssub.s32 %s9, 1
      // Predicated region
      $region13: #{_lambda_.14} parent=11 // pred_check
        %p118 = pneg %p56
      $region14: #{_lambda_.14} parent=11 // pred_check_branch
        %120 = sbr.rel (%p118) target = $region16
      $region15: #{_lambda_.14} parent=11 // pred_region
        _
      $region16: #{_lambda_.14} parent=11 // pred_fallthru
        _
      // Predicated region
      $region17: #{_lambda_.14} parent=11 // pred_check
        %p121 = pneg %p77
      $region18: #{_lambda_.14} parent=11 // pred_check_branch
        %123 = sbr.rel (%p121) target = $region20
      $region19: #{_lambda_.14} parent=11 // pred_region
        _
      $region20: #{_lambda_.14} parent=11 // pred_fallthru
        _
    $region12: #{_lambda_.14} parent=5 // pred_fallthru
      _
    %p124 = scmp.lt.s32.totalorder %s9, 2
    // Predicated region
    $region21: #{_lambda_.14} parent=5 // pred_check
      %p125 = pneg %p124
    $region22: #{_lambda_.14} parent=5 // pred_check_branch
      %127 = sbr.rel (%p125) target = $region24
    $region23: #{_lambda_.14} parent=5 // pred_region
      // Predicated region
      $region25: #{_lambda_.14} parent=23 // pred_check
        %p128 = pneg %p29
      $region26: #{_lambda_.14} parent=23 // pred_check_branch
        %130 = sbr.rel (%p128) target = $region28
      $region27: #{_lambda_.14} parent=23 // pred_region
        %p131 = scmp.lt.s32.totalorder %s9, 1
        %s132 = scalar_select %p131, %s9, 1
        %s133 = smul.addr %s132, 2
        %s134 = smul.addr %s133, 8
        %s135 = scalar_lea.vmem %s0, %s134
      $region28: #{_lambda_.14} parent=23 // pred_fallthru
        _
    $region24: #{_lambda_.14} parent=5 // pred_fallthru
      _
    %p136 = scmp.le.s32.totalorder 1, %s9
    %p137 = scmp.lt.s32.totalorder %s9, 3
    %p138 = pnand %p136, %p137
    %p139 = pneg %p138
    // Predicated region
    $region29: #{_lambda_.14} parent=5 // pred_check
      _
    $region30: #{_lambda_.14} parent=5 // pred_check_branch
      %141 = sbr.rel (%p138) target = $region32
    $region31: #{_lambda_.14} parent=5 // pred_region
      %s142 = ssub.s32 %s9, 1
      %p143 = scmp.lt.s32.totalorder %s14, 1
      %s144 = scalar_select %p143, %s14, 1
      %s145 = smul.addr %s144, 2
      %s146 = smul.addr %s145, 8
      %s147 = scalar_lea.vmem %s0, %s146
      %p148 = pneg %p35
      %p149 = pneg %p32
      %p150 = pneg %p56
      %p151 = pneg %p53
      %p152 = pneg %p77
      %p153 = pneg %p74
      %p154 = pneg %p103
      %p155 = pneg %p100
      %p156 = scmp.lt.s32.totalorder %s14, 1
      %s157 = scalar_select %p156, %s14, 1
      %s158 = smul.addr %s157, 8
      %s159 = scalar_lea.vmem %s3, %s158
      %p160 = scmp.lt.s32.totalorder %s14, 1
      %s161 = scalar_select %p160, %s14, 1
      %s162 = smul.addr %s161, 2
      %s163 = smul.addr %s162, 8
      %s164 = scalar_lea.vmem %s0, %s163
      %p165 = scmp.lt.s32.totalorder %s14, 1
      %s166 = scalar_select %p165, %s14, 1
      %s167 = smul.addr %s166, 8
      %s168 = scalar_lea.vmem %s3, %s167
      %v170 = vld [vmem:[%s164] sm:$0x3f]
      %v171 = vpack.c.bf16 %v170, %v170
      %v172 = vld [vmem:[%s1] sm:$0xf]
      %v173 = vld [vmem:[%s1 + $0x4] sm:$0xf]
      %v174 = vld [vmem:[%s164 + $0x1] sm:$0x3f]
      %v175 = vpack.c.bf16 %v174, %v174
      %s176 = scalar_lea.vmem %s1, 8
      %v177 = vld [vmem:[%s176] sm:$0xf]
      %v178 = vld [vmem:[%s176 + $0x4] sm:$0xf]
      %v181 = vunpack.c.l.b16 %v177
      %v182 = vunpack.c.l.b16 %v178
      %v183 = vpack.c.b16 %v182, %v181
      %vm185 = vcmask 130048
      %v187 = vsel %vm185, %v175, 0
      %189 = vmatprep.subr.bf16.mxu0 0
      %190 = vmatpush1.bf16.msra.mxu0 %v183
      %191 = vmatprep.subr.bf16.mxu0 0
      %192 = vmatpush1.bf16.msra.mxu0 0
      %193 = vmatprep.subr.bf16.mxu0 0
      %194 = vmatpush1.bf16.msra.mxu0 0
      %195 = vmatprep.subr.bf16.mxu0 0
      %196 = vmatpush1.bf16.msra.mxu0 0
      %197 = vmatprep.subr.bf16.mxu0 0
      %198 = vmatpush1.bf16.msra.mxu0 0
      %199 = vmatprep.subr.bf16.mxu0 0
      %200 = vmatpush1.bf16.msra.mxu0 0
      %201 = vmatprep.subr.bf16.mxu0 0
      %202 = vmatpush1.bf16.msra.mxu0 0
      %203 = vmatprep.subr.bf16.mxu0 0
      %204 = vmatpush1.bf16.msra.mxu0 0
      %205 = vmatprep.subr.bf16.mxu0 0
      %206 = vmatpush1.bf16.msra.mxu0 0
      %207 = vmatprep.subr.bf16.mxu0 0
      %208 = vmatpush1.bf16.msra.mxu0 0
      %209 = vmatprep.subr.bf16.mxu0 0
      %210 = vmatpush1.bf16.msra.mxu0 0
      %211 = vmatprep.subr.bf16.mxu0 0
      %212 = vmatpush1.bf16.msra.mxu0 0
      %213 = vmatprep.subr.bf16.mxu0 0
      %214 = vmatpush1.bf16.msra.mxu0 0
      %215 = vmatprep.subr.bf16.mxu0 0
      %216 = vmatpush1.bf16.msra.mxu0 0
      %217 = vmatprep.subr.bf16.mxu0 0
      %218 = vmatpush1.bf16.msra.mxu0 0
      %219 = vmatprep.subr.bf16.mxu0 0
      %220 = vmatpush1.bf16.msra.mxu0 0
      %221 = vmatprep.mubr.bf16.mxu0 0
      %222 = vmatmul.mubr.bf16.gmra.mrb[0].mxu0 %v187
      %v223 = vpop.f32.mrb[0].mxu0
      %v224 = vadd.f32 0.0, %v223
      %v225 = vpop.f32.mrb[0].mxu0
      %v226 = vpop.f32.mrb[0].mxu0
      %v227 = vpop.f32.mrb[0].mxu0
      %228 = vdwg.mxu0
      %v231 = vunpack.c.l.b16 %v172
      %v232 = vunpack.c.l.b16 %v173
      %v233 = vpack.c.b16 %v232, %v231
      %v236 = vsel %vm185, %v171, 0
      %238 = vmatprep.subr.bf16.mxu0 0
      %239 = vmatpush1.bf16.msra.mxu0 %v233
      %240 = vmatprep.subr.bf16.mxu0 0
      %241 = vmatpush1.bf16.msra.mxu0 0
      %242 = vmatprep.subr.bf16.mxu0 0
      %243 = vmatpush1.bf16.msra.mxu0 0
      %244 = vmatprep.subr.bf16.mxu0 0
      %245 = vmatpush1.bf16.msra.mxu0 0
      %246 = vmatprep.subr.bf16.mxu0 0
      %247 = vmatpush1.bf16.msra.mxu0 0
      %248 = vmatprep.subr.bf16.mxu0 0
      %249 = vmatpush1.bf16.msra.mxu0 0
      %250 = vmatprep.subr.bf16.mxu0 0
      %251 = vmatpush1.bf16.msra.mxu0 0
      %252 = vmatprep.subr.bf16.mxu0 0
      %253 = vmatpush1.bf16.msra.mxu0 0
      %254 = vmatprep.subr.bf16.mxu0 0
      %255 = vmatpush1.bf16.msra.mxu0 0
      %256 = vmatprep.subr.bf16.mxu0 0
      %257 = vmatpush1.bf16.msra.mxu0 0
      %258 = vmatprep.subr.bf16.mxu0 0
      %259 = vmatpush1.bf16.msra.mxu0 0
      %260 = vmatprep.subr.bf16.mxu0 0
      %261 = vmatpush1.bf16.msra.mxu0 0
      %262 = vmatprep.subr.bf16.mxu0 0
      %263 = vmatpush1.bf16.msra.mxu0 0
      %264 = vmatprep.subr.bf16.mxu0 0
      %265 = vmatpush1.bf16.msra.mxu0 0
      %266 = vmatprep.subr.bf16.mxu0 0
      %267 = vmatpush1.bf16.msra.mxu0 0
      %268 = vmatprep.subr.bf16.mxu0 0
      %269 = vmatpush1.bf16.msra.mxu0 0
      %270 = vmatprep.mubr.bf16.mxu0 0
      %271 = vmatmul.mubr.bf16.gmra.mrb[0].mxu0 %v236
      %v272 = vpop.f32.mrb[0].mxu0
      %v273 = vadd.f32 %v224, %v272
      %v274 = vpop.f32.mrb[0].mxu0
      %v275 = vpop.f32.mrb[0].mxu0
      %v276 = vpop.f32.mrb[0].mxu0
      %277 = vdwg.mxu0
      %v278 = vld [vmem:[%s164 + $0x2] sm:$0x3f]
      %v279 = vpack.c.bf16 %v278, %v278
      %s280 = scalar_lea.vmem %s1, 16
      %v281 = vld [vmem:[%s280] sm:$0xf]
      %v282 = vld [vmem:[%s280 + $0x4] sm:$0xf]
      %v285 = vunpack.c.l.b16 %v281
      %v286 = vunpack.c.l.b16 %v282
      %v287 = vpack.c.b16 %v286, %v285
      %v290 = vsel %vm185, %v279, 0
      %292 = vmatprep.subr.bf16.mxu0 0
      %293 = vmatpush1.bf16.msra.mxu0 %v287
      %294 = vmatprep.subr.bf16.mxu0 0
      %295 = vmatpush1.bf16.msra.mxu0 0
      %296 = vmatprep.subr.bf16.mxu0 0
      %297 = vmatpush1.bf16.msra.mxu0 0
      %298 = vmatprep.subr.bf16.mxu0 0
      %299 = vmatpush1.bf16.msra.mxu0 0
      %300 = vmatprep.subr.bf16.mxu0 0
      %301 = vmatpush1.bf16.msra.mxu0 0
      %302 = vmatprep.subr.bf16.mxu0 0
      %303 = vmatpush1.bf16.msra.mxu0 0
      %304 = vmatprep.subr.bf16.mxu0 0
      %305 = vmatpush1.bf16.msra.mxu0 0
      %306 = vmatprep.subr.bf16.mxu0 0
      %307 = vmatpush1.bf16.msra.mxu0 0
      %308 = vmatprep.subr.bf16.mxu0 0
      %309 = vmatpush1.bf16.msra.mxu0 0
      %310 = vmatprep.subr.bf16.mxu0 0
      %311 = vmatpush1.bf16.msra.mxu0 0
      %312 = vmatprep.subr.bf16.mxu0 0
      %313 = vmatpush1.bf16.msra.mxu0 0
      %314 = vmatprep.subr.bf16.mxu0 0
      %315 = vmatpush1.bf16.msra.mxu0 0
      %316 = vmatprep.subr.bf16.mxu0 0
      %317 = vmatpush1.bf16.msra.mxu0 0
      %318 = vmatprep.subr.bf16.mxu0 0
      %319 = vmatpush1.bf16.msra.mxu0 0
      %320 = vmatprep.subr.bf16.mxu0 0
      %321 = vmatpush1.bf16.msra.mxu0 0
      %322 = vmatprep.subr.bf16.mxu0 0
      %323 = vmatpush1.bf16.msra.mxu0 0
      %324 = vmatprep.mubr.bf16.mxu0 0
      %325 = vmatmul.mubr.bf16.gmra.mrb[0].mxu0 %v290
      %v326 = vpop.f32.mrb[0].mxu0
      %v327 = vadd.f32 0.0, %v326
      %v328 = vpop.f32.mrb[0].mxu0
      %v329 = vpop.f32.mrb[0].mxu0
      %v330 = vpop.f32.mrb[0].mxu0
      %331 = vdwg.mxu0
      %v332 = vadd.f32 %v273, %v327
      %v333 = vld [vmem:[%s164 + $0x4] sm:$0x3f]
      %v334 = vpack.c.bf16 %v333, %v333
      %s335 = scalar_lea.vmem %s1, 24
      %v336 = vld [vmem:[%s335] sm:$0xf]
      %v337 = vld [vmem:[%s335 + $0x4] sm:$0xf]
      %v340 = vunpack.c.l.b16 %v336
      %v341 = vunpack.c.l.b16 %v337
      %v342 = vpack.c.b16 %v341, %v340
      %v345 = vsel %vm185, %v334, 0
      %347 = vmatprep.subr.bf16.mxu0 0
      %348 = vmatpush1.bf16.msra.mxu0 %v342
      %349 = vmatprep.subr.bf16.mxu0 0
      %350 = vmatpush1.bf16.msra.mxu0 0
      %351 = vmatprep.subr.bf16.mxu0 0
      %352 = vmatpush1.bf16.msra.mxu0 0
      %353 = vmatprep.subr.bf16.mxu0 0
      %354 = vmatpush1.bf16.msra.mxu0 0
      %355 = vmatprep.subr.bf16.mxu0 0
      %356 = vmatpush1.bf16.msra.mxu0 0
      %357 = vmatprep.subr.bf16.mxu0 0
      %358 = vmatpush1.bf16.msra.mxu0 0
      %359 = vmatprep.subr.bf16.mxu0 0
      %360 = vmatpush1.bf16.msra.mxu0 0
      %361 = vmatprep.subr.bf16.mxu0 0
      %362 = vmatpush1.bf16.msra.mxu0 0
      %363 = vmatprep.subr.bf16.mxu0 0
      %364 = vmatpush1.bf16.msra.mxu0 0
      %365 = vmatprep.subr.bf16.mxu0 0
      %366 = vmatpush1.bf16.msra.mxu0 0
      %367 = vmatprep.subr.bf16.mxu0 0
      %368 = vmatpush1.bf16.msra.mxu0 0
      %369 = vmatprep.subr.bf16.mxu0 0
      %370 = vmatpush1.bf16.msra.mxu0 0
      %371 = vmatprep.subr.bf16.mxu0 0
      %372 = vmatpush1.bf16.msra.mxu0 0
      %373 = vmatprep.subr.bf16.mxu0 0
      %374 = vmatpush1.bf16.msra.mxu0 0
      %375 = vmatprep.subr.bf16.mxu0 0
      %376 = vmatpush1.bf16.msra.mxu0 0
      %377 = vmatprep.subr.bf16.mxu0 0
      %378 = vmatpush1.bf16.msra.mxu0 0
      %379 = vmatprep.mubr.bf16.mxu0 0
      %380 = vmatmul.mubr.bf16.gmra.mrb[0].mxu0 %v345
      %v381 = vpop.f32.mrb[0].mxu0
      %v382 = vadd.f32 0.0, %v381
      %v383 = vpop.f32.mrb[0].mxu0
      %v384 = vpop.f32.mrb[0].mxu0
      %v385 = vpop.f32.mrb[0].mxu0
      %386 = vdwg.mxu0
      %v387 = vadd.f32 %v332, %v382
      %v388 = vld [vmem:[%s164 + $0x5] sm:$0x3f]
      %v389 = vpack.c.bf16 %v388, %v388
      %s390 = scalar_lea.vmem %s1, 32
      %v391 = vld [vmem:[%s390] sm:$0xf]
      %v392 = vld [vmem:[%s390 + $0x4] sm:$0xf]
      %v395 = vunpack.c.l.b16 %v391
      %v396 = vunpack.c.l.b16 %v392
      %v397 = vpack.c.b16 %v396, %v395
      %v400 = vsel %vm185, %v389, 0
      %402 = vmatprep.subr.bf16.mxu0 0
      %403 = vmatpush1.bf16.msra.mxu0 %v397
      %404 = vmatprep.subr.bf16.mxu0 0
      %405 = vmatpush1.bf16.msra.mxu0 0
      %406 = vmatprep.subr.bf16.mxu0 0
      %407 = vmatpush1.bf16.msra.mxu0 0
      %408 = vmatprep.subr.bf16.mxu0 0
      %409 = vmatpush1.bf16.msra.mxu0 0
      %410 = vmatprep.subr.bf16.mxu0 0
      %411 = vmatpush1.bf16.msra.mxu0 0
      %412 = vmatprep.subr.bf16.mxu0 0
      %413 = vmatpush1.bf16.msra.mxu0 0
      %414 = vmatprep.subr.bf16.mxu0 0
      %415 = vmatpush1.bf16.msra.mxu0 0
      %416 = vmatprep.subr.bf16.mxu0 0
      %417 = vmatpush1.bf16.msra.mxu0 0
      %418 = vmatprep.subr.bf16.mxu0 0
      %419 = vmatpush1.bf16.msra.mxu0 0
      %420 = vmatprep.subr.bf16.mxu0 0
      %421 = vmatpush1.bf16.msra.mxu0 0
      %422 = vmatprep.subr.bf16.mxu0 0
      %423 = vmatpush1.bf16.msra.mxu0 0
      %424 = vmatprep.subr.bf16.mxu0 0
      %425 = vmatpush1.bf16.msra.mxu0 0
      %426 = vmatprep.subr.bf16.mxu0 0
      %427 = vmatpush1.bf16.msra.mxu0 0
      %428 = vmatprep.subr.bf16.mxu0 0
      %429 = vmatpush1.bf16.msra.mxu0 0
      %430 = vmatprep.subr.bf16.mxu0 0
      %431 = vmatpush1.bf16.msra.mxu0 0
      %432 = vmatprep.subr.bf16.mxu0 0
      %433 = vmatpush1.bf16.msra.mxu0 0
      %434 = vmatprep.mubr.bf16.mxu0 0
      %435 = vmatmul.mubr.bf16.gmra.mrb[0].mxu0 %v400
      %v436 = vpop.f32.mrb[0].mxu0
      %v437 = vadd.f32 0.0, %v436
      %v438 = vpop.f32.mrb[0].mxu0
      %v439 = vpop.f32.mrb[0].mxu0
      %v440 = vpop.f32.mrb[0].mxu0
      %441 = vdwg.mxu0
      %v442 = vadd.f32 %v387, %v437
      %v443 = vld [vmem:[%s164 + $0x6] sm:$0x3f]
      %v444 = vpack.c.bf16 %v443, %v443
      %s445 = scalar_lea.vmem %s1, 40
      %v446 = vld [vmem:[%s445] sm:$0xf]
      %v447 = vld [vmem:[%s445 + $0x4] sm:$0xf]
      %v450 = vunpack.c.l.b16 %v446
      %v451 = vunpack.c.l.b16 %v447
      %v452 = vpack.c.b16 %v451, %v450
      %v455 = vsel %vm185, %v444, 0
      %457 = vmatprep.subr.bf16.mxu0 0
      %458 = vmatpush1.bf16.msra.mxu0 %v452
      %459 = vmatprep.subr.bf16.mxu0 0
      %460 = vmatpush1.bf16.msra.mxu0 0
      %461 = vmatprep.subr.bf16.mxu0 0
      %462 = vmatpush1.bf16.msra.mxu0 0
      %463 = vmatprep.subr.bf16.mxu0 0
      %464 = vmatpush1.bf16.msra.mxu0 0
      %465 = vmatprep.subr.bf16.mxu0 0
      %466 = vmatpush1.bf16.msra.mxu0 0
      %467 = vmatprep.subr.bf16.mxu0 0
      %468 = vmatpush1.bf16.msra.mxu0 0
      %469 = vmatprep.subr.bf16.mxu0 0
      %470 = vmatpush1.bf16.msra.mxu0 0
      %471 = vmatprep.subr.bf16.mxu0 0
      %472 = vmatpush1.bf16.msra.mxu0 0
      %473 = vmatprep.subr.bf16.mxu0 0
      %474 = vmatpush1.bf16.msra.mxu0 0
      %475 = vmatprep.subr.bf16.mxu0 0
      %476 = vmatpush1.bf16.msra.mxu0 0
      %477 = vmatprep.subr.bf16.mxu0 0
      %478 = vmatpush1.bf16.msra.mxu0 0
      %479 = vmatprep.subr.bf16.mxu0 0
      %480 = vmatpush1.bf16.msra.mxu0 0
      %481 = vmatprep.subr.bf16.mxu0 0
      %482 = vmatpush1.bf16.msra.mxu0 0
      %483 = vmatprep.subr.bf16.mxu0 0
      %484 = vmatpush1.bf16.msra.mxu0 0
      %485 = vmatprep.subr.bf16.mxu0 0
      %486 = vmatpush1.bf16.msra.mxu0 0
      %487 = vmatprep.subr.bf16.mxu0 0
      %488 = vmatpush1.bf16.msra.mxu0 0
      %489 = vmatprep.mubr.bf16.mxu0 0
      %490 = vmatmul.mubr.bf16.gmra.mrb[0].mxu0 %v455
      %v491 = vpop.f32.mrb[0].mxu0
      %v492 = vadd.f32 0.0, %v491
      %v493 = vpop.f32.mrb[0].mxu0
      %v494 = vpop.f32.mrb[0].mxu0
      %v495 = vpop.f32.mrb[0].mxu0
      %496 = vdwg.mxu0
      %v497 = vadd.f32 %v442, %v492
      %v498 = vld [vmem:[%s164 + $0x8] sm:$0x3f]
      %v499 = vpack.c.bf16 %v498, %v498
      %s500 = scalar_lea.vmem %s1, 48
      %v501 = vld [vmem:[%s500] sm:$0xf]
      %v502 = vld [vmem:[%s500 + $0x4] sm:$0xf]
      %v505 = vunpack.c.l.b16 %v501
      %v506 = vunpack.c.l.b16 %v502
      %v507 = vpack.c.b16 %v506, %v505
      %v510 = vsel %vm185, %v499, 0
      %512 = vmatprep.subr.bf16.mxu0 0
      %513 = vmatpush1.bf16.msra.mxu0 %v507
      %514 = vmatprep.subr.bf16.mxu0 0
      %515 = vmatpush1.bf16.msra.mxu0 0
      %516 = vmatprep.subr.bf16.mxu0 0
      %517 = vmatpush1.bf16.msra.mxu0 0
      %518 = vmatprep.subr.bf16.mxu0 0
      %519 = vmatpush1.bf16.msra.mxu0 0
      %520 = vmatprep.subr.bf16.mxu0 0
      %521 = vmatpush1.bf16.msra.mxu0 0
      %522 = vmatprep.subr.bf16.mxu0 0
      %523 = vmatpush1.bf16.msra.mxu0 0
      %524 = vmatprep.subr.bf16.mxu0 0
      %525 = vmatpush1.bf16.msra.mxu0 0
      %526 = vmatprep.subr.bf16.mxu0 0
      %527 = vmatpush1.bf16.msra.mxu0 0
      %528 = vmatprep.subr.bf16.mxu0 0
      %529 = vmatpush1.bf16.msra.mxu0 0
      %530 = vmatprep.subr.bf16.mxu0 0
      %531 = vmatpush1.bf16.msra.mxu0 0
      %532 = vmatprep.subr.bf16.mxu0 0
      %533 = vmatpush1.bf16.msra.mxu0 0
      %534 = vmatprep.subr.bf16.mxu0 0
      %535 = vmatpush1.bf16.msra.mxu0 0
      %536 = vmatprep.subr.bf16.mxu0 0
      %537 = vmatpush1.bf16.msra.mxu0 0
      %538 = vmatprep.subr.bf16.mxu0 0
      %539 = vmatpush1.bf16.msra.mxu0 0
      %540 = vmatprep.subr.bf16.mxu0 0
      %541 = vmatpush1.bf16.msra.mxu0 0
      %542 = vmatprep.subr.bf16.mxu0 0
      %543 = vmatpush1.bf16.msra.mxu0 0
      %544 = vmatprep.mubr.bf16.mxu0 0
      %545 = vmatmul.mubr.bf16.gmra.mrb[0].mxu0 %v510
      %v546 = vpop.f32.mrb[0].mxu0
      %v547 = vadd.f32 0.0, %v546
      %v548 = vpop.f32.mrb[0].mxu0
      %v549 = vpop.f32.mrb[0].mxu0
      %v550 = vpop.f32.mrb[0].mxu0
      %551 = vdwg.mxu0
      %v552 = vadd.f32 %v497, %v547
      %v553 = vld [vmem:[%s164 + $0x9] sm:$0x3f]
      %v554 = vpack.c.bf16 %v553, %v553
      %s555 = scalar_lea.vmem %s1, 56
      %v556 = vld [vmem:[%s555] sm:$0xf]
      %v557 = vld [vmem:[%s555 + $0x4] sm:$0xf]
      %v560 = vunpack.c.l.b16 %v556
      %v561 = vunpack.c.l.b16 %v557
      %v562 = vpack.c.b16 %v561, %v560
      %v565 = vsel %vm185, %v554, 0
      %567 = vmatprep.subr.bf16.mxu0 0
      %568 = vmatpush1.bf16.msra.mxu0 %v562
      %569 = vmatprep.subr.bf16.mxu0 0
      %570 = vmatpush1.bf16.msra.mxu0 0
      %571 = vmatprep.subr.bf16.mxu0 0
      %572 = vmatpush1.bf16.msra.mxu0 0
      %573 = vmatprep.subr.bf16.mxu0 0
      %574 = vmatpush1.bf16.msra.mxu0 0
      %575 = vmatprep.subr.bf16.mxu0 0
      %576 = vmatpush1.bf16.msra.mxu0 0
      %577 = vmatprep.subr.bf16.mxu0 0
      %578 = vmatpush1.bf16.msra.mxu0 0
      %579 = vmatprep.subr.bf16.mxu0 0
      %580 = vmatpush1.bf16.msra.mxu0 0
      %581 = vmatprep.subr.bf16.mxu0 0
      %582 = vmatpush1.bf16.msra.mxu0 0
      %583 = vmatprep.subr.bf16.mxu0 0
      %584 = vmatpush1.bf16.msra.mxu0 0
      %585 = vmatprep.subr.bf16.mxu0 0
      %586 = vmatpush1.bf16.msra.mxu0 0
      %587 = vmatprep.subr.bf16.mxu0 0
      %588 = vmatpush1.bf16.msra.mxu0 0
      %589 = vmatprep.subr.bf16.mxu0 0
      %590 = vmatpush1.bf16.msra.mxu0 0
      %591 = vmatprep.subr.bf16.mxu0 0
      %592 = vmatpush1.bf16.msra.mxu0 0
      %593 = vmatprep.subr.bf16.mxu0 0
      %594 = vmatpush1.bf16.msra.mxu0 0
      %595 = vmatprep.subr.bf16.mxu0 0
      %596 = vmatpush1.bf16.msra.mxu0 0
      %597 = vmatprep.subr.bf16.mxu0 0
      %598 = vmatpush1.bf16.msra.mxu0 0
      %599 = vmatprep.mubr.bf16.mxu0 0
      %600 = vmatmul.mubr.bf16.gmra.mrb[0].mxu0 %v565
      %v601 = vpop.f32.mrb[0].mxu0
      %v602 = vadd.f32 0.0, %v601
      %v603 = vpop.f32.mrb[0].mxu0
      %v604 = vpop.f32.mrb[0].mxu0
      %v605 = vpop.f32.mrb[0].mxu0
      %606 = vdwg.mxu0
      %v607 = vadd.f32 %v552, %v602
      %v608 = vld [vmem:[%s164 + $0xa] sm:$0x3f]
      %v609 = vpack.c.bf16 %v608, %v608
      %s610 = scalar_lea.vmem %s1, 64
      %v611 = vld [vmem:[%s610] sm:$0xf]
      %v612 = vld [vmem:[%s610 + $0x4] sm:$0xf]
      %v615 = vunpack.c.l.b16 %v611
      %v616 = vunpack.c.l.b16 %v612
      %v617 = vpack.c.b16 %v616, %v615
      %v620 = vsel %vm185, %v609, 0
      %622 = vmatprep.subr.bf16.mxu0 0
      %623 = vmatpush1.bf16.msra.mxu0 %v617
      %624 = vmatprep.subr.bf16.mxu0 0
      %625 = vmatpush1.bf16.msra.mxu0 0
      %626 = vmatprep.subr.bf16.mxu0 0
      %627 = vmatpush1.bf16.msra.mxu0 0
      %628 = vmatprep.subr.bf16.mxu0 0
      %629 = vmatpush1.bf16.msra.mxu0 0
      %630 = vmatprep.subr.bf16.mxu0 0
      %631 = vmatpush1.bf16.msra.mxu0 0
      %632 = vmatprep.subr.bf16.mxu0 0
      %633 = vmatpush1.bf16.msra.mxu0 0
      %634 = vmatprep.subr.bf16.mxu0 0
      %635 = vmatpush1.bf16.msra.mxu0 0
      %636 = vmatprep.subr.bf16.mxu0 0
      %637 = vmatpush1.bf16.msra.mxu0 0
      %638 = vmatprep.subr.bf16.mxu0 0
      %639 = vmatpush1.bf16.msra.mxu0 0
      %640 = vmatprep.subr.bf16.mxu0 0
      %641 = vmatpush1.bf16.msra.mxu0 0
      %642 = vmatprep.subr.bf16.mxu0 0
      %643 = vmatpush1.bf16.msra.mxu0 0
      %644 = vmatprep.subr.bf16.mxu0 0
      %645 = vmatpush1.bf16.msra.mxu0 0
      %646 = vmatprep.subr.bf16.mxu0 0
      %647 = vmatpush1.bf16.msra.mxu0 0
      %648 = vmatprep.subr.bf16.mxu0 0
      %649 = vmatpush1.bf16.msra.mxu0 0
      %650 = vmatprep.subr.bf16.mxu0 0
      %651 = vmatpush1.bf16.msra.mxu0 0
      %652 = vmatprep.subr.bf16.mxu0 0
      %653 = vmatpush1.bf16.msra.mxu0 0
      %654 = vmatprep.mubr.bf16.mxu0 0
      %655 = vmatmul.mubr.bf16.gmra.mrb[0].mxu0 %v620
      %v656 = vpop.f32.mrb[0].mxu0
      %v657 = vadd.f32 0.0, %v656
      %v658 = vpop.f32.mrb[0].mxu0
      %v659 = vpop.f32.mrb[0].mxu0
      %v660 = vpop.f32.mrb[0].mxu0
      %661 = vdwg.mxu0
      %v662 = vadd.f32 %v607, %v657
      %v663 = vld [vmem:[%s2] sm:$0x1]
      %v665 = vlaneseq
      %v666 = vshrl.u32 %v665, 7
      %v667 = vsub.s32 0, %v666
      %v668 = vrot.slane %v663, %v667
      %v670 = vadd.f32 %v662, %v668
      %vm671 = vcmask 128000
      %672 = vst.msk [vmem:[%s168] sm:$0x3f] %vm671, %v670
      %p673 = scmp.lt.s32.totalorder %s14, 1
      %s674 = scalar_select %p673, %s14, 1
      %s675 = smul.addr %s674, 8
      %s676 = scalar_lea.vmem %s3, %s675
      // Predicated region
      $region33: #{_lambda_.14} parent=31 // pred_check
        %p677 = pneg %p100
      $region34: #{_lambda_.14} parent=31 // pred_check_branch
        %679 = sbr.rel (%p677) target = $region36
      $region35: #{_lambda_.14} parent=31 // pred_region
        _
      $region36: #{_lambda_.14} parent=31 // pred_fallthru
        _
    $region32: #{_lambda_.14} parent=5 // pred_fallthru
      _
    %p680 = scmp.le.s32.totalorder 2, %s9
    // Predicated region
    $region37: #{_lambda_.14} parent=5 // pred_check
      %p681 = pneg %p680
    $region38: #{_lambda_.14} parent=5 // pred_check_branch
      %683 = sbr.rel (%p681) target = $region40
    $region39: #{_lambda_.14} parent=5 // pred_region
      %s684 = ssub.s32 %s9, 2
      // Predicated region
      $region41: #{_lambda_.14} parent=39 // pred_check
        %p685 = pneg %p106
      $region42: #{_lambda_.14} parent=39 // pred_check_branch
        %687 = sbr.rel (%p685) target = $region44
      $region43: #{_lambda_.14} parent=39 // pred_region
        %p688 = scmp.lt.s32.totalorder %s15, 1
        %s689 = scalar_select %p688, %s15, 1
        %s690 = smul.addr %s689, 8
        %s691 = scalar_lea.vmem %s3, %s690
      $region44: #{_lambda_.14} parent=39 // pred_fallthru
        _
    $region40: #{_lambda_.14} parent=5 // pred_fallthru
      _
  $region6: #{_lambda_.14} parent=0 // loop_footer
    %s13 = sadd.s32 1, %s9
  $region7: #{_lambda_.14} parent=0 // loop_footer_branch
    %8 = sbr.rel target = $region3
  $region8: #{_lambda_.14} parent=0 // loop_exit
    _

// kernel: _lambda_.16
$region0: #{_lambda_.16}
  #allocation0 [shape = 'u32[]', space=smem, size = 0x4, offset = 0x4, fixed_abs, tag = 'smem constant byte address 0x4 - core index']
  #allocation1 [shape = 'u32[144,128]{1,0:T(1,128)}', space=vmem, size = 0x12000, scoped, tag = 'internal scratch']
  %s0 = inlined_call_operand.vmem [shape: f32[2,25,16], index: 0, kind: input, shape index: {}]
  %s1 = inlined_call_operand.vmem [shape: bf16[9,16,8], index: 1, kind: input, shape index: {}]
  %s2 = inlined_call_operand.vmem [shape: f32[1,32], index: 2, kind: input, shape index: {}]
  %s3 = inlined_call_operand.vmem [shape: f32[2,19,32], index: 3, kind: output, shape index: {}]
  %s4 = sld [smem:[#allocation0]]
  $region45: #{_lambda_.16} parent=0
    _
  %s6 = ssub.s32 1, %s4
  %s7 = scalar_select 0, %s6, %s4
  loop: start=0, step=1, limit=4
  $region2: #{_lambda_.16} parent=0 // loop_pre_header
    _
  $region3: #{_lambda_.16} parent=0 // loop_header
    %s9 = sphi 0, %s13
    %p10 = scmp.ge.s32.totalorder %s9, 4
    %s19 = sphi 0, %s21
    %s22 = sphi 0, %s19
    %s23 = sphi 0, %s22
    %s39 = sphi 0, %s23
    %s43 = sphi 0, %s43
    %s45 = sphi 0, %s43
    %s46 = sphi 0, %s45
    %s60 = sphi 0, %s46
    %s64 = sphi 0, %s64
    %s66 = sphi 0, %s64
    %s67 = sphi 0, %s66
    %s81 = sphi 0, %s67
    %s87 = sphi 0, %s89
    %s90 = sphi 0, %s87
    %s91 = sphi 0, %s90
    %s107 = sphi 0, %s91
  $region4: #{_lambda_.16} parent=0 // loop_header_branch
    %12 = sbr.rel (%p10) target = $region8
  $region5: #{_lambda_.16} parent=0 // loop_body
    %s14 = ssub.s32 %s9, 1
    %s15 = ssub.s32 %s9, 2
    %s16 = sadd.s32 %s9, 1
    %s17 = ssub.s32 %s9, %s16
    %p18 = scmp.eq.s32.totalorder %s17, 0
    %s20 = sadd.s32 %s19, 1
    %s21 = scalar_select %p18, %s19, %s20
    %p24 = pneg %p18
    %p25 = scmp.eq.s32.totalorder %s9, 1
    %p26 = por %p24, %p25
    %p27 = scmp.ne.s32.totalorder %s19, %s22
    %p28 = scmp.eq.s32.totalorder %s9, 0
    %p29 = por %p27, %p28
    %p30 = scmp.ne.s32.totalorder %s19, %s22
    %p31 = scmp.eq.s32.totalorder %s14, 1
    %p32 = por %p30, %p31
    %p33 = scmp.ne.s32.totalorder %s22, %s23
    %p34 = scmp.eq.s32.totalorder %s14, 0
    %p35 = por %p33, %p34
    %p36 = scmp.ne.s32.totalorder %s22, %s23
    %p37 = scmp.eq.s32.totalorder %s15, 1
    %p38 = por %p36, %p37
    %p40 = scmp.ne.s32.totalorder %s23, %s39
    %p41 = scmp.eq.s32.totalorder %s15, 0
    %p42 = por %p40, %p41
    %s44 = sadd.s32 %s43, 1
    %p47 = scmp.eq.s32.totalorder %s9, 1
    %p48 = scmp.ne.s32.totalorder %s43, %s45
    %p49 = scmp.eq.s32.totalorder %s9, 0
    %p50 = por %p48, %p49
    %p51 = scmp.ne.s32.totalorder %s43, %s45
    %p52 = scmp.eq.s32.totalorder %s14, 1
    %p53 = por %p51, %p52
    %p54 = scmp.ne.s32.totalorder %s45, %s46
    %p55 = scmp.eq.s32.totalorder %s14, 0
    %p56 = por %p54, %p55
    %p57 = scmp.ne.s32.totalorder %s45, %s46
    %p58 = scmp.eq.s32.totalorder %s15, 1
    %p59 = por %p57, %p58
    %p61 = scmp.ne.s32.totalorder %s46, %s60
    %p62 = scmp.eq.s32.totalorder %s15, 0
    %p63 = por %p61, %p62
    %s65 = sadd.s32 %s64, 1
    %p68 = scmp.eq.s32.totalorder %s9, 1
    %p69 = scmp.ne.s32.totalorder %s64, %s66
    %p70 = scmp.eq.s32.totalorder %s9, 0
    %p71 = por %p69, %p70
    %p72 = scmp.ne.s32.totalorder %s64, %s66
    %p73 = scmp.eq.s32.totalorder %s14, 1
    %p74 = por %p72, %p73
    %p75 = scmp.ne.s32.totalorder %s66, %s67
    %p76 = scmp.eq.s32.totalorder %s14, 0
    %p77 = por %p75, %p76
    %p78 = scmp.ne.s32.totalorder %s66, %s67
    %p79 = scmp.eq.s32.totalorder %s15, 1
    %p80 = por %p78, %p79
    %p82 = scmp.ne.s32.totalorder %s67, %s81
    %p83 = scmp.eq.s32.totalorder %s15, 0
    %p84 = por %p82, %p83
    %s85 = ssub.s32 %s9, %s16
    %p86 = scmp.eq.s32.totalorder %s85, 0
    %s88 = sadd.s32 %s87, 1
    %s89 = scalar_select %p86, %s87, %s88
    %p92 = pneg %p86
    %p93 = scmp.eq.s32.totalorder %s9, 1
    %p94 = por %p92, %p93
    %p95 = scmp.ne.s32.totalorder %s87, %s90
    %p96 = scmp.eq.s32.totalorder %s9, 0
    %p97 = por %p95, %p96
    %p98 = scmp.ne.s32.totalorder %s87, %s90
    %p99 = scmp.eq.s32.totalorder %s14, 1
    %p100 = por %p98, %p99
    %p101 = scmp.ne.s32.totalorder %s90, %s91
    %p102 = scmp.eq.s32.totalorder %s14, 0
    %p103 = por %p101, %p102
    %p104 = scmp.ne.s32.totalorder %s90, %s91
    %p105 = scmp.eq.s32.totalorder %s15, 1
    %p106 = por %p104, %p105
    %p108 = scmp.ne.s32.totalorder %s91, %s107
    %p109 = scmp.eq.s32.totalorder %s15, 0
    %p110 = por %p108, %p109
    %p111 = scmp.le.s32.totalorder 1, %s9
    %p112 = scmp.lt.s32.totalorder %s9, 3
    %p113 = pnand %p111, %p112
    %p114 = pneg %p113
    // Predicated region
    $region9: #{_lambda_.16} parent=5 // pred_check
      _
    $region10: #{_lambda_.16} parent=5 // pred_check_branch
      %116 = sbr.rel (%p113) target = $region12
    $region11: #{_lambda_.16} parent=5 // pred_region
      %s117 = ssub.s32 %s9, 1
      // Predicated region
      $region13: #{_lambda_.16} parent=11 // pred_check
        %p118 = pneg %p56
      $region14: #{_lambda_.16} parent=11 // pred_check_branch
        %120 = sbr.rel (%p118) target = $region16
      $region15: #{_lambda_.16} parent=11 // pred_region
        _
      $region16: #{_lambda_.16} parent=11 // pred_fallthru
        _
      // Predicated region
      $region17: #{_lambda_.16} parent=11 // pred_check
        %p121 = pneg %p77
      $region18: #{_lambda_.16} parent=11 // pred_check_branch
        %123 = sbr.rel (%p121) target = $region20
      $region19: #{_lambda_.16} parent=11 // pred_region
        _
      $region20: #{_lambda_.16} parent=11 // pred_fallthru
        _
    $region12: #{_lambda_.16} parent=5 // pred_fallthru
      _
    %p124 = scmp.lt.s32.totalorder %s9, 2
    // Predicated region
    $region21: #{_lambda_.16} parent=5 // pred_check
      %p125 = pneg %p124
    $region22: #{_lambda_.16} parent=5 // pred_check_branch
      %127 = sbr.rel (%p125) target = $region24
    $region23: #{_lambda_.16} parent=5 // pred_region
      // Predicated region
      $region25: #{_lambda_.16} parent=23 // pred_check
        %p128 = pneg %p29
      $region26: #{_lambda_.16} parent=23 // pred_check_branch
        %130 = sbr.rel (%p128) target = $region28
      $region27: #{_lambda_.16} parent=23 // pred_region
        %p131 = scmp.lt.s32.totalorder %s9, 1
        %s132 = scalar_select %p131, %s9, 1
        %s133 = smul.addr %s132, 4
        %s134 = smul.addr %s133, 8
        %s135 = scalar_lea.vmem %s0, %s134
      $region28: #{_lambda_.16} parent=23 // pred_fallthru
        _
    $region24: #{_lambda_.16} parent=5 // pred_fallthru
      _
    %p136 = scmp.le.s32.totalorder 1, %s9
    %p137 = scmp.lt.s32.totalorder %s9, 3
    %p138 = pnand %p136, %p137
    %p139 = pneg %p138
    // Predicated region
    $region29: #{_lambda_.16} parent=5 // pred_check
      _
    $region30: #{_lambda_.16} parent=5 // pred_check_branch
      %141 = sbr.rel (%p138) target = $region32
    $region31: #{_lambda_.16} parent=5 // pred_region
      %s142 = ssub.s32 %s9, 1
      %p143 = scmp.lt.s32.totalorder %s14, 1
      %s144 = scalar_select %p143, %s14, 1
      %s145 = smul.addr %s144, 4
      %s146 = smul.addr %s145, 8
      %s147 = scalar_lea.vmem %s0, %s146
      %p148 = pneg %p35
      %p149 = pneg %p32
      %p150 = pneg %p56
      %p151 = pneg %p53
      %p152 = pneg %p77
      %p153 = pneg %p74
      %p154 = pneg %p103
      %p155 = pneg %p100
      %p156 = scmp.lt.s32.totalorder %s14, 1
      %s157 = scalar_select %p156, %s14, 1
      %s158 = smul.addr %s157, 3
      %s159 = smul.addr %s158, 8
      %s160 = scalar_lea.vmem %s3, %s159
      %p161 = scmp.lt.s32.totalorder %s14, 1
      %s162 = scalar_select %p161, %s14, 1
      %s163 = smul.addr %s162, 4
      %s164 = smul.addr %s163, 8
      %s165 = scalar_lea.vmem %s0, %s164
      %p166 = scmp.lt.s32.totalorder %s14, 1
      %s167 = scalar_select %p166, %s14, 1
      %s168 = smul.addr %s167, 3
      %s169 = smul.addr %s168, 8
      %s170 = scalar_lea.vmem %s3, %s169
      %v172 = vld [vmem:[%s165] sm:$0xff]
      %v173 = vld [vmem:[%s165 + $0x8] sm:$0xff]
      %v174 = vld [vmem:[%s165 + $0x10] sm:$0x7]
      %v175 = vpack.c.bf16 %v173, %v172
      %v176 = vpack.c.bf16 %v174, %v174
      %v177 = vld [vmem:[%s1] sm:$0xf]
      %v178 = vld [vmem:[%s1 + $0x4] sm:$0xf]
      %v181 = vunpack.c.l.b16 %v177
      %v182 = vunpack.c.l.b16 %v178
      %v183 = vpack.c.b16 %v182, %v181
      %vm185 = vcmask 130048
      %v187 = vsel %vm185, %v175, 0
      %v190 = vsel %vm185, %v176, 0
      %192 = vmatprep.subr.bf16.mxu0 0
      %193 = vmatpush1.bf16.msra.mxu0 %v183
      %194 = vmatprep.subr.bf16.mxu0 0
      %195 = vmatpush1.bf16.msra.mxu0 0
      %196 = vmatprep.subr.bf16.mxu0 0
      %197 = vmatpush1.bf16.msra.mxu0 0
      %198 = vmatprep.subr.bf16.mxu0 0
      %199 = vmatpush1.bf16.msra.mxu0 0
      %200 = vmatprep.subr.bf16.mxu0 0
      %201 = vmatpush1.bf16.msra.mxu0 0
      %202 = vmatprep.subr.bf16.mxu0 0
      %203 = vmatpush1.bf16.msra.mxu0 0
      %204 = vmatprep.subr.bf16.mxu0 0
      %205 = vmatpush1.bf16.msra.mxu0 0
      %206 = vmatprep.subr.bf16.mxu0 0
      %207 = vmatpush1.bf16.msra.mxu0 0
      %208 = vmatprep.subr.bf16.mxu0 0
      %209 = vmatpush1.bf16.msra.mxu0 0
      %210 = vmatprep.subr.bf16.mxu0 0
      %211 = vmatpush1.bf16.msra.mxu0 0
      %212 = vmatprep.subr.bf16.mxu0 0
      %213 = vmatpush1.bf16.msra.mxu0 0
      %214 = vmatprep.subr.bf16.mxu0 0
      %215 = vmatpush1.bf16.msra.mxu0 0
      %216 = vmatprep.subr.bf16.mxu0 0
      %217 = vmatpush1.bf16.msra.mxu0 0
      %218 = vmatprep.subr.bf16.mxu0 0
      %219 = vmatpush1.bf16.msra.mxu0 0
      %220 = vmatprep.subr.bf16.mxu0 0
      %221 = vmatpush1.bf16.msra.mxu0 0
      %222 = vmatprep.subr.bf16.mxu0 0
      %223 = vmatpush1.bf16.msra.mxu0 0
      %224 = vmatprep.mubr.bf16.mxu0 0
      %225 = vmatmul.mubr.bf16.gmra.mrb[0].mxu0 %v187
      %v226 = vpop.f32.mrb[0].mxu0
      %v227 = vadd.f32 0.0, %v226
      %v228 = vpop.f32.mrb[0].mxu0
      %v229 = vpop.f32.mrb[0].mxu0
      %v230 = vadd.f32 0.0, %v229
      %v231 = vpop.f32.mrb[0].mxu0
      %232 = vmatprep.mubr.bf16.mxu0 0
      %233 = vmatmul.mubr.bf16.gmra.mrb[0].mxu0 %v190
      %v234 = vpop.f32.mrb[0].mxu0
      %v235 = vadd.f32 0.0, %v234
      %v236 = vpop.f32.mrb[0].mxu0
      %v237 = vpop.f32.mrb[0].mxu0
      %v238 = vpop.f32.mrb[0].mxu0
      %239 = vdwg.mxu0
      %s240 = scalar_lea.vmem %s1, 8
      %v241 = vld [vmem:[%s240] sm:$0xf]
      %v242 = vld [vmem:[%s240 + $0x4] sm:$0xf]
      %v243 = vld [vmem:[%s165 + $0x1] sm:$0xff]
      %v244 = vld [vmem:[%s165 + $0x9] sm:$0xff]
      %v245 = vld [vmem:[%s165 + $0x11] sm:$0x7]
      %v246 = vpack.c.bf16 %v244, %v243
      %v247 = vpack.c.bf16 %v245, %v245
      %s248 = scalar_lea.vmem %s1, 16
      %v249 = vld [vmem:[%s248] sm:$0xf]
      %v250 = vld [vmem:[%s248 + $0x4] sm:$0xf]
      %v253 = vunpack.c.l.b16 %v249
      %v254 = vunpack.c.l.b16 %v250
      %v255 = vpack.c.b16 %v254, %v253
      %v258 = vsel %vm185, %v246, 0
      %v261 = vsel %vm185, %v247, 0
      %263 = vmatprep.subr.bf16.mxu0 0
      %264 = vmatpush1.bf16.msra.mxu0 %v255
      %265 = vmatprep.subr.bf16.mxu0 0
      %266 = vmatpush1.bf16.msra.mxu0 0
      %267 = vmatprep.subr.bf16.mxu0 0
      %268 = vmatpush1.bf16.msra.mxu0 0
      %269 = vmatprep.subr.bf16.mxu0 0
      %270 = vmatpush1.bf16.msra.mxu0 0
      %271 = vmatprep.subr.bf16.mxu0 0
      %272 = vmatpush1.bf16.msra.mxu0 0
      %273 = vmatprep.subr.bf16.mxu0 0
      %274 = vmatpush1.bf16.msra.mxu0 0
      %275 = vmatprep.subr.bf16.mxu0 0
      %276 = vmatpush1.bf16.msra.mxu0 0
      %277 = vmatprep.subr.bf16.mxu0 0
      %278 = vmatpush1.bf16.msra.mxu0 0
      %279 = vmatprep.subr.bf16.mxu0 0
      %280 = vmatpush1.bf16.msra.mxu0 0
      %281 = vmatprep.subr.bf16.mxu0 0
      %282 = vmatpush1.bf16.msra.mxu0 0
      %283 = vmatprep.subr.bf16.mxu0 0
      %284 = vmatpush1.bf16.msra.mxu0 0
      %285 = vmatprep.subr.bf16.mxu0 0
      %286 = vmatpush1.bf16.msra.mxu0 0
      %287 = vmatprep.subr.bf16.mxu0 0
      %288 = vmatpush1.bf16.msra.mxu0 0
      %289 = vmatprep.subr.bf16.mxu0 0
      %290 = vmatpush1.bf16.msra.mxu0 0
      %291 = vmatprep.subr.bf16.mxu0 0
      %292 = vmatpush1.bf16.msra.mxu0 0
      %293 = vmatprep.subr.bf16.mxu0 0
      %294 = vmatpush1.bf16.msra.mxu0 0
      %295 = vmatprep.mubr.bf16.mxu0 0
      %296 = vmatmul.mubr.bf16.gmra.mrb[0].mxu0 %v258
      %v297 = vpop.f32.mrb[0].mxu0
      %v298 = vadd.f32 0.0, %v297
      %v299 = vpop.f32.mrb[0].mxu0
      %v300 = vpop.f32.mrb[0].mxu0
      %v301 = vadd.f32 0.0, %v300
      %v302 = vpop.f32.mrb[0].mxu0
      %303 = vmatprep.mubr.bf16.mxu0 0
      %304 = vmatmul.mubr.bf16.gmra.mrb[0].mxu0 %v261
      %v305 = vpop.f32.mrb[0].mxu0
      %v306 = vadd.f32 0.0, %v305
      %v307 = vpop.f32.mrb[0].mxu0
      %v308 = vpop.f32.mrb[0].mxu0
      %v309 = vpop.f32.mrb[0].mxu0
      %310 = vdwg.mxu0
      %v313 = vunpack.c.l.b16 %v241
      %v314 = vunpack.c.l.b16 %v242
      %v315 = vpack.c.b16 %v314, %v313
      %317 = vmatprep.subr.bf16.mxu0 0
      %318 = vmatpush1.bf16.msra.mxu0 %v315
      %319 = vmatprep.subr.bf16.mxu0 0
      %320 = vmatpush1.bf16.msra.mxu0 0
      %321 = vmatprep.subr.bf16.mxu0 0
      %322 = vmatpush1.bf16.msra.mxu0 0
      %323 = vmatprep.subr.bf16.mxu0 0
      %324 = vmatpush1.bf16.msra.mxu0 0
      %325 = vmatprep.subr.bf16.mxu0 0
      %326 = vmatpush1.bf16.msra.mxu0 0
      %327 = vmatprep.subr.bf16.mxu0 0
      %328 = vmatpush1.bf16.msra.mxu0 0
      %329 = vmatprep.subr.bf16.mxu0 0
      %330 = vmatpush1.bf16.msra.mxu0 0
      %331 = vmatprep.subr.bf16.mxu0 0
      %332 = vmatpush1.bf16.msra.mxu0 0
      %333 = vmatprep.subr.bf16.mxu0 0
      %334 = vmatpush1.bf16.msra.mxu0 0
      %335 = vmatprep.subr.bf16.mxu0 0
      %336 = vmatpush1.bf16.msra.mxu0 0
      %337 = vmatprep.subr.bf16.mxu0 0
      %338 = vmatpush1.bf16.msra.mxu0 0
      %339 = vmatprep.subr.bf16.mxu0 0
      %340 = vmatpush1.bf16.msra.mxu0 0
      %341 = vmatprep.subr.bf16.mxu0 0
      %342 = vmatpush1.bf16.msra.mxu0 0
      %343 = vmatprep.subr.bf16.mxu0 0
      %344 = vmatpush1.bf16.msra.mxu0 0
      %345 = vmatprep.subr.bf16.mxu0 0
      %346 = vmatpush1.bf16.msra.mxu0 0
      %347 = vmatprep.subr.bf16.mxu0 0
      %348 = vmatpush1.bf16.msra.mxu0 0
      %349 = vmatprep.mubr.bf16.mxu0 0
      %350 = vmatmul.mubr.bf16.gmra.mrb[0].mxu0 %v187
      %v351 = vpop.f32.mrb[0].mxu0
      %v352 = vadd.f32 %v298, %v351
      %v353 = vpop.f32.mrb[0].mxu0
      %v354 = vpop.f32.mrb[0].mxu0
      %v355 = vadd.f32 %v301, %v354
      %v356 = vpop.f32.mrb[0].mxu0
      %357 = vmatprep.mubr.bf16.mxu0 0
      %358 = vmatmul.mubr.bf16.gmra.mrb[0].mxu0 %v190
      %v359 = vpop.f32.mrb[0].mxu0
      %v360 = vadd.f32 %v306, %v359
      %v361 = vpop.f32.mrb[0].mxu0
      %v362 = vpop.f32.mrb[0].mxu0
      %v363 = vpop.f32.mrb[0].mxu0
      %364 = vdwg.mxu0
      %s365 = scalar_lea.vmem %s1, 24
      %v366 = vld [vmem:[%s365] sm:$0xf]
      %v367 = vld [vmem:[%s365 + $0x4] sm:$0xf]
      %v368 = vld [vmem:[%s165 + $0x5] sm:$0xff]
      %v369 = vld [vmem:[%s165 + $0xd] sm:$0xff]
      %v370 = vld [vmem:[%s165 + $0x15] sm:$0x7]
      %v371 = vpack.c.bf16 %v369, %v368
      %v372 = vpack.c.bf16 %v370, %v370
      %s373 = scalar_lea.vmem %s1, 32
      %v374 = vld [vmem:[%s373] sm:$0xf]
      %v375 = vld [vmem:[%s373 + $0x4] sm:$0xf]
      %v378 = vunpack.c.l.b16 %v374
      %v379 = vunpack.c.l.b16 %v375
      %v380 = vpack.c.b16 %v379, %v378
      %v383 = vsel %vm185, %v371, 0
      %v386 = vsel %vm185, %v372, 0
      %388 = vmatprep.subr.bf16.mxu0 0
      %389 = vmatpush1.bf16.msra.mxu0 %v380
      %390 = vmatprep.subr.bf16.mxu0 0
      %391 = vmatpush1.bf16.msra.mxu0 0
      %392 = vmatprep.subr.bf16.mxu0 0
      %393 = vmatpush1.bf16.msra.mxu0 0
      %394 = vmatprep.subr.bf16.mxu0 0
      %395 = vmatpush1.bf16.msra.mxu0 0
      %396 = vmatprep.subr.bf16.mxu0 0
      %397 = vmatpush1.bf16.msra.mxu0 0
      %398 = vmatprep.subr.bf16.mxu0 0
      %399 = vmatpush1.bf16.msra.mxu0 0
      %400 = vmatprep.subr.bf16.mxu0 0
      %401 = vmatpush1.bf16.msra.mxu0 0
      %402 = vmatprep.subr.bf16.mxu0 0
      %403 = vmatpush1.bf16.msra.mxu0 0
      %404 = vmatprep.subr.bf16.mxu0 0
      %405 = vmatpush1.bf16.msra.mxu0 0
      %406 = vmatprep.subr.bf16.mxu0 0
      %407 = vmatpush1.bf16.msra.mxu0 0
      %408 = vmatprep.subr.bf16.mxu0 0
      %409 = vmatpush1.bf16.msra.mxu0 0
      %410 = vmatprep.subr.bf16.mxu0 0
      %411 = vmatpush1.bf16.msra.mxu0 0
      %412 = vmatprep.subr.bf16.mxu0 0
      %413 = vmatpush1.bf16.msra.mxu0 0
      %414 = vmatprep.subr.bf16.mxu0 0
      %415 = vmatpush1.bf16.msra.mxu0 0
      %416 = vmatprep.subr.bf16.mxu0 0
      %417 = vmatpush1.bf16.msra.mxu0 0
      %418 = vmatprep.subr.bf16.mxu0 0
      %419 = vmatpush1.bf16.msra.mxu0 0
      %420 = vmatprep.mubr.bf16.mxu0 0
      %421 = vmatmul.mubr.bf16.gmra.mrb[0].mxu0 %v383
      %v422 = vpop.f32.mrb[0].mxu0
      %v423 = vadd.f32 0.0, %v422
      %v424 = vpop.f32.mrb[0].mxu0
      %v425 = vpop.f32.mrb[0].mxu0
      %v426 = vadd.f32 0.0, %v425
      %v427 = vpop.f32.mrb[0].mxu0
      %428 = vmatprep.mubr.bf16.mxu0 0
      %429 = vmatmul.mubr.bf16.gmra.mrb[0].mxu0 %v386
      %v430 = vpop.f32.mrb[0].mxu0
      %v431 = vadd.f32 0.0, %v430
      %v432 = vpop.f32.mrb[0].mxu0
      %v433 = vpop.f32.mrb[0].mxu0
      %v434 = vpop.f32.mrb[0].mxu0
      %435 = vdwg.mxu0
      %v438 = vunpack.c.l.b16 %v366
      %v439 = vunpack.c.l.b16 %v367
      %v440 = vpack.c.b16 %v439, %v438
      %442 = vmatprep.subr.bf16.mxu0 0
      %443 = vmatpush1.bf16.msra.mxu0 %v440
      %444 = vmatprep.subr.bf16.mxu0 0
      %445 = vmatpush1.bf16.msra.mxu0 0
      %446 = vmatprep.subr.bf16.mxu0 0
      %447 = vmatpush1.bf16.msra.mxu0 0
      %448 = vmatprep.subr.bf16.mxu0 0
      %449 = vmatpush1.bf16.msra.mxu0 0
      %450 = vmatprep.subr.bf16.mxu0 0
      %451 = vmatpush1.bf16.msra.mxu0 0
      %452 = vmatprep.subr.bf16.mxu0 0
      %453 = vmatpush1.bf16.msra.mxu0 0
      %454 = vmatprep.subr.bf16.mxu0 0
      %455 = vmatpush1.bf16.msra.mxu0 0
      %456 = vmatprep.subr.bf16.mxu0 0
      %457 = vmatpush1.bf16.msra.mxu0 0
      %458 = vmatprep.subr.bf16.mxu0 0
      %459 = vmatpush1.bf16.msra.mxu0 0
      %460 = vmatprep.subr.bf16.mxu0 0
      %461 = vmatpush1.bf16.msra.mxu0 0
      %462 = vmatprep.subr.bf16.mxu0 0
      %463 = vmatpush1.bf16.msra.mxu0 0
      %464 = vmatprep.subr.bf16.mxu0 0
      %465 = vmatpush1.bf16.msra.mxu0 0
      %466 = vmatprep.subr.bf16.mxu0 0
      %467 = vmatpush1.bf16.msra.mxu0 0
      %468 = vmatprep.subr.bf16.mxu0 0
      %469 = vmatpush1.bf16.msra.mxu0 0
      %470 = vmatprep.subr.bf16.mxu0 0
      %471 = vmatpush1.bf16.msra.mxu0 0
      %472 = vmatprep.subr.bf16.mxu0 0
      %473 = vmatpush1.bf16.msra.mxu0 0
      %474 = vmatprep.mubr.bf16.mxu0 0
      %475 = vmatmul.mubr.bf16.gmra.mrb[0].mxu0 %v187
      %v476 = vpop.f32.mrb[0].mxu0
      %v477 = vadd.f32 %v423, %v476
      %v478 = vpop.f32.mrb[0].mxu0
      %v479 = vpop.f32.mrb[0].mxu0
      %v480 = vadd.f32 %v426, %v479
      %v481 = vpop.f32.mrb[0].mxu0
      %482 = vmatprep.mubr.bf16.mxu0 0
      %483 = vmatmul.mubr.bf16.gmra.mrb[0].mxu0 %v190
      %v484 = vpop.f32.mrb[0].mxu0
      %v485 = vadd.f32 %v431, %v484
      %v486 = vpop.f32.mrb[0].mxu0
      %v487 = vpop.f32.mrb[0].mxu0
      %v488 = vpop.f32.mrb[0].mxu0
      %489 = vdwg.mxu0
      %s490 = scalar_lea.vmem %s1, 40
      %v491 = vld [vmem:[%s490] sm:$0xf]
      %v492 = vld [vmem:[%s490 + $0x4] sm:$0xf]
      %s493 = scalar_lea.vmem %s1, 48
      %v494 = vld [vmem:[%s493] sm:$0xf]
      %v495 = vld [vmem:[%s493 + $0x4] sm:$0xf]
      %v498 = vunpack.c.l.b16 %v494
      %v499 = vunpack.c.l.b16 %v495
      %v500 = vpack.c.b16 %v499, %v498
      %502 = vmatprep.subr.bf16.mxu0 0
      %503 = vmatpush1.bf16.msra.mxu0 %v500
      %504 = vmatprep.subr.bf16.mxu0 0
      %505 = vmatpush1.bf16.msra.mxu0 0
      %506 = vmatprep.subr.bf16.mxu0 0
      %507 = vmatpush1.bf16.msra.mxu0 0
      %508 = vmatprep.subr.bf16.mxu0 0
      %509 = vmatpush1.bf16.msra.mxu0 0
      %510 = vmatprep.subr.bf16.mxu0 0
      %511 = vmatpush1.bf16.msra.mxu0 0
      %512 = vmatprep.subr.bf16.mxu0 0
      %513 = vmatpush1.bf16.msra.mxu0 0
      %514 = vmatprep.subr.bf16.mxu0 0
      %515 = vmatpush1.bf16.msra.mxu0 0
      %516 = vmatprep.subr.bf16.mxu0 0
      %517 = vmatpush1.bf16.msra.mxu0 0
      %518 = vmatprep.subr.bf16.mxu0 0
      %519 = vmatpush1.bf16.msra.mxu0 0
      %520 = vmatprep.subr.bf16.mxu0 0
      %521 = vmatpush1.bf16.msra.mxu0 0
      %522 = vmatprep.subr.bf16.mxu0 0
      %523 = vmatpush1.bf16.msra.mxu0 0
      %524 = vmatprep.subr.bf16.mxu0 0
      %525 = vmatpush1.bf16.msra.mxu0 0
      %526 = vmatprep.subr.bf16.mxu0 0
      %527 = vmatpush1.bf16.msra.mxu0 0
      %528 = vmatprep.subr.bf16.mxu0 0
      %529 = vmatpush1.bf16.msra.mxu0 0
      %530 = vmatprep.subr.bf16.mxu0 0
      %531 = vmatpush1.bf16.msra.mxu0 0
      %532 = vmatprep.subr.bf16.mxu0 0
      %533 = vmatpush1.bf16.msra.mxu0 0
      %534 = vmatprep.mubr.bf16.mxu0 0
      %535 = vmatmul.mubr.bf16.gmra.mrb[0].mxu0 %v258
      %v536 = vpop.f32.mrb[0].mxu0
      %v537 = vadd.f32 0.0, %v536
      %v538 = vpop.f32.mrb[0].mxu0
      %v539 = vpop.f32.mrb[0].mxu0
      %v540 = vadd.f32 0.0, %v539
      %v541 = vpop.f32.mrb[0].mxu0
      %542 = vmatprep.mubr.bf16.mxu0 0
      %543 = vmatmul.mubr.bf16.gmra.mrb[0].mxu0 %v261
      %v544 = vpop.f32.mrb[0].mxu0
      %v545 = vadd.f32 0.0, %v544
      %v546 = vpop.f32.mrb[0].mxu0
      %v547 = vpop.f32.mrb[0].mxu0
      %v548 = vpop.f32.mrb[0].mxu0
      %549 = vdwg.mxu0
      %v552 = vunpack.c.l.b16 %v491
      %v553 = vunpack.c.l.b16 %v492
      %v554 = vpack.c.b16 %v553, %v552
      %556 = vmatprep.subr.bf16.mxu0 0
      %557 = vmatpush1.bf16.msra.mxu0 %v554
      %558 = vmatprep.subr.bf16.mxu0 0
      %559 = vmatpush1.bf16.msra.mxu0 0
      %560 = vmatprep.subr.bf16.mxu0 0
      %561 = vmatpush1.bf16.msra.mxu0 0
      %562 = vmatprep.subr.bf16.mxu0 0
      %563 = vmatpush1.bf16.msra.mxu0 0
      %564 = vmatprep.subr.bf16.mxu0 0
      %565 = vmatpush1.bf16.msra.mxu0 0
      %566 = vmatprep.subr.bf16.mxu0 0
      %567 = vmatpush1.bf16.msra.mxu0 0
      %568 = vmatprep.subr.bf16.mxu0 0
      %569 = vmatpush1.bf16.msra.mxu0 0
      %570 = vmatprep.subr.bf16.mxu0 0
      %571 = vmatpush1.bf16.msra.mxu0 0
      %572 = vmatprep.subr.bf16.mxu0 0
      %573 = vmatpush1.bf16.msra.mxu0 0
      %574 = vmatprep.subr.bf16.mxu0 0
      %575 = vmatpush1.bf16.msra.mxu0 0
      %576 = vmatprep.subr.bf16.mxu0 0
      %577 = vmatpush1.bf16.msra.mxu0 0
      %578 = vmatprep.subr.bf16.mxu0 0
      %579 = vmatpush1.bf16.msra.mxu0 0
      %580 = vmatprep.subr.bf16.mxu0 0
      %581 = vmatpush1.bf16.msra.mxu0 0
      %582 = vmatprep.subr.bf16.mxu0 0
      %583 = vmatpush1.bf16.msra.mxu0 0
      %584 = vmatprep.subr.bf16.mxu0 0
      %585 = vmatpush1.bf16.msra.mxu0 0
      %586 = vmatprep.subr.bf16.mxu0 0
      %587 = vmatpush1.bf16.msra.mxu0 0
      %588 = vmatprep.mubr.bf16.mxu0 0
      %589 = vmatmul.mubr.bf16.gmra.mrb[0].mxu0 %v187
      %v590 = vpop.f32.mrb[0].mxu0
      %v591 = vadd.f32 %v537, %v590
      %v592 = vpop.f32.mrb[0].mxu0
      %v593 = vpop.f32.mrb[0].mxu0
      %v594 = vadd.f32 %v540, %v593
      %v595 = vpop.f32.mrb[0].mxu0
      %596 = vmatprep.mubr.bf16.mxu0 0
      %597 = vmatmul.mubr.bf16.gmra.mrb[0].mxu0 %v190
      %v598 = vpop.f32.mrb[0].mxu0
      %v599 = vadd.f32 %v545, %v598
      %v600 = vpop.f32.mrb[0].mxu0
      %v601 = vpop.f32.mrb[0].mxu0
      %v602 = vpop.f32.mrb[0].mxu0
      %603 = vdwg.mxu0
      %s604 = scalar_lea.vmem %s1, 56
      %v605 = vld [vmem:[%s604] sm:$0xf]
      %v606 = vld [vmem:[%s604 + $0x4] sm:$0xf]
      %v609 = vunpack.c.l.b16 %v605
      %v610 = vunpack.c.l.b16 %v606
      %v611 = vpack.c.b16 %v610, %v609
      %613 = vmatprep.subr.bf16.mxu0 0
      %614 = vmatpush1.bf16.msra.mxu0 %v611
      %615 = vmatprep.subr.bf16.mxu0 0
      %616 = vmatpush1.bf16.msra.mxu0 0
      %617 = vmatprep.subr.bf16.mxu0 0
      %618 = vmatpush1.bf16.msra.mxu0 0
      %619 = vmatprep.subr.bf16.mxu0 0
      %620 = vmatpush1.bf16.msra.mxu0 0
      %621 = vmatprep.subr.bf16.mxu0 0
      %622 = vmatpush1.bf16.msra.mxu0 0
      %623 = vmatprep.subr.bf16.mxu0 0
      %624 = vmatpush1.bf16.msra.mxu0 0
      %625 = vmatprep.subr.bf16.mxu0 0
      %626 = vmatpush1.bf16.msra.mxu0 0
      %627 = vmatprep.subr.bf16.mxu0 0
      %628 = vmatpush1.bf16.msra.mxu0 0
      %629 = vmatprep.subr.bf16.mxu0 0
      %630 = vmatpush1.bf16.msra.mxu0 0
      %631 = vmatprep.subr.bf16.mxu0 0
      %632 = vmatpush1.bf16.msra.mxu0 0
      %633 = vmatprep.subr.bf16.mxu0 0
      %634 = vmatpush1.bf16.msra.mxu0 0
      %635 = vmatprep.subr.bf16.mxu0 0
      %636 = vmatpush1.bf16.msra.mxu0 0
      %637 = vmatprep.subr.bf16.mxu0 0
      %638 = vmatpush1.bf16.msra.mxu0 0
      %639 = vmatprep.subr.bf16.mxu0 0
      %640 = vmatpush1.bf16.msra.mxu0 0
      %641 = vmatprep.subr.bf16.mxu0 0
      %642 = vmatpush1.bf16.msra.mxu0 0
      %643 = vmatprep.subr.bf16.mxu0 0
      %644 = vmatpush1.bf16.msra.mxu0 0
      %645 = vmatprep.mubr.bf16.mxu0 0
      %646 = vmatmul.mubr.bf16.gmra.mrb[0].mxu0 %v383
      %v647 = vpop.f32.mrb[0].mxu0
      %v648 = vadd.f32 0.0, %v647
      %v649 = vpop.f32.mrb[0].mxu0
      %v650 = vpop.f32.mrb[0].mxu0
      %v651 = vadd.f32 0.0, %v650
      %v652 = vpop.f32.mrb[0].mxu0
      %653 = vmatprep.mubr.bf16.mxu0 0
      %654 = vmatmul.mubr.bf16.gmra.mrb[0].mxu0 %v386
      %v655 = vpop.f32.mrb[0].mxu0
      %v656 = vadd.f32 0.0, %v655
      %v657 = vpop.f32.mrb[0].mxu0
      %v658 = vpop.f32.mrb[0].mxu0
      %v659 = vpop.f32.mrb[0].mxu0
      %660 = vdwg.mxu0
      %v661 = vadd.f32 %v591, %v648
      %v662 = vadd.f32 %v594, %v651
      %v663 = vadd.f32 %v599, %v656
      %v664 = vld [vmem:[%s165 + $0x6] sm:$0xff]
      %v665 = vld [vmem:[%s165 + $0xe] sm:$0xff]
      %v666 = vld [vmem:[%s165 + $0x16] sm:$0x7]
      %v667 = vpack.c.bf16 %v665, %v664
      %v668 = vpack.c.bf16 %v666, %v666
      %s669 = scalar_lea.vmem %s1, 64
      %v670 = vld [vmem:[%s669] sm:$0xf]
      %v671 = vld [vmem:[%s669 + $0x4] sm:$0xf]
      %v674 = vunpack.c.l.b16 %v670
      %v675 = vunpack.c.l.b16 %v671
      %v676 = vpack.c.b16 %v675, %v674
      %v679 = vsel %vm185, %v667, 0
      %v682 = vsel %vm185, %v668, 0
      %684 = vmatprep.subr.bf16.mxu0 0
      %685 = vmatpush1.bf16.msra.mxu0 %v676
      %686 = vmatprep.subr.bf16.mxu0 0
      %687 = vmatpush1.bf16.msra.mxu0 0
      %688 = vmatprep.subr.bf16.mxu0 0
      %689 = vmatpush1.bf16.msra.mxu0 0
      %690 = vmatprep.subr.bf16.mxu0 0
      %691 = vmatpush1.bf16.msra.mxu0 0
      %692 = vmatprep.subr.bf16.mxu0 0
      %693 = vmatpush1.bf16.msra.mxu0 0
      %694 = vmatprep.subr.bf16.mxu0 0
      %695 = vmatpush1.bf16.msra.mxu0 0
      %696 = vmatprep.subr.bf16.mxu0 0
      %697 = vmatpush1.bf16.msra.mxu0 0
      %698 = vmatprep.subr.bf16.mxu0 0
      %699 = vmatpush1.bf16.msra.mxu0 0
      %700 = vmatprep.subr.bf16.mxu0 0
      %701 = vmatpush1.bf16.msra.mxu0 0
      %702 = vmatprep.subr.bf16.mxu0 0
      %703 = vmatpush1.bf16.msra.mxu0 0
      %704 = vmatprep.subr.bf16.mxu0 0
      %705 = vmatpush1.bf16.msra.mxu0 0
      %706 = vmatprep.subr.bf16.mxu0 0
      %707 = vmatpush1.bf16.msra.mxu0 0
      %708 = vmatprep.subr.bf16.mxu0 0
      %709 = vmatpush1.bf16.msra.mxu0 0
      %710 = vmatprep.subr.bf16.mxu0 0
      %711 = vmatpush1.bf16.msra.mxu0 0
      %712 = vmatprep.subr.bf16.mxu0 0
      %713 = vmatpush1.bf16.msra.mxu0 0
      %714 = vmatprep.subr.bf16.mxu0 0
      %715 = vmatpush1.bf16.msra.mxu0 0
      %716 = vmatprep.mubr.bf16.mxu0 0
      %717 = vmatmul.mubr.bf16.gmra.mrb[0].mxu0 %v679
      %v718 = vpop.f32.mrb[0].mxu0
      %v719 = vadd.f32 0.0, %v718
      %v720 = vpop.f32.mrb[0].mxu0
      %v721 = vpop.f32.mrb[0].mxu0
      %v722 = vadd.f32 0.0, %v721
      %v723 = vpop.f32.mrb[0].mxu0
      %724 = vmatprep.mubr.bf16.mxu0 0
      %725 = vmatmul.mubr.bf16.gmra.mrb[0].mxu0 %v682
      %v726 = vpop.f32.mrb[0].mxu0
      %v727 = vadd.f32 0.0, %v726
      %v728 = vpop.f32.mrb[0].mxu0
      %v729 = vpop.f32.mrb[0].mxu0
      %v730 = vpop.f32.mrb[0].mxu0
      %731 = vdwg.mxu0
      %v732 = vadd.f32 %v661, %v719
      %v733 = vadd.f32 %v662, %v722
      %v734 = vadd.f32 %v663, %v727
      %738 = vrot.lane.b32.xlu0 %v352, 8
      %v739 = vpop.permute.xlu0 %738
      %740 = vrot.lane.b32.xlu0 %v355, 8
      %v741 = vpop.permute.xlu0 %740
      %742 = vrot.lane.b32.xlu0 %v360, 8
      %v743 = vpop.permute.xlu0 %742
      %750 = vrot.lane.b32.xlu0 %v477, 16
      %v751 = vpop.permute.xlu0 %750
      %752 = vrot.lane.b32.xlu0 %v480, 16
      %v753 = vpop.permute.xlu0 %752
      %754 = vrot.lane.b32.xlu0 %v485, 16
      %v755 = vpop.permute.xlu0 %754
      %762 = vrot.lane.b32.xlu0 %v732, 24
      %v763 = vpop.permute.xlu0 %762
      %764 = vrot.lane.b32.xlu0 %v733, 24
      %v765 = vpop.permute.xlu0 %764
      %766 = vrot.lane.b32.xlu0 %v734, 24
      %v767 = vpop.permute.xlu0 %766
      %vm771 = vcmask 64512
      %v772 = vsel %vm771, %v227, %v739
      %v773 = vsel %vm771, %v230, %v741
      %v774 = vsel %vm771, %v235, %v743
      %v775 = vsel %vm185, %v772, %v751
      %v776 = vsel %vm185, %v773, %v753
      %v777 = vsel %vm185, %v774, %v755
      %vm778 = vcmask 195584
      %v779 = vsel %vm778, %v775, %v763
      %v780 = vsel %vm778, %v776, %v765
      %v781 = vsel %vm778, %v777, %v767
      %v782 = vld [vmem:[%s2] sm:$0x1]
      %v784 = vlaneseq
      %v785 = vshrl.u32 %v784, 7
      %v786 = vsub.s32 0, %v785
      %v787 = vrot.slane %v782, %v786
      %v789 = vadd.f32 %v779, %v787
      %v790 = vadd.f32 %v780, %v787
      %v791 = vadd.f32 %v781, %v787
      %vm792 = vcmp.ge.f32.partialorder %v789, 0.0
      %vm793 = vcmp.ge.f32.partialorder %v790, 0.0
      %vm794 = vcmp.ge.f32.partialorder %v791, 0.0
      %v795 = vmul.f32 %v789, 0.01
      %v796 = vmul.f32 %v790, 0.01
      %v797 = vmul.f32 %v791, 0.01
      %v798 = vsel %vm792, %v789, %v795
      %v799 = vsel %vm793, %v790, %v796
      %v800 = vsel %vm794, %v791, %v797
      %vm801 = vcmask 261120
      %802 = vst.msk [vmem:[%s170] sm:$0xff] %vm801, %v798
      %803 = vst.msk [vmem:[%s170 + $0x8] sm:$0xff] %vm801, %v799
      %vm804 = vcmask 256000
      %805 = vst.msk [vmem:[%s170 + $0x10] sm:$0x7] %vm804, %v800
      %p806 = scmp.lt.s32.totalorder %s14, 1
      %s807 = scalar_select %p806, %s14, 1
      %s808 = smul.addr %s807, 3
      %s809 = smul.addr %s808, 8
      %s810 = scalar_lea.vmem %s3, %s809
      // Predicated region
      $region33: #{_lambda_.16} parent=31 // pred_check
        %p811 = pneg %p100
      $region34: #{_lambda_.16} parent=31 // pred_check_branch
        %813 = sbr.rel (%p811) target = $region36
      $region35: #{_lambda_.16} parent=31 // pred_region
        _
      $region36: #{_lambda_.16} parent=31 // pred_fallthru
        _
    $region32: #{_lambda_.16} parent=5 // pred_fallthru
      _
    %p814 = scmp.le.s32.totalorder 2, %s9
    // Predicated region
    $region37: #{_lambda_.16} parent=5 // pred_check
      %p815 = pneg %p814
    $region38: #{_lambda_.16} parent=5 // pred_check_branch
      %817 = sbr.rel (%p815) target = $region40
    $region39: #{_lambda_.16} parent=5 // pred_region
      %s818 = ssub.s32 %s9, 2
      // Predicated region
      $region41: #{_lambda_.16} parent=39 // pred_check
        %p819 = pneg %p106
      $region42: #{_lambda_.16} parent=39 // pred_check_branch
        %821 = sbr.rel (%p819) target = $region44
      $region43: #{_lambda_.16} parent=39 // pred_region
        %p822 = scmp.lt.s32.totalorder %s15, 1
        %s823 = scalar_select %p822, %s15, 1
        %s824 = smul.addr %s823, 3
        %s825 = smul.addr %s824, 8
        %s826 = scalar_lea.vmem %s3, %s825
      $region44: #{_lambda_.16} parent=39 // pred_fallthru
        _
    $region40: #{_lambda_.16} parent=5 // pred_fallthru
      _
  $region6: #{_lambda_.16} parent=0 // loop_footer
    %s13 = sadd.s32 1, %s9
  $region7: #{_lambda_.16} parent=0 // loop_footer_branch
    %8 = sbr.rel target = $region3
  $region8: #{_lambda_.16} parent=0 // loop_exit
    _

// kernel: _lambda_.17
$region0: #{_lambda_.17}
  #allocation0 [shape = 'u32[]', space=smem, size = 0x4, offset = 0x4, fixed_abs, tag = 'smem constant byte address 0x4 - core index']
  #allocation1 [shape = 'u32[144,128]{1,0:T(1,128)}', space=vmem, size = 0x12000, scoped, tag = 'internal scratch']
  %s0 = inlined_call_operand.vmem [shape: f32[2,81,8], index: 0, kind: input, shape index: {}]
  %s1 = inlined_call_operand.vmem [shape: bf16[9,8,8], index: 1, kind: input, shape index: {}]
  %s2 = inlined_call_operand.vmem [shape: f32[1,32], index: 2, kind: input, shape index: {}]
  %s3 = inlined_call_operand.vmem [shape: f32[2,71,32], index: 3, kind: output, shape index: {}]
  %s4 = sld [smem:[#allocation0]]
  $region45: #{_lambda_.17} parent=0
    _
  %s6 = ssub.s32 1, %s4
  %s7 = scalar_select 0, %s6, %s4
  loop: start=0, step=1, limit=4
  $region2: #{_lambda_.17} parent=0 // loop_pre_header
    _
  $region3: #{_lambda_.17} parent=0 // loop_header
    %s9 = sphi 0, %s13
    %p10 = scmp.ge.s32.totalorder %s9, 4
    %s19 = sphi 0, %s21
    %s22 = sphi 0, %s19
    %s23 = sphi 0, %s22
    %s39 = sphi 0, %s23
    %s43 = sphi 0, %s43
    %s45 = sphi 0, %s43
    %s46 = sphi 0, %s45
    %s60 = sphi 0, %s46
    %s64 = sphi 0, %s64
    %s66 = sphi 0, %s64
    %s67 = sphi 0, %s66
    %s81 = sphi 0, %s67
    %s87 = sphi 0, %s89
    %s90 = sphi 0, %s87
    %s91 = sphi 0, %s90
    %s107 = sphi 0, %s91
  $region4: #{_lambda_.17} parent=0 // loop_header_branch
    %12 = sbr.rel (%p10) target = $region8
  $region5: #{_lambda_.17} parent=0 // loop_body
    %s14 = ssub.s32 %s9, 1
    %s15 = ssub.s32 %s9, 2
    %s16 = sadd.s32 %s9, 1
    %s17 = ssub.s32 %s9, %s16
    %p18 = scmp.eq.s32.totalorder %s17, 0
    %s20 = sadd.s32 %s19, 1
    %s21 = scalar_select %p18, %s19, %s20
    %p24 = pneg %p18
    %p25 = scmp.eq.s32.totalorder %s9, 1
    %p26 = por %p24, %p25
    %p27 = scmp.ne.s32.totalorder %s19, %s22
    %p28 = scmp.eq.s32.totalorder %s9, 0
    %p29 = por %p27, %p28
    %p30 = scmp.ne.s32.totalorder %s19, %s22
    %p31 = scmp.eq.s32.totalorder %s14, 1
    %p32 = por %p30, %p31
    %p33 = scmp.ne.s32.totalorder %s22, %s23
    %p34 = scmp.eq.s32.totalorder %s14, 0
    %p35 = por %p33, %p34
    %p36 = scmp.ne.s32.totalorder %s22, %s23
    %p37 = scmp.eq.s32.totalorder %s15, 1
    %p38 = por %p36, %p37
    %p40 = scmp.ne.s32.totalorder %s23, %s39
    %p41 = scmp.eq.s32.totalorder %s15, 0
    %p42 = por %p40, %p41
    %s44 = sadd.s32 %s43, 1
    %p47 = scmp.eq.s32.totalorder %s9, 1
    %p48 = scmp.ne.s32.totalorder %s43, %s45
    %p49 = scmp.eq.s32.totalorder %s9, 0
    %p50 = por %p48, %p49
    %p51 = scmp.ne.s32.totalorder %s43, %s45
    %p52 = scmp.eq.s32.totalorder %s14, 1
    %p53 = por %p51, %p52
    %p54 = scmp.ne.s32.totalorder %s45, %s46
    %p55 = scmp.eq.s32.totalorder %s14, 0
    %p56 = por %p54, %p55
    %p57 = scmp.ne.s32.totalorder %s45, %s46
    %p58 = scmp.eq.s32.totalorder %s15, 1
    %p59 = por %p57, %p58
    %p61 = scmp.ne.s32.totalorder %s46, %s60
    %p62 = scmp.eq.s32.totalorder %s15, 0
    %p63 = por %p61, %p62
    %s65 = sadd.s32 %s64, 1
    %p68 = scmp.eq.s32.totalorder %s9, 1
    %p69 = scmp.ne.s32.totalorder %s64, %s66
    %p70 = scmp.eq.s32.totalorder %s9, 0
    %p71 = por %p69, %p70
    %p72 = scmp.ne.s32.totalorder %s64, %s66
    %p73 = scmp.eq.s32.totalorder %s14, 1
    %p74 = por %p72, %p73
    %p75 = scmp.ne.s32.totalorder %s66, %s67
    %p76 = scmp.eq.s32.totalorder %s14, 0
    %p77 = por %p75, %p76
    %p78 = scmp.ne.s32.totalorder %s66, %s67
    %p79 = scmp.eq.s32.totalorder %s15, 1
    %p80 = por %p78, %p79
    %p82 = scmp.ne.s32.totalorder %s67, %s81
    %p83 = scmp.eq.s32.totalorder %s15, 0
    %p84 = por %p82, %p83
    %s85 = ssub.s32 %s9, %s16
    %p86 = scmp.eq.s32.totalorder %s85, 0
    %s88 = sadd.s32 %s87, 1
    %s89 = scalar_select %p86, %s87, %s88
    %p92 = pneg %p86
    %p93 = scmp.eq.s32.totalorder %s9, 1
    %p94 = por %p92, %p93
    %p95 = scmp.ne.s32.totalorder %s87, %s90
    %p96 = scmp.eq.s32.totalorder %s9, 0
    %p97 = por %p95, %p96
    %p98 = scmp.ne.s32.totalorder %s87, %s90
    %p99 = scmp.eq.s32.totalorder %s14, 1
    %p100 = por %p98, %p99
    %p101 = scmp.ne.s32.totalorder %s90, %s91
    %p102 = scmp.eq.s32.totalorder %s14, 0
    %p103 = por %p101, %p102
    %p104 = scmp.ne.s32.totalorder %s90, %s91
    %p105 = scmp.eq.s32.totalorder %s15, 1
    %p106 = por %p104, %p105
    %p108 = scmp.ne.s32.totalorder %s91, %s107
    %p109 = scmp.eq.s32.totalorder %s15, 0
    %p110 = por %p108, %p109
    %p111 = scmp.le.s32.totalorder 1, %s9
    %p112 = scmp.lt.s32.totalorder %s9, 3
    %p113 = pnand %p111, %p112
    %p114 = pneg %p113
    // Predicated region
    $region9: #{_lambda_.17} parent=5 // pred_check
      _
    $region10: #{_lambda_.17} parent=5 // pred_check_branch
      %116 = sbr.rel (%p113) target = $region12
    $region11: #{_lambda_.17} parent=5 // pred_region
      %s117 = ssub.s32 %s9, 1
      // Predicated region
      $region13: #{_lambda_.17} parent=11 // pred_check
        %p118 = pneg %p56
      $region14: #{_lambda_.17} parent=11 // pred_check_branch
        %120 = sbr.rel (%p118) target = $region16
      $region15: #{_lambda_.17} parent=11 // pred_region
        _
      $region16: #{_lambda_.17} parent=11 // pred_fallthru
        _
      // Predicated region
      $region17: #{_lambda_.17} parent=11 // pred_check
        %p121 = pneg %p77
      $region18: #{_lambda_.17} parent=11 // pred_check_branch
        %123 = sbr.rel (%p121) target = $region20
      $region19: #{_lambda_.17} parent=11 // pred_region
        _
      $region20: #{_lambda_.17} parent=11 // pred_fallthru
        _
    $region12: #{_lambda_.17} parent=5 // pred_fallthru
      _
    %p124 = scmp.lt.s32.totalorder %s9, 2
    // Predicated region
    $region21: #{_lambda_.17} parent=5 // pred_check
      %p125 = pneg %p124
    $region22: #{_lambda_.17} parent=5 // pred_check_branch
      %127 = sbr.rel (%p125) target = $region24
    $region23: #{_lambda_.17} parent=5 // pred_region
      // Predicated region
      $region25: #{_lambda_.17} parent=23 // pred_check
        %p128 = pneg %p29
      $region26: #{_lambda_.17} parent=23 // pred_check_branch
        %130 = sbr.rel (%p128) target = $region28
      $region27: #{_lambda_.17} parent=23 // pred_region
        %p131 = scmp.lt.s32.totalorder %s9, 1
        %s132 = scalar_select %p131, %s9, 1
        %s133 = smul.addr %s132, 11
        %s134 = smul.addr %s133, 8
        %s135 = scalar_lea.vmem %s0, %s134
      $region28: #{_lambda_.17} parent=23 // pred_fallthru
        _
    $region24: #{_lambda_.17} parent=5 // pred_fallthru
      _
    %p136 = scmp.le.s32.totalorder 1, %s9
    %p137 = scmp.lt.s32.totalorder %s9, 3
    %p138 = pnand %p136, %p137
    %p139 = pneg %p138
    // Predicated region
    $region29: #{_lambda_.17} parent=5 // pred_check
      _
    $region30: #{_lambda_.17} parent=5 // pred_check_branch
      %141 = sbr.rel (%p138) target = $region32
    $region31: #{_lambda_.17} parent=5 // pred_region
      %s142 = ssub.s32 %s9, 1
      %p143 = scmp.lt.s32.totalorder %s14, 1
      %s144 = scalar_select %p143, %s14, 1
      %s145 = smul.addr %s144, 11
      %s146 = smul.addr %s145, 8
      %s147 = scalar_lea.vmem %s0, %s146
      %p148 = pneg %p35
      %p149 = pneg %p32
      %p150 = pneg %p56
      %p151 = pneg %p53
      %p152 = pneg %p77
      %p153 = pneg %p74
      %p154 = pneg %p103
      %p155 = pneg %p100
      %p156 = scmp.lt.s32.totalorder %s14, 1
      %s157 = scalar_select %p156, %s14, 1
      %s158 = smul.addr %s157, 9
      %s159 = smul.addr %s158, 8
      %s160 = scalar_lea.vmem %s3, %s159
      %p161 = scmp.lt.s32.totalorder %s14, 1
      %s162 = scalar_select %p161, %s14, 1
      %s163 = smul.addr %s162, 11
      %s164 = smul.addr %s163, 8
      %s165 = scalar_lea.vmem %s0, %s164
      %p166 = scmp.lt.s32.totalorder %s14, 1
      %s167 = scalar_select %p166, %s14, 1
      %s168 = smul.addr %s167, 9
      %s169 = smul.addr %s168, 8
      %s170 = scalar_lea.vmem %s3, %s169
      %v172 = vld [vmem:[%s165] sm:$0xff]
      %v173 = vld [vmem:[%s165 + $0x8] sm:$0xff]
      %v174 = vld [vmem:[%s165 + $0x10] sm:$0xff]
      %v175 = vld [vmem:[%s165 + $0x18] sm:$0xff]
      %v176 = vld [vmem:[%s165 + $0x20] sm:$0xff]
      %v177 = vld [vmem:[%s165 + $0x28] sm:$0xff]
      %v178 = vld [vmem:[%s165 + $0x30] sm:$0xff]
      %v179 = vld [vmem:[%s165 + $0x38] sm:$0xff]
      %v180 = vld [vmem:[%s165 + $0x40] sm:$0x7f]
      %v181 = vpack.c.bf16 %v173, %v172
      %v182 = vpack.c.bf16 %v175, %v174
      %v183 = vpack.c.bf16 %v177, %v176
      %v184 = vpack.c.bf16 %v179, %v178
      %v185 = vpack.c.bf16 %v180, %v180
      %v186 = vld [vmem:[%s1] sm:$0xf]
      %vm187 = vcmask 64512
      %v189 = vsel %vm187, %v181, 0
      %v192 = vsel %vm187, %v182, 0
      %v195 = vsel %vm187, %v183, 0
      %v198 = vsel %vm187, %v184, 0
      %v201 = vsel %vm187, %v185, 0
      %vm203 = vcmask 1043456
      %v205 = vsel %vm203, %v186, 0
      %207 = vmatprep.subr.bf16.mxu0 0
      %208 = vmatpush1.bf16.msra.mxu0 %v205
      %209 = vmatprep.subr.bf16.mxu0 0
      %210 = vmatpush1.bf16.msra.mxu0 0
      %211 = vmatprep.subr.bf16.mxu0 0
      %212 = vmatpush1.bf16.msra.mxu0 0
      %213 = vmatprep.subr.bf16.mxu0 0
      %214 = vmatpush1.bf16.msra.mxu0 0
      %215 = vmatprep.subr.bf16.mxu0 0
      %216 = vmatpush1.bf16.msra.mxu0 0
      %217 = vmatprep.subr.bf16.mxu0 0
      %218 = vmatpush1.bf16.msra.mxu0 0
      %219 = vmatprep.subr.bf16.mxu0 0
      %220 = vmatpush1.bf16.msra.mxu0 0
      %221 = vmatprep.subr.bf16.mxu0 0
      %222 = vmatpush1.bf16.msra.mxu0 0
      %223 = vmatprep.subr.bf16.mxu0 0
      %224 = vmatpush1.bf16.msra.mxu0 0
      %225 = vmatprep.subr.bf16.mxu0 0
      %226 = vmatpush1.bf16.msra.mxu0 0
      %227 = vmatprep.subr.bf16.mxu0 0
      %228 = vmatpush1.bf16.msra.mxu0 0
      %229 = vmatprep.subr.bf16.mxu0 0
      %230 = vmatpush1.bf16.msra.mxu0 0
      %231 = vmatprep.subr.bf16.mxu0 0
      %232 = vmatpush1.bf16.msra.mxu0 0
      %233 = vmatprep.subr.bf16.mxu0 0
      %234 = vmatpush1.bf16.msra.mxu0 0
      %235 = vmatprep.subr.bf16.mxu0 0
      %236 = vmatpush1.bf16.msra.mxu0 0
      %237 = vmatprep.subr.bf16.mxu0 0
      %238 = vmatpush1.bf16.msra.mxu0 0
      %239 = vmatprep.mubr.bf16.mxu0 0
      %240 = vmatmul.mubr.bf16.gmra.mrb[0].mxu0 %v189
      %v241 = vpop.f32.mrb[0].mxu0
      %v242 = vadd.f32 0.0, %v241
      %v243 = vpop.f32.mrb[0].mxu0
      %v244 = vpop.f32.mrb[0].mxu0
      %v245 = vadd.f32 0.0, %v244
      %v246 = vpop.f32.mrb[0].mxu0
      %247 = vmatprep.mubr.bf16.mxu0 0
      %248 = vmatmul.mubr.bf16.gmra.mrb[0].mxu0 %v192
      %v249 = vpop.f32.mrb[0].mxu0
      %v250 = vadd.f32 0.0, %v249
      %v251 = vpop.f32.mrb[0].mxu0
      %v252 = vpop.f32.mrb[0].mxu0
      %v253 = vadd.f32 0.0, %v252
      %v254 = vpop.f32.mrb[0].mxu0
      %255 = vmatprep.mubr.bf16.mxu0 0
      %256 = vmatmul.mubr.bf16.gmra.mrb[0].mxu0 %v195
      %v257 = vpop.f32.mrb[0].mxu0
      %v258 = vadd.f32 0.0, %v257
      %v259 = vpop.f32.mrb[0].mxu0
      %v260 = vpop.f32.mrb[0].mxu0
      %v261 = vadd.f32 0.0, %v260
      %v262 = vpop.f32.mrb[0].mxu0
      %263 = vmatprep.mubr.bf16.mxu0 0
      %264 = vmatmul.mubr.bf16.gmra.mrb[0].mxu0 %v198
      %v265 = vpop.f32.mrb[0].mxu0
      %v266 = vadd.f32 0.0, %v265
      %v267 = vpop.f32.mrb[0].mxu0
      %v268 = vpop.f32.mrb[0].mxu0
      %v269 = vadd.f32 0.0, %v268
      %v270 = vpop.f32.mrb[0].mxu0
      %271 = vmatprep.mubr.bf16.mxu0 0
      %272 = vmatmul.mubr.bf16.gmra.mrb[0].mxu0 %v201
      %v273 = vpop.f32.mrb[0].mxu0
      %v274 = vadd.f32 0.0, %v273
      %v275 = vpop.f32.mrb[0].mxu0
      %v276 = vpop.f32.mrb[0].mxu0
      %v277 = vpop.f32.mrb[0].mxu0
      %278 = vdwg.mxu0
      %s279 = scalar_lea.vmem %s1, 4
      %v280 = vld [vmem:[%s279] sm:$0xf]
      %v281 = vld [vmem:[%s165 + $0x1] sm:$0xff]
      %v282 = vld [vmem:[%s165 + $0x9] sm:$0xff]
      %v283 = vld [vmem:[%s165 + $0x11] sm:$0xff]
      %v284 = vld [vmem:[%s165 + $0x19] sm:$0xff]
      %v285 = vld [vmem:[%s165 + $0x21] sm:$0xff]
      %v286 = vld [vmem:[%s165 + $0x29] sm:$0xff]
      %v287 = vld [vmem:[%s165 + $0x31] sm:$0xff]
      %v288 = vld [vmem:[%s165 + $0x39] sm:$0xff]
      %v289 = vld [vmem:[%s165 + $0x41] sm:$0x7f]
      %v290 = vpack.c.bf16 %v282, %v281
      %v291 = vpack.c.bf16 %v284, %v283
      %v292 = vpack.c.bf16 %v286, %v285
      %v293 = vpack.c.bf16 %v288, %v287
      %v294 = vpack.c.bf16 %v289, %v289
      %s295 = scalar_lea.vmem %s1, 8
      %v296 = vld [vmem:[%s295] sm:$0xf]
      %v298 = vsel %vm187, %v290, 0
      %v301 = vsel %vm187, %v291, 0
      %v304 = vsel %vm187, %v292, 0
      %v307 = vsel %vm187, %v293, 0
      %v310 = vsel %vm187, %v294, 0
      %v313 = vsel %vm203, %v296, 0
      %315 = vmatprep.subr.bf16.mxu0 0
      %316 = vmatpush1.bf16.msra.mxu0 %v313
      %317 = vmatprep.subr.bf16.mxu0 0
      %318 = vmatpush1.bf16.msra.mxu0 0
      %319 = vmatprep.subr.bf16.mxu0 0
      %320 = vmatpush1.bf16.msra.mxu0 0
      %321 = vmatprep.subr.bf16.mxu0 0
      %322 = vmatpush1.bf16.msra.mxu0 0
      %323 = vmatprep.subr.bf16.mxu0 0
      %324 = vmatpush1.bf16.msra.mxu0 0
      %325 = vmatprep.subr.bf16.mxu0 0
      %326 = vmatpush1.bf16.msra.mxu0 0
      %327 = vmatprep.subr.bf16.mxu0 0
      %328 = vmatpush1.bf16.msra.mxu0 0
      %329 = vmatprep.subr.bf16.mxu0 0
      %330 = vmatpush1.bf16.msra.mxu0 0
      %331 = vmatprep.subr.bf16.mxu0 0
      %332 = vmatpush1.bf16.msra.mxu0 0
      %333 = vmatprep.subr.bf16.mxu0 0
      %334 = vmatpush1.bf16.msra.mxu0 0
      %335 = vmatprep.subr.bf16.mxu0 0
      %336 = vmatpush1.bf16.msra.mxu0 0
      %337 = vmatprep.subr.bf16.mxu0 0
      %338 = vmatpush1.bf16.msra.mxu0 0
      %339 = vmatprep.subr.bf16.mxu0 0
      %340 = vmatpush1.bf16.msra.mxu0 0
      %341 = vmatprep.subr.bf16.mxu0 0
      %342 = vmatpush1.bf16.msra.mxu0 0
      %343 = vmatprep.subr.bf16.mxu0 0
      %344 = vmatpush1.bf16.msra.mxu0 0
      %345 = vmatprep.subr.bf16.mxu0 0
      %346 = vmatpush1.bf16.msra.mxu0 0
      %347 = vmatprep.mubr.bf16.mxu0 0
      %348 = vmatmul.mubr.bf16.gmra.mrb[0].mxu0 %v298
      %v349 = vpop.f32.mrb[0].mxu0
      %v350 = vadd.f32 0.0, %v349
      %v351 = vpop.f32.mrb[0].mxu0
      %v352 = vpop.f32.mrb[0].mxu0
      %v353 = vadd.f32 0.0, %v352
      %v354 = vpop.f32.mrb[0].mxu0
      %355 = vmatprep.mubr.bf16.mxu0 0
      %356 = vmatmul.mubr.bf16.gmra.mrb[0].mxu0 %v301
      %v357 = vpop.f32.mrb[0].mxu0
      %v358 = vadd.f32 0.0, %v357
      %v359 = vpop.f32.mrb[0].mxu0
      %v360 = vpop.f32.mrb[0].mxu0
      %v361 = vadd.f32 0.0, %v360
      %v362 = vpop.f32.mrb[0].mxu0
      %363 = vmatprep.mubr.bf16.mxu0 0
      %364 = vmatmul.mubr.bf16.gmra.mrb[0].mxu0 %v304
      %v365 = vpop.f32.mrb[0].mxu0
      %v366 = vadd.f32 0.0, %v365
      %v367 = vpop.f32.mrb[0].mxu0
      %v368 = vpop.f32.mrb[0].mxu0
      %v369 = vadd.f32 0.0, %v368
      %v370 = vpop.f32.mrb[0].mxu0
      %371 = vmatprep.mubr.bf16.mxu0 0
      %372 = vmatmul.mubr.bf16.gmra.mrb[0].mxu0 %v307
      %v373 = vpop.f32.mrb[0].mxu0
      %v374 = vadd.f32 0.0, %v373
      %v375 = vpop.f32.mrb[0].mxu0
      %v376 = vpop.f32.mrb[0].mxu0
      %v377 = vadd.f32 0.0, %v376
      %v378 = vpop.f32.mrb[0].mxu0
      %379 = vmatprep.mubr.bf16.mxu0 0
      %380 = vmatmul.mubr.bf16.gmra.mrb[0].mxu0 %v310
      %v381 = vpop.f32.mrb[0].mxu0
      %v382 = vadd.f32 0.0, %v381
      %v383 = vpop.f32.mrb[0].mxu0
      %v384 = vpop.f32.mrb[0].mxu0
      %v385 = vpop.f32.mrb[0].mxu0
      %386 = vdwg.mxu0
      %v388 = vsel %vm203, %v280, 0
      %390 = vmatprep.subr.bf16.mxu0 0
      %391 = vmatpush1.bf16.msra.mxu0 %v388
      %392 = vmatprep.subr.bf16.mxu0 0
      %393 = vmatpush1.bf16.msra.mxu0 0
      %394 = vmatprep.subr.bf16.mxu0 0
      %395 = vmatpush1.bf16.msra.mxu0 0
      %396 = vmatprep.subr.bf16.mxu0 0
      %397 = vmatpush1.bf16.msra.mxu0 0
      %398 = vmatprep.subr.bf16.mxu0 0
      %399 = vmatpush1.bf16.msra.mxu0 0
      %400 = vmatprep.subr.bf16.mxu0 0
      %401 = vmatpush1.bf16.msra.mxu0 0
      %402 = vmatprep.subr.bf16.mxu0 0
      %403 = vmatpush1.bf16.msra.mxu0 0
      %404 = vmatprep.subr.bf16.mxu0 0
      %405 = vmatpush1.bf16.msra.mxu0 0
      %406 = vmatprep.subr.bf16.mxu0 0
      %407 = vmatpush1.bf16.msra.mxu0 0
      %408 = vmatprep.subr.bf16.mxu0 0
      %409 = vmatpush1.bf16.msra.mxu0 0
      %410 = vmatprep.subr.bf16.mxu0 0
      %411 = vmatpush1.bf16.msra.mxu0 0
      %412 = vmatprep.subr.bf16.mxu0 0
      %413 = vmatpush1.bf16.msra.mxu0 0
      %414 = vmatprep.subr.bf16.mxu0 0
      %415 = vmatpush1.bf16.msra.mxu0 0
      %416 = vmatprep.subr.bf16.mxu0 0
      %417 = vmatpush1.bf16.msra.mxu0 0
      %418 = vmatprep.subr.bf16.mxu0 0
      %419 = vmatpush1.bf16.msra.mxu0 0
      %420 = vmatprep.subr.bf16.mxu0 0
      %421 = vmatpush1.bf16.msra.mxu0 0
      %422 = vmatprep.mubr.bf16.mxu0 0
      %423 = vmatmul.mubr.bf16.gmra.mrb[0].mxu0 %v189
      %v424 = vpop.f32.mrb[0].mxu0
      %v425 = vadd.f32 %v350, %v424
      %v426 = vpop.f32.mrb[0].mxu0
      %v427 = vpop.f32.mrb[0].mxu0
      %v428 = vadd.f32 %v353, %v427
      %v429 = vpop.f32.mrb[0].mxu0
      %430 = vmatprep.mubr.bf16.mxu0 0
      %431 = vmatmul.mubr.bf16.gmra.mrb[0].mxu0 %v192
      %v432 = vpop.f32.mrb[0].mxu0
      %v433 = vadd.f32 %v358, %v432
      %v434 = vpop.f32.mrb[0].mxu0
      %v435 = vpop.f32.mrb[0].mxu0
      %v436 = vadd.f32 %v361, %v435
      %v437 = vpop.f32.mrb[0].mxu0
      %438 = vmatprep.mubr.bf16.mxu0 0
      %439 = vmatmul.mubr.bf16.gmra.mrb[0].mxu0 %v195
      %v440 = vpop.f32.mrb[0].mxu0
      %v441 = vadd.f32 %v366, %v440
      %v442 = vpop.f32.mrb[0].mxu0
      %v443 = vpop.f32.mrb[0].mxu0
      %v444 = vadd.f32 %v369, %v443
      %v445 = vpop.f32.mrb[0].mxu0
      %446 = vmatprep.mubr.bf16.mxu0 0
      %447 = vmatmul.mubr.bf16.gmra.mrb[0].mxu0 %v198
      %v448 = vpop.f32.mrb[0].mxu0
      %v449 = vadd.f32 %v374, %v448
      %v450 = vpop.f32.mrb[0].mxu0
      %v451 = vpop.f32.mrb[0].mxu0
      %v452 = vadd.f32 %v377, %v451
      %v453 = vpop.f32.mrb[0].mxu0
      %454 = vmatprep.mubr.bf16.mxu0 0
      %455 = vmatmul.mubr.bf16.gmra.mrb[0].mxu0 %v201
      %v456 = vpop.f32.mrb[0].mxu0
      %v457 = vadd.f32 %v382, %v456
      %v458 = vpop.f32.mrb[0].mxu0
      %v459 = vpop.f32.mrb[0].mxu0
      %v460 = vpop.f32.mrb[0].mxu0
      %461 = vdwg.mxu0
      %s462 = scalar_lea.vmem %s1, 12
      %v463 = vld [vmem:[%s462] sm:$0xf]
      %v464 = vld [vmem:[%s165 + $0x9] sm:$0xff]
      %v465 = vld [vmem:[%s165 + $0x11] sm:$0xff]
      %v466 = vld [vmem:[%s165 + $0x19] sm:$0xff]
      %v467 = vld [vmem:[%s165 + $0x21] sm:$0xff]
      %v468 = vld [vmem:[%s165 + $0x29] sm:$0xff]
      %v469 = vld [vmem:[%s165 + $0x31] sm:$0xff]
      %v470 = vld [vmem:[%s165 + $0x39] sm:$0xff]
      %v471 = vld [vmem:[%s165 + $0x41] sm:$0xff]
      %v472 = vld [vmem:[%s165 + $0x49] sm:$0x7f]
      %v473 = vpack.c.bf16 %v465, %v464
      %v474 = vpack.c.bf16 %v467, %v466
      %v475 = vpack.c.bf16 %v469, %v468
      %v476 = vpack.c.bf16 %v471, %v470
      %v477 = vpack.c.bf16 %v472, %v472
      %s478 = scalar_lea.vmem %s1, 16
      %v479 = vld [vmem:[%s478] sm:$0xf]
      %v481 = vsel %vm187, %v473, 0
      %v484 = vsel %vm187, %v474, 0
      %v487 = vsel %vm187, %v475, 0
      %v490 = vsel %vm187, %v476, 0
      %v493 = vsel %vm187, %v477, 0
      %v496 = vsel %vm203, %v479, 0
      %498 = vmatprep.subr.bf16.mxu0 0
      %499 = vmatpush1.bf16.msra.mxu0 %v496
      %500 = vmatprep.subr.bf16.mxu0 0
      %501 = vmatpush1.bf16.msra.mxu0 0
      %502 = vmatprep.subr.bf16.mxu0 0
      %503 = vmatpush1.bf16.msra.mxu0 0
      %504 = vmatprep.subr.bf16.mxu0 0
      %505 = vmatpush1.bf16.msra.mxu0 0
      %506 = vmatprep.subr.bf16.mxu0 0
      %507 = vmatpush1.bf16.msra.mxu0 0
      %508 = vmatprep.subr.bf16.mxu0 0
      %509 = vmatpush1.bf16.msra.mxu0 0
      %510 = vmatprep.subr.bf16.mxu0 0
      %511 = vmatpush1.bf16.msra.mxu0 0
      %512 = vmatprep.subr.bf16.mxu0 0
      %513 = vmatpush1.bf16.msra.mxu0 0
      %514 = vmatprep.subr.bf16.mxu0 0
      %515 = vmatpush1.bf16.msra.mxu0 0
      %516 = vmatprep.subr.bf16.mxu0 0
      %517 = vmatpush1.bf16.msra.mxu0 0
      %518 = vmatprep.subr.bf16.mxu0 0
      %519 = vmatpush1.bf16.msra.mxu0 0
      %520 = vmatprep.subr.bf16.mxu0 0
      %521 = vmatpush1.bf16.msra.mxu0 0
      %522 = vmatprep.subr.bf16.mxu0 0
      %523 = vmatpush1.bf16.msra.mxu0 0
      %524 = vmatprep.subr.bf16.mxu0 0
      %525 = vmatpush1.bf16.msra.mxu0 0
      %526 = vmatprep.subr.bf16.mxu0 0
      %527 = vmatpush1.bf16.msra.mxu0 0
      %528 = vmatprep.subr.bf16.mxu0 0
      %529 = vmatpush1.bf16.msra.mxu0 0
      %530 = vmatprep.mubr.bf16.mxu0 0
      %531 = vmatmul.mubr.bf16.gmra.mrb[0].mxu0 %v481
      %v532 = vpop.f32.mrb[0].mxu0
      %v533 = vadd.f32 0.0, %v532
      %v534 = vpop.f32.mrb[0].mxu0
      %v535 = vpop.f32.mrb[0].mxu0
      %v536 = vadd.f32 0.0, %v535
      %v537 = vpop.f32.mrb[0].mxu0
      %538 = vmatprep.mubr.bf16.mxu0 0
      %539 = vmatmul.mubr.bf16.gmra.mrb[0].mxu0 %v484
      %v540 = vpop.f32.mrb[0].mxu0
      %v541 = vadd.f32 0.0, %v540
      %v542 = vpop.f32.mrb[0].mxu0
      %v543 = vpop.f32.mrb[0].mxu0
      %v544 = vadd.f32 0.0, %v543
      %v545 = vpop.f32.mrb[0].mxu0
      %546 = vmatprep.mubr.bf16.mxu0 0
      %547 = vmatmul.mubr.bf16.gmra.mrb[0].mxu0 %v487
      %v548 = vpop.f32.mrb[0].mxu0
      %v549 = vadd.f32 0.0, %v548
      %v550 = vpop.f32.mrb[0].mxu0
      %v551 = vpop.f32.mrb[0].mxu0
      %v552 = vadd.f32 0.0, %v551
      %v553 = vpop.f32.mrb[0].mxu0
      %554 = vmatprep.mubr.bf16.mxu0 0
      %555 = vmatmul.mubr.bf16.gmra.mrb[0].mxu0 %v490
      %v556 = vpop.f32.mrb[0].mxu0
      %v557 = vadd.f32 0.0, %v556
      %v558 = vpop.f32.mrb[0].mxu0
      %v559 = vpop.f32.mrb[0].mxu0
      %v560 = vadd.f32 0.0, %v559
      %v561 = vpop.f32.mrb[0].mxu0
      %562 = vmatprep.mubr.bf16.mxu0 0
      %563 = vmatmul.mubr.bf16.gmra.mrb[0].mxu0 %v493
      %v564 = vpop.f32.mrb[0].mxu0
      %v565 = vadd.f32 0.0, %v564
      %v566 = vpop.f32.mrb[0].mxu0
      %v567 = vpop.f32.mrb[0].mxu0
      %v568 = vpop.f32.mrb[0].mxu0
      %569 = vdwg.mxu0
      %v571 = vsel %vm203, %v463, 0
      %573 = vmatprep.subr.bf16.mxu0 0
      %574 = vmatpush1.bf16.msra.mxu0 %v571
      %575 = vmatprep.subr.bf16.mxu0 0
      %576 = vmatpush1.bf16.msra.mxu0 0
      %577 = vmatprep.subr.bf16.mxu0 0
      %578 = vmatpush1.bf16.msra.mxu0 0
      %579 = vmatprep.subr.bf16.mxu0 0
      %580 = vmatpush1.bf16.msra.mxu0 0
      %581 = vmatprep.subr.bf16.mxu0 0
      %582 = vmatpush1.bf16.msra.mxu0 0
      %583 = vmatprep.subr.bf16.mxu0 0
      %584 = vmatpush1.bf16.msra.mxu0 0
      %585 = vmatprep.subr.bf16.mxu0 0
      %586 = vmatpush1.bf16.msra.mxu0 0
      %587 = vmatprep.subr.bf16.mxu0 0
      %588 = vmatpush1.bf16.msra.mxu0 0
      %589 = vmatprep.subr.bf16.mxu0 0
      %590 = vmatpush1.bf16.msra.mxu0 0
      %591 = vmatprep.subr.bf16.mxu0 0
      %592 = vmatpush1.bf16.msra.mxu0 0
      %593 = vmatprep.subr.bf16.mxu0 0
      %594 = vmatpush1.bf16.msra.mxu0 0
      %595 = vmatprep.subr.bf16.mxu0 0
      %596 = vmatpush1.bf16.msra.mxu0 0
      %597 = vmatprep.subr.bf16.mxu0 0
      %598 = vmatpush1.bf16.msra.mxu0 0
      %599 = vmatprep.subr.bf16.mxu0 0
      %600 = vmatpush1.bf16.msra.mxu0 0
      %601 = vmatprep.subr.bf16.mxu0 0
      %602 = vmatpush1.bf16.msra.mxu0 0
      %603 = vmatprep.subr.bf16.mxu0 0
      %604 = vmatpush1.bf16.msra.mxu0 0
      %605 = vmatprep.mubr.bf16.mxu0 0
      %606 = vmatmul.mubr.bf16.gmra.mrb[0].mxu0 %v189
      %v607 = vpop.f32.mrb[0].mxu0
      %v608 = vadd.f32 %v533, %v607
      %v609 = vpop.f32.mrb[0].mxu0
      %v610 = vpop.f32.mrb[0].mxu0
      %v611 = vadd.f32 %v536, %v610
      %v612 = vpop.f32.mrb[0].mxu0
      %613 = vmatprep.mubr.bf16.mxu0 0
      %614 = vmatmul.mubr.bf16.gmra.mrb[0].mxu0 %v192
      %v615 = vpop.f32.mrb[0].mxu0
      %v616 = vadd.f32 %v541, %v615
      %v617 = vpop.f32.mrb[0].mxu0
      %v618 = vpop.f32.mrb[0].mxu0
      %v619 = vadd.f32 %v544, %v618
      %v620 = vpop.f32.mrb[0].mxu0
      %621 = vmatprep.mubr.bf16.mxu0 0
      %622 = vmatmul.mubr.bf16.gmra.mrb[0].mxu0 %v195
      %v623 = vpop.f32.mrb[0].mxu0
      %v624 = vadd.f32 %v549, %v623
      %v625 = vpop.f32.mrb[0].mxu0
      %v626 = vpop.f32.mrb[0].mxu0
      %v627 = vadd.f32 %v552, %v626
      %v628 = vpop.f32.mrb[0].mxu0
      %629 = vmatprep.mubr.bf16.mxu0 0
      %630 = vmatmul.mubr.bf16.gmra.mrb[0].mxu0 %v198
      %v631 = vpop.f32.mrb[0].mxu0
      %v632 = vadd.f32 %v557, %v631
      %v633 = vpop.f32.mrb[0].mxu0
      %v634 = vpop.f32.mrb[0].mxu0
      %v635 = vadd.f32 %v560, %v634
      %v636 = vpop.f32.mrb[0].mxu0
      %637 = vmatprep.mubr.bf16.mxu0 0
      %638 = vmatmul.mubr.bf16.gmra.mrb[0].mxu0 %v201
      %v639 = vpop.f32.mrb[0].mxu0
      %v640 = vadd.f32 %v565, %v639
      %v641 = vpop.f32.mrb[0].mxu0
      %v642 = vpop.f32.mrb[0].mxu0
      %v643 = vpop.f32.mrb[0].mxu0
      %644 = vdwg.mxu0
      %s645 = scalar_lea.vmem %s1, 20
      %v646 = vld [vmem:[%s645] sm:$0xf]
      %s647 = scalar_lea.vmem %s1, 24
      %v648 = vld [vmem:[%s647] sm:$0xf]
      %v650 = vsel %vm203, %v648, 0
      %652 = vmatprep.subr.bf16.mxu0 0
      %653 = vmatpush1.bf16.msra.mxu0 %v650
      %654 = vmatprep.subr.bf16.mxu0 0
      %655 = vmatpush1.bf16.msra.mxu0 0
      %656 = vmatprep.subr.bf16.mxu0 0
      %657 = vmatpush1.bf16.msra.mxu0 0
      %658 = vmatprep.subr.bf16.mxu0 0
      %659 = vmatpush1.bf16.msra.mxu0 0
      %660 = vmatprep.subr.bf16.mxu0 0
      %661 = vmatpush1.bf16.msra.mxu0 0
      %662 = vmatprep.subr.bf16.mxu0 0
      %663 = vmatpush1.bf16.msra.mxu0 0
      %664 = vmatprep.subr.bf16.mxu0 0
      %665 = vmatpush1.bf16.msra.mxu0 0
      %666 = vmatprep.subr.bf16.mxu0 0
      %667 = vmatpush1.bf16.msra.mxu0 0
      %668 = vmatprep.subr.bf16.mxu0 0
      %669 = vmatpush1.bf16.msra.mxu0 0
      %670 = vmatprep.subr.bf16.mxu0 0
      %671 = vmatpush1.bf16.msra.mxu0 0
      %672 = vmatprep.subr.bf16.mxu0 0
      %673 = vmatpush1.bf16.msra.mxu0 0
      %674 = vmatprep.subr.bf16.mxu0 0
      %675 = vmatpush1.bf16.msra.mxu0 0
      %676 = vmatprep.subr.bf16.mxu0 0
      %677 = vmatpush1.bf16.msra.mxu0 0
      %678 = vmatprep.subr.bf16.mxu0 0
      %679 = vmatpush1.bf16.msra.mxu0 0
      %680 = vmatprep.subr.bf16.mxu0 0
      %681 = vmatpush1.bf16.msra.mxu0 0
      %682 = vmatprep.subr.bf16.mxu0 0
      %683 = vmatpush1.bf16.msra.mxu0 0
      %684 = vmatprep.mubr.bf16.mxu0 0
      %685 = vmatmul.mubr.bf16.gmra.mrb[0].mxu0 %v298
      %v686 = vpop.f32.mrb[0].mxu0
      %v687 = vadd.f32 0.0, %v686
      %v688 = vpop.f32.mrb[0].mxu0
      %v689 = vpop.f32.mrb[0].mxu0
      %v690 = vadd.f32 0.0, %v689
      %v691 = vpop.f32.mrb[0].mxu0
      %692 = vmatprep.mubr.bf16.mxu0 0
      %693 = vmatmul.mubr.bf16.gmra.mrb[0].mxu0 %v301
      %v694 = vpop.f32.mrb[0].mxu0
      %v695 = vadd.f32 0.0, %v694
      %v696 = vpop.f32.mrb[0].mxu0
      %v697 = vpop.f32.mrb[0].mxu0
      %v698 = vadd.f32 0.0, %v697
      %v699 = vpop.f32.mrb[0].mxu0
      %700 = vmatprep.mubr.bf16.mxu0 0
      %701 = vmatmul.mubr.bf16.gmra.mrb[0].mxu0 %v304
      %v702 = vpop.f32.mrb[0].mxu0
      %v703 = vadd.f32 0.0, %v702
      %v704 = vpop.f32.mrb[0].mxu0
      %v705 = vpop.f32.mrb[0].mxu0
      %v706 = vadd.f32 0.0, %v705
      %v707 = vpop.f32.mrb[0].mxu0
      %708 = vmatprep.mubr.bf16.mxu0 0
      %709 = vmatmul.mubr.bf16.gmra.mrb[0].mxu0 %v307
      %v710 = vpop.f32.mrb[0].mxu0
      %v711 = vadd.f32 0.0, %v710
      %v712 = vpop.f32.mrb[0].mxu0
      %v713 = vpop.f32.mrb[0].mxu0
      %v714 = vadd.f32 0.0, %v713
      %v715 = vpop.f32.mrb[0].mxu0
      %716 = vmatprep.mubr.bf16.mxu0 0
      %717 = vmatmul.mubr.bf16.gmra.mrb[0].mxu0 %v310
      %v718 = vpop.f32.mrb[0].mxu0
      %v719 = vadd.f32 0.0, %v718
      %v720 = vpop.f32.mrb[0].mxu0
      %v721 = vpop.f32.mrb[0].mxu0
      %v722 = vpop.f32.mrb[0].mxu0
      %723 = vdwg.mxu0
      %v725 = vsel %vm203, %v646, 0
      %727 = vmatprep.subr.bf16.mxu0 0
      %728 = vmatpush1.bf16.msra.mxu0 %v725
      %729 = vmatprep.subr.bf16.mxu0 0
      %730 = vmatpush1.bf16.msra.mxu0 0
      %731 = vmatprep.subr.bf16.mxu0 0
      %732 = vmatpush1.bf16.msra.mxu0 0
      %733 = vmatprep.subr.bf16.mxu0 0
      %734 = vmatpush1.bf16.msra.mxu0 0
      %735 = vmatprep.subr.bf16.mxu0 0
      %736 = vmatpush1.bf16.msra.mxu0 0
      %737 = vmatprep.subr.bf16.mxu0 0
      %738 = vmatpush1.bf16.msra.mxu0 0
      %739 = vmatprep.subr.bf16.mxu0 0
      %740 = vmatpush1.bf16.msra.mxu0 0
      %741 = vmatprep.subr.bf16.mxu0 0
      %742 = vmatpush1.bf16.msra.mxu0 0
      %743 = vmatprep.subr.bf16.mxu0 0
      %744 = vmatpush1.bf16.msra.mxu0 0
      %745 = vmatprep.subr.bf16.mxu0 0
      %746 = vmatpush1.bf16.msra.mxu0 0
      %747 = vmatprep.subr.bf16.mxu0 0
      %748 = vmatpush1.bf16.msra.mxu0 0
      %749 = vmatprep.subr.bf16.mxu0 0
      %750 = vmatpush1.bf16.msra.mxu0 0
      %751 = vmatprep.subr.bf16.mxu0 0
      %752 = vmatpush1.bf16.msra.mxu0 0
      %753 = vmatprep.subr.bf16.mxu0 0
      %754 = vmatpush1.bf16.msra.mxu0 0
      %755 = vmatprep.subr.bf16.mxu0 0
      %756 = vmatpush1.bf16.msra.mxu0 0
      %757 = vmatprep.subr.bf16.mxu0 0
      %758 = vmatpush1.bf16.msra.mxu0 0
      %759 = vmatprep.mubr.bf16.mxu0 0
      %760 = vmatmul.mubr.bf16.gmra.mrb[0].mxu0 %v189
      %v761 = vpop.f32.mrb[0].mxu0
      %v762 = vadd.f32 %v687, %v761
      %v763 = vpop.f32.mrb[0].mxu0
      %v764 = vpop.f32.mrb[0].mxu0
      %v765 = vadd.f32 %v690, %v764
      %v766 = vpop.f32.mrb[0].mxu0
      %767 = vmatprep.mubr.bf16.mxu0 0
      %768 = vmatmul.mubr.bf16.gmra.mrb[0].mxu0 %v192
      %v769 = vpop.f32.mrb[0].mxu0
      %v770 = vadd.f32 %v695, %v769
      %v771 = vpop.f32.mrb[0].mxu0
      %v772 = vpop.f32.mrb[0].mxu0
      %v773 = vadd.f32 %v698, %v772
      %v774 = vpop.f32.mrb[0].mxu0
      %775 = vmatprep.mubr.bf16.mxu0 0
      %776 = vmatmul.mubr.bf16.gmra.mrb[0].mxu0 %v195
      %v777 = vpop.f32.mrb[0].mxu0
      %v778 = vadd.f32 %v703, %v777
      %v779 = vpop.f32.mrb[0].mxu0
      %v780 = vpop.f32.mrb[0].mxu0
      %v781 = vadd.f32 %v706, %v780
      %v782 = vpop.f32.mrb[0].mxu0
      %783 = vmatprep.mubr.bf16.mxu0 0
      %784 = vmatmul.mubr.bf16.gmra.mrb[0].mxu0 %v198
      %v785 = vpop.f32.mrb[0].mxu0
      %v786 = vadd.f32 %v711, %v785
      %v787 = vpop.f32.mrb[0].mxu0
      %v788 = vpop.f32.mrb[0].mxu0
      %v789 = vadd.f32 %v714, %v788
      %v790 = vpop.f32.mrb[0].mxu0
      %791 = vmatprep.mubr.bf16.mxu0 0
      %792 = vmatmul.mubr.bf16.gmra.mrb[0].mxu0 %v201
      %v793 = vpop.f32.mrb[0].mxu0
      %v794 = vadd.f32 %v719, %v793
      %v795 = vpop.f32.mrb[0].mxu0
      %v796 = vpop.f32.mrb[0].mxu0
      %v797 = vpop.f32.mrb[0].mxu0
      %798 = vdwg.mxu0
      %s799 = scalar_lea.vmem %s1, 28
      %v800 = vld [vmem:[%s799] sm:$0xf]
      %v802 = vsel %vm203, %v800, 0
      %804 = vmatprep.subr.bf16.mxu0 0
      %805 = vmatpush1.bf16.msra.mxu0 %v802
      %806 = vmatprep.subr.bf16.mxu0 0
      %807 = vmatpush1.bf16.msra.mxu0 0
      %808 = vmatprep.subr.bf16.mxu0 0
      %809 = vmatpush1.bf16.msra.mxu0 0
      %810 = vmatprep.subr.bf16.mxu0 0
      %811 = vmatpush1.bf16.msra.mxu0 0
      %812 = vmatprep.subr.bf16.mxu0 0
      %813 = vmatpush1.bf16.msra.mxu0 0
      %814 = vmatprep.subr.bf16.mxu0 0
      %815 = vmatpush1.bf16.msra.mxu0 0
      %816 = vmatprep.subr.bf16.mxu0 0
      %817 = vmatpush1.bf16.msra.mxu0 0
      %818 = vmatprep.subr.bf16.mxu0 0
      %819 = vmatpush1.bf16.msra.mxu0 0
      %820 = vmatprep.subr.bf16.mxu0 0
      %821 = vmatpush1.bf16.msra.mxu0 0
      %822 = vmatprep.subr.bf16.mxu0 0
      %823 = vmatpush1.bf16.msra.mxu0 0
      %824 = vmatprep.subr.bf16.mxu0 0
      %825 = vmatpush1.bf16.msra.mxu0 0
      %826 = vmatprep.subr.bf16.mxu0 0
      %827 = vmatpush1.bf16.msra.mxu0 0
      %828 = vmatprep.subr.bf16.mxu0 0
      %829 = vmatpush1.bf16.msra.mxu0 0
      %830 = vmatprep.subr.bf16.mxu0 0
      %831 = vmatpush1.bf16.msra.mxu0 0
      %832 = vmatprep.subr.bf16.mxu0 0
      %833 = vmatpush1.bf16.msra.mxu0 0
      %834 = vmatprep.subr.bf16.mxu0 0
      %835 = vmatpush1.bf16.msra.mxu0 0
      %836 = vmatprep.mubr.bf16.mxu0 0
      %837 = vmatmul.mubr.bf16.gmra.mrb[0].mxu0 %v481
      %v838 = vpop.f32.mrb[0].mxu0
      %v839 = vadd.f32 0.0, %v838
      %v840 = vpop.f32.mrb[0].mxu0
      %v841 = vpop.f32.mrb[0].mxu0
      %v842 = vadd.f32 0.0, %v841
      %v843 = vpop.f32.mrb[0].mxu0
      %844 = vmatprep.mubr.bf16.mxu0 0
      %845 = vmatmul.mubr.bf16.gmra.mrb[0].mxu0 %v484
      %v846 = vpop.f32.mrb[0].mxu0
      %v847 = vadd.f32 0.0, %v846
      %v848 = vpop.f32.mrb[0].mxu0
      %v849 = vpop.f32.mrb[0].mxu0
      %v850 = vadd.f32 0.0, %v849
      %v851 = vpop.f32.mrb[0].mxu0
      %852 = vmatprep.mubr.bf16.mxu0 0
      %853 = vmatmul.mubr.bf16.gmra.mrb[0].mxu0 %v487
      %v854 = vpop.f32.mrb[0].mxu0
      %v855 = vadd.f32 0.0, %v854
      %v856 = vpop.f32.mrb[0].mxu0
      %v857 = vpop.f32.mrb[0].mxu0
      %v858 = vadd.f32 0.0, %v857
      %v859 = vpop.f32.mrb[0].mxu0
      %860 = vmatprep.mubr.bf16.mxu0 0
      %861 = vmatmul.mubr.bf16.gmra.mrb[0].mxu0 %v490
      %v862 = vpop.f32.mrb[0].mxu0
      %v863 = vadd.f32 0.0, %v862
      %v864 = vpop.f32.mrb[0].mxu0
      %v865 = vpop.f32.mrb[0].mxu0
      %v866 = vadd.f32 0.0, %v865
      %v867 = vpop.f32.mrb[0].mxu0
      %868 = vmatprep.mubr.bf16.mxu0 0
      %869 = vmatmul.mubr.bf16.gmra.mrb[0].mxu0 %v493
      %v870 = vpop.f32.mrb[0].mxu0
      %v871 = vadd.f32 0.0, %v870
      %v872 = vpop.f32.mrb[0].mxu0
      %v873 = vpop.f32.mrb[0].mxu0
      %v874 = vpop.f32.mrb[0].mxu0
      %875 = vdwg.mxu0
      %v876 = vadd.f32 %v762, %v839
      %v877 = vadd.f32 %v765, %v842
      %v878 = vadd.f32 %v770, %v847
      %v879 = vadd.f32 %v773, %v850
      %v880 = vadd.f32 %v778, %v855
      %v881 = vadd.f32 %v781, %v858
      %v882 = vadd.f32 %v786, %v863
      %v883 = vadd.f32 %v789, %v866
      %v884 = vadd.f32 %v794, %v871
      %v885 = vld [vmem:[%s165 + $0xa] sm:$0xff]
      %v886 = vld [vmem:[%s165 + $0x12] sm:$0xff]
      %v887 = vld [vmem:[%s165 + $0x1a] sm:$0xff]
      %v888 = vld [vmem:[%s165 + $0x22] sm:$0xff]
      %v889 = vld [vmem:[%s165 + $0x2a] sm:$0xff]
      %v890 = vld [vmem:[%s165 + $0x32] sm:$0xff]
      %v891 = vld [vmem:[%s165 + $0x3a] sm:$0xff]
      %v892 = vld [vmem:[%s165 + $0x42] sm:$0xff]
      %v893 = vld [vmem:[%s165 + $0x4a] sm:$0x7f]
      %v894 = vpack.c.bf16 %v886, %v885
      %v895 = vpack.c.bf16 %v888, %v887
      %v896 = vpack.c.bf16 %v890, %v889
      %v897 = vpack.c.bf16 %v892, %v891
      %v898 = vpack.c.bf16 %v893, %v893
      %s899 = scalar_lea.vmem %s1, 32
      %v900 = vld [vmem:[%s899] sm:$0xf]
      %v902 = vsel %vm187, %v894, 0
      %v905 = vsel %vm187, %v895, 0
      %v908 = vsel %vm187, %v896, 0
      %v911 = vsel %vm187, %v897, 0
      %v914 = vsel %vm187, %v898, 0
      %v917 = vsel %vm203, %v900, 0
      %919 = vmatprep.subr.bf16.mxu0 0
      %920 = vmatpush1.bf16.msra.mxu0 %v917
      %921 = vmatprep.subr.bf16.mxu0 0
      %922 = vmatpush1.bf16.msra.mxu0 0
      %923 = vmatprep.subr.bf16.mxu0 0
      %924 = vmatpush1.bf16.msra.mxu0 0
      %925 = vmatprep.subr.bf16.mxu0 0
      %926 = vmatpush1.bf16.msra.mxu0 0
      %927 = vmatprep.subr.bf16.mxu0 0
      %928 = vmatpush1.bf16.msra.mxu0 0
      %929 = vmatprep.subr.bf16.mxu0 0
      %930 = vmatpush1.bf16.msra.mxu0 0
      %931 = vmatprep.subr.bf16.mxu0 0
      %932 = vmatpush1.bf16.msra.mxu0 0
      %933 = vmatprep.subr.bf16.mxu0 0
      %934 = vmatpush1.bf16.msra.mxu0 0
      %935 = vmatprep.subr.bf16.mxu0 0
      %936 = vmatpush1.bf16.msra.mxu0 0
      %937 = vmatprep.subr.bf16.mxu0 0
      %938 = vmatpush1.bf16.msra.mxu0 0
      %939 = vmatprep.subr.bf16.mxu0 0
      %940 = vmatpush1.bf16.msra.mxu0 0
      %941 = vmatprep.subr.bf16.mxu0 0
      %942 = vmatpush1.bf16.msra.mxu0 0
      %943 = vmatprep.subr.bf16.mxu0 0
      %944 = vmatpush1.bf16.msra.mxu0 0
      %945 = vmatprep.subr.bf16.mxu0 0
      %946 = vmatpush1.bf16.msra.mxu0 0
      %947 = vmatprep.subr.bf16.mxu0 0
      %948 = vmatpush1.bf16.msra.mxu0 0
      %949 = vmatprep.subr.bf16.mxu0 0
      %950 = vmatpush1.bf16.msra.mxu0 0
      %951 = vmatprep.mubr.bf16.mxu0 0
      %952 = vmatmul.mubr.bf16.gmra.mrb[0].mxu0 %v902
      %v953 = vpop.f32.mrb[0].mxu0
      %v954 = vadd.f32 0.0, %v953
      %v955 = vpop.f32.mrb[0].mxu0
      %v956 = vpop.f32.mrb[0].mxu0
      %v957 = vadd.f32 0.0, %v956
      %v958 = vpop.f32.mrb[0].mxu0
      %959 = vmatprep.mubr.bf16.mxu0 0
      %960 = vmatmul.mubr.bf16.gmra.mrb[0].mxu0 %v905
      %v961 = vpop.f32.mrb[0].mxu0
      %v962 = vadd.f32 0.0, %v961
      %v963 = vpop.f32.mrb[0].mxu0
      %v964 = vpop.f32.mrb[0].mxu0
      %v965 = vadd.f32 0.0, %v964
      %v966 = vpop.f32.mrb[0].mxu0
      %967 = vmatprep.mubr.bf16.mxu0 0
      %968 = vmatmul.mubr.bf16.gmra.mrb[0].mxu0 %v908
      %v969 = vpop.f32.mrb[0].mxu0
      %v970 = vadd.f32 0.0, %v969
      %v971 = vpop.f32.mrb[0].mxu0
      %v972 = vpop.f32.mrb[0].mxu0
      %v973 = vadd.f32 0.0, %v972
      %v974 = vpop.f32.mrb[0].mxu0
      %975 = vmatprep.mubr.bf16.mxu0 0
      %976 = vmatmul.mubr.bf16.gmra.mrb[0].mxu0 %v911
      %v977 = vpop.f32.mrb[0].mxu0
      %v978 = vadd.f32 0.0, %v977
      %v979 = vpop.f32.mrb[0].mxu0
      %v980 = vpop.f32.mrb[0].mxu0
      %v981 = vadd.f32 0.0, %v980
      %v982 = vpop.f32.mrb[0].mxu0
      %983 = vmatprep.mubr.bf16.mxu0 0
      %984 = vmatmul.mubr.bf16.gmra.mrb[0].mxu0 %v914
      %v985 = vpop.f32.mrb[0].mxu0
      %v986 = vadd.f32 0.0, %v985
      %v987 = vpop.f32.mrb[0].mxu0
      %v988 = vpop.f32.mrb[0].mxu0
      %v989 = vpop.f32.mrb[0].mxu0
      %990 = vdwg.mxu0
      %v991 = vadd.f32 %v876, %v954
      %v992 = vadd.f32 %v877, %v957
      %v993 = vadd.f32 %v878, %v962
      %v994 = vadd.f32 %v879, %v965
      %v995 = vadd.f32 %v880, %v970
      %v996 = vadd.f32 %v881, %v973
      %v997 = vadd.f32 %v882, %v978
      %v998 = vadd.f32 %v883, %v981
      %v999 = vadd.f32 %v884, %v986
      %1009 = vrot.lane.b32.xlu0 %v425, 8
      %v1010 = vpop.permute.xlu0 %1009
      %1011 = vrot.lane.b32.xlu0 %v428, 8
      %v1012 = vpop.permute.xlu0 %1011
      %1013 = vrot.lane.b32.xlu0 %v433, 8
      %v1014 = vpop.permute.xlu0 %1013
      %1015 = vrot.lane.b32.xlu0 %v436, 8
      %v1016 = vpop.permute.xlu0 %1015
      %1017 = vrot.lane.b32.xlu0 %v441, 8
      %v1018 = vpop.permute.xlu0 %1017
      %1019 = vrot.lane.b32.xlu0 %v444, 8
      %v1020 = vpop.permute.xlu0 %1019
      %1021 = vrot.lane.b32.xlu0 %v449, 8
      %v1022 = vpop.permute.xlu0 %1021
      %1023 = vrot.lane.b32.xlu0 %v452, 8
      %v1024 = vpop.permute.xlu0 %1023
      %1025 = vrot.lane.b32.xlu0 %v457, 8
      %v1026 = vpop.permute.xlu0 %1025
      %1045 = vrot.lane.b32.xlu0 %v608, 16
      %v1046 = vpop.permute.xlu0 %1045
      %1047 = vrot.lane.b32.xlu0 %v611, 16
      %v1048 = vpop.permute.xlu0 %1047
      %1049 = vrot.lane.b32.xlu0 %v616, 16
      %v1050 = vpop.permute.xlu0 %1049
      %1051 = vrot.lane.b32.xlu0 %v619, 16
      %v1052 = vpop.permute.xlu0 %1051
      %1053 = vrot.lane.b32.xlu0 %v624, 16
      %v1054 = vpop.permute.xlu0 %1053
      %1055 = vrot.lane.b32.xlu0 %v627, 16
      %v1056 = vpop.permute.xlu0 %1055
      %1057 = vrot.lane.b32.xlu0 %v632, 16
      %v1058 = vpop.permute.xlu0 %1057
      %1059 = vrot.lane.b32.xlu0 %v635, 16
      %v1060 = vpop.permute.xlu0 %1059
      %1061 = vrot.lane.b32.xlu0 %v640, 16
      %v1062 = vpop.permute.xlu0 %1061
      %1081 = vrot.lane.b32.xlu0 %v991, 24
      %v1082 = vpop.permute.xlu0 %1081
      %1083 = vrot.lane.b32.xlu0 %v992, 24
      %v1084 = vpop.permute.xlu0 %1083
      %1085 = vrot.lane.b32.xlu0 %v993, 24
      %v1086 = vpop.permute.xlu0 %1085
      %1087 = vrot.lane.b32.xlu0 %v994, 24
      %v1088 = vpop.permute.xlu0 %1087
      %1089 = vrot.lane.b32.xlu0 %v995, 24
      %v1090 = vpop.permute.xlu0 %1089
      %1091 = vrot.lane.b32.xlu0 %v996, 24
      %v1092 = vpop.permute.xlu0 %1091
      %1093 = vrot.lane.b32.xlu0 %v997, 24
      %v1094 = vpop.permute.xlu0 %1093
      %1095 = vrot.lane.b32.xlu0 %v998, 24
      %v1096 = vpop.permute.xlu0 %1095
      %1097 = vrot.lane.b32.xlu0 %v999, 24
      %v1098 = vpop.permute.xlu0 %1097
      %v1108 = vsel %vm187, %v242, %v1010
      %v1109 = vsel %vm187, %v245, %v1012
      %v1110 = vsel %vm187, %v250, %v1014
      %v1111 = vsel %vm187, %v253, %v1016
      %v1112 = vsel %vm187, %v258, %v1018
      %v1113 = vsel %vm187, %v261, %v1020
      %v1114 = vsel %vm187, %v266, %v1022
      %v1115 = vsel %vm187, %v269, %v1024
      %v1116 = vsel %vm187, %v274, %v1026
      %vm1117 = vcmask 130048
      %v1118 = vsel %vm1117, %v1108, %v1046
      %v1119 = vsel %vm1117, %v1109, %v1048
      %v1120 = vsel %vm1117, %v1110, %v1050
      %v1121 = vsel %vm1117, %v1111, %v1052
      %v1122 = vsel %vm1117, %v1112, %v1054
      %v1123 = vsel %vm1117, %v1113, %v1056
      %v1124 = vsel %vm1117, %v1114, %v1058
      %v1125 = vsel %vm1117, %v1115, %v1060
      %v1126 = vsel %vm1117, %v1116, %v1062
      %vm1127 = vcmask 195584
      %v1128 = vsel %vm1127, %v1118, %v1082
      %v1129 = vsel %vm1127, %v1119, %v1084
      %v1130 = vsel %vm1127, %v1120, %v1086
      %v1131 = vsel %vm1127, %v1121, %v1088
      %v1132 = vsel %vm1127, %v1122, %v1090
      %v1133 = vsel %vm1127, %v1123, %v1092
      %v1134 = vsel %vm1127, %v1124, %v1094
      %v1135 = vsel %vm1127, %v1125, %v1096
      %v1136 = vsel %vm1127, %v1126, %v1098
      %v1137 = vld [vmem:[%s2] sm:$0x1]
      %v1139 = vlaneseq
      %v1140 = vshrl.u32 %v1139, 7
      %v1141 = vsub.s32 0, %v1140
      %v1142 = vrot.slane %v1137, %v1141
      %v1144 = vadd.f32 %v1128, %v1142
      %v1145 = vadd.f32 %v1129, %v1142
      %v1146 = vadd.f32 %v1130, %v1142
      %v1147 = vadd.f32 %v1131, %v1142
      %v1148 = vadd.f32 %v1132, %v1142
      %v1149 = vadd.f32 %v1133, %v1142
      %v1150 = vadd.f32 %v1134, %v1142
      %v1151 = vadd.f32 %v1135, %v1142
      %v1152 = vadd.f32 %v1136, %v1142
      %vm1153 = vcmp.ge.f32.partialorder %v1144, 0.0
      %vm1154 = vcmp.ge.f32.partialorder %v1145, 0.0
      %vm1155 = vcmp.ge.f32.partialorder %v1146, 0.0
      %vm1156 = vcmp.ge.f32.partialorder %v1147, 0.0
      %vm1157 = vcmp.ge.f32.partialorder %v1148, 0.0
      %vm1158 = vcmp.ge.f32.partialorder %v1149, 0.0
      %vm1159 = vcmp.ge.f32.partialorder %v1150, 0.0
      %vm1160 = vcmp.ge.f32.partialorder %v1151, 0.0
      %vm1161 = vcmp.ge.f32.partialorder %v1152, 0.0
      %v1162 = vmul.f32 %v1144, 0.01
      %v1163 = vmul.f32 %v1145, 0.01
      %v1164 = vmul.f32 %v1146, 0.01
      %v1165 = vmul.f32 %v1147, 0.01
      %v1166 = vmul.f32 %v1148, 0.01
      %v1167 = vmul.f32 %v1149, 0.01
      %v1168 = vmul.f32 %v1150, 0.01
      %v1169 = vmul.f32 %v1151, 0.01
      %v1170 = vmul.f32 %v1152, 0.01
      %v1171 = vsel %vm1153, %v1144, %v1162
      %v1172 = vsel %vm1154, %v1145, %v1163
      %v1173 = vsel %vm1155, %v1146, %v1164
      %v1174 = vsel %vm1156, %v1147, %v1165
      %v1175 = vsel %vm1157, %v1148, %v1166
      %v1176 = vsel %vm1158, %v1149, %v1167
      %v1177 = vsel %vm1159, %v1150, %v1168
      %v1178 = vsel %vm1160, %v1151, %v1169
      %v1179 = vsel %vm1161, %v1152, %v1170
      %vm1180 = vcmask 261120
      %1181 = vst.msk [vmem:[%s170] sm:$0xff] %vm1180, %v1171
      %1182 = vst.msk [vmem:[%s170 + $0x8] sm:$0xff] %vm1180, %v1172
      %1183 = vst.msk [vmem:[%s170 + $0x10] sm:$0xff] %vm1180, %v1173
      %1184 = vst.msk [vmem:[%s170 + $0x18] sm:$0xff] %vm1180, %v1174
      %1185 = vst.msk [vmem:[%s170 + $0x20] sm:$0xff] %vm1180, %v1175
      %1186 = vst.msk [vmem:[%s170 + $0x28] sm:$0xff] %vm1180, %v1176
      %1187 = vst.msk [vmem:[%s170 + $0x30] sm:$0xff] %vm1180, %v1177
      %1188 = vst.msk [vmem:[%s170 + $0x38] sm:$0xff] %vm1180, %v1178
      %vm1189 = vcmask 260096
      %1190 = vst.msk [vmem:[%s170 + $0x40] sm:$0x7f] %vm1189, %v1179
      %p1191 = scmp.lt.s32.totalorder %s14, 1
      %s1192 = scalar_select %p1191, %s14, 1
      %s1193 = smul.addr %s1192, 9
      %s1194 = smul.addr %s1193, 8
      %s1195 = scalar_lea.vmem %s3, %s1194
      // Predicated region
      $region33: #{_lambda_.17} parent=31 // pred_check
        %p1196 = pneg %p100
      $region34: #{_lambda_.17} parent=31 // pred_check_branch
        %1198 = sbr.rel (%p1196) target = $region36
      $region35: #{_lambda_.17} parent=31 // pred_region
        _
      $region36: #{_lambda_.17} parent=31 // pred_fallthru
        _
    $region32: #{_lambda_.17} parent=5 // pred_fallthru
      _
    %p1199 = scmp.le.s32.totalorder 2, %s9
    // Predicated region
    $region37: #{_lambda_.17} parent=5 // pred_check
      %p1200 = pneg %p1199
    $region38: #{_lambda_.17} parent=5 // pred_check_branch
      %1202 = sbr.rel (%p1200) target = $region40
    $region39: #{_lambda_.17} parent=5 // pred_region
      %s1203 = ssub.s32 %s9, 2
      // Predicated region
      $region41: #{_lambda_.17} parent=39 // pred_check
        %p1204 = pneg %p106
      $region42: #{_lambda_.17} parent=39 // pred_check_branch
        %1206 = sbr.rel (%p1204) target = $region44
      $region43: #{_lambda_.17} parent=39 // pred_region
        %p1207 = scmp.lt.s32.totalorder %s15, 1
        %s1208 = scalar_select %p1207, %s15, 1
        %s1209 = smul.addr %s1208, 9
        %s1210 = smul.addr %s1209, 8
        %s1211 = scalar_lea.vmem %s3, %s1210
      $region44: #{_lambda_.17} parent=39 // pred_fallthru
        _
    $region40: #{_lambda_.17} parent=5 // pred_fallthru
      _
  $region6: #{_lambda_.17} parent=0 // loop_footer
    %s13 = sadd.s32 1, %s9
  $region7: #{_lambda_.17} parent=0 // loop_footer_branch
    %8 = sbr.rel target = $region3
  $region8: #{_lambda_.17} parent=0 // loop_exit
    _

// kernel: squeeze.7
$region0: #{squeeze.7}
  %s0 = inlined_call_operand.vmem [shape: f32[8,32], index: 0, kind: input, shape index: {}]
  %s1 = inlined_call_operand.vmem [shape: f32[2,128], index: 1, kind: output, shape index: {}]
  $region1: #{squeeze.7} parent=0
    #allocation0 [shape = 'u8[4096]{0}', space=vmem, size = 0x1000, scoped, tag = 'scoped mem for output reshape']
    %s2 = smov 3
    %v3 = vld [vmem:[%s0] ss:$4 sm:%s2]
    %vm4 = vcmask 261120
    %5 = vst.msk [vmem:[#allocation0] sm:$0x3] %vm4, %v3
    %s6 = scalar_lea.vmem %s0, 3
    %s7 = smov 3
    %v8 = vld [vmem:[%s6] ss:$4 sm:%s7]
    %9 = vrot.lane.b32.xlu0 %v8, 96
    %v10 = vpop.permute.xlu0 %9
    %vm11 = vcmask 1048320
    %12 = vst.msk [vmem:[#allocation0] sm:$0x3] %vm11, %v10
    %s13 = scalar_lea.vmem %s0, 2
    %s14 = smov 3
    %v15 = vld [vmem:[%s13] ss:$4 sm:%s14]
    %16 = vrot.lane.b32.xlu0 %v15, 64
    %v17 = vpop.permute.xlu0 %16
    %vm18 = vcmask 785920
    %19 = vst.msk [vmem:[#allocation0] sm:$0x3] %vm18, %v17
    %s20 = scalar_lea.vmem %s0, 1
    %s21 = smov 3
    %v22 = vld [vmem:[%s20] ss:$4 sm:%s21]
    %23 = vrot.lane.b32.xlu0 %v22, 32
    %v24 = vpop.permute.xlu0 %23
    %vm25 = vcmask 523520
    %26 = vst.msk [vmem:[#allocation0] sm:$0x3] %vm25, %v24
    %s28 = sshllo.u32 0, 2
    %v30 = vld [vmem:[#allocation0] sm:%s28]
    %s31 = sshllo.u32 0, 2
    %32 = vst [vmem:[%s1] sm:%s31] %v30

// kernel: _lambda_.19
$region0: #{_lambda_.19}
  #allocation0 [shape = 'u32[]', space=smem, size = 0x4, offset = 0x4, fixed_abs, tag = 'smem constant byte address 0x4 - core index']
  #allocation1 [shape = 'u32[144,128]{1,0:T(1,128)}', space=vmem, size = 0x12000, scoped, tag = 'internal scratch']
  %s0 = inlined_call_operand.vmem [shape: f32[2,128], index: 0, kind: input, shape index: {}]
  %s1 = inlined_call_operand.vmem [shape: f32[2,128], index: 1, kind: input, shape index: {}]
  %s2 = inlined_call_operand.vmem [shape: bf16[128,512], index: 2, kind: input, shape index: {}]
  %s3 = inlined_call_operand.vmem [shape: f32[1,512], index: 3, kind: input, shape index: {}]
  %s4 = inlined_call_operand.vmem [shape: bf16[512,128], index: 4, kind: input, shape index: {}]
  %s5 = inlined_call_operand.vmem [shape: f32[1,128], index: 5, kind: input, shape index: {}]
  %s6 = inlined_call_operand.vmem [shape: bf16[128,32], index: 6, kind: input, shape index: {}]
  %s7 = inlined_call_operand.vmem [shape: f32[1,32], index: 7, kind: input, shape index: {}]
  %s8 = inlined_call_operand.vmem [shape: bf16[32,3], index: 8, kind: input, shape index: {}]
  %s9 = inlined_call_operand.vmem [shape: f32[1,3], index: 9, kind: input, shape index: {}]
  %s10 = inlined_call_operand.hbm [shape: f32[2,3], index: 10, kind: output, shape index: {}]
  %s11 = sld [smem:[#allocation0]]
  $region50: #{_lambda_.19} parent=0
    _
  %s13 = ssub.s32 1, %s11
  %s14 = scalar_select 0, %s13, %s11
  $region1: #{_lambda_.19} parent=0
    #allocation2 [shape = 'u8[1024]{0}', space=vmem, size = 0x400, scoped, tag = 'output window, operand 0, single buffered']
    #allocation3 [shape = 's32[1]{0}', space=sflag, size = 0x4, scoped, tag = 'scoped memory for _lambda_.19']
    %15 = vsyncpa [#allocation3], 0
    // Predicated region
    $region2: #{_lambda_.19} parent=1 // pred_check
      _
    $region3: #{_lambda_.19} parent=1 // pred_check_branch
      %17 = sbr.rel (0) target = $region5
    $region4: #{_lambda_.19} parent=1 // pred_region
      _
    $region5: #{_lambda_.19} parent=1 // pred_fallthru
      _
    // Predicated region
    $region6: #{_lambda_.19} parent=1 // pred_check
      _
    $region7: #{_lambda_.19} parent=1 // pred_check_branch
      %19 = sbr.rel (0) target = $region9
    $region8: #{_lambda_.19} parent=1 // pred_region
      _
    $region9: #{_lambda_.19} parent=1 // pred_fallthru
      _
    // Predicated region
    $region10: #{_lambda_.19} parent=1 // pred_check
      _
    $region11: #{_lambda_.19} parent=1 // pred_check_branch
      %21 = sbr.rel (0) target = $region13
    $region12: #{_lambda_.19} parent=1 // pred_region
      _
    $region13: #{_lambda_.19} parent=1 // pred_fallthru
      _
    // Predicated region
    $region14: #{_lambda_.19} parent=1 // pred_check
      _
    $region15: #{_lambda_.19} parent=1 // pred_check_branch
      %23 = sbr.rel (0) target = $region17
    $region16: #{_lambda_.19} parent=1 // pred_region
      _
    $region17: #{_lambda_.19} parent=1 // pred_fallthru
      _
    // Predicated region
    $region18: #{_lambda_.19} parent=1 // pred_check
      _
    $region19: #{_lambda_.19} parent=1 // pred_check_branch
      %25 = sbr.rel (0) target = $region21
    $region20: #{_lambda_.19} parent=1 // pred_region
      _
    $region21: #{_lambda_.19} parent=1 // pred_fallthru
      _
    // Predicated region
    $region22: #{_lambda_.19} parent=1 // pred_check
      _
    $region23: #{_lambda_.19} parent=1 // pred_check_branch
      %27 = sbr.rel (0) target = $region25
    $region24: #{_lambda_.19} parent=1 // pred_region
      _
    $region25: #{_lambda_.19} parent=1 // pred_fallthru
      _
    // Predicated region
    $region26: #{_lambda_.19} parent=1 // pred_check
      _
    $region27: #{_lambda_.19} parent=1 // pred_check_branch
      %29 = sbr.rel (0) target = $region29
    $region28: #{_lambda_.19} parent=1 // pred_region
      _
    $region29: #{_lambda_.19} parent=1 // pred_fallthru
      _
    // Predicated region
    $region30: #{_lambda_.19} parent=1 // pred_check
      _
    $region31: #{_lambda_.19} parent=1 // pred_check_branch
      %31 = sbr.rel (0) target = $region33
    $region32: #{_lambda_.19} parent=1 // pred_region
      _
    $region33: #{_lambda_.19} parent=1 // pred_fallthru
      _
    // Predicated region
    $region34: #{_lambda_.19} parent=1 // pred_check
      _
    $region35: #{_lambda_.19} parent=1 // pred_check_branch
      %33 = sbr.rel (0) target = $region37
    $region36: #{_lambda_.19} parent=1 // pred_region
      _
    $region37: #{_lambda_.19} parent=1 // pred_fallthru
      _
    // Predicated region
    $region38: #{_lambda_.19} parent=1 // pred_check
      _
    $region39: #{_lambda_.19} parent=1 // pred_check_branch
      %35 = sbr.rel (0) target = $region41
    $region40: #{_lambda_.19} parent=1 // pred_region
      _
    $region41: #{_lambda_.19} parent=1 // pred_fallthru
      _
    %v37 = vld [vmem:[%s1] sm:$0x3]
    %v38 = vld [vmem:[%s0] sm:$0x3]
    %v39 = vsub.f32 %v37, %v38
    %v40 = vand.u32 2147483647, %v39
    %v41 = vpack.c.bf16 %v40, %v40
    %v42 = vld [vmem:[%s2] sm:$0xff]
    %v43 = vld [vmem:[%s2 + $0x8] sm:$0xff]
    %v44 = vld [vmem:[%s2 + $0x10] sm:$0xff]
    %v45 = vld [vmem:[%s2 + $0x18] sm:$0xff]
    %v46 = vld [vmem:[%s2 + $0x20] sm:$0xff]
    %v47 = vld [vmem:[%s2 + $0x28] sm:$0xff]
    %v48 = vld [vmem:[%s2 + $0x30] sm:$0xff]
    %v49 = vld [vmem:[%s2 + $0x38] sm:$0xff]
    %v50 = vld [vmem:[%s2 + $0x40] sm:$0xff]
    %v51 = vld [vmem:[%s2 + $0x48] sm:$0xff]
    %v52 = vld [vmem:[%s2 + $0x50] sm:$0xff]
    %v53 = vld [vmem:[%s2 + $0x58] sm:$0xff]
    %v54 = vld [vmem:[%s2 + $0x60] sm:$0xff]
    %v55 = vld [vmem:[%s2 + $0x68] sm:$0xff]
    %v56 = vld [vmem:[%s2 + $0x70] sm:$0xff]
    %v57 = vld [vmem:[%s2 + $0x78] sm:$0xff]
    %v58 = vld [vmem:[%s2 + $0x80] sm:$0xff]
    %v59 = vld [vmem:[%s2 + $0x88] sm:$0xff]
    %v60 = vld [vmem:[%s2 + $0x90] sm:$0xff]
    %v61 = vld [vmem:[%s2 + $0x98] sm:$0xff]
    %v62 = vld [vmem:[%s2 + $0xa0] sm:$0xff]
    %v63 = vld [vmem:[%s2 + $0xa8] sm:$0xff]
    %v64 = vld [vmem:[%s2 + $0xb0] sm:$0xff]
    %v65 = vld [vmem:[%s2 + $0xb8] sm:$0xff]
    %v66 = vld [vmem:[%s2 + $0xc0] sm:$0xff]
    %v67 = vld [vmem:[%s2 + $0xc8] sm:$0xff]
    %v68 = vld [vmem:[%s2 + $0xd0] sm:$0xff]
    %v69 = vld [vmem:[%s2 + $0xd8] sm:$0xff]
    %v70 = vld [vmem:[%s2 + $0xe0] sm:$0xff]
    %v71 = vld [vmem:[%s2 + $0xe8] sm:$0xff]
    %v72 = vld [vmem:[%s2 + $0xf0] sm:$0xff]
    %v73 = vld [vmem:[%s2 + $0xf8] sm:$0xff]
    %v74 = vld [vmem:[%s3] sm:$0xf]
    %v76 = vlaneseq
    %v77 = vshrl.u32 %v76, 7
    %v78 = vsub.s32 0, %v77
    %v79 = vrot.slane %v74, %v78
    %v80 = vlaneseq
    %v81 = vshrl.u32 %v80, 7
    %v82 = vsub.s32 1, %v81
    %v83 = vrot.slane %v74, %v82
    %v84 = vlaneseq
    %v85 = vshrl.u32 %v84, 7
    %v86 = vsub.s32 2, %v85
    %v87 = vrot.slane %v74, %v86
    %v88 = vlaneseq
    %v89 = vshrl.u32 %v88, 7
    %v90 = vsub.s32 3, %v89
    %v91 = vrot.slane %v74, %v90
    %v128 = vunpack.c.l.b16 %v42
    %v129 = vunpack.c.h.b16 %v42
    %v130 = vunpack.c.l.b16 %v43
    %v131 = vunpack.c.h.b16 %v43
    %v132 = vunpack.c.l.b16 %v44
    %v133 = vunpack.c.h.b16 %v44
    %v134 = vunpack.c.l.b16 %v45
    %v135 = vunpack.c.h.b16 %v45
    %v136 = vunpack.c.l.b16 %v46
    %v137 = vunpack.c.h.b16 %v46
    %v138 = vunpack.c.l.b16 %v47
    %v139 = vunpack.c.h.b16 %v47
    %v140 = vunpack.c.l.b16 %v48
    %v141 = vunpack.c.h.b16 %v48
    %v142 = vunpack.c.l.b16 %v49
    %v143 = vunpack.c.h.b16 %v49
    %v144 = vunpack.c.l.b16 %v50
    %v145 = vunpack.c.h.b16 %v50
    %v146 = vunpack.c.l.b16 %v51
    %v147 = vunpack.c.h.b16 %v51
    %v148 = vunpack.c.l.b16 %v52
    %v149 = vunpack.c.h.b16 %v52
    %v150 = vunpack.c.l.b16 %v53
    %v151 = vunpack.c.h.b16 %v53
    %v152 = vunpack.c.l.b16 %v54
    %v153 = vunpack.c.h.b16 %v54
    %v154 = vunpack.c.l.b16 %v55
    %v155 = vunpack.c.h.b16 %v55
    %v156 = vunpack.c.l.b16 %v56
    %v157 = vunpack.c.h.b16 %v56
    %v158 = vunpack.c.l.b16 %v57
    %v159 = vunpack.c.h.b16 %v57
    %v160 = vunpack.c.l.b16 %v58
    %v161 = vunpack.c.h.b16 %v58
    %v162 = vunpack.c.l.b16 %v59
    %v163 = vunpack.c.h.b16 %v59
    %v164 = vunpack.c.l.b16 %v60
    %v165 = vunpack.c.h.b16 %v60
    %v166 = vunpack.c.l.b16 %v61
    %v167 = vunpack.c.h.b16 %v61
    %v168 = vunpack.c.l.b16 %v62
    %v169 = vunpack.c.h.b16 %v62
    %v170 = vunpack.c.l.b16 %v63
    %v171 = vunpack.c.h.b16 %v63
    %v172 = vunpack.c.l.b16 %v64
    %v173 = vunpack.c.h.b16 %v64
    %v174 = vunpack.c.l.b16 %v65
    %v175 = vunpack.c.h.b16 %v65
    %v176 = vunpack.c.l.b16 %v66
    %v177 = vunpack.c.h.b16 %v66
    %v178 = vunpack.c.l.b16 %v67
    %v179 = vunpack.c.h.b16 %v67
    %v180 = vunpack.c.l.b16 %v68
    %v181 = vunpack.c.h.b16 %v68
    %v182 = vunpack.c.l.b16 %v69
    %v183 = vunpack.c.h.b16 %v69
    %v184 = vunpack.c.l.b16 %v70
    %v185 = vunpack.c.h.b16 %v70
    %v186 = vunpack.c.l.b16 %v71
    %v187 = vunpack.c.h.b16 %v71
    %v188 = vunpack.c.l.b16 %v72
    %v189 = vunpack.c.h.b16 %v72
    %v190 = vunpack.c.l.b16 %v73
    %v191 = vunpack.c.h.b16 %v73
    %v192 = vpack.c.b16 %v132, %v128
    %v193 = vpack.c.b16 %v133, %v129
    %v194 = vpack.c.b16 %v134, %v130
    %v195 = vpack.c.b16 %v135, %v131
    %v196 = vpack.c.b16 %v140, %v136
    %v197 = vpack.c.b16 %v141, %v137
    %v198 = vpack.c.b16 %v142, %v138
    %v199 = vpack.c.b16 %v143, %v139
    %v200 = vpack.c.b16 %v148, %v144
    %v201 = vpack.c.b16 %v149, %v145
    %v202 = vpack.c.b16 %v150, %v146
    %v203 = vpack.c.b16 %v151, %v147
    %v204 = vpack.c.b16 %v156, %v152
    %v205 = vpack.c.b16 %v157, %v153
    %v206 = vpack.c.b16 %v158, %v154
    %v207 = vpack.c.b16 %v159, %v155
    %v208 = vpack.c.b16 %v164, %v160
    %v209 = vpack.c.b16 %v165, %v161
    %v210 = vpack.c.b16 %v166, %v162
    %v211 = vpack.c.b16 %v167, %v163
    %v212 = vpack.c.b16 %v172, %v168
    %v213 = vpack.c.b16 %v173, %v169
    %v214 = vpack.c.b16 %v174, %v170
    %v215 = vpack.c.b16 %v175, %v171
    %v216 = vpack.c.b16 %v180, %v176
    %v217 = vpack.c.b16 %v181, %v177
    %v218 = vpack.c.b16 %v182, %v178
    %v219 = vpack.c.b16 %v183, %v179
    %v220 = vpack.c.b16 %v188, %v184
    %v221 = vpack.c.b16 %v189, %v185
    %v222 = vpack.c.b16 %v190, %v186
    %v223 = vpack.c.b16 %v191, %v187
    %256 = vmatprep.subr.bf16.mxu0 %v193
    %257 = vmatpush1.bf16.msra.mxu0 %v192
    %258 = vmatprep.subr.bf16.mxu0 %v197
    %259 = vmatpush1.bf16.msra.mxu0 %v196
    %260 = vmatprep.subr.bf16.mxu0 %v201
    %261 = vmatpush1.bf16.msra.mxu0 %v200
    %262 = vmatprep.subr.bf16.mxu0 %v205
    %263 = vmatpush1.bf16.msra.mxu0 %v204
    %264 = vmatprep.subr.bf16.mxu0 %v209
    %265 = vmatpush1.bf16.msra.mxu0 %v208
    %266 = vmatprep.subr.bf16.mxu0 %v213
    %267 = vmatpush1.bf16.msra.mxu0 %v212
    %268 = vmatprep.subr.bf16.mxu0 %v217
    %269 = vmatpush1.bf16.msra.mxu0 %v216
    %270 = vmatprep.subr.bf16.mxu0 %v221
    %271 = vmatpush1.bf16.msra.mxu0 %v220
    %272 = vmatprep.subr.bf16.mxu0 0
    %273 = vmatpush1.bf16.msra.mxu0 0
    %274 = vmatprep.subr.bf16.mxu0 0
    %275 = vmatpush1.bf16.msra.mxu0 0
    %276 = vmatprep.subr.bf16.mxu0 0
    %277 = vmatpush1.bf16.msra.mxu0 0
    %278 = vmatprep.subr.bf16.mxu0 0
    %279 = vmatpush1.bf16.msra.mxu0 0
    %280 = vmatprep.subr.bf16.mxu0 0
    %281 = vmatpush1.bf16.msra.mxu0 0
    %282 = vmatprep.subr.bf16.mxu0 0
    %283 = vmatpush1.bf16.msra.mxu0 0
    %284 = vmatprep.subr.bf16.mxu0 0
    %285 = vmatpush1.bf16.msra.mxu0 0
    %286 = vmatprep.subr.bf16.mxu0 0
    %287 = vmatpush1.bf16.msra.mxu0 0
    %288 = vmatprep.mubr.bf16.mxu0 0
    %289 = vmatmul.mubr.bf16.gmra.mrb[0].mxu0 %v41
    %v290 = vpop.f32.mrb[0].mxu0
    %v291 = vadd.f32 %v79, %v290
    %v292 = vpop.f32.mrb[0].mxu0
    %v293 = vadd.f32 %v83, %v292
    %v294 = vpop.f32.mrb[0].mxu0
    %v295 = vpop.f32.mrb[0].mxu0
    %296 = vdwg.mxu0
    %297 = vmatprep.subr.bf16.mxu0 %v195
    %298 = vmatpush1.bf16.msra.mxu0 %v194
    %299 = vmatprep.subr.bf16.mxu0 %v199
    %300 = vmatpush1.bf16.msra.mxu0 %v198
    %301 = vmatprep.subr.bf16.mxu0 %v203
    %302 = vmatpush1.bf16.msra.mxu0 %v202
    %303 = vmatprep.subr.bf16.mxu0 %v207
    %304 = vmatpush1.bf16.msra.mxu0 %v206
    %305 = vmatprep.subr.bf16.mxu0 %v211
    %306 = vmatpush1.bf16.msra.mxu0 %v210
    %307 = vmatprep.subr.bf16.mxu0 %v215
    %308 = vmatpush1.bf16.msra.mxu0 %v214
    %309 = vmatprep.subr.bf16.mxu0 %v219
    %310 = vmatpush1.bf16.msra.mxu0 %v218
    %311 = vmatprep.subr.bf16.mxu0 %v223
    %312 = vmatpush1.bf16.msra.mxu0 %v222
    %313 = vmatprep.subr.bf16.mxu0 0
    %314 = vmatpush1.bf16.msra.mxu0 0
    %315 = vmatprep.subr.bf16.mxu0 0
    %316 = vmatpush1.bf16.msra.mxu0 0
    %317 = vmatprep.subr.bf16.mxu0 0
    %318 = vmatpush1.bf16.msra.mxu0 0
    %319 = vmatprep.subr.bf16.mxu0 0
    %320 = vmatpush1.bf16.msra.mxu0 0
    %321 = vmatprep.subr.bf16.mxu0 0
    %322 = vmatpush1.bf16.msra.mxu0 0
    %323 = vmatprep.subr.bf16.mxu0 0
    %324 = vmatpush1.bf16.msra.mxu0 0
    %325 = vmatprep.subr.bf16.mxu0 0
    %326 = vmatpush1.bf16.msra.mxu0 0
    %327 = vmatprep.subr.bf16.mxu0 0
    %328 = vmatpush1.bf16.msra.mxu0 0
    %329 = vmatprep.mubr.bf16.mxu0 0
    %330 = vmatmul.mubr.bf16.gmra.mrb[0].mxu0 %v41
    %v331 = vpop.f32.mrb[0].mxu0
    %v332 = vadd.f32 %v87, %v331
    %v333 = vpop.f32.mrb[0].mxu0
    %v334 = vadd.f32 %v91, %v333
    %v335 = vpop.f32.mrb[0].mxu0
    %v336 = vpop.f32.mrb[0].mxu0
    %337 = vdwg.mxu0
    %v338 = vmax.f32 %v291, 0.0
    %v339 = vmax.f32 %v293, 0.0
    %v340 = vmax.f32 %v332, 0.0
    %v341 = vmax.f32 %v334, 0.0
    %v342 = vmin.f32 %v338, 6.0
    %v343 = vmin.f32 %v339, 6.0
    %v344 = vmin.f32 %v340, 6.0
    %v345 = vmin.f32 %v341, 6.0
    %v346 = vpack.c.bf16 %v342, %v342
    %v347 = vpack.c.bf16 %v343, %v343
    %v348 = vpack.c.bf16 %v344, %v344
    %v349 = vpack.c.bf16 %v345, %v345
    %v350 = vld [vmem:[%s4] sm:$0xf]
    %v351 = vld [vmem:[%s4 + $0x4] sm:$0xf]
    %v352 = vld [vmem:[%s4 + $0x8] sm:$0xf]
    %v353 = vld [vmem:[%s4 + $0xc] sm:$0xf]
    %v354 = vld [vmem:[%s4 + $0x10] sm:$0xf]
    %v355 = vld [vmem:[%s4 + $0x14] sm:$0xf]
    %v356 = vld [vmem:[%s4 + $0x18] sm:$0xf]
    %v357 = vld [vmem:[%s4 + $0x1c] sm:$0xf]
    %v358 = vld [vmem:[%s4 + $0x20] sm:$0xf]
    %v359 = vld [vmem:[%s4 + $0x24] sm:$0xf]
    %v360 = vld [vmem:[%s4 + $0x28] sm:$0xf]
    %v361 = vld [vmem:[%s4 + $0x2c] sm:$0xf]
    %v362 = vld [vmem:[%s4 + $0x30] sm:$0xf]
    %v363 = vld [vmem:[%s4 + $0x34] sm:$0xf]
    %v364 = vld [vmem:[%s4 + $0x38] sm:$0xf]
    %v365 = vld [vmem:[%s4 + $0x3c] sm:$0xf]
    %v366 = vld [vmem:[%s4 + $0x40] sm:$0xf]
    %v367 = vld [vmem:[%s4 + $0x44] sm:$0xf]
    %v368 = vld [vmem:[%s4 + $0x48] sm:$0xf]
    %v369 = vld [vmem:[%s4 + $0x4c] sm:$0xf]
    %v370 = vld [vmem:[%s4 + $0x50] sm:$0xf]
    %v371 = vld [vmem:[%s4 + $0x54] sm:$0xf]
    %v372 = vld [vmem:[%s4 + $0x58] sm:$0xf]
    %v373 = vld [vmem:[%s4 + $0x5c] sm:$0xf]
    %v374 = vld [vmem:[%s4 + $0x60] sm:$0xf]
    %v375 = vld [vmem:[%s4 + $0x64] sm:$0xf]
    %v376 = vld [vmem:[%s4 + $0x68] sm:$0xf]
    %v377 = vld [vmem:[%s4 + $0x6c] sm:$0xf]
    %v378 = vld [vmem:[%s4 + $0x70] sm:$0xf]
    %v379 = vld [vmem:[%s4 + $0x74] sm:$0xf]
    %v380 = vld [vmem:[%s4 + $0x78] sm:$0xf]
    %v381 = vld [vmem:[%s4 + $0x7c] sm:$0xf]
    %v382 = vld [vmem:[%s4 + $0x80] sm:$0xf]
    %v383 = vld [vmem:[%s4 + $0x84] sm:$0xf]
    %v384 = vld [vmem:[%s4 + $0x88] sm:$0xf]
    %v385 = vld [vmem:[%s4 + $0x8c] sm:$0xf]
    %v386 = vld [vmem:[%s4 + $0x90] sm:$0xf]
    %v387 = vld [vmem:[%s4 + $0x94] sm:$0xf]
    %v388 = vld [vmem:[%s4 + $0x98] sm:$0xf]
    %v389 = vld [vmem:[%s4 + $0x9c] sm:$0xf]
    %v390 = vld [vmem:[%s4 + $0xa0] sm:$0xf]
    %v391 = vld [vmem:[%s4 + $0xa4] sm:$0xf]
    %v392 = vld [vmem:[%s4 + $0xa8] sm:$0xf]
    %v393 = vld [vmem:[%s4 + $0xac] sm:$0xf]
    %v394 = vld [vmem:[%s4 + $0xb0] sm:$0xf]
    %v395 = vld [vmem:[%s4 + $0xb4] sm:$0xf]
    %v396 = vld [vmem:[%s4 + $0xb8] sm:$0xf]
    %v397 = vld [vmem:[%s4 + $0xbc] sm:$0xf]
    %v398 = vld [vmem:[%s4 + $0xc0] sm:$0xf]
    %v399 = vld [vmem:[%s4 + $0xc4] sm:$0xf]
    %v400 = vld [vmem:[%s4 + $0xc8] sm:$0xf]
    %v401 = vld [vmem:[%s4 + $0xcc] sm:$0xf]
    %v402 = vld [vmem:[%s4 + $0xd0] sm:$0xf]
    %v403 = vld [vmem:[%s4 + $0xd4] sm:$0xf]
    %v404 = vld [vmem:[%s4 + $0xd8] sm:$0xf]
    %v405 = vld [vmem:[%s4 + $0xdc] sm:$0xf]
    %v406 = vld [vmem:[%s4 + $0xe0] sm:$0xf]
    %v407 = vld [vmem:[%s4 + $0xe4] sm:$0xf]
    %v408 = vld [vmem:[%s4 + $0xe8] sm:$0xf]
    %v409 = vld [vmem:[%s4 + $0xec] sm:$0xf]
    %v410 = vld [vmem:[%s4 + $0xf0] sm:$0xf]
    %v411 = vld [vmem:[%s4 + $0xf4] sm:$0xf]
    %v412 = vld [vmem:[%s4 + $0xf8] sm:$0xf]
    %v413 = vld [vmem:[%s4 + $0xfc] sm:$0xf]
    %v414 = vld [vmem:[%s5] sm:$0x1]
    %v416 = vlaneseq
    %v417 = vshrl.u32 %v416, 7
    %v418 = vsub.s32 0, %v417
    %v419 = vrot.slane %v414, %v418
    %v485 = vunpack.c.l.b16 %v350
    %v486 = vunpack.c.l.b16 %v351
    %v487 = vunpack.c.l.b16 %v352
    %v488 = vunpack.c.l.b16 %v353
    %v489 = vunpack.c.l.b16 %v354
    %v490 = vunpack.c.l.b16 %v355
    %v491 = vunpack.c.l.b16 %v356
    %v492 = vunpack.c.l.b16 %v357
    %v493 = vunpack.c.l.b16 %v358
    %v494 = vunpack.c.l.b16 %v359
    %v495 = vunpack.c.l.b16 %v360
    %v496 = vunpack.c.l.b16 %v361
    %v497 = vunpack.c.l.b16 %v362
    %v498 = vunpack.c.l.b16 %v363
    %v499 = vunpack.c.l.b16 %v364
    %v500 = vunpack.c.l.b16 %v365
    %v501 = vunpack.c.l.b16 %v366
    %v502 = vunpack.c.l.b16 %v367
    %v503 = vunpack.c.l.b16 %v368
    %v504 = vunpack.c.l.b16 %v369
    %v505 = vunpack.c.l.b16 %v370
    %v506 = vunpack.c.l.b16 %v371
    %v507 = vunpack.c.l.b16 %v372
    %v508 = vunpack.c.l.b16 %v373
    %v509 = vunpack.c.l.b16 %v374
    %v510 = vunpack.c.l.b16 %v375
    %v511 = vunpack.c.l.b16 %v376
    %v512 = vunpack.c.l.b16 %v377
    %v513 = vunpack.c.l.b16 %v378
    %v514 = vunpack.c.l.b16 %v379
    %v515 = vunpack.c.l.b16 %v380
    %v516 = vunpack.c.l.b16 %v381
    %v517 = vunpack.c.l.b16 %v382
    %v518 = vunpack.c.l.b16 %v383
    %v519 = vunpack.c.l.b16 %v384
    %v520 = vunpack.c.l.b16 %v385
    %v521 = vunpack.c.l.b16 %v386
    %v522 = vunpack.c.l.b16 %v387
    %v523 = vunpack.c.l.b16 %v388
    %v524 = vunpack.c.l.b16 %v389
    %v525 = vunpack.c.l.b16 %v390
    %v526 = vunpack.c.l.b16 %v391
    %v527 = vunpack.c.l.b16 %v392
    %v528 = vunpack.c.l.b16 %v393
    %v529 = vunpack.c.l.b16 %v394
    %v530 = vunpack.c.l.b16 %v395
    %v531 = vunpack.c.l.b16 %v396
    %v532 = vunpack.c.l.b16 %v397
    %v533 = vunpack.c.l.b16 %v398
    %v534 = vunpack.c.l.b16 %v399
    %v535 = vunpack.c.l.b16 %v400
    %v536 = vunpack.c.l.b16 %v401
    %v537 = vunpack.c.l.b16 %v402
    %v538 = vunpack.c.l.b16 %v403
    %v539 = vunpack.c.l.b16 %v404
    %v540 = vunpack.c.l.b16 %v405
    %v541 = vunpack.c.l.b16 %v406
    %v542 = vunpack.c.l.b16 %v407
    %v543 = vunpack.c.l.b16 %v408
    %v544 = vunpack.c.l.b16 %v409
    %v545 = vunpack.c.l.b16 %v410
    %v546 = vunpack.c.l.b16 %v411
    %v547 = vunpack.c.l.b16 %v412
    %v548 = vunpack.c.l.b16 %v413
    %v549 = vpack.c.b16 %v486, %v485
    %v550 = vpack.c.b16 %v488, %v487
    %v551 = vpack.c.b16 %v490, %v489
    %v552 = vpack.c.b16 %v492, %v491
    %v553 = vpack.c.b16 %v494, %v493
    %v554 = vpack.c.b16 %v496, %v495
    %v555 = vpack.c.b16 %v498, %v497
    %v556 = vpack.c.b16 %v500, %v499
    %v557 = vpack.c.b16 %v502, %v501
    %v558 = vpack.c.b16 %v504, %v503
    %v559 = vpack.c.b16 %v506, %v505
    %v560 = vpack.c.b16 %v508, %v507
    %v561 = vpack.c.b16 %v510, %v509
    %v562 = vpack.c.b16 %v512, %v511
    %v563 = vpack.c.b16 %v514, %v513
    %v564 = vpack.c.b16 %v516, %v515
    %v565 = vpack.c.b16 %v518, %v517
    %v566 = vpack.c.b16 %v520, %v519
    %v567 = vpack.c.b16 %v522, %v521
    %v568 = vpack.c.b16 %v524, %v523
    %v569 = vpack.c.b16 %v526, %v525
    %v570 = vpack.c.b16 %v528, %v527
    %v571 = vpack.c.b16 %v530, %v529
    %v572 = vpack.c.b16 %v532, %v531
    %v573 = vpack.c.b16 %v534, %v533
    %v574 = vpack.c.b16 %v536, %v535
    %v575 = vpack.c.b16 %v538, %v537
    %v576 = vpack.c.b16 %v540, %v539
    %v577 = vpack.c.b16 %v542, %v541
    %v578 = vpack.c.b16 %v544, %v543
    %v579 = vpack.c.b16 %v546, %v545
    %v580 = vpack.c.b16 %v548, %v547
    %613 = vmatprep.subr.bf16.mxu0 0
    %614 = vmatpush1.bf16.msra.mxu0 %v549
    %615 = vmatprep.subr.bf16.mxu0 0
    %616 = vmatpush1.bf16.msra.mxu0 %v550
    %617 = vmatprep.subr.bf16.mxu0 0
    %618 = vmatpush1.bf16.msra.mxu0 %v551
    %619 = vmatprep.subr.bf16.mxu0 0
    %620 = vmatpush1.bf16.msra.mxu0 %v552
    %621 = vmatprep.subr.bf16.mxu0 0
    %622 = vmatpush1.bf16.msra.mxu0 %v553
    %623 = vmatprep.subr.bf16.mxu0 0
    %624 = vmatpush1.bf16.msra.mxu0 %v554
    %625 = vmatprep.subr.bf16.mxu0 0
    %626 = vmatpush1.bf16.msra.mxu0 %v555
    %627 = vmatprep.subr.bf16.mxu0 0
    %628 = vmatpush1.bf16.msra.mxu0 %v556
    %629 = vmatprep.subr.bf16.mxu0 0
    %630 = vmatpush1.bf16.msra.mxu0 %v557
    %631 = vmatprep.subr.bf16.mxu0 0
    %632 = vmatpush1.bf16.msra.mxu0 %v558
    %633 = vmatprep.subr.bf16.mxu0 0
    %634 = vmatpush1.bf16.msra.mxu0 %v559
    %635 = vmatprep.subr.bf16.mxu0 0
    %636 = vmatpush1.bf16.msra.mxu0 %v560
    %637 = vmatprep.subr.bf16.mxu0 0
    %638 = vmatpush1.bf16.msra.mxu0 %v561
    %639 = vmatprep.subr.bf16.mxu0 0
    %640 = vmatpush1.bf16.msra.mxu0 %v562
    %641 = vmatprep.subr.bf16.mxu0 0
    %642 = vmatpush1.bf16.msra.mxu0 %v563
    %643 = vmatprep.subr.bf16.mxu0 0
    %644 = vmatpush1.bf16.msra.mxu0 %v564
    %645 = vmatprep.mubr.bf16.mxu0 %v347
    %646 = vmatmul.mubr.bf16.gmra.mrb[0].mxu0 %v346
    %v647 = vpop.f32.mrb[0].mxu0
    %v648 = vadd.f32 %v419, %v647
    %v649 = vpop.f32.mrb[0].mxu0
    %v650 = vpop.f32.mrb[0].mxu0
    %v651 = vpop.f32.mrb[0].mxu0
    %652 = vdwg.mxu0
    %653 = vmatprep.subr.bf16.mxu0 0
    %654 = vmatpush1.bf16.msra.mxu0 %v565
    %655 = vmatprep.subr.bf16.mxu0 0
    %656 = vmatpush1.bf16.msra.mxu0 %v566
    %657 = vmatprep.subr.bf16.mxu0 0
    %658 = vmatpush1.bf16.msra.mxu0 %v567
    %659 = vmatprep.subr.bf16.mxu0 0
    %660 = vmatpush1.bf16.msra.mxu0 %v568
    %661 = vmatprep.subr.bf16.mxu0 0
    %662 = vmatpush1.bf16.msra.mxu0 %v569
    %663 = vmatprep.subr.bf16.mxu0 0
    %664 = vmatpush1.bf16.msra.mxu0 %v570
    %665 = vmatprep.subr.bf16.mxu0 0
    %666 = vmatpush1.bf16.msra.mxu0 %v571
    %667 = vmatprep.subr.bf16.mxu0 0
    %668 = vmatpush1.bf16.msra.mxu0 %v572
    %669 = vmatprep.subr.bf16.mxu0 0
    %670 = vmatpush1.bf16.msra.mxu0 %v573
    %671 = vmatprep.subr.bf16.mxu0 0
    %672 = vmatpush1.bf16.msra.mxu0 %v574
    %673 = vmatprep.subr.bf16.mxu0 0
    %674 = vmatpush1.bf16.msra.mxu0 %v575
    %675 = vmatprep.subr.bf16.mxu0 0
    %676 = vmatpush1.bf16.msra.mxu0 %v576
    %677 = vmatprep.subr.bf16.mxu0 0
    %678 = vmatpush1.bf16.msra.mxu0 %v577
    %679 = vmatprep.subr.bf16.mxu0 0
    %680 = vmatpush1.bf16.msra.mxu0 %v578
    %681 = vmatprep.subr.bf16.mxu0 0
    %682 = vmatpush1.bf16.msra.mxu0 %v579
    %683 = vmatprep.subr.bf16.mxu0 0
    %684 = vmatpush1.bf16.msra.mxu0 %v580
    %685 = vmatprep.mubr.bf16.mxu0 %v349
    %686 = vmatmul.mubr.bf16.gmra.mrb[0].mxu0 %v348
    %v687 = vpop.f32.mrb[0].mxu0
    %v688 = vadd.f32 %v648, %v687
    %v689 = vpop.f32.mrb[0].mxu0
    %v690 = vpop.f32.mrb[0].mxu0
    %v691 = vpop.f32.mrb[0].mxu0
    %692 = vdwg.mxu0
    %v693 = vmax.f32 %v688, 0.0
    %v694 = vmin.f32 %v693, 6.0
    %v695 = vpack.c.bf16 %v694, %v694
    %v696 = vld [vmem:[%s6] sm:$0xf]
    %v697 = vld [vmem:[%s6 + $0x4] sm:$0xf]
    %v698 = vld [vmem:[%s6 + $0x8] sm:$0xf]
    %v699 = vld [vmem:[%s6 + $0xc] sm:$0xf]
    %v700 = vld [vmem:[%s6 + $0x10] sm:$0xf]
    %v701 = vld [vmem:[%s6 + $0x14] sm:$0xf]
    %v702 = vld [vmem:[%s6 + $0x18] sm:$0xf]
    %v703 = vld [vmem:[%s6 + $0x1c] sm:$0xf]
    %v704 = vld [vmem:[%s6 + $0x20] sm:$0xf]
    %v705 = vld [vmem:[%s6 + $0x24] sm:$0xf]
    %v706 = vld [vmem:[%s6 + $0x28] sm:$0xf]
    %v707 = vld [vmem:[%s6 + $0x2c] sm:$0xf]
    %v708 = vld [vmem:[%s6 + $0x30] sm:$0xf]
    %v709 = vld [vmem:[%s6 + $0x34] sm:$0xf]
    %v710 = vld [vmem:[%s6 + $0x38] sm:$0xf]
    %v711 = vld [vmem:[%s6 + $0x3c] sm:$0xf]
    %v712 = vld [vmem:[%s7] sm:$0x1]
    %v714 = vlaneseq
    %v715 = vshrl.u32 %v714, 7
    %v716 = vsub.s32 0, %v715
    %v717 = vrot.slane %v712, %v716
    %v735 = vunpack.c.l.b16 %v696
    %v736 = vunpack.c.l.b16 %v697
    %v737 = vunpack.c.l.b16 %v698
    %v738 = vunpack.c.l.b16 %v699
    %v739 = vunpack.c.l.b16 %v700
    %v740 = vunpack.c.l.b16 %v701
    %v741 = vunpack.c.l.b16 %v702
    %v742 = vunpack.c.l.b16 %v703
    %v743 = vunpack.c.l.b16 %v704
    %v744 = vunpack.c.l.b16 %v705
    %v745 = vunpack.c.l.b16 %v706
    %v746 = vunpack.c.l.b16 %v707
    %v747 = vunpack.c.l.b16 %v708
    %v748 = vunpack.c.l.b16 %v709
    %v749 = vunpack.c.l.b16 %v710
    %v750 = vunpack.c.l.b16 %v711
    %v751 = vpack.c.b16 %v736, %v735
    %v752 = vpack.c.b16 %v738, %v737
    %v753 = vpack.c.b16 %v740, %v739
    %v754 = vpack.c.b16 %v742, %v741
    %v755 = vpack.c.b16 %v744, %v743
    %v756 = vpack.c.b16 %v746, %v745
    %v757 = vpack.c.b16 %v748, %v747
    %v758 = vpack.c.b16 %v750, %v749
    %767 = vmatprep.subr.bf16.mxu0 0
    %768 = vmatpush1.bf16.msra.mxu0 %v751
    %769 = vmatprep.subr.bf16.mxu0 0
    %770 = vmatpush1.bf16.msra.mxu0 %v752
    %771 = vmatprep.subr.bf16.mxu0 0
    %772 = vmatpush1.bf16.msra.mxu0 %v753
    %773 = vmatprep.subr.bf16.mxu0 0
    %774 = vmatpush1.bf16.msra.mxu0 %v754
    %775 = vmatprep.subr.bf16.mxu0 0
    %776 = vmatpush1.bf16.msra.mxu0 %v755
    %777 = vmatprep.subr.bf16.mxu0 0
    %778 = vmatpush1.bf16.msra.mxu0 %v756
    %779 = vmatprep.subr.bf16.mxu0 0
    %780 = vmatpush1.bf16.msra.mxu0 %v757
    %781 = vmatprep.subr.bf16.mxu0 0
    %782 = vmatpush1.bf16.msra.mxu0 %v758
    %783 = vmatprep.subr.bf16.mxu0 0
    %784 = vmatpush1.bf16.msra.mxu0 0
    %785 = vmatprep.subr.bf16.mxu0 0
    %786 = vmatpush1.bf16.msra.mxu0 0
    %787 = vmatprep.subr.bf16.mxu0 0
    %788 = vmatpush1.bf16.msra.mxu0 0
    %789 = vmatprep.subr.bf16.mxu0 0
    %790 = vmatpush1.bf16.msra.mxu0 0
    %791 = vmatprep.subr.bf16.mxu0 0
    %792 = vmatpush1.bf16.msra.mxu0 0
    %793 = vmatprep.subr.bf16.mxu0 0
    %794 = vmatpush1.bf16.msra.mxu0 0
    %795 = vmatprep.subr.bf16.mxu0 0
    %796 = vmatpush1.bf16.msra.mxu0 0
    %797 = vmatprep.subr.bf16.mxu0 0
    %798 = vmatpush1.bf16.msra.mxu0 0
    %799 = vmatprep.mubr.bf16.mxu0 0
    %800 = vmatmul.mubr.bf16.gmra.mrb[0].mxu0 %v695
    %v801 = vpop.f32.mrb[0].mxu0
    %v802 = vadd.f32 %v717, %v801
    %v803 = vpop.f32.mrb[0].mxu0
    %v804 = vpop.f32.mrb[0].mxu0
    %v805 = vpop.f32.mrb[0].mxu0
    %806 = vdwg.mxu0
    %v807 = vmax.f32 %v802, 0.0
    %v808 = vmin.f32 %v807, 6.0
    %v809 = vpack.c.bf16 %v808, %v808
    %v810 = vld [vmem:[%s8] sm:$0xf]
    %v811 = vld [vmem:[%s8 + $0x4] sm:$0xf]
    %v812 = vld [vmem:[%s8 + $0x8] sm:$0xf]
    %v813 = vld [vmem:[%s8 + $0xc] sm:$0xf]
    %v814 = vld [vmem:[%s9] sm:$0x1]
    %v816 = vlaneseq
    %v817 = vshrl.u32 %v816, 7
    %v818 = vsub.s32 0, %v817
    %v819 = vrot.slane %v814, %v818
    %v825 = vunpack.c.l.b16 %v810
    %v826 = vunpack.c.l.b16 %v811
    %v827 = vunpack.c.l.b16 %v812
    %v828 = vunpack.c.l.b16 %v813
    %v829 = vpack.c.b16 %v826, %v825
    %v830 = vpack.c.b16 %v828, %v827
    %vm833 = vcmask 261120
    %v835 = vsel %vm833, %v809, 0
    %837 = vmatprep.subr.bf16.mxu0 0
    %838 = vmatpush1.bf16.msra.mxu0 %v829
    %839 = vmatprep.subr.bf16.mxu0 0
    %840 = vmatpush1.bf16.msra.mxu0 %v830
    %841 = vmatprep.subr.bf16.mxu0 0
    %842 = vmatpush1.bf16.msra.mxu0 0
    %843 = vmatprep.subr.bf16.mxu0 0
    %844 = vmatpush1.bf16.msra.mxu0 0
    %845 = vmatprep.subr.bf16.mxu0 0
    %846 = vmatpush1.bf16.msra.mxu0 0
    %847 = vmatprep.subr.bf16.mxu0 0
    %848 = vmatpush1.bf16.msra.mxu0 0
    %849 = vmatprep.subr.bf16.mxu0 0
    %850 = vmatpush1.bf16.msra.mxu0 0
    %851 = vmatprep.subr.bf16.mxu0 0
    %852 = vmatpush1.bf16.msra.mxu0 0
    %853 = vmatprep.subr.bf16.mxu0 0
    %854 = vmatpush1.bf16.msra.mxu0 0
    %855 = vmatprep.subr.bf16.mxu0 0
    %856 = vmatpush1.bf16.msra.mxu0 0
    %857 = vmatprep.subr.bf16.mxu0 0
    %858 = vmatpush1.bf16.msra.mxu0 0
    %859 = vmatprep.subr.bf16.mxu0 0
    %860 = vmatpush1.bf16.msra.mxu0 0
    %861 = vmatprep.subr.bf16.mxu0 0
    %862 = vmatpush1.bf16.msra.mxu0 0
    %863 = vmatprep.subr.bf16.mxu0 0
    %864 = vmatpush1.bf16.msra.mxu0 0
    %865 = vmatprep.subr.bf16.mxu0 0
    %866 = vmatpush1.bf16.msra.mxu0 0
    %867 = vmatprep.subr.bf16.mxu0 0
    %868 = vmatpush1.bf16.msra.mxu0 0
    %869 = vmatprep.mubr.bf16.mxu0 0
    %870 = vmatmul.mubr.bf16.gmra.mrb[0].mxu0 %v835
    %v871 = vpop.f32.mrb[0].mxu0
    %v872 = vadd.f32 %v819, %v871
    %v873 = vpop.f32.mrb[0].mxu0
    %v874 = vpop.f32.mrb[0].mxu0
    %v875 = vpop.f32.mrb[0].mxu0
    %876 = vdwg.mxu0
    %vm877 = vcmask 17408
    %v878 = vsel %vm877, %v872, -inf
    %879 = vmax.xlane.f32.xlu0 %v878
    %v880 = vpop.xlane.xlu0 %879
    %v881 = vsub.f32 %v872, %v880
    %v882 = vmul.f32 %v881, 1.442695
    %v883 = vpow.pop %v882
    %v884 = vsel %vm877, %v883, 0.0
    %885 = vadd.xlane.f32.xlu0 %v884
    %v886 = vpop.xlane.xlu0 %885
    %v887 = vrcp.pop %v886
    %v888 = vmul.f32 %v883, %v887
    %889 = vst.msk [vmem:[#allocation2] sm:$0x3] %vm877, %v888
    // Predicated region
    $region42: #{_lambda_.19} parent=1 // pred_check
      _
    $region43: #{_lambda_.19} parent=1 // pred_check_branch
      %891 = sbr.rel (0) target = $region45
    $region44: #{_lambda_.19} parent=1 // pred_region
      %s893 = ssub.s32 32, 32
      %894 = vsyncadd [#allocation3], %s893
      %s896 = sshll.u32 [#allocation2], 4
      %s897 = int_to_ptr.vmem [resolvable:$true] %s896
      %899 = dma.vmem_to_hbm [thread:$0]  %s897, 32, %s10, [#allocation3]
    $region45: #{_lambda_.19} parent=1 // pred_fallthru
      _
    // Predicated region
    $region46: #{_lambda_.19} parent=1 // pred_check
      _
    $region47: #{_lambda_.19} parent=1 // pred_check_branch
      %901 = sbr.rel (0) target = $region49
    $region48: #{_lambda_.19} parent=1 // pred_region
      %902 = dma.done [#allocation3], 32
    $region49: #{_lambda_.19} parent=1 // pred_fallthru
      _
    %903 = vsyncpa [#allocation3], 1

// kernel: _lambda_.18
$region0: #{_lambda_.18}
  #allocation0 [shape = 'u32[]', space=smem, size = 0x4, offset = 0x4, fixed_abs, tag = 'smem constant byte address 0x4 - core index']
  #allocation1 [shape = 'u32[144,128]{1,0:T(1,128)}', space=vmem, size = 0x12000, scoped, tag = 'internal scratch']
  %s0 = inlined_call_operand.vmem [shape: f32[2,324,8], index: 0, kind: input, shape index: {}]
  %s1 = inlined_call_operand.vmem [shape: bf16[9,8,3], index: 1, kind: input, shape index: {}]
  %s2 = inlined_call_operand.vmem [shape: f32[1,3], index: 2, kind: input, shape index: {}]
  %s3 = inlined_call_operand.vmem [shape: f32[2,286,3], index: 3, kind: output, shape index: {}]
  %s4 = sld [smem:[#allocation0]]
  $region45: #{_lambda_.18} parent=0
    _
  %s6 = ssub.s32 1, %s4
  %s7 = scalar_select 0, %s6, %s4
  loop: start=0, step=1, limit=4
  $region2: #{_lambda_.18} parent=0 // loop_pre_header
    _
  $region3: #{_lambda_.18} parent=0 // loop_header
    %s9 = sphi 0, %s13
    %p10 = scmp.ge.s32.totalorder %s9, 4
    %s19 = sphi 0, %s21
    %s22 = sphi 0, %s19
    %s23 = sphi 0, %s22
    %s39 = sphi 0, %s23
    %s43 = sphi 0, %s43
    %s45 = sphi 0, %s43
    %s46 = sphi 0, %s45
    %s60 = sphi 0, %s46
    %s64 = sphi 0, %s64
    %s66 = sphi 0, %s64
    %s67 = sphi 0, %s66
    %s81 = sphi 0, %s67
    %s87 = sphi 0, %s89
    %s90 = sphi 0, %s87
    %s91 = sphi 0, %s90
    %s107 = sphi 0, %s91
  $region4: #{_lambda_.18} parent=0 // loop_header_branch
    %12 = sbr.rel (%p10) target = $region8
  $region5: #{_lambda_.18} parent=0 // loop_body
    %s14 = ssub.s32 %s9, 1
    %s15 = ssub.s32 %s9, 2
    %s16 = sadd.s32 %s9, 1
    %s17 = ssub.s32 %s9, %s16
    %p18 = scmp.eq.s32.totalorder %s17, 0
    %s20 = sadd.s32 %s19, 1
    %s21 = scalar_select %p18, %s19, %s20
    %p24 = pneg %p18
    %p25 = scmp.eq.s32.totalorder %s9, 1
    %p26 = por %p24, %p25
    %p27 = scmp.ne.s32.totalorder %s19, %s22
    %p28 = scmp.eq.s32.totalorder %s9, 0
    %p29 = por %p27, %p28
    %p30 = scmp.ne.s32.totalorder %s19, %s22
    %p31 = scmp.eq.s32.totalorder %s14, 1
    %p32 = por %p30, %p31
    %p33 = scmp.ne.s32.totalorder %s22, %s23
    %p34 = scmp.eq.s32.totalorder %s14, 0
    %p35 = por %p33, %p34
    %p36 = scmp.ne.s32.totalorder %s22, %s23
    %p37 = scmp.eq.s32.totalorder %s15, 1
    %p38 = por %p36, %p37
    %p40 = scmp.ne.s32.totalorder %s23, %s39
    %p41 = scmp.eq.s32.totalorder %s15, 0
    %p42 = por %p40, %p41
    %s44 = sadd.s32 %s43, 1
    %p47 = scmp.eq.s32.totalorder %s9, 1
    %p48 = scmp.ne.s32.totalorder %s43, %s45
    %p49 = scmp.eq.s32.totalorder %s9, 0
    %p50 = por %p48, %p49
    %p51 = scmp.ne.s32.totalorder %s43, %s45
    %p52 = scmp.eq.s32.totalorder %s14, 1
    %p53 = por %p51, %p52
    %p54 = scmp.ne.s32.totalorder %s45, %s46
    %p55 = scmp.eq.s32.totalorder %s14, 0
    %p56 = por %p54, %p55
    %p57 = scmp.ne.s32.totalorder %s45, %s46
    %p58 = scmp.eq.s32.totalorder %s15, 1
    %p59 = por %p57, %p58
    %p61 = scmp.ne.s32.totalorder %s46, %s60
    %p62 = scmp.eq.s32.totalorder %s15, 0
    %p63 = por %p61, %p62
    %s65 = sadd.s32 %s64, 1
    %p68 = scmp.eq.s32.totalorder %s9, 1
    %p69 = scmp.ne.s32.totalorder %s64, %s66
    %p70 = scmp.eq.s32.totalorder %s9, 0
    %p71 = por %p69, %p70
    %p72 = scmp.ne.s32.totalorder %s64, %s66
    %p73 = scmp.eq.s32.totalorder %s14, 1
    %p74 = por %p72, %p73
    %p75 = scmp.ne.s32.totalorder %s66, %s67
    %p76 = scmp.eq.s32.totalorder %s14, 0
    %p77 = por %p75, %p76
    %p78 = scmp.ne.s32.totalorder %s66, %s67
    %p79 = scmp.eq.s32.totalorder %s15, 1
    %p80 = por %p78, %p79
    %p82 = scmp.ne.s32.totalorder %s67, %s81
    %p83 = scmp.eq.s32.totalorder %s15, 0
    %p84 = por %p82, %p83
    %s85 = ssub.s32 %s9, %s16
    %p86 = scmp.eq.s32.totalorder %s85, 0
    %s88 = sadd.s32 %s87, 1
    %s89 = scalar_select %p86, %s87, %s88
    %p92 = pneg %p86
    %p93 = scmp.eq.s32.totalorder %s9, 1
    %p94 = por %p92, %p93
    %p95 = scmp.ne.s32.totalorder %s87, %s90
    %p96 = scmp.eq.s32.totalorder %s9, 0
    %p97 = por %p95, %p96
    %p98 = scmp.ne.s32.totalorder %s87, %s90
    %p99 = scmp.eq.s32.totalorder %s14, 1
    %p100 = por %p98, %p99
    %p101 = scmp.ne.s32.totalorder %s90, %s91
    %p102 = scmp.eq.s32.totalorder %s14, 0
    %p103 = por %p101, %p102
    %p104 = scmp.ne.s32.totalorder %s90, %s91
    %p105 = scmp.eq.s32.totalorder %s15, 1
    %p106 = por %p104, %p105
    %p108 = scmp.ne.s32.totalorder %s91, %s107
    %p109 = scmp.eq.s32.totalorder %s15, 0
    %p110 = por %p108, %p109
    %p111 = scmp.le.s32.totalorder 1, %s9
    %p112 = scmp.lt.s32.totalorder %s9, 3
    %p113 = pnand %p111, %p112
    %p114 = pneg %p113
    // Predicated region
    $region9: #{_lambda_.18} parent=5 // pred_check
      _
    $region10: #{_lambda_.18} parent=5 // pred_check_branch
      %116 = sbr.rel (%p113) target = $region12
    $region11: #{_lambda_.18} parent=5 // pred_region
      %s117 = ssub.s32 %s9, 1
      // Predicated region
      $region13: #{_lambda_.18} parent=11 // pred_check
        %p118 = pneg %p56
      $region14: #{_lambda_.18} parent=11 // pred_check_branch
        %120 = sbr.rel (%p118) target = $region16
      $region15: #{_lambda_.18} parent=11 // pred_region
        _
      $region16: #{_lambda_.18} parent=11 // pred_fallthru
        _
      // Predicated region
      $region17: #{_lambda_.18} parent=11 // pred_check
        %p121 = pneg %p77
      $region18: #{_lambda_.18} parent=11 // pred_check_branch
        %123 = sbr.rel (%p121) target = $region20
      $region19: #{_lambda_.18} parent=11 // pred_region
        _
      $region20: #{_lambda_.18} parent=11 // pred_fallthru
        _
    $region12: #{_lambda_.18} parent=5 // pred_fallthru
      _
    %p124 = scmp.lt.s32.totalorder %s9, 2
    // Predicated region
    $region21: #{_lambda_.18} parent=5 // pred_check
      %p125 = pneg %p124
    $region22: #{_lambda_.18} parent=5 // pred_check_branch
      %127 = sbr.rel (%p125) target = $region24
    $region23: #{_lambda_.18} parent=5 // pred_region
      // Predicated region
      $region25: #{_lambda_.18} parent=23 // pred_check
        %p128 = pneg %p29
      $region26: #{_lambda_.18} parent=23 // pred_check_branch
        %130 = sbr.rel (%p128) target = $region28
      $region27: #{_lambda_.18} parent=23 // pred_region
        %p131 = scmp.lt.s32.totalorder %s9, 1
        %s132 = scalar_select %p131, %s9, 1
        %s133 = smul.addr %s132, 41
        %s134 = smul.addr %s133, 8
        %s135 = scalar_lea.vmem %s0, %s134
      $region28: #{_lambda_.18} parent=23 // pred_fallthru
        _
    $region24: #{_lambda_.18} parent=5 // pred_fallthru
      _
    %p136 = scmp.le.s32.totalorder 1, %s9
    %p137 = scmp.lt.s32.totalorder %s9, 3
    %p138 = pnand %p136, %p137
    %p139 = pneg %p138
    // Predicated region
    $region29: #{_lambda_.18} parent=5 // pred_check
      _
    $region30: #{_lambda_.18} parent=5 // pred_check_branch
      %141 = sbr.rel (%p138) target = $region32
    $region31: #{_lambda_.18} parent=5 // pred_region
      %s142 = ssub.s32 %s9, 1
      %p143 = scmp.lt.s32.totalorder %s14, 1
      %s144 = scalar_select %p143, %s14, 1
      %s145 = smul.addr %s144, 41
      %s146 = smul.addr %s145, 8
      %s147 = scalar_lea.vmem %s0, %s146
      %p148 = pneg %p35
      %p149 = pneg %p32
      %p150 = pneg %p56
      %p151 = pneg %p53
      %p152 = pneg %p77
      %p153 = pneg %p74
      %p154 = pneg %p103
      %p155 = pneg %p100
      %p156 = scmp.lt.s32.totalorder %s14, 1
      %s157 = scalar_select %p156, %s14, 1
      %s158 = smul.addr %s157, 36
      %s159 = smul.addr %s158, 8
      %s160 = scalar_lea.vmem %s3, %s159
      %p161 = scmp.lt.s32.totalorder %s14, 1
      %s162 = scalar_select %p161, %s14, 1
      %s163 = smul.addr %s162, 41
      %s164 = smul.addr %s163, 8
      %s165 = scalar_lea.vmem %s0, %s164
      %p166 = scmp.lt.s32.totalorder %s14, 1
      %s167 = scalar_select %p166, %s14, 1
      %s168 = smul.addr %s167, 36
      %s169 = smul.addr %s168, 8
      %s170 = scalar_lea.vmem %s3, %s169
      %v172 = vld [vmem:[%s165] sm:$0xff]
      %v173 = vld [vmem:[%s165 + $0x8] sm:$0xff]
      %v174 = vld [vmem:[%s165 + $0x10] sm:$0xff]
      %v175 = vld [vmem:[%s165 + $0x18] sm:$0xff]
      %v176 = vld [vmem:[%s165 + $0x20] sm:$0xff]
      %v177 = vld [vmem:[%s165 + $0x28] sm:$0xff]
      %v178 = vld [vmem:[%s165 + $0x30] sm:$0xff]
      %v179 = vld [vmem:[%s165 + $0x38] sm:$0xff]
      %v180 = vld [vmem:[%s165 + $0x40] sm:$0xff]
      %v181 = vld [vmem:[%s165 + $0x48] sm:$0xff]
      %v182 = vld [vmem:[%s165 + $0x50] sm:$0xff]
      %v183 = vld [vmem:[%s165 + $0x58] sm:$0xff]
      %v184 = vld [vmem:[%s165 + $0x60] sm:$0xff]
      %v185 = vld [vmem:[%s165 + $0x68] sm:$0xff]
      %v186 = vld [vmem:[%s165 + $0x70] sm:$0xff]
      %v187 = vld [vmem:[%s165 + $0x78] sm:$0xff]
      %v188 = vld [vmem:[%s165 + $0x80] sm:$0xff]
      %v189 = vld [vmem:[%s165 + $0x88] sm:$0xff]
      %v190 = vld [vmem:[%s165 + $0x90] sm:$0xff]
      %v191 = vld [vmem:[%s165 + $0x98] sm:$0xff]
      %v192 = vld [vmem:[%s165 + $0xa0] sm:$0xff]
      %v193 = vld [vmem:[%s165 + $0xa8] sm:$0xff]
      %v194 = vld [vmem:[%s165 + $0xb0] sm:$0xff]
      %v195 = vld [vmem:[%s165 + $0xb8] sm:$0xff]
      %v196 = vld [vmem:[%s165 + $0xc0] sm:$0xff]
      %v197 = vld [vmem:[%s165 + $0xc8] sm:$0xff]
      %v198 = vld [vmem:[%s165 + $0xd0] sm:$0xff]
      %v199 = vld [vmem:[%s165 + $0xd8] sm:$0xff]
      %v200 = vld [vmem:[%s165 + $0xe0] sm:$0xff]
      %v201 = vld [vmem:[%s165 + $0xe8] sm:$0xff]
      %v202 = vld [vmem:[%s165 + $0xf0] sm:$0xff]
      %v203 = vld [vmem:[%s165 + $0xf8] sm:$0xff]
      %v204 = vld [vmem:[%s165 + $0x100] sm:$0xff]
      %v205 = vld [vmem:[%s165 + $0x108] sm:$0xff]
      %v206 = vld [vmem:[%s165 + $0x110] sm:$0xff]
      %v207 = vld [vmem:[%s165 + $0x118] sm:$0x3f]
      %v208 = vpack.c.bf16 %v173, %v172
      %v209 = vpack.c.bf16 %v175, %v174
      %v210 = vpack.c.bf16 %v177, %v176
      %v211 = vpack.c.bf16 %v179, %v178
      %v212 = vpack.c.bf16 %v181, %v180
      %v213 = vpack.c.bf16 %v183, %v182
      %v214 = vpack.c.bf16 %v185, %v184
      %v215 = vpack.c.bf16 %v187, %v186
      %v216 = vpack.c.bf16 %v189, %v188
      %v217 = vpack.c.bf16 %v191, %v190
      %v218 = vpack.c.bf16 %v193, %v192
      %v219 = vpack.c.bf16 %v195, %v194
      %v220 = vpack.c.bf16 %v197, %v196
      %v221 = vpack.c.bf16 %v199, %v198
      %v222 = vpack.c.bf16 %v201, %v200
      %v223 = vpack.c.bf16 %v203, %v202
      %v224 = vpack.c.bf16 %v205, %v204
      %v225 = vpack.c.bf16 %v207, %v206
      %v226 = vld [vmem:[%s1] sm:$0xf]
      %v227 = vld [vmem:[%s165 + $0x1] sm:$0xff]
      %v228 = vld [vmem:[%s165 + $0x9] sm:$0xff]
      %v229 = vld [vmem:[%s165 + $0x11] sm:$0xff]
      %v230 = vld [vmem:[%s165 + $0x19] sm:$0xff]
      %v231 = vld [vmem:[%s165 + $0x21] sm:$0xff]
      %v232 = vld [vmem:[%s165 + $0x29] sm:$0xff]
      %v233 = vld [vmem:[%s165 + $0x31] sm:$0xff]
      %v234 = vld [vmem:[%s165 + $0x39] sm:$0xff]
      %v235 = vld [vmem:[%s165 + $0x41] sm:$0xff]
      %v236 = vld [vmem:[%s165 + $0x49] sm:$0xff]
      %v237 = vld [vmem:[%s165 + $0x51] sm:$0xff]
      %v238 = vld [vmem:[%s165 + $0x59] sm:$0xff]
      %v239 = vld [vmem:[%s165 + $0x61] sm:$0xff]
      %v240 = vld [vmem:[%s165 + $0x69] sm:$0xff]
      %v241 = vld [vmem:[%s165 + $0x71] sm:$0xff]
      %v242 = vld [vmem:[%s165 + $0x79] sm:$0xff]
      %v243 = vld [vmem:[%s165 + $0x81] sm:$0xff]
      %v244 = vld [vmem:[%s165 + $0x89] sm:$0xff]
      %v245 = vld [vmem:[%s165 + $0x91] sm:$0xff]
      %v246 = vld [vmem:[%s165 + $0x99] sm:$0xff]
      %v247 = vld [vmem:[%s165 + $0xa1] sm:$0xff]
      %v248 = vld [vmem:[%s165 + $0xa9] sm:$0xff]
      %v249 = vld [vmem:[%s165 + $0xb1] sm:$0xff]
      %v250 = vld [vmem:[%s165 + $0xb9] sm:$0xff]
      %v251 = vld [vmem:[%s165 + $0xc1] sm:$0xff]
      %v252 = vld [vmem:[%s165 + $0xc9] sm:$0xff]
      %v253 = vld [vmem:[%s165 + $0xd1] sm:$0xff]
      %v254 = vld [vmem:[%s165 + $0xd9] sm:$0xff]
      %v255 = vld [vmem:[%s165 + $0xe1] sm:$0xff]
      %v256 = vld [vmem:[%s165 + $0xe9] sm:$0xff]
      %v257 = vld [vmem:[%s165 + $0xf1] sm:$0xff]
      %v258 = vld [vmem:[%s165 + $0xf9] sm:$0xff]
      %v259 = vld [vmem:[%s165 + $0x101] sm:$0xff]
      %v260 = vld [vmem:[%s165 + $0x109] sm:$0xff]
      %v261 = vld [vmem:[%s165 + $0x111] sm:$0xff]
      %v262 = vld [vmem:[%s165 + $0x119] sm:$0x3f]
      %v263 = vpack.c.bf16 %v228, %v227
      %v264 = vpack.c.bf16 %v230, %v229
      %v265 = vpack.c.bf16 %v232, %v231
      %v266 = vpack.c.bf16 %v234, %v233
      %v267 = vpack.c.bf16 %v236, %v235
      %v268 = vpack.c.bf16 %v238, %v237
      %v269 = vpack.c.bf16 %v240, %v239
      %v270 = vpack.c.bf16 %v242, %v241
      %v271 = vpack.c.bf16 %v244, %v243
      %v272 = vpack.c.bf16 %v246, %v245
      %v273 = vpack.c.bf16 %v248, %v247
      %v274 = vpack.c.bf16 %v250, %v249
      %v275 = vpack.c.bf16 %v252, %v251
      %v276 = vpack.c.bf16 %v254, %v253
      %v277 = vpack.c.bf16 %v256, %v255
      %v278 = vpack.c.bf16 %v258, %v257
      %v279 = vpack.c.bf16 %v260, %v259
      %v280 = vpack.c.bf16 %v262, %v261
      %s281 = scalar_lea.vmem %s1, 4
      %v282 = vld [vmem:[%s281] sm:$0xf]
      %vm283 = vcmask 64512
      %v285 = vsel %vm283, %v263, 0
      %v288 = vsel %vm283, %v264, 0
      %v291 = vsel %vm283, %v265, 0
      %v294 = vsel %vm283, %v266, 0
      %v297 = vsel %vm283, %v267, 0
      %v300 = vsel %vm283, %v268, 0
      %v303 = vsel %vm283, %v269, 0
      %v306 = vsel %vm283, %v270, 0
      %v309 = vsel %vm283, %v271, 0
      %v312 = vsel %vm283, %v272, 0
      %v315 = vsel %vm283, %v273, 0
      %v318 = vsel %vm283, %v274, 0
      %v321 = vsel %vm283, %v275, 0
      %v324 = vsel %vm283, %v276, 0
      %v327 = vsel %vm283, %v277, 0
      %v330 = vsel %vm283, %v278, 0
      %v333 = vsel %vm283, %v279, 0
      %v336 = vsel %vm283, %v280, 0
      %vm338 = vcmask 1043456
      %v340 = vsel %vm338, %v282, 0
      %342 = vmatprep.subr.bf16.mxu0 0
      %343 = vmatpush1.bf16.msra.mxu0 %v340
      %344 = vmatprep.subr.bf16.mxu0 0
      %345 = vmatpush1.bf16.msra.mxu0 0
      %346 = vmatprep.subr.bf16.mxu0 0
      %347 = vmatpush1.bf16.msra.mxu0 0
      %348 = vmatprep.subr.bf16.mxu0 0
      %349 = vmatpush1.bf16.msra.mxu0 0
      %350 = vmatprep.subr.bf16.mxu0 0
      %351 = vmatpush1.bf16.msra.mxu0 0
      %352 = vmatprep.subr.bf16.mxu0 0
      %353 = vmatpush1.bf16.msra.mxu0 0
      %354 = vmatprep.subr.bf16.mxu0 0
      %355 = vmatpush1.bf16.msra.mxu0 0
      %356 = vmatprep.subr.bf16.mxu0 0
      %357 = vmatpush1.bf16.msra.mxu0 0
      %358 = vmatprep.subr.bf16.mxu0 0
      %359 = vmatpush1.bf16.msra.mxu0 0
      %360 = vmatprep.subr.bf16.mxu0 0
      %361 = vmatpush1.bf16.msra.mxu0 0
      %362 = vmatprep.subr.bf16.mxu0 0
      %363 = vmatpush1.bf16.msra.mxu0 0
      %364 = vmatprep.subr.bf16.mxu0 0
      %365 = vmatpush1.bf16.msra.mxu0 0
      %366 = vmatprep.subr.bf16.mxu0 0
      %367 = vmatpush1.bf16.msra.mxu0 0
      %368 = vmatprep.subr.bf16.mxu0 0
      %369 = vmatpush1.bf16.msra.mxu0 0
      %370 = vmatprep.subr.bf16.mxu0 0
      %371 = vmatpush1.bf16.msra.mxu0 0
      %372 = vmatprep.subr.bf16.mxu0 0
      %373 = vmatpush1.bf16.msra.mxu0 0
      %374 = vmatprep.mubr.bf16.mxu0 0
      %375 = vmatmul.mubr.bf16.gmra.mrb[0].mxu0 %v285
      %v376 = vpop.f32.mrb[0].mxu0
      %v377 = vadd.f32 0.0, %v376
      %v378 = vpop.f32.mrb[0].mxu0
      %v379 = vpop.f32.mrb[0].mxu0
      %v380 = vadd.f32 0.0, %v379
      %v381 = vpop.f32.mrb[0].mxu0
      %382 = vmatprep.mubr.bf16.mxu0 0
      %383 = vmatmul.mubr.bf16.gmra.mrb[0].mxu0 %v288
      %v384 = vpop.f32.mrb[0].mxu0
      %v385 = vadd.f32 0.0, %v384
      %v386 = vpop.f32.mrb[0].mxu0
      %v387 = vpop.f32.mrb[0].mxu0
      %v388 = vadd.f32 0.0, %v387
      %v389 = vpop.f32.mrb[0].mxu0
      %390 = vmatprep.mubr.bf16.mxu0 0
      %391 = vmatmul.mubr.bf16.gmra.mrb[0].mxu0 %v291
      %v392 = vpop.f32.mrb[0].mxu0
      %v393 = vadd.f32 0.0, %v392
      %v394 = vpop.f32.mrb[0].mxu0
      %v395 = vpop.f32.mrb[0].mxu0
      %v396 = vadd.f32 0.0, %v395
      %v397 = vpop.f32.mrb[0].mxu0
      %398 = vmatprep.mubr.bf16.mxu0 0
      %399 = vmatmul.mubr.bf16.gmra.mrb[0].mxu0 %v294
      %v400 = vpop.f32.mrb[0].mxu0
      %v401 = vadd.f32 0.0, %v400
      %v402 = vpop.f32.mrb[0].mxu0
      %v403 = vpop.f32.mrb[0].mxu0
      %v404 = vadd.f32 0.0, %v403
      %v405 = vpop.f32.mrb[0].mxu0
      %406 = vmatprep.mubr.bf16.mxu0 0
      %407 = vmatmul.mubr.bf16.gmra.mrb[0].mxu0 %v297
      %v408 = vpop.f32.mrb[0].mxu0
      %v409 = vadd.f32 0.0, %v408
      %v410 = vpop.f32.mrb[0].mxu0
      %v411 = vpop.f32.mrb[0].mxu0
      %v412 = vadd.f32 0.0, %v411
      %v413 = vpop.f32.mrb[0].mxu0
      %414 = vmatprep.mubr.bf16.mxu0 0
      %415 = vmatmul.mubr.bf16.gmra.mrb[0].mxu0 %v300
      %v416 = vpop.f32.mrb[0].mxu0
      %v417 = vadd.f32 0.0, %v416
      %v418 = vpop.f32.mrb[0].mxu0
      %v419 = vpop.f32.mrb[0].mxu0
      %v420 = vadd.f32 0.0, %v419
      %v421 = vpop.f32.mrb[0].mxu0
      %422 = vmatprep.mubr.bf16.mxu0 0
      %423 = vmatmul.mubr.bf16.gmra.mrb[0].mxu0 %v303
      %v424 = vpop.f32.mrb[0].mxu0
      %v425 = vadd.f32 0.0, %v424
      %v426 = vpop.f32.mrb[0].mxu0
      %v427 = vpop.f32.mrb[0].mxu0
      %v428 = vadd.f32 0.0, %v427
      %v429 = vpop.f32.mrb[0].mxu0
      %430 = vmatprep.mubr.bf16.mxu0 0
      %431 = vmatmul.mubr.bf16.gmra.mrb[0].mxu0 %v306
      %v432 = vpop.f32.mrb[0].mxu0
      %v433 = vadd.f32 0.0, %v432
      %v434 = vpop.f32.mrb[0].mxu0
      %v435 = vpop.f32.mrb[0].mxu0
      %v436 = vadd.f32 0.0, %v435
      %v437 = vpop.f32.mrb[0].mxu0
      %438 = vmatprep.mubr.bf16.mxu0 0
      %439 = vmatmul.mubr.bf16.gmra.mrb[0].mxu0 %v309
      %v440 = vpop.f32.mrb[0].mxu0
      %v441 = vadd.f32 0.0, %v440
      %v442 = vpop.f32.mrb[0].mxu0
      %v443 = vpop.f32.mrb[0].mxu0
      %v444 = vadd.f32 0.0, %v443
      %v445 = vpop.f32.mrb[0].mxu0
      %446 = vmatprep.mubr.bf16.mxu0 0
      %447 = vmatmul.mubr.bf16.gmra.mrb[0].mxu0 %v312
      %v448 = vpop.f32.mrb[0].mxu0
      %v449 = vadd.f32 0.0, %v448
      %v450 = vpop.f32.mrb[0].mxu0
      %v451 = vpop.f32.mrb[0].mxu0
      %v452 = vadd.f32 0.0, %v451
      %v453 = vpop.f32.mrb[0].mxu0
      %454 = vmatprep.mubr.bf16.mxu0 0
      %455 = vmatmul.mubr.bf16.gmra.mrb[0].mxu0 %v315
      %v456 = vpop.f32.mrb[0].mxu0
      %v457 = vadd.f32 0.0, %v456
      %v458 = vpop.f32.mrb[0].mxu0
      %v459 = vpop.f32.mrb[0].mxu0
      %v460 = vadd.f32 0.0, %v459
      %v461 = vpop.f32.mrb[0].mxu0
      %462 = vmatprep.mubr.bf16.mxu0 0
      %463 = vmatmul.mubr.bf16.gmra.mrb[0].mxu0 %v318
      %v464 = vpop.f32.mrb[0].mxu0
      %v465 = vadd.f32 0.0, %v464
      %v466 = vpop.f32.mrb[0].mxu0
      %v467 = vpop.f32.mrb[0].mxu0
      %v468 = vadd.f32 0.0, %v467
      %v469 = vpop.f32.mrb[0].mxu0
      %470 = vmatprep.mubr.bf16.mxu0 0
      %471 = vmatmul.mubr.bf16.gmra.mrb[0].mxu0 %v321
      %v472 = vpop.f32.mrb[0].mxu0
      %v473 = vadd.f32 0.0, %v472
      %v474 = vpop.f32.mrb[0].mxu0
      %v475 = vpop.f32.mrb[0].mxu0
      %v476 = vadd.f32 0.0, %v475
      %v477 = vpop.f32.mrb[0].mxu0
      %478 = vmatprep.mubr.bf16.mxu0 0
      %479 = vmatmul.mubr.bf16.gmra.mrb[0].mxu0 %v324
      %v480 = vpop.f32.mrb[0].mxu0
      %v481 = vadd.f32 0.0, %v480
      %v482 = vpop.f32.mrb[0].mxu0
      %v483 = vpop.f32.mrb[0].mxu0
      %v484 = vadd.f32 0.0, %v483
      %v485 = vpop.f32.mrb[0].mxu0
      %486 = vmatprep.mubr.bf16.mxu0 0
      %487 = vmatmul.mubr.bf16.gmra.mrb[0].mxu0 %v327
      %v488 = vpop.f32.mrb[0].mxu0
      %v489 = vadd.f32 0.0, %v488
      %v490 = vpop.f32.mrb[0].mxu0
      %v491 = vpop.f32.mrb[0].mxu0
      %v492 = vadd.f32 0.0, %v491
      %v493 = vpop.f32.mrb[0].mxu0
      %494 = vmatprep.mubr.bf16.mxu0 0
      %495 = vmatmul.mubr.bf16.gmra.mrb[0].mxu0 %v330
      %v496 = vpop.f32.mrb[0].mxu0
      %v497 = vadd.f32 0.0, %v496
      %v498 = vpop.f32.mrb[0].mxu0
      %v499 = vpop.f32.mrb[0].mxu0
      %v500 = vadd.f32 0.0, %v499
      %v501 = vpop.f32.mrb[0].mxu0
      %502 = vmatprep.mubr.bf16.mxu0 0
      %503 = vmatmul.mubr.bf16.gmra.mrb[0].mxu0 %v333
      %v504 = vpop.f32.mrb[0].mxu0
      %v505 = vadd.f32 0.0, %v504
      %v506 = vpop.f32.mrb[0].mxu0
      %v507 = vpop.f32.mrb[0].mxu0
      %v508 = vadd.f32 0.0, %v507
      %v509 = vpop.f32.mrb[0].mxu0
      %510 = vmatprep.mubr.bf16.mxu0 0
      %511 = vmatmul.mubr.bf16.gmra.mrb[0].mxu0 %v336
      %v512 = vpop.f32.mrb[0].mxu0
      %v513 = vadd.f32 0.0, %v512
      %v514 = vpop.f32.mrb[0].mxu0
      %v515 = vpop.f32.mrb[0].mxu0
      %v516 = vadd.f32 0.0, %v515
      %v517 = vpop.f32.mrb[0].mxu0
      %518 = vdwg.mxu0
      %v520 = vsel %vm283, %v208, 0
      %v523 = vsel %vm283, %v209, 0
      %v526 = vsel %vm283, %v210, 0
      %v529 = vsel %vm283, %v211, 0
      %v532 = vsel %vm283, %v212, 0
      %v535 = vsel %vm283, %v213, 0
      %v538 = vsel %vm283, %v214, 0
      %v541 = vsel %vm283, %v215, 0
      %v544 = vsel %vm283, %v216, 0
      %v547 = vsel %vm283, %v217, 0
      %v550 = vsel %vm283, %v218, 0
      %v553 = vsel %vm283, %v219, 0
      %v556 = vsel %vm283, %v220, 0
      %v559 = vsel %vm283, %v221, 0
      %v562 = vsel %vm283, %v222, 0
      %v565 = vsel %vm283, %v223, 0
      %v568 = vsel %vm283, %v224, 0
      %v571 = vsel %vm283, %v225, 0
      %v574 = vsel %vm338, %v226, 0
      %576 = vmatprep.subr.bf16.mxu0 0
      %577 = vmatpush1.bf16.msra.mxu0 %v574
      %578 = vmatprep.subr.bf16.mxu0 0
      %579 = vmatpush1.bf16.msra.mxu0 0
      %580 = vmatprep.subr.bf16.mxu0 0
      %581 = vmatpush1.bf16.msra.mxu0 0
      %582 = vmatprep.subr.bf16.mxu0 0
      %583 = vmatpush1.bf16.msra.mxu0 0
      %584 = vmatprep.subr.bf16.mxu0 0
      %585 = vmatpush1.bf16.msra.mxu0 0
      %586 = vmatprep.subr.bf16.mxu0 0
      %587 = vmatpush1.bf16.msra.mxu0 0
      %588 = vmatprep.subr.bf16.mxu0 0
      %589 = vmatpush1.bf16.msra.mxu0 0
      %590 = vmatprep.subr.bf16.mxu0 0
      %591 = vmatpush1.bf16.msra.mxu0 0
      %592 = vmatprep.subr.bf16.mxu0 0
      %593 = vmatpush1.bf16.msra.mxu0 0
      %594 = vmatprep.subr.bf16.mxu0 0
      %595 = vmatpush1.bf16.msra.mxu0 0
      %596 = vmatprep.subr.bf16.mxu0 0
      %597 = vmatpush1.bf16.msra.mxu0 0
      %598 = vmatprep.subr.bf16.mxu0 0
      %599 = vmatpush1.bf16.msra.mxu0 0
      %600 = vmatprep.subr.bf16.mxu0 0
      %601 = vmatpush1.bf16.msra.mxu0 0
      %602 = vmatprep.subr.bf16.mxu0 0
      %603 = vmatpush1.bf16.msra.mxu0 0
      %604 = vmatprep.subr.bf16.mxu0 0
      %605 = vmatpush1.bf16.msra.mxu0 0
      %606 = vmatprep.subr.bf16.mxu0 0
      %607 = vmatpush1.bf16.msra.mxu0 0
      %608 = vmatprep.mubr.bf16.mxu0 0
      %609 = vmatmul.mubr.bf16.gmra.mrb[0].mxu0 %v520
      %v610 = vpop.f32.mrb[0].mxu0
      %v611 = vadd.f32 %v377, %v610
      %v612 = vpop.f32.mrb[0].mxu0
      %v613 = vpop.f32.mrb[0].mxu0
      %v614 = vadd.f32 %v380, %v613
      %v615 = vpop.f32.mrb[0].mxu0
      %616 = vmatprep.mubr.bf16.mxu0 0
      %617 = vmatmul.mubr.bf16.gmra.mrb[0].mxu0 %v523
      %v618 = vpop.f32.mrb[0].mxu0
      %v619 = vadd.f32 %v385, %v618
      %v620 = vpop.f32.mrb[0].mxu0
      %v621 = vpop.f32.mrb[0].mxu0
      %v622 = vadd.f32 %v388, %v621
      %v623 = vpop.f32.mrb[0].mxu0
      %624 = vmatprep.mubr.bf16.mxu0 0
      %625 = vmatmul.mubr.bf16.gmra.mrb[0].mxu0 %v526
      %v626 = vpop.f32.mrb[0].mxu0
      %v627 = vadd.f32 %v393, %v626
      %v628 = vpop.f32.mrb[0].mxu0
      %v629 = vpop.f32.mrb[0].mxu0
      %v630 = vadd.f32 %v396, %v629
      %v631 = vpop.f32.mrb[0].mxu0
      %632 = vmatprep.mubr.bf16.mxu0 0
      %633 = vmatmul.mubr.bf16.gmra.mrb[0].mxu0 %v529
      %v634 = vpop.f32.mrb[0].mxu0
      %v635 = vadd.f32 %v401, %v634
      %v636 = vpop.f32.mrb[0].mxu0
      %v637 = vpop.f32.mrb[0].mxu0
      %v638 = vadd.f32 %v404, %v637
      %v639 = vpop.f32.mrb[0].mxu0
      %640 = vmatprep.mubr.bf16.mxu0 0
      %641 = vmatmul.mubr.bf16.gmra.mrb[0].mxu0 %v532
      %v642 = vpop.f32.mrb[0].mxu0
      %v643 = vadd.f32 %v409, %v642
      %v644 = vpop.f32.mrb[0].mxu0
      %v645 = vpop.f32.mrb[0].mxu0
      %v646 = vadd.f32 %v412, %v645
      %v647 = vpop.f32.mrb[0].mxu0
      %648 = vmatprep.mubr.bf16.mxu0 0
      %649 = vmatmul.mubr.bf16.gmra.mrb[0].mxu0 %v535
      %v650 = vpop.f32.mrb[0].mxu0
      %v651 = vadd.f32 %v417, %v650
      %v652 = vpop.f32.mrb[0].mxu0
      %v653 = vpop.f32.mrb[0].mxu0
      %v654 = vadd.f32 %v420, %v653
      %v655 = vpop.f32.mrb[0].mxu0
      %656 = vmatprep.mubr.bf16.mxu0 0
      %657 = vmatmul.mubr.bf16.gmra.mrb[0].mxu0 %v538
      %v658 = vpop.f32.mrb[0].mxu0
      %v659 = vadd.f32 %v425, %v658
      %v660 = vpop.f32.mrb[0].mxu0
      %v661 = vpop.f32.mrb[0].mxu0
      %v662 = vadd.f32 %v428, %v661
      %v663 = vpop.f32.mrb[0].mxu0
      %664 = vmatprep.mubr.bf16.mxu0 0
      %665 = vmatmul.mubr.bf16.gmra.mrb[0].mxu0 %v541
      %v666 = vpop.f32.mrb[0].mxu0
      %v667 = vadd.f32 %v433, %v666
      %v668 = vpop.f32.mrb[0].mxu0
      %v669 = vpop.f32.mrb[0].mxu0
      %v670 = vadd.f32 %v436, %v669
      %v671 = vpop.f32.mrb[0].mxu0
      %672 = vmatprep.mubr.bf16.mxu0 0
      %673 = vmatmul.mubr.bf16.gmra.mrb[0].mxu0 %v544
      %v674 = vpop.f32.mrb[0].mxu0
      %v675 = vadd.f32 %v441, %v674
      %v676 = vpop.f32.mrb[0].mxu0
      %v677 = vpop.f32.mrb[0].mxu0
      %v678 = vadd.f32 %v444, %v677
      %v679 = vpop.f32.mrb[0].mxu0
      %680 = vmatprep.mubr.bf16.mxu0 0
      %681 = vmatmul.mubr.bf16.gmra.mrb[0].mxu0 %v547
      %v682 = vpop.f32.mrb[0].mxu0
      %v683 = vadd.f32 %v449, %v682
      %v684 = vpop.f32.mrb[0].mxu0
      %v685 = vpop.f32.mrb[0].mxu0
      %v686 = vadd.f32 %v452, %v685
      %v687 = vpop.f32.mrb[0].mxu0
      %688 = vmatprep.mubr.bf16.mxu0 0
      %689 = vmatmul.mubr.bf16.gmra.mrb[0].mxu0 %v550
      %v690 = vpop.f32.mrb[0].mxu0
      %v691 = vadd.f32 %v457, %v690
      %v692 = vpop.f32.mrb[0].mxu0
      %v693 = vpop.f32.mrb[0].mxu0
      %v694 = vadd.f32 %v460, %v693
      %v695 = vpop.f32.mrb[0].mxu0
      %696 = vmatprep.mubr.bf16.mxu0 0
      %697 = vmatmul.mubr.bf16.gmra.mrb[0].mxu0 %v553
      %v698 = vpop.f32.mrb[0].mxu0
      %v699 = vadd.f32 %v465, %v698
      %v700 = vpop.f32.mrb[0].mxu0
      %v701 = vpop.f32.mrb[0].mxu0
      %v702 = vadd.f32 %v468, %v701
      %v703 = vpop.f32.mrb[0].mxu0
      %704 = vmatprep.mubr.bf16.mxu0 0
      %705 = vmatmul.mubr.bf16.gmra.mrb[0].mxu0 %v556
      %v706 = vpop.f32.mrb[0].mxu0
      %v707 = vadd.f32 %v473, %v706
      %v708 = vpop.f32.mrb[0].mxu0
      %v709 = vpop.f32.mrb[0].mxu0
      %v710 = vadd.f32 %v476, %v709
      %v711 = vpop.f32.mrb[0].mxu0
      %712 = vmatprep.mubr.bf16.mxu0 0
      %713 = vmatmul.mubr.bf16.gmra.mrb[0].mxu0 %v559
      %v714 = vpop.f32.mrb[0].mxu0
      %v715 = vadd.f32 %v481, %v714
      %v716 = vpop.f32.mrb[0].mxu0
      %v717 = vpop.f32.mrb[0].mxu0
      %v718 = vadd.f32 %v484, %v717
      %v719 = vpop.f32.mrb[0].mxu0
      %720 = vmatprep.mubr.bf16.mxu0 0
      %721 = vmatmul.mubr.bf16.gmra.mrb[0].mxu0 %v562
      %v722 = vpop.f32.mrb[0].mxu0
      %v723 = vadd.f32 %v489, %v722
      %v724 = vpop.f32.mrb[0].mxu0
      %v725 = vpop.f32.mrb[0].mxu0
      %v726 = vadd.f32 %v492, %v725
      %v727 = vpop.f32.mrb[0].mxu0
      %728 = vmatprep.mubr.bf16.mxu0 0
      %729 = vmatmul.mubr.bf16.gmra.mrb[0].mxu0 %v565
      %v730 = vpop.f32.mrb[0].mxu0
      %v731 = vadd.f32 %v497, %v730
      %v732 = vpop.f32.mrb[0].mxu0
      %v733 = vpop.f32.mrb[0].mxu0
      %v734 = vadd.f32 %v500, %v733
      %v735 = vpop.f32.mrb[0].mxu0
      %736 = vmatprep.mubr.bf16.mxu0 0
      %737 = vmatmul.mubr.bf16.gmra.mrb[0].mxu0 %v568
      %v738 = vpop.f32.mrb[0].mxu0
      %v739 = vadd.f32 %v505, %v738
      %v740 = vpop.f32.mrb[0].mxu0
      %v741 = vpop.f32.mrb[0].mxu0
      %v742 = vadd.f32 %v508, %v741
      %v743 = vpop.f32.mrb[0].mxu0
      %744 = vmatprep.mubr.bf16.mxu0 0
      %745 = vmatmul.mubr.bf16.gmra.mrb[0].mxu0 %v571
      %v746 = vpop.f32.mrb[0].mxu0
      %v747 = vadd.f32 %v513, %v746
      %v748 = vpop.f32.mrb[0].mxu0
      %v749 = vpop.f32.mrb[0].mxu0
      %v750 = vadd.f32 %v516, %v749
      %v751 = vpop.f32.mrb[0].mxu0
      %752 = vdwg.mxu0
      %v753 = vld [vmem:[%s165 + $0x2] sm:$0xff]
      %v754 = vld [vmem:[%s165 + $0xa] sm:$0xff]
      %v755 = vld [vmem:[%s165 + $0x12] sm:$0xff]
      %v756 = vld [vmem:[%s165 + $0x1a] sm:$0xff]
      %v757 = vld [vmem:[%s165 + $0x22] sm:$0xff]
      %v758 = vld [vmem:[%s165 + $0x2a] sm:$0xff]
      %v759 = vld [vmem:[%s165 + $0x32] sm:$0xff]
      %v760 = vld [vmem:[%s165 + $0x3a] sm:$0xff]
      %v761 = vld [vmem:[%s165 + $0x42] sm:$0xff]
      %v762 = vld [vmem:[%s165 + $0x4a] sm:$0xff]
      %v763 = vld [vmem:[%s165 + $0x52] sm:$0xff]
      %v764 = vld [vmem:[%s165 + $0x5a] sm:$0xff]
      %v765 = vld [vmem:[%s165 + $0x62] sm:$0xff]
      %v766 = vld [vmem:[%s165 + $0x6a] sm:$0xff]
      %v767 = vld [vmem:[%s165 + $0x72] sm:$0xff]
      %v768 = vld [vmem:[%s165 + $0x7a] sm:$0xff]
      %v769 = vld [vmem:[%s165 + $0x82] sm:$0xff]
      %v770 = vld [vmem:[%s165 + $0x8a] sm:$0xff]
      %v771 = vld [vmem:[%s165 + $0x92] sm:$0xff]
      %v772 = vld [vmem:[%s165 + $0x9a] sm:$0xff]
      %v773 = vld [vmem:[%s165 + $0xa2] sm:$0xff]
      %v774 = vld [vmem:[%s165 + $0xaa] sm:$0xff]
      %v775 = vld [vmem:[%s165 + $0xb2] sm:$0xff]
      %v776 = vld [vmem:[%s165 + $0xba] sm:$0xff]
      %v777 = vld [vmem:[%s165 + $0xc2] sm:$0xff]
      %v778 = vld [vmem:[%s165 + $0xca] sm:$0xff]
      %v779 = vld [vmem:[%s165 + $0xd2] sm:$0xff]
      %v780 = vld [vmem:[%s165 + $0xda] sm:$0xff]
      %v781 = vld [vmem:[%s165 + $0xe2] sm:$0xff]
      %v782 = vld [vmem:[%s165 + $0xea] sm:$0xff]
      %v783 = vld [vmem:[%s165 + $0xf2] sm:$0xff]
      %v784 = vld [vmem:[%s165 + $0xfa] sm:$0xff]
      %v785 = vld [vmem:[%s165 + $0x102] sm:$0xff]
      %v786 = vld [vmem:[%s165 + $0x10a] sm:$0xff]
      %v787 = vld [vmem:[%s165 + $0x112] sm:$0xff]
      %v788 = vld [vmem:[%s165 + $0x11a] sm:$0x3f]
      %v789 = vpack.c.bf16 %v754, %v753
      %v790 = vpack.c.bf16 %v756, %v755
      %v791 = vpack.c.bf16 %v758, %v757
      %v792 = vpack.c.bf16 %v760, %v759
      %v793 = vpack.c.bf16 %v762, %v761
      %v794 = vpack.c.bf16 %v764, %v763
      %v795 = vpack.c.bf16 %v766, %v765
      %v796 = vpack.c.bf16 %v768, %v767
      %v797 = vpack.c.bf16 %v770, %v769
      %v798 = vpack.c.bf16 %v772, %v771
      %v799 = vpack.c.bf16 %v774, %v773
      %v800 = vpack.c.bf16 %v776, %v775
      %v801 = vpack.c.bf16 %v778, %v777
      %v802 = vpack.c.bf16 %v780, %v779
      %v803 = vpack.c.bf16 %v782, %v781
      %v804 = vpack.c.bf16 %v784, %v783
      %v805 = vpack.c.bf16 %v786, %v785
      %v806 = vpack.c.bf16 %v788, %v787
      %s807 = scalar_lea.vmem %s1, 8
      %v808 = vld [vmem:[%s807] sm:$0xf]
      %v810 = vsel %vm283, %v789, 0
      %v813 = vsel %vm283, %v790, 0
      %v816 = vsel %vm283, %v791, 0
      %v819 = vsel %vm283, %v792, 0
      %v822 = vsel %vm283, %v793, 0
      %v825 = vsel %vm283, %v794, 0
      %v828 = vsel %vm283, %v795, 0
      %v831 = vsel %vm283, %v796, 0
      %v834 = vsel %vm283, %v797, 0
      %v837 = vsel %vm283, %v798, 0
      %v840 = vsel %vm283, %v799, 0
      %v843 = vsel %vm283, %v800, 0
      %v846 = vsel %vm283, %v801, 0
      %v849 = vsel %vm283, %v802, 0
      %v852 = vsel %vm283, %v803, 0
      %v855 = vsel %vm283, %v804, 0
      %v858 = vsel %vm283, %v805, 0
      %v861 = vsel %vm283, %v806, 0
      %v864 = vsel %vm338, %v808, 0
      %866 = vmatprep.subr.bf16.mxu0 0
      %867 = vmatpush1.bf16.msra.mxu0 %v864
      %868 = vmatprep.subr.bf16.mxu0 0
      %869 = vmatpush1.bf16.msra.mxu0 0
      %870 = vmatprep.subr.bf16.mxu0 0
      %871 = vmatpush1.bf16.msra.mxu0 0
      %872 = vmatprep.subr.bf16.mxu0 0
      %873 = vmatpush1.bf16.msra.mxu0 0
      %874 = vmatprep.subr.bf16.mxu0 0
      %875 = vmatpush1.bf16.msra.mxu0 0
      %876 = vmatprep.subr.bf16.mxu0 0
      %877 = vmatpush1.bf16.msra.mxu0 0
      %878 = vmatprep.subr.bf16.mxu0 0
      %879 = vmatpush1.bf16.msra.mxu0 0
      %880 = vmatprep.subr.bf16.mxu0 0
      %881 = vmatpush1.bf16.msra.mxu0 0
      %882 = vmatprep.subr.bf16.mxu0 0
      %883 = vmatpush1.bf16.msra.mxu0 0
      %884 = vmatprep.subr.bf16.mxu0 0
      %885 = vmatpush1.bf16.msra.mxu0 0
      %886 = vmatprep.subr.bf16.mxu0 0
      %887 = vmatpush1.bf16.msra.mxu0 0
      %888 = vmatprep.subr.bf16.mxu0 0
      %889 = vmatpush1.bf16.msra.mxu0 0
      %890 = vmatprep.subr.bf16.mxu0 0
      %891 = vmatpush1.bf16.msra.mxu0 0
      %892 = vmatprep.subr.bf16.mxu0 0
      %893 = vmatpush1.bf16.msra.mxu0 0
      %894 = vmatprep.subr.bf16.mxu0 0
      %895 = vmatpush1.bf16.msra.mxu0 0
      %896 = vmatprep.subr.bf16.mxu0 0
      %897 = vmatpush1.bf16.msra.mxu0 0
      %898 = vmatprep.mubr.bf16.mxu0 0
      %899 = vmatmul.mubr.bf16.gmra.mrb[0].mxu0 %v810
      %v900 = vpop.f32.mrb[0].mxu0
      %v901 = vadd.f32 0.0, %v900
      %v902 = vpop.f32.mrb[0].mxu0
      %v903 = vpop.f32.mrb[0].mxu0
      %v904 = vadd.f32 0.0, %v903
      %v905 = vpop.f32.mrb[0].mxu0
      %906 = vmatprep.mubr.bf16.mxu0 0
      %907 = vmatmul.mubr.bf16.gmra.mrb[0].mxu0 %v813
      %v908 = vpop.f32.mrb[0].mxu0
      %v909 = vadd.f32 0.0, %v908
      %v910 = vpop.f32.mrb[0].mxu0
      %v911 = vpop.f32.mrb[0].mxu0
      %v912 = vadd.f32 0.0, %v911
      %v913 = vpop.f32.mrb[0].mxu0
      %914 = vmatprep.mubr.bf16.mxu0 0
      %915 = vmatmul.mubr.bf16.gmra.mrb[0].mxu0 %v816
      %v916 = vpop.f32.mrb[0].mxu0
      %v917 = vadd.f32 0.0, %v916
      %v918 = vpop.f32.mrb[0].mxu0
      %v919 = vpop.f32.mrb[0].mxu0
      %v920 = vadd.f32 0.0, %v919
      %v921 = vpop.f32.mrb[0].mxu0
      %922 = vmatprep.mubr.bf16.mxu0 0
      %923 = vmatmul.mubr.bf16.gmra.mrb[0].mxu0 %v819
      %v924 = vpop.f32.mrb[0].mxu0
      %v925 = vadd.f32 0.0, %v924
      %v926 = vpop.f32.mrb[0].mxu0
      %v927 = vpop.f32.mrb[0].mxu0
      %v928 = vadd.f32 0.0, %v927
      %v929 = vpop.f32.mrb[0].mxu0
      %930 = vmatprep.mubr.bf16.mxu0 0
      %931 = vmatmul.mubr.bf16.gmra.mrb[0].mxu0 %v822
      %v932 = vpop.f32.mrb[0].mxu0
      %v933 = vadd.f32 0.0, %v932
      %v934 = vpop.f32.mrb[0].mxu0
      %v935 = vpop.f32.mrb[0].mxu0
      %v936 = vadd.f32 0.0, %v935
      %v937 = vpop.f32.mrb[0].mxu0
      %938 = vmatprep.mubr.bf16.mxu0 0
      %939 = vmatmul.mubr.bf16.gmra.mrb[0].mxu0 %v825
      %v940 = vpop.f32.mrb[0].mxu0
      %v941 = vadd.f32 0.0, %v940
      %v942 = vpop.f32.mrb[0].mxu0
      %v943 = vpop.f32.mrb[0].mxu0
      %v944 = vadd.f32 0.0, %v943
      %v945 = vpop.f32.mrb[0].mxu0
      %946 = vmatprep.mubr.bf16.mxu0 0
      %947 = vmatmul.mubr.bf16.gmra.mrb[0].mxu0 %v828
      %v948 = vpop.f32.mrb[0].mxu0
      %v949 = vadd.f32 0.0, %v948
      %v950 = vpop.f32.mrb[0].mxu0
      %v951 = vpop.f32.mrb[0].mxu0
      %v952 = vadd.f32 0.0, %v951
      %v953 = vpop.f32.mrb[0].mxu0
      %954 = vmatprep.mubr.bf16.mxu0 0
      %955 = vmatmul.mubr.bf16.gmra.mrb[0].mxu0 %v831
      %v956 = vpop.f32.mrb[0].mxu0
      %v957 = vadd.f32 0.0, %v956
      %v958 = vpop.f32.mrb[0].mxu0
      %v959 = vpop.f32.mrb[0].mxu0
      %v960 = vadd.f32 0.0, %v959
      %v961 = vpop.f32.mrb[0].mxu0
      %962 = vmatprep.mubr.bf16.mxu0 0
      %963 = vmatmul.mubr.bf16.gmra.mrb[0].mxu0 %v834
      %v964 = vpop.f32.mrb[0].mxu0
      %v965 = vadd.f32 0.0, %v964
      %v966 = vpop.f32.mrb[0].mxu0
      %v967 = vpop.f32.mrb[0].mxu0
      %v968 = vadd.f32 0.0, %v967
      %v969 = vpop.f32.mrb[0].mxu0
      %970 = vmatprep.mubr.bf16.mxu0 0
      %971 = vmatmul.mubr.bf16.gmra.mrb[0].mxu0 %v837
      %v972 = vpop.f32.mrb[0].mxu0
      %v973 = vadd.f32 0.0, %v972
      %v974 = vpop.f32.mrb[0].mxu0
      %v975 = vpop.f32.mrb[0].mxu0
      %v976 = vadd.f32 0.0, %v975
      %v977 = vpop.f32.mrb[0].mxu0
      %978 = vmatprep.mubr.bf16.mxu0 0
      %979 = vmatmul.mubr.bf16.gmra.mrb[0].mxu0 %v840
      %v980 = vpop.f32.mrb[0].mxu0
      %v981 = vadd.f32 0.0, %v980
      %v982 = vpop.f32.mrb[0].mxu0
      %v983 = vpop.f32.mrb[0].mxu0
      %v984 = vadd.f32 0.0, %v983
      %v985 = vpop.f32.mrb[0].mxu0
      %986 = vmatprep.mubr.bf16.mxu0 0
      %987 = vmatmul.mubr.bf16.gmra.mrb[0].mxu0 %v843
      %v988 = vpop.f32.mrb[0].mxu0
      %v989 = vadd.f32 0.0, %v988
      %v990 = vpop.f32.mrb[0].mxu0
      %v991 = vpop.f32.mrb[0].mxu0
      %v992 = vadd.f32 0.0, %v991
      %v993 = vpop.f32.mrb[0].mxu0
      %994 = vmatprep.mubr.bf16.mxu0 0
      %995 = vmatmul.mubr.bf16.gmra.mrb[0].mxu0 %v846
      %v996 = vpop.f32.mrb[0].mxu0
      %v997 = vadd.f32 0.0, %v996
      %v998 = vpop.f32.mrb[0].mxu0
      %v999 = vpop.f32.mrb[0].mxu0
      %v1000 = vadd.f32 0.0, %v999
      %v1001 = vpop.f32.mrb[0].mxu0
      %1002 = vmatprep.mubr.bf16.mxu0 0
      %1003 = vmatmul.mubr.bf16.gmra.mrb[0].mxu0 %v849
      %v1004 = vpop.f32.mrb[0].mxu0
      %v1005 = vadd.f32 0.0, %v1004
      %v1006 = vpop.f32.mrb[0].mxu0
      %v1007 = vpop.f32.mrb[0].mxu0
      %v1008 = vadd.f32 0.0, %v1007
      %v1009 = vpop.f32.mrb[0].mxu0
      %1010 = vmatprep.mubr.bf16.mxu0 0
      %1011 = vmatmul.mubr.bf16.gmra.mrb[0].mxu0 %v852
      %v1012 = vpop.f32.mrb[0].mxu0
      %v1013 = vadd.f32 0.0, %v1012
      %v1014 = vpop.f32.mrb[0].mxu0
      %v1015 = vpop.f32.mrb[0].mxu0
      %v1016 = vadd.f32 0.0, %v1015
      %v1017 = vpop.f32.mrb[0].mxu0
      %1018 = vmatprep.mubr.bf16.mxu0 0
      %1019 = vmatmul.mubr.bf16.gmra.mrb[0].mxu0 %v855
      %v1020 = vpop.f32.mrb[0].mxu0
      %v1021 = vadd.f32 0.0, %v1020
      %v1022 = vpop.f32.mrb[0].mxu0
      %v1023 = vpop.f32.mrb[0].mxu0
      %v1024 = vadd.f32 0.0, %v1023
      %v1025 = vpop.f32.mrb[0].mxu0
      %1026 = vmatprep.mubr.bf16.mxu0 0
      %1027 = vmatmul.mubr.bf16.gmra.mrb[0].mxu0 %v858
      %v1028 = vpop.f32.mrb[0].mxu0
      %v1029 = vadd.f32 0.0, %v1028
      %v1030 = vpop.f32.mrb[0].mxu0
      %v1031 = vpop.f32.mrb[0].mxu0
      %v1032 = vadd.f32 0.0, %v1031
      %v1033 = vpop.f32.mrb[0].mxu0
      %1034 = vmatprep.mubr.bf16.mxu0 0
      %1035 = vmatmul.mubr.bf16.gmra.mrb[0].mxu0 %v861
      %v1036 = vpop.f32.mrb[0].mxu0
      %v1037 = vadd.f32 0.0, %v1036
      %v1038 = vpop.f32.mrb[0].mxu0
      %v1039 = vpop.f32.mrb[0].mxu0
      %v1040 = vadd.f32 0.0, %v1039
      %v1041 = vpop.f32.mrb[0].mxu0
      %1042 = vdwg.mxu0
      %v1043 = vadd.f32 %v611, %v901
      %v1044 = vadd.f32 %v614, %v904
      %v1045 = vadd.f32 %v619, %v909
      %v1046 = vadd.f32 %v622, %v912
      %v1047 = vadd.f32 %v627, %v917
      %v1048 = vadd.f32 %v630, %v920
      %v1049 = vadd.f32 %v635, %v925
      %v1050 = vadd.f32 %v638, %v928
      %v1051 = vadd.f32 %v643, %v933
      %v1052 = vadd.f32 %v646, %v936
      %v1053 = vadd.f32 %v651, %v941
      %v1054 = vadd.f32 %v654, %v944
      %v1055 = vadd.f32 %v659, %v949
      %v1056 = vadd.f32 %v662, %v952
      %v1057 = vadd.f32 %v667, %v957
      %v1058 = vadd.f32 %v670, %v960
      %v1059 = vadd.f32 %v675, %v965
      %v1060 = vadd.f32 %v678, %v968
      %v1061 = vadd.f32 %v683, %v973
      %v1062 = vadd.f32 %v686, %v976
      %v1063 = vadd.f32 %v691, %v981
      %v1064 = vadd.f32 %v694, %v984
      %v1065 = vadd.f32 %v699, %v989
      %v1066 = vadd.f32 %v702, %v992
      %v1067 = vadd.f32 %v707, %v997
      %v1068 = vadd.f32 %v710, %v1000
      %v1069 = vadd.f32 %v715, %v1005
      %v1070 = vadd.f32 %v718, %v1008
      %v1071 = vadd.f32 %v723, %v1013
      %v1072 = vadd.f32 %v726, %v1016
      %v1073 = vadd.f32 %v731, %v1021
      %v1074 = vadd.f32 %v734, %v1024
      %v1075 = vadd.f32 %v739, %v1029
      %v1076 = vadd.f32 %v742, %v1032
      %v1077 = vadd.f32 %v747, %v1037
      %v1078 = vadd.f32 %v750, %v1040
      %v1079 = vld [vmem:[%s165 + $0x12] sm:$0xff]
      %v1080 = vld [vmem:[%s165 + $0x1a] sm:$0xff]
      %v1081 = vld [vmem:[%s165 + $0x22] sm:$0xff]
      %v1082 = vld [vmem:[%s165 + $0x2a] sm:$0xff]
      %v1083 = vld [vmem:[%s165 + $0x32] sm:$0xff]
      %v1084 = vld [vmem:[%s165 + $0x3a] sm:$0xff]
      %v1085 = vld [vmem:[%s165 + $0x42] sm:$0xff]
      %v1086 = vld [vmem:[%s165 + $0x4a] sm:$0xff]
      %v1087 = vld [vmem:[%s165 + $0x52] sm:$0xff]
      %v1088 = vld [vmem:[%s165 + $0x5a] sm:$0xff]
      %v1089 = vld [vmem:[%s165 + $0x62] sm:$0xff]
      %v1090 = vld [vmem:[%s165 + $0x6a] sm:$0xff]
      %v1091 = vld [vmem:[%s165 + $0x72] sm:$0xff]
      %v1092 = vld [vmem:[%s165 + $0x7a] sm:$0xff]
      %v1093 = vld [vmem:[%s165 + $0x82] sm:$0xff]
      %v1094 = vld [vmem:[%s165 + $0x8a] sm:$0xff]
      %v1095 = vld [vmem:[%s165 + $0x92] sm:$0xff]
      %v1096 = vld [vmem:[%s165 + $0x9a] sm:$0xff]
      %v1097 = vld [vmem:[%s165 + $0xa2] sm:$0xff]
      %v1098 = vld [vmem:[%s165 + $0xaa] sm:$0xff]
      %v1099 = vld [vmem:[%s165 + $0xb2] sm:$0xff]
      %v1100 = vld [vmem:[%s165 + $0xba] sm:$0xff]
      %v1101 = vld [vmem:[%s165 + $0xc2] sm:$0xff]
      %v1102 = vld [vmem:[%s165 + $0xca] sm:$0xff]
      %v1103 = vld [vmem:[%s165 + $0xd2] sm:$0xff]
      %v1104 = vld [vmem:[%s165 + $0xda] sm:$0xff]
      %v1105 = vld [vmem:[%s165 + $0xe2] sm:$0xff]
      %v1106 = vld [vmem:[%s165 + $0xea] sm:$0xff]
      %v1107 = vld [vmem:[%s165 + $0xf2] sm:$0xff]
      %v1108 = vld [vmem:[%s165 + $0xfa] sm:$0xff]
      %v1109 = vld [vmem:[%s165 + $0x102] sm:$0xff]
      %v1110 = vld [vmem:[%s165 + $0x10a] sm:$0xff]
      %v1111 = vld [vmem:[%s165 + $0x112] sm:$0xff]
      %v1112 = vld [vmem:[%s165 + $0x11a] sm:$0xff]
      %v1113 = vld [vmem:[%s165 + $0x122] sm:$0xff]
      %v1114 = vld [vmem:[%s165 + $0x12a] sm:$0x3f]
      %v1115 = vpack.c.bf16 %v1080, %v1079
      %v1116 = vpack.c.bf16 %v1082, %v1081
      %v1117 = vpack.c.bf16 %v1084, %v1083
      %v1118 = vpack.c.bf16 %v1086, %v1085
      %v1119 = vpack.c.bf16 %v1088, %v1087
      %v1120 = vpack.c.bf16 %v1090, %v1089
      %v1121 = vpack.c.bf16 %v1092, %v1091
      %v1122 = vpack.c.bf16 %v1094, %v1093
      %v1123 = vpack.c.bf16 %v1096, %v1095
      %v1124 = vpack.c.bf16 %v1098, %v1097
      %v1125 = vpack.c.bf16 %v1100, %v1099
      %v1126 = vpack.c.bf16 %v1102, %v1101
      %v1127 = vpack.c.bf16 %v1104, %v1103
      %v1128 = vpack.c.bf16 %v1106, %v1105
      %v1129 = vpack.c.bf16 %v1108, %v1107
      %v1130 = vpack.c.bf16 %v1110, %v1109
      %v1131 = vpack.c.bf16 %v1112, %v1111
      %v1132 = vpack.c.bf16 %v1114, %v1113
      %s1133 = scalar_lea.vmem %s1, 12
      %v1134 = vld [vmem:[%s1133] sm:$0xf]
      %v1136 = vsel %vm283, %v1115, 0
      %v1139 = vsel %vm283, %v1116, 0
      %v1142 = vsel %vm283, %v1117, 0
      %v1145 = vsel %vm283, %v1118, 0
      %v1148 = vsel %vm283, %v1119, 0
      %v1151 = vsel %vm283, %v1120, 0
      %v1154 = vsel %vm283, %v1121, 0
      %v1157 = vsel %vm283, %v1122, 0
      %v1160 = vsel %vm283, %v1123, 0
      %v1163 = vsel %vm283, %v1124, 0
      %v1166 = vsel %vm283, %v1125, 0
      %v1169 = vsel %vm283, %v1126, 0
      %v1172 = vsel %vm283, %v1127, 0
      %v1175 = vsel %vm283, %v1128, 0
      %v1178 = vsel %vm283, %v1129, 0
      %v1181 = vsel %vm283, %v1130, 0
      %v1184 = vsel %vm283, %v1131, 0
      %v1187 = vsel %vm283, %v1132, 0
      %v1190 = vsel %vm338, %v1134, 0
      %1192 = vmatprep.subr.bf16.mxu0 0
      %1193 = vmatpush1.bf16.msra.mxu0 %v1190
      %1194 = vmatprep.subr.bf16.mxu0 0
      %1195 = vmatpush1.bf16.msra.mxu0 0
      %1196 = vmatprep.subr.bf16.mxu0 0
      %1197 = vmatpush1.bf16.msra.mxu0 0
      %1198 = vmatprep.subr.bf16.mxu0 0
      %1199 = vmatpush1.bf16.msra.mxu0 0
      %1200 = vmatprep.subr.bf16.mxu0 0
      %1201 = vmatpush1.bf16.msra.mxu0 0
      %1202 = vmatprep.subr.bf16.mxu0 0
      %1203 = vmatpush1.bf16.msra.mxu0 0
      %1204 = vmatprep.subr.bf16.mxu0 0
      %1205 = vmatpush1.bf16.msra.mxu0 0
      %1206 = vmatprep.subr.bf16.mxu0 0
      %1207 = vmatpush1.bf16.msra.mxu0 0
      %1208 = vmatprep.subr.bf16.mxu0 0
      %1209 = vmatpush1.bf16.msra.mxu0 0
      %1210 = vmatprep.subr.bf16.mxu0 0
      %1211 = vmatpush1.bf16.msra.mxu0 0
      %1212 = vmatprep.subr.bf16.mxu0 0
      %1213 = vmatpush1.bf16.msra.mxu0 0
      %1214 = vmatprep.subr.bf16.mxu0 0
      %1215 = vmatpush1.bf16.msra.mxu0 0
      %1216 = vmatprep.subr.bf16.mxu0 0
      %1217 = vmatpush1.bf16.msra.mxu0 0
      %1218 = vmatprep.subr.bf16.mxu0 0
      %1219 = vmatpush1.bf16.msra.mxu0 0
      %1220 = vmatprep.subr.bf16.mxu0 0
      %1221 = vmatpush1.bf16.msra.mxu0 0
      %1222 = vmatprep.subr.bf16.mxu0 0
      %1223 = vmatpush1.bf16.msra.mxu0 0
      %1224 = vmatprep.mubr.bf16.mxu0 0
      %1225 = vmatmul.mubr.bf16.gmra.mrb[0].mxu0 %v1136
      %v1226 = vpop.f32.mrb[0].mxu0
      %v1227 = vadd.f32 0.0, %v1226
      %v1228 = vpop.f32.mrb[0].mxu0
      %v1229 = vpop.f32.mrb[0].mxu0
      %v1230 = vadd.f32 0.0, %v1229
      %v1231 = vpop.f32.mrb[0].mxu0
      %1232 = vmatprep.mubr.bf16.mxu0 0
      %1233 = vmatmul.mubr.bf16.gmra.mrb[0].mxu0 %v1139
      %v1234 = vpop.f32.mrb[0].mxu0
      %v1235 = vadd.f32 0.0, %v1234
      %v1236 = vpop.f32.mrb[0].mxu0
      %v1237 = vpop.f32.mrb[0].mxu0
      %v1238 = vadd.f32 0.0, %v1237
      %v1239 = vpop.f32.mrb[0].mxu0
      %1240 = vmatprep.mubr.bf16.mxu0 0
      %1241 = vmatmul.mubr.bf16.gmra.mrb[0].mxu0 %v1142
      %v1242 = vpop.f32.mrb[0].mxu0
      %v1243 = vadd.f32 0.0, %v1242
      %v1244 = vpop.f32.mrb[0].mxu0
      %v1245 = vpop.f32.mrb[0].mxu0
      %v1246 = vadd.f32 0.0, %v1245
      %v1247 = vpop.f32.mrb[0].mxu0
      %1248 = vmatprep.mubr.bf16.mxu0 0
      %1249 = vmatmul.mubr.bf16.gmra.mrb[0].mxu0 %v1145
      %v1250 = vpop.f32.mrb[0].mxu0
      %v1251 = vadd.f32 0.0, %v1250
      %v1252 = vpop.f32.mrb[0].mxu0
      %v1253 = vpop.f32.mrb[0].mxu0
      %v1254 = vadd.f32 0.0, %v1253
      %v1255 = vpop.f32.mrb[0].mxu0
      %1256 = vmatprep.mubr.bf16.mxu0 0
      %1257 = vmatmul.mubr.bf16.gmra.mrb[0].mxu0 %v1148
      %v1258 = vpop.f32.mrb[0].mxu0
      %v1259 = vadd.f32 0.0, %v1258
      %v1260 = vpop.f32.mrb[0].mxu0
      %v1261 = vpop.f32.mrb[0].mxu0
      %v1262 = vadd.f32 0.0, %v1261
      %v1263 = vpop.f32.mrb[0].mxu0
      %1264 = vmatprep.mubr.bf16.mxu0 0
      %1265 = vmatmul.mubr.bf16.gmra.mrb[0].mxu0 %v1151
      %v1266 = vpop.f32.mrb[0].mxu0
      %v1267 = vadd.f32 0.0, %v1266
      %v1268 = vpop.f32.mrb[0].mxu0
      %v1269 = vpop.f32.mrb[0].mxu0
      %v1270 = vadd.f32 0.0, %v1269
      %v1271 = vpop.f32.mrb[0].mxu0
      %1272 = vmatprep.mubr.bf16.mxu0 0
      %1273 = vmatmul.mubr.bf16.gmra.mrb[0].mxu0 %v1154
      %v1274 = vpop.f32.mrb[0].mxu0
      %v1275 = vadd.f32 0.0, %v1274
      %v1276 = vpop.f32.mrb[0].mxu0
      %v1277 = vpop.f32.mrb[0].mxu0
      %v1278 = vadd.f32 0.0, %v1277
      %v1279 = vpop.f32.mrb[0].mxu0
      %1280 = vmatprep.mubr.bf16.mxu0 0
      %1281 = vmatmul.mubr.bf16.gmra.mrb[0].mxu0 %v1157
      %v1282 = vpop.f32.mrb[0].mxu0
      %v1283 = vadd.f32 0.0, %v1282
      %v1284 = vpop.f32.mrb[0].mxu0
      %v1285 = vpop.f32.mrb[0].mxu0
      %v1286 = vadd.f32 0.0, %v1285
      %v1287 = vpop.f32.mrb[0].mxu0
      %1288 = vmatprep.mubr.bf16.mxu0 0
      %1289 = vmatmul.mubr.bf16.gmra.mrb[0].mxu0 %v1160
      %v1290 = vpop.f32.mrb[0].mxu0
      %v1291 = vadd.f32 0.0, %v1290
      %v1292 = vpop.f32.mrb[0].mxu0
      %v1293 = vpop.f32.mrb[0].mxu0
      %v1294 = vadd.f32 0.0, %v1293
      %v1295 = vpop.f32.mrb[0].mxu0
      %1296 = vmatprep.mubr.bf16.mxu0 0
      %1297 = vmatmul.mubr.bf16.gmra.mrb[0].mxu0 %v1163
      %v1298 = vpop.f32.mrb[0].mxu0
      %v1299 = vadd.f32 0.0, %v1298
      %v1300 = vpop.f32.mrb[0].mxu0
      %v1301 = vpop.f32.mrb[0].mxu0
      %v1302 = vadd.f32 0.0, %v1301
      %v1303 = vpop.f32.mrb[0].mxu0
      %1304 = vmatprep.mubr.bf16.mxu0 0
      %1305 = vmatmul.mubr.bf16.gmra.mrb[0].mxu0 %v1166
      %v1306 = vpop.f32.mrb[0].mxu0
      %v1307 = vadd.f32 0.0, %v1306
      %v1308 = vpop.f32.mrb[0].mxu0
      %v1309 = vpop.f32.mrb[0].mxu0
      %v1310 = vadd.f32 0.0, %v1309
      %v1311 = vpop.f32.mrb[0].mxu0
      %1312 = vmatprep.mubr.bf16.mxu0 0
      %1313 = vmatmul.mubr.bf16.gmra.mrb[0].mxu0 %v1169
      %v1314 = vpop.f32.mrb[0].mxu0
      %v1315 = vadd.f32 0.0, %v1314
      %v1316 = vpop.f32.mrb[0].mxu0
      %v1317 = vpop.f32.mrb[0].mxu0
      %v1318 = vadd.f32 0.0, %v1317
      %v1319 = vpop.f32.mrb[0].mxu0
      %1320 = vmatprep.mubr.bf16.mxu0 0
      %1321 = vmatmul.mubr.bf16.gmra.mrb[0].mxu0 %v1172
      %v1322 = vpop.f32.mrb[0].mxu0
      %v1323 = vadd.f32 0.0, %v1322
      %v1324 = vpop.f32.mrb[0].mxu0
      %v1325 = vpop.f32.mrb[0].mxu0
      %v1326 = vadd.f32 0.0, %v1325
      %v1327 = vpop.f32.mrb[0].mxu0
      %1328 = vmatprep.mubr.bf16.mxu0 0
      %1329 = vmatmul.mubr.bf16.gmra.mrb[0].mxu0 %v1175
      %v1330 = vpop.f32.mrb[0].mxu0
      %v1331 = vadd.f32 0.0, %v1330
      %v1332 = vpop.f32.mrb[0].mxu0
      %v1333 = vpop.f32.mrb[0].mxu0
      %v1334 = vadd.f32 0.0, %v1333
      %v1335 = vpop.f32.mrb[0].mxu0
      %1336 = vmatprep.mubr.bf16.mxu0 0
      %1337 = vmatmul.mubr.bf16.gmra.mrb[0].mxu0 %v1178
      %v1338 = vpop.f32.mrb[0].mxu0
      %v1339 = vadd.f32 0.0, %v1338
      %v1340 = vpop.f32.mrb[0].mxu0
      %v1341 = vpop.f32.mrb[0].mxu0
      %v1342 = vadd.f32 0.0, %v1341
      %v1343 = vpop.f32.mrb[0].mxu0
      %1344 = vmatprep.mubr.bf16.mxu0 0
      %1345 = vmatmul.mubr.bf16.gmra.mrb[0].mxu0 %v1181
      %v1346 = vpop.f32.mrb[0].mxu0
      %v1347 = vadd.f32 0.0, %v1346
      %v1348 = vpop.f32.mrb[0].mxu0
      %v1349 = vpop.f32.mrb[0].mxu0
      %v1350 = vadd.f32 0.0, %v1349
      %v1351 = vpop.f32.mrb[0].mxu0
      %1352 = vmatprep.mubr.bf16.mxu0 0
      %1353 = vmatmul.mubr.bf16.gmra.mrb[0].mxu0 %v1184
      %v1354 = vpop.f32.mrb[0].mxu0
      %v1355 = vadd.f32 0.0, %v1354
      %v1356 = vpop.f32.mrb[0].mxu0
      %v1357 = vpop.f32.mrb[0].mxu0
      %v1358 = vadd.f32 0.0, %v1357
      %v1359 = vpop.f32.mrb[0].mxu0
      %1360 = vmatprep.mubr.bf16.mxu0 0
      %1361 = vmatmul.mubr.bf16.gmra.mrb[0].mxu0 %v1187
      %v1362 = vpop.f32.mrb[0].mxu0
      %v1363 = vadd.f32 0.0, %v1362
      %v1364 = vpop.f32.mrb[0].mxu0
      %v1365 = vpop.f32.mrb[0].mxu0
      %v1366 = vadd.f32 0.0, %v1365
      %v1367 = vpop.f32.mrb[0].mxu0
      %1368 = vdwg.mxu0
      %v1369 = vadd.f32 %v1043, %v1227
      %v1370 = vadd.f32 %v1044, %v1230
      %v1371 = vadd.f32 %v1045, %v1235
      %v1372 = vadd.f32 %v1046, %v1238
      %v1373 = vadd.f32 %v1047, %v1243
      %v1374 = vadd.f32 %v1048, %v1246
      %v1375 = vadd.f32 %v1049, %v1251
      %v1376 = vadd.f32 %v1050, %v1254
      %v1377 = vadd.f32 %v1051, %v1259
      %v1378 = vadd.f32 %v1052, %v1262
      %v1379 = vadd.f32 %v1053, %v1267
      %v1380 = vadd.f32 %v1054, %v1270
      %v1381 = vadd.f32 %v1055, %v1275
      %v1382 = vadd.f32 %v1056, %v1278
      %v1383 = vadd.f32 %v1057, %v1283
      %v1384 = vadd.f32 %v1058, %v1286
      %v1385 = vadd.f32 %v1059, %v1291
      %v1386 = vadd.f32 %v1060, %v1294
      %v1387 = vadd.f32 %v1061, %v1299
      %v1388 = vadd.f32 %v1062, %v1302
      %v1389 = vadd.f32 %v1063, %v1307
      %v1390 = vadd.f32 %v1064, %v1310
      %v1391 = vadd.f32 %v1065, %v1315
      %v1392 = vadd.f32 %v1066, %v1318
      %v1393 = vadd.f32 %v1067, %v1323
      %v1394 = vadd.f32 %v1068, %v1326
      %v1395 = vadd.f32 %v1069, %v1331
      %v1396 = vadd.f32 %v1070, %v1334
      %v1397 = vadd.f32 %v1071, %v1339
      %v1398 = vadd.f32 %v1072, %v1342
      %v1399 = vadd.f32 %v1073, %v1347
      %v1400 = vadd.f32 %v1074, %v1350
      %v1401 = vadd.f32 %v1075, %v1355
      %v1402 = vadd.f32 %v1076, %v1358
      %v1403 = vadd.f32 %v1077, %v1363
      %v1404 = vadd.f32 %v1078, %v1366
      %v1405 = vld [vmem:[%s165 + $0x13] sm:$0xff]
      %v1406 = vld [vmem:[%s165 + $0x1b] sm:$0xff]
      %v1407 = vld [vmem:[%s165 + $0x23] sm:$0xff]
      %v1408 = vld [vmem:[%s165 + $0x2b] sm:$0xff]
      %v1409 = vld [vmem:[%s165 + $0x33] sm:$0xff]
      %v1410 = vld [vmem:[%s165 + $0x3b] sm:$0xff]
      %v1411 = vld [vmem:[%s165 + $0x43] sm:$0xff]
      %v1412 = vld [vmem:[%s165 + $0x4b] sm:$0xff]
      %v1413 = vld [vmem:[%s165 + $0x53] sm:$0xff]
      %v1414 = vld [vmem:[%s165 + $0x5b] sm:$0xff]
      %v1415 = vld [vmem:[%s165 + $0x63] sm:$0xff]
      %v1416 = vld [vmem:[%s165 + $0x6b] sm:$0xff]
      %v1417 = vld [vmem:[%s165 + $0x73] sm:$0xff]
      %v1418 = vld [vmem:[%s165 + $0x7b] sm:$0xff]
      %v1419 = vld [vmem:[%s165 + $0x83] sm:$0xff]
      %v1420 = vld [vmem:[%s165 + $0x8b] sm:$0xff]
      %v1421 = vld [vmem:[%s165 + $0x93] sm:$0xff]
      %v1422 = vld [vmem:[%s165 + $0x9b] sm:$0xff]
      %v1423 = vld [vmem:[%s165 + $0xa3] sm:$0xff]
      %v1424 = vld [vmem:[%s165 + $0xab] sm:$0xff]
      %v1425 = vld [vmem:[%s165 + $0xb3] sm:$0xff]
      %v1426 = vld [vmem:[%s165 + $0xbb] sm:$0xff]
      %v1427 = vld [vmem:[%s165 + $0xc3] sm:$0xff]
      %v1428 = vld [vmem:[%s165 + $0xcb] sm:$0xff]
      %v1429 = vld [vmem:[%s165 + $0xd3] sm:$0xff]
      %v1430 = vld [vmem:[%s165 + $0xdb] sm:$0xff]
      %v1431 = vld [vmem:[%s165 + $0xe3] sm:$0xff]
      %v1432 = vld [vmem:[%s165 + $0xeb] sm:$0xff]
      %v1433 = vld [vmem:[%s165 + $0xf3] sm:$0xff]
      %v1434 = vld [vmem:[%s165 + $0xfb] sm:$0xff]
      %v1435 = vld [vmem:[%s165 + $0x103] sm:$0xff]
      %v1436 = vld [vmem:[%s165 + $0x10b] sm:$0xff]
      %v1437 = vld [vmem:[%s165 + $0x113] sm:$0xff]
      %v1438 = vld [vmem:[%s165 + $0x11b] sm:$0xff]
      %v1439 = vld [vmem:[%s165 + $0x123] sm:$0xff]
      %v1440 = vld [vmem:[%s165 + $0x12b] sm:$0x3f]
      %v1441 = vpack.c.bf16 %v1406, %v1405
      %v1442 = vpack.c.bf16 %v1408, %v1407
      %v1443 = vpack.c.bf16 %v1410, %v1409
      %v1444 = vpack.c.bf16 %v1412, %v1411
      %v1445 = vpack.c.bf16 %v1414, %v1413
      %v1446 = vpack.c.bf16 %v1416, %v1415
      %v1447 = vpack.c.bf16 %v1418, %v1417
      %v1448 = vpack.c.bf16 %v1420, %v1419
      %v1449 = vpack.c.bf16 %v1422, %v1421
      %v1450 = vpack.c.bf16 %v1424, %v1423
      %v1451 = vpack.c.bf16 %v1426, %v1425
      %v1452 = vpack.c.bf16 %v1428, %v1427
      %v1453 = vpack.c.bf16 %v1430, %v1429
      %v1454 = vpack.c.bf16 %v1432, %v1431
      %v1455 = vpack.c.bf16 %v1434, %v1433
      %v1456 = vpack.c.bf16 %v1436, %v1435
      %v1457 = vpack.c.bf16 %v1438, %v1437
      %v1458 = vpack.c.bf16 %v1440, %v1439
      %s1459 = scalar_lea.vmem %s1, 16
      %v1460 = vld [vmem:[%s1459] sm:$0xf]
      %v1462 = vsel %vm283, %v1441, 0
      %v1465 = vsel %vm283, %v1442, 0
      %v1468 = vsel %vm283, %v1443, 0
      %v1471 = vsel %vm283, %v1444, 0
      %v1474 = vsel %vm283, %v1445, 0
      %v1477 = vsel %vm283, %v1446, 0
      %v1480 = vsel %vm283, %v1447, 0
      %v1483 = vsel %vm283, %v1448, 0
      %v1486 = vsel %vm283, %v1449, 0
      %v1489 = vsel %vm283, %v1450, 0
      %v1492 = vsel %vm283, %v1451, 0
      %v1495 = vsel %vm283, %v1452, 0
      %v1498 = vsel %vm283, %v1453, 0
      %v1501 = vsel %vm283, %v1454, 0
      %v1504 = vsel %vm283, %v1455, 0
      %v1507 = vsel %vm283, %v1456, 0
      %v1510 = vsel %vm283, %v1457, 0
      %v1513 = vsel %vm283, %v1458, 0
      %v1516 = vsel %vm338, %v1460, 0
      %1518 = vmatprep.subr.bf16.mxu0 0
      %1519 = vmatpush1.bf16.msra.mxu0 %v1516
      %1520 = vmatprep.subr.bf16.mxu0 0
      %1521 = vmatpush1.bf16.msra.mxu0 0
      %1522 = vmatprep.subr.bf16.mxu0 0
      %1523 = vmatpush1.bf16.msra.mxu0 0
      %1524 = vmatprep.subr.bf16.mxu0 0
      %1525 = vmatpush1.bf16.msra.mxu0 0
      %1526 = vmatprep.subr.bf16.mxu0 0
      %1527 = vmatpush1.bf16.msra.mxu0 0
      %1528 = vmatprep.subr.bf16.mxu0 0
      %1529 = vmatpush1.bf16.msra.mxu0 0
      %1530 = vmatprep.subr.bf16.mxu0 0
      %1531 = vmatpush1.bf16.msra.mxu0 0
      %1532 = vmatprep.subr.bf16.mxu0 0
      %1533 = vmatpush1.bf16.msra.mxu0 0
      %1534 = vmatprep.subr.bf16.mxu0 0
      %1535 = vmatpush1.bf16.msra.mxu0 0
      %1536 = vmatprep.subr.bf16.mxu0 0
      %1537 = vmatpush1.bf16.msra.mxu0 0
      %1538 = vmatprep.subr.bf16.mxu0 0
      %1539 = vmatpush1.bf16.msra.mxu0 0
      %1540 = vmatprep.subr.bf16.mxu0 0
      %1541 = vmatpush1.bf16.msra.mxu0 0
      %1542 = vmatprep.subr.bf16.mxu0 0
      %1543 = vmatpush1.bf16.msra.mxu0 0
      %1544 = vmatprep.subr.bf16.mxu0 0
      %1545 = vmatpush1.bf16.msra.mxu0 0
      %1546 = vmatprep.subr.bf16.mxu0 0
      %1547 = vmatpush1.bf16.msra.mxu0 0
      %1548 = vmatprep.subr.bf16.mxu0 0
      %1549 = vmatpush1.bf16.msra.mxu0 0
      %1550 = vmatprep.mubr.bf16.mxu0 0
      %1551 = vmatmul.mubr.bf16.gmra.mrb[0].mxu0 %v1462
      %v1552 = vpop.f32.mrb[0].mxu0
      %v1553 = vadd.f32 0.0, %v1552
      %v1554 = vpop.f32.mrb[0].mxu0
      %v1555 = vpop.f32.mrb[0].mxu0
      %v1556 = vadd.f32 0.0, %v1555
      %v1557 = vpop.f32.mrb[0].mxu0
      %1558 = vmatprep.mubr.bf16.mxu0 0
      %1559 = vmatmul.mubr.bf16.gmra.mrb[0].mxu0 %v1465
      %v1560 = vpop.f32.mrb[0].mxu0
      %v1561 = vadd.f32 0.0, %v1560
      %v1562 = vpop.f32.mrb[0].mxu0
      %v1563 = vpop.f32.mrb[0].mxu0
      %v1564 = vadd.f32 0.0, %v1563
      %v1565 = vpop.f32.mrb[0].mxu0
      %1566 = vmatprep.mubr.bf16.mxu0 0
      %1567 = vmatmul.mubr.bf16.gmra.mrb[0].mxu0 %v1468
      %v1568 = vpop.f32.mrb[0].mxu0
      %v1569 = vadd.f32 0.0, %v1568
      %v1570 = vpop.f32.mrb[0].mxu0
      %v1571 = vpop.f32.mrb[0].mxu0
      %v1572 = vadd.f32 0.0, %v1571
      %v1573 = vpop.f32.mrb[0].mxu0
      %1574 = vmatprep.mubr.bf16.mxu0 0
      %1575 = vmatmul.mubr.bf16.gmra.mrb[0].mxu0 %v1471
      %v1576 = vpop.f32.mrb[0].mxu0
      %v1577 = vadd.f32 0.0, %v1576
      %v1578 = vpop.f32.mrb[0].mxu0
      %v1579 = vpop.f32.mrb[0].mxu0
      %v1580 = vadd.f32 0.0, %v1579
      %v1581 = vpop.f32.mrb[0].mxu0
      %1582 = vmatprep.mubr.bf16.mxu0 0
      %1583 = vmatmul.mubr.bf16.gmra.mrb[0].mxu0 %v1474
      %v1584 = vpop.f32.mrb[0].mxu0
      %v1585 = vadd.f32 0.0, %v1584
      %v1586 = vpop.f32.mrb[0].mxu0
      %v1587 = vpop.f32.mrb[0].mxu0
      %v1588 = vadd.f32 0.0, %v1587
      %v1589 = vpop.f32.mrb[0].mxu0
      %1590 = vmatprep.mubr.bf16.mxu0 0
      %1591 = vmatmul.mubr.bf16.gmra.mrb[0].mxu0 %v1477
      %v1592 = vpop.f32.mrb[0].mxu0
      %v1593 = vadd.f32 0.0, %v1592
      %v1594 = vpop.f32.mrb[0].mxu0
      %v1595 = vpop.f32.mrb[0].mxu0
      %v1596 = vadd.f32 0.0, %v1595
      %v1597 = vpop.f32.mrb[0].mxu0
      %1598 = vmatprep.mubr.bf16.mxu0 0
      %1599 = vmatmul.mubr.bf16.gmra.mrb[0].mxu0 %v1480
      %v1600 = vpop.f32.mrb[0].mxu0
      %v1601 = vadd.f32 0.0, %v1600
      %v1602 = vpop.f32.mrb[0].mxu0
      %v1603 = vpop.f32.mrb[0].mxu0
      %v1604 = vadd.f32 0.0, %v1603
      %v1605 = vpop.f32.mrb[0].mxu0
      %1606 = vmatprep.mubr.bf16.mxu0 0
      %1607 = vmatmul.mubr.bf16.gmra.mrb[0].mxu0 %v1483
      %v1608 = vpop.f32.mrb[0].mxu0
      %v1609 = vadd.f32 0.0, %v1608
      %v1610 = vpop.f32.mrb[0].mxu0
      %v1611 = vpop.f32.mrb[0].mxu0
      %v1612 = vadd.f32 0.0, %v1611
      %v1613 = vpop.f32.mrb[0].mxu0
      %1614 = vmatprep.mubr.bf16.mxu0 0
      %1615 = vmatmul.mubr.bf16.gmra.mrb[0].mxu0 %v1486
      %v1616 = vpop.f32.mrb[0].mxu0
      %v1617 = vadd.f32 0.0, %v1616
      %v1618 = vpop.f32.mrb[0].mxu0
      %v1619 = vpop.f32.mrb[0].mxu0
      %v1620 = vadd.f32 0.0, %v1619
      %v1621 = vpop.f32.mrb[0].mxu0
      %1622 = vmatprep.mubr.bf16.mxu0 0
      %1623 = vmatmul.mubr.bf16.gmra.mrb[0].mxu0 %v1489
      %v1624 = vpop.f32.mrb[0].mxu0
      %v1625 = vadd.f32 0.0, %v1624
      %v1626 = vpop.f32.mrb[0].mxu0
      %v1627 = vpop.f32.mrb[0].mxu0
      %v1628 = vadd.f32 0.0, %v1627
      %v1629 = vpop.f32.mrb[0].mxu0
      %1630 = vmatprep.mubr.bf16.mxu0 0
      %1631 = vmatmul.mubr.bf16.gmra.mrb[0].mxu0 %v1492
      %v1632 = vpop.f32.mrb[0].mxu0
      %v1633 = vadd.f32 0.0, %v1632
      %v1634 = vpop.f32.mrb[0].mxu0
      %v1635 = vpop.f32.mrb[0].mxu0
      %v1636 = vadd.f32 0.0, %v1635
      %v1637 = vpop.f32.mrb[0].mxu0
      %1638 = vmatprep.mubr.bf16.mxu0 0
      %1639 = vmatmul.mubr.bf16.gmra.mrb[0].mxu0 %v1495
      %v1640 = vpop.f32.mrb[0].mxu0
      %v1641 = vadd.f32 0.0, %v1640
      %v1642 = vpop.f32.mrb[0].mxu0
      %v1643 = vpop.f32.mrb[0].mxu0
      %v1644 = vadd.f32 0.0, %v1643
      %v1645 = vpop.f32.mrb[0].mxu0
      %1646 = vmatprep.mubr.bf16.mxu0 0
      %1647 = vmatmul.mubr.bf16.gmra.mrb[0].mxu0 %v1498
      %v1648 = vpop.f32.mrb[0].mxu0
      %v1649 = vadd.f32 0.0, %v1648
      %v1650 = vpop.f32.mrb[0].mxu0
      %v1651 = vpop.f32.mrb[0].mxu0
      %v1652 = vadd.f32 0.0, %v1651
      %v1653 = vpop.f32.mrb[0].mxu0
      %1654 = vmatprep.mubr.bf16.mxu0 0
      %1655 = vmatmul.mubr.bf16.gmra.mrb[0].mxu0 %v1501
      %v1656 = vpop.f32.mrb[0].mxu0
      %v1657 = vadd.f32 0.0, %v1656
      %v1658 = vpop.f32.mrb[0].mxu0
      %v1659 = vpop.f32.mrb[0].mxu0
      %v1660 = vadd.f32 0.0, %v1659
      %v1661 = vpop.f32.mrb[0].mxu0
      %1662 = vmatprep.mubr.bf16.mxu0 0
      %1663 = vmatmul.mubr.bf16.gmra.mrb[0].mxu0 %v1504
      %v1664 = vpop.f32.mrb[0].mxu0
      %v1665 = vadd.f32 0.0, %v1664
      %v1666 = vpop.f32.mrb[0].mxu0
      %v1667 = vpop.f32.mrb[0].mxu0
      %v1668 = vadd.f32 0.0, %v1667
      %v1669 = vpop.f32.mrb[0].mxu0
      %1670 = vmatprep.mubr.bf16.mxu0 0
      %1671 = vmatmul.mubr.bf16.gmra.mrb[0].mxu0 %v1507
      %v1672 = vpop.f32.mrb[0].mxu0
      %v1673 = vadd.f32 0.0, %v1672
      %v1674 = vpop.f32.mrb[0].mxu0
      %v1675 = vpop.f32.mrb[0].mxu0
      %v1676 = vadd.f32 0.0, %v1675
      %v1677 = vpop.f32.mrb[0].mxu0
      %1678 = vmatprep.mubr.bf16.mxu0 0
      %1679 = vmatmul.mubr.bf16.gmra.mrb[0].mxu0 %v1510
      %v1680 = vpop.f32.mrb[0].mxu0
      %v1681 = vadd.f32 0.0, %v1680
      %v1682 = vpop.f32.mrb[0].mxu0
      %v1683 = vpop.f32.mrb[0].mxu0
      %v1684 = vadd.f32 0.0, %v1683
      %v1685 = vpop.f32.mrb[0].mxu0
      %1686 = vmatprep.mubr.bf16.mxu0 0
      %1687 = vmatmul.mubr.bf16.gmra.mrb[0].mxu0 %v1513
      %v1688 = vpop.f32.mrb[0].mxu0
      %v1689 = vadd.f32 0.0, %v1688
      %v1690 = vpop.f32.mrb[0].mxu0
      %v1691 = vpop.f32.mrb[0].mxu0
      %v1692 = vadd.f32 0.0, %v1691
      %v1693 = vpop.f32.mrb[0].mxu0
      %1694 = vdwg.mxu0
      %v1695 = vadd.f32 %v1369, %v1553
      %v1696 = vadd.f32 %v1370, %v1556
      %v1697 = vadd.f32 %v1371, %v1561
      %v1698 = vadd.f32 %v1372, %v1564
      %v1699 = vadd.f32 %v1373, %v1569
      %v1700 = vadd.f32 %v1374, %v1572
      %v1701 = vadd.f32 %v1375, %v1577
      %v1702 = vadd.f32 %v1376, %v1580
      %v1703 = vadd.f32 %v1377, %v1585
      %v1704 = vadd.f32 %v1378, %v1588
      %v1705 = vadd.f32 %v1379, %v1593
      %v1706 = vadd.f32 %v1380, %v1596
      %v1707 = vadd.f32 %v1381, %v1601
      %v1708 = vadd.f32 %v1382, %v1604
      %v1709 = vadd.f32 %v1383, %v1609
      %v1710 = vadd.f32 %v1384, %v1612
      %v1711 = vadd.f32 %v1385, %v1617
      %v1712 = vadd.f32 %v1386, %v1620
      %v1713 = vadd.f32 %v1387, %v1625
      %v1714 = vadd.f32 %v1388, %v1628
      %v1715 = vadd.f32 %v1389, %v1633
      %v1716 = vadd.f32 %v1390, %v1636
      %v1717 = vadd.f32 %v1391, %v1641
      %v1718 = vadd.f32 %v1392, %v1644
      %v1719 = vadd.f32 %v1393, %v1649
      %v1720 = vadd.f32 %v1394, %v1652
      %v1721 = vadd.f32 %v1395, %v1657
      %v1722 = vadd.f32 %v1396, %v1660
      %v1723 = vadd.f32 %v1397, %v1665
      %v1724 = vadd.f32 %v1398, %v1668
      %v1725 = vadd.f32 %v1399, %v1673
      %v1726 = vadd.f32 %v1400, %v1676
      %v1727 = vadd.f32 %v1401, %v1681
      %v1728 = vadd.f32 %v1402, %v1684
      %v1729 = vadd.f32 %v1403, %v1689
      %v1730 = vadd.f32 %v1404, %v1692
      %v1731 = vld [vmem:[%s165 + $0x14] sm:$0xff]
      %v1732 = vld [vmem:[%s165 + $0x1c] sm:$0xff]
      %v1733 = vld [vmem:[%s165 + $0x24] sm:$0xff]
      %v1734 = vld [vmem:[%s165 + $0x2c] sm:$0xff]
      %v1735 = vld [vmem:[%s165 + $0x34] sm:$0xff]
      %v1736 = vld [vmem:[%s165 + $0x3c] sm:$0xff]
      %v1737 = vld [vmem:[%s165 + $0x44] sm:$0xff]
      %v1738 = vld [vmem:[%s165 + $0x4c] sm:$0xff]
      %v1739 = vld [vmem:[%s165 + $0x54] sm:$0xff]
      %v1740 = vld [vmem:[%s165 + $0x5c] sm:$0xff]
      %v1741 = vld [vmem:[%s165 + $0x64] sm:$0xff]
      %v1742 = vld [vmem:[%s165 + $0x6c] sm:$0xff]
      %v1743 = vld [vmem:[%s165 + $0x74] sm:$0xff]
      %v1744 = vld [vmem:[%s165 + $0x7c] sm:$0xff]
      %v1745 = vld [vmem:[%s165 + $0x84] sm:$0xff]
      %v1746 = vld [vmem:[%s165 + $0x8c] sm:$0xff]
      %v1747 = vld [vmem:[%s165 + $0x94] sm:$0xff]
      %v1748 = vld [vmem:[%s165 + $0x9c] sm:$0xff]
      %v1749 = vld [vmem:[%s165 + $0xa4] sm:$0xff]
      %v1750 = vld [vmem:[%s165 + $0xac] sm:$0xff]
      %v1751 = vld [vmem:[%s165 + $0xb4] sm:$0xff]
      %v1752 = vld [vmem:[%s165 + $0xbc] sm:$0xff]
      %v1753 = vld [vmem:[%s165 + $0xc4] sm:$0xff]
      %v1754 = vld [vmem:[%s165 + $0xcc] sm:$0xff]
      %v1755 = vld [vmem:[%s165 + $0xd4] sm:$0xff]
      %v1756 = vld [vmem:[%s165 + $0xdc] sm:$0xff]
      %v1757 = vld [vmem:[%s165 + $0xe4] sm:$0xff]
      %v1758 = vld [vmem:[%s165 + $0xec] sm:$0xff]
      %v1759 = vld [vmem:[%s165 + $0xf4] sm:$0xff]
      %v1760 = vld [vmem:[%s165 + $0xfc] sm:$0xff]
      %v1761 = vld [vmem:[%s165 + $0x104] sm:$0xff]
      %v1762 = vld [vmem:[%s165 + $0x10c] sm:$0xff]
      %v1763 = vld [vmem:[%s165 + $0x114] sm:$0xff]
      %v1764 = vld [vmem:[%s165 + $0x11c] sm:$0xff]
      %v1765 = vld [vmem:[%s165 + $0x124] sm:$0xff]
      %v1766 = vld [vmem:[%s165 + $0x12c] sm:$0x3f]
      %v1767 = vpack.c.bf16 %v1732, %v1731
      %v1768 = vpack.c.bf16 %v1734, %v1733
      %v1769 = vpack.c.bf16 %v1736, %v1735
      %v1770 = vpack.c.bf16 %v1738, %v1737
      %v1771 = vpack.c.bf16 %v1740, %v1739
      %v1772 = vpack.c.bf16 %v1742, %v1741
      %v1773 = vpack.c.bf16 %v1744, %v1743
      %v1774 = vpack.c.bf16 %v1746, %v1745
      %v1775 = vpack.c.bf16 %v1748, %v1747
      %v1776 = vpack.c.bf16 %v1750, %v1749
      %v1777 = vpack.c.bf16 %v1752, %v1751
      %v1778 = vpack.c.bf16 %v1754, %v1753
      %v1779 = vpack.c.bf16 %v1756, %v1755
      %v1780 = vpack.c.bf16 %v1758, %v1757
      %v1781 = vpack.c.bf16 %v1760, %v1759
      %v1782 = vpack.c.bf16 %v1762, %v1761
      %v1783 = vpack.c.bf16 %v1764, %v1763
      %v1784 = vpack.c.bf16 %v1766, %v1765
      %s1785 = scalar_lea.vmem %s1, 20
      %v1786 = vld [vmem:[%s1785] sm:$0xf]
      %v1788 = vsel %vm283, %v1767, 0
      %v1791 = vsel %vm283, %v1768, 0
      %v1794 = vsel %vm283, %v1769, 0
      %v1797 = vsel %vm283, %v1770, 0
      %v1800 = vsel %vm283, %v1771, 0
      %v1803 = vsel %vm283, %v1772, 0
      %v1806 = vsel %vm283, %v1773, 0
      %v1809 = vsel %vm283, %v1774, 0
      %v1812 = vsel %vm283, %v1775, 0
      %v1815 = vsel %vm283, %v1776, 0
      %v1818 = vsel %vm283, %v1777, 0
      %v1821 = vsel %vm283, %v1778, 0
      %v1824 = vsel %vm283, %v1779, 0
      %v1827 = vsel %vm283, %v1780, 0
      %v1830 = vsel %vm283, %v1781, 0
      %v1833 = vsel %vm283, %v1782, 0
      %v1836 = vsel %vm283, %v1783, 0
      %v1839 = vsel %vm283, %v1784, 0
      %v1842 = vsel %vm338, %v1786, 0
      %1844 = vmatprep.subr.bf16.mxu0 0
      %1845 = vmatpush1.bf16.msra.mxu0 %v1842
      %1846 = vmatprep.subr.bf16.mxu0 0
      %1847 = vmatpush1.bf16.msra.mxu0 0
      %1848 = vmatprep.subr.bf16.mxu0 0
      %1849 = vmatpush1.bf16.msra.mxu0 0
      %1850 = vmatprep.subr.bf16.mxu0 0
      %1851 = vmatpush1.bf16.msra.mxu0 0
      %1852 = vmatprep.subr.bf16.mxu0 0
      %1853 = vmatpush1.bf16.msra.mxu0 0
      %1854 = vmatprep.subr.bf16.mxu0 0
      %1855 = vmatpush1.bf16.msra.mxu0 0
      %1856 = vmatprep.subr.bf16.mxu0 0
      %1857 = vmatpush1.bf16.msra.mxu0 0
      %1858 = vmatprep.subr.bf16.mxu0 0
      %1859 = vmatpush1.bf16.msra.mxu0 0
      %1860 = vmatprep.subr.bf16.mxu0 0
      %1861 = vmatpush1.bf16.msra.mxu0 0
      %1862 = vmatprep.subr.bf16.mxu0 0
      %1863 = vmatpush1.bf16.msra.mxu0 0
      %1864 = vmatprep.subr.bf16.mxu0 0
      %1865 = vmatpush1.bf16.msra.mxu0 0
      %1866 = vmatprep.subr.bf16.mxu0 0
      %1867 = vmatpush1.bf16.msra.mxu0 0
      %1868 = vmatprep.subr.bf16.mxu0 0
      %1869 = vmatpush1.bf16.msra.mxu0 0
      %1870 = vmatprep.subr.bf16.mxu0 0
      %1871 = vmatpush1.bf16.msra.mxu0 0
      %1872 = vmatprep.subr.bf16.mxu0 0
      %1873 = vmatpush1.bf16.msra.mxu0 0
      %1874 = vmatprep.subr.bf16.mxu0 0
      %1875 = vmatpush1.bf16.msra.mxu0 0
      %1876 = vmatprep.mubr.bf16.mxu0 0
      %1877 = vmatmul.mubr.bf16.gmra.mrb[0].mxu0 %v1788
      %v1878 = vpop.f32.mrb[0].mxu0
      %v1879 = vadd.f32 0.0, %v1878
      %v1880 = vpop.f32.mrb[0].mxu0
      %v1881 = vpop.f32.mrb[0].mxu0
      %v1882 = vadd.f32 0.0, %v1881
      %v1883 = vpop.f32.mrb[0].mxu0
      %1884 = vmatprep.mubr.bf16.mxu0 0
      %1885 = vmatmul.mubr.bf16.gmra.mrb[0].mxu0 %v1791
      %v1886 = vpop.f32.mrb[0].mxu0
      %v1887 = vadd.f32 0.0, %v1886
      %v1888 = vpop.f32.mrb[0].mxu0
      %v1889 = vpop.f32.mrb[0].mxu0
      %v1890 = vadd.f32 0.0, %v1889
      %v1891 = vpop.f32.mrb[0].mxu0
      %1892 = vmatprep.mubr.bf16.mxu0 0
      %1893 = vmatmul.mubr.bf16.gmra.mrb[0].mxu0 %v1794
      %v1894 = vpop.f32.mrb[0].mxu0
      %v1895 = vadd.f32 0.0, %v1894
      %v1896 = vpop.f32.mrb[0].mxu0
      %v1897 = vpop.f32.mrb[0].mxu0
      %v1898 = vadd.f32 0.0, %v1897
      %v1899 = vpop.f32.mrb[0].mxu0
      %1900 = vmatprep.mubr.bf16.mxu0 0
      %1901 = vmatmul.mubr.bf16.gmra.mrb[0].mxu0 %v1797
      %v1902 = vpop.f32.mrb[0].mxu0
      %v1903 = vadd.f32 0.0, %v1902
      %v1904 = vpop.f32.mrb[0].mxu0
      %v1905 = vpop.f32.mrb[0].mxu0
      %v1906 = vadd.f32 0.0, %v1905
      %v1907 = vpop.f32.mrb[0].mxu0
      %1908 = vmatprep.mubr.bf16.mxu0 0
      %1909 = vmatmul.mubr.bf16.gmra.mrb[0].mxu0 %v1800
      %v1910 = vpop.f32.mrb[0].mxu0
      %v1911 = vadd.f32 0.0, %v1910
      %v1912 = vpop.f32.mrb[0].mxu0
      %v1913 = vpop.f32.mrb[0].mxu0
      %v1914 = vadd.f32 0.0, %v1913
      %v1915 = vpop.f32.mrb[0].mxu0
      %1916 = vmatprep.mubr.bf16.mxu0 0
      %1917 = vmatmul.mubr.bf16.gmra.mrb[0].mxu0 %v1803
      %v1918 = vpop.f32.mrb[0].mxu0
      %v1919 = vadd.f32 0.0, %v1918
      %v1920 = vpop.f32.mrb[0].mxu0
      %v1921 = vpop.f32.mrb[0].mxu0
      %v1922 = vadd.f32 0.0, %v1921
      %v1923 = vpop.f32.mrb[0].mxu0
      %1924 = vmatprep.mubr.bf16.mxu0 0
      %1925 = vmatmul.mubr.bf16.gmra.mrb[0].mxu0 %v1806
      %v1926 = vpop.f32.mrb[0].mxu0
      %v1927 = vadd.f32 0.0, %v1926
      %v1928 = vpop.f32.mrb[0].mxu0
      %v1929 = vpop.f32.mrb[0].mxu0
      %v1930 = vadd.f32 0.0, %v1929
      %v1931 = vpop.f32.mrb[0].mxu0
      %1932 = vmatprep.mubr.bf16.mxu0 0
      %1933 = vmatmul.mubr.bf16.gmra.mrb[0].mxu0 %v1809
      %v1934 = vpop.f32.mrb[0].mxu0
      %v1935 = vadd.f32 0.0, %v1934
      %v1936 = vpop.f32.mrb[0].mxu0
      %v1937 = vpop.f32.mrb[0].mxu0
      %v1938 = vadd.f32 0.0, %v1937
      %v1939 = vpop.f32.mrb[0].mxu0
      %1940 = vmatprep.mubr.bf16.mxu0 0
      %1941 = vmatmul.mubr.bf16.gmra.mrb[0].mxu0 %v1812
      %v1942 = vpop.f32.mrb[0].mxu0
      %v1943 = vadd.f32 0.0, %v1942
      %v1944 = vpop.f32.mrb[0].mxu0
      %v1945 = vpop.f32.mrb[0].mxu0
      %v1946 = vadd.f32 0.0, %v1945
      %v1947 = vpop.f32.mrb[0].mxu0
      %1948 = vmatprep.mubr.bf16.mxu0 0
      %1949 = vmatmul.mubr.bf16.gmra.mrb[0].mxu0 %v1815
      %v1950 = vpop.f32.mrb[0].mxu0
      %v1951 = vadd.f32 0.0, %v1950
      %v1952 = vpop.f32.mrb[0].mxu0
      %v1953 = vpop.f32.mrb[0].mxu0
      %v1954 = vadd.f32 0.0, %v1953
      %v1955 = vpop.f32.mrb[0].mxu0
      %1956 = vmatprep.mubr.bf16.mxu0 0
      %1957 = vmatmul.mubr.bf16.gmra.mrb[0].mxu0 %v1818
      %v1958 = vpop.f32.mrb[0].mxu0
      %v1959 = vadd.f32 0.0, %v1958
      %v1960 = vpop.f32.mrb[0].mxu0
      %v1961 = vpop.f32.mrb[0].mxu0
      %v1962 = vadd.f32 0.0, %v1961
      %v1963 = vpop.f32.mrb[0].mxu0
      %1964 = vmatprep.mubr.bf16.mxu0 0
      %1965 = vmatmul.mubr.bf16.gmra.mrb[0].mxu0 %v1821
      %v1966 = vpop.f32.mrb[0].mxu0
      %v1967 = vadd.f32 0.0, %v1966
      %v1968 = vpop.f32.mrb[0].mxu0
      %v1969 = vpop.f32.mrb[0].mxu0
      %v1970 = vadd.f32 0.0, %v1969
      %v1971 = vpop.f32.mrb[0].mxu0
      %1972 = vmatprep.mubr.bf16.mxu0 0
      %1973 = vmatmul.mubr.bf16.gmra.mrb[0].mxu0 %v1824
      %v1974 = vpop.f32.mrb[0].mxu0
      %v1975 = vadd.f32 0.0, %v1974
      %v1976 = vpop.f32.mrb[0].mxu0
      %v1977 = vpop.f32.mrb[0].mxu0
      %v1978 = vadd.f32 0.0, %v1977
      %v1979 = vpop.f32.mrb[0].mxu0
      %1980 = vmatprep.mubr.bf16.mxu0 0
      %1981 = vmatmul.mubr.bf16.gmra.mrb[0].mxu0 %v1827
      %v1982 = vpop.f32.mrb[0].mxu0
      %v1983 = vadd.f32 0.0, %v1982
      %v1984 = vpop.f32.mrb[0].mxu0
      %v1985 = vpop.f32.mrb[0].mxu0
      %v1986 = vadd.f32 0.0, %v1985
      %v1987 = vpop.f32.mrb[0].mxu0
      %1988 = vmatprep.mubr.bf16.mxu0 0
      %1989 = vmatmul.mubr.bf16.gmra.mrb[0].mxu0 %v1830
      %v1990 = vpop.f32.mrb[0].mxu0
      %v1991 = vadd.f32 0.0, %v1990
      %v1992 = vpop.f32.mrb[0].mxu0
      %v1993 = vpop.f32.mrb[0].mxu0
      %v1994 = vadd.f32 0.0, %v1993
      %v1995 = vpop.f32.mrb[0].mxu0
      %1996 = vmatprep.mubr.bf16.mxu0 0
      %1997 = vmatmul.mubr.bf16.gmra.mrb[0].mxu0 %v1833
      %v1998 = vpop.f32.mrb[0].mxu0
      %v1999 = vadd.f32 0.0, %v1998
      %v2000 = vpop.f32.mrb[0].mxu0
      %v2001 = vpop.f32.mrb[0].mxu0
      %v2002 = vadd.f32 0.0, %v2001
      %v2003 = vpop.f32.mrb[0].mxu0
      %2004 = vmatprep.mubr.bf16.mxu0 0
      %2005 = vmatmul.mubr.bf16.gmra.mrb[0].mxu0 %v1836
      %v2006 = vpop.f32.mrb[0].mxu0
      %v2007 = vadd.f32 0.0, %v2006
      %v2008 = vpop.f32.mrb[0].mxu0
      %v2009 = vpop.f32.mrb[0].mxu0
      %v2010 = vadd.f32 0.0, %v2009
      %v2011 = vpop.f32.mrb[0].mxu0
      %2012 = vmatprep.mubr.bf16.mxu0 0
      %2013 = vmatmul.mubr.bf16.gmra.mrb[0].mxu0 %v1839
      %v2014 = vpop.f32.mrb[0].mxu0
      %v2015 = vadd.f32 0.0, %v2014
      %v2016 = vpop.f32.mrb[0].mxu0
      %v2017 = vpop.f32.mrb[0].mxu0
      %v2018 = vadd.f32 0.0, %v2017
      %v2019 = vpop.f32.mrb[0].mxu0
      %2020 = vdwg.mxu0
      %v2021 = vadd.f32 %v1695, %v1879
      %v2022 = vadd.f32 %v1696, %v1882
      %v2023 = vadd.f32 %v1697, %v1887
      %v2024 = vadd.f32 %v1698, %v1890
      %v2025 = vadd.f32 %v1699, %v1895
      %v2026 = vadd.f32 %v1700, %v1898
      %v2027 = vadd.f32 %v1701, %v1903
      %v2028 = vadd.f32 %v1702, %v1906
      %v2029 = vadd.f32 %v1703, %v1911
      %v2030 = vadd.f32 %v1704, %v1914
      %v2031 = vadd.f32 %v1705, %v1919
      %v2032 = vadd.f32 %v1706, %v1922
      %v2033 = vadd.f32 %v1707, %v1927
      %v2034 = vadd.f32 %v1708, %v1930
      %v2035 = vadd.f32 %v1709, %v1935
      %v2036 = vadd.f32 %v1710, %v1938
      %v2037 = vadd.f32 %v1711, %v1943
      %v2038 = vadd.f32 %v1712, %v1946
      %v2039 = vadd.f32 %v1713, %v1951
      %v2040 = vadd.f32 %v1714, %v1954
      %v2041 = vadd.f32 %v1715, %v1959
      %v2042 = vadd.f32 %v1716, %v1962
      %v2043 = vadd.f32 %v1717, %v1967
      %v2044 = vadd.f32 %v1718, %v1970
      %v2045 = vadd.f32 %v1719, %v1975
      %v2046 = vadd.f32 %v1720, %v1978
      %v2047 = vadd.f32 %v1721, %v1983
      %v2048 = vadd.f32 %v1722, %v1986
      %v2049 = vadd.f32 %v1723, %v1991
      %v2050 = vadd.f32 %v1724, %v1994
      %v2051 = vadd.f32 %v1725, %v1999
      %v2052 = vadd.f32 %v1726, %v2002
      %v2053 = vadd.f32 %v1727, %v2007
      %v2054 = vadd.f32 %v1728, %v2010
      %v2055 = vadd.f32 %v1729, %v2015
      %v2056 = vadd.f32 %v1730, %v2018
      %v2057 = vld [vmem:[%s165 + $0x24] sm:$0xff]
      %v2058 = vld [vmem:[%s165 + $0x2c] sm:$0xff]
      %v2059 = vld [vmem:[%s165 + $0x34] sm:$0xff]
      %v2060 = vld [vmem:[%s165 + $0x3c] sm:$0xff]
      %v2061 = vld [vmem:[%s165 + $0x44] sm:$0xff]
      %v2062 = vld [vmem:[%s165 + $0x4c] sm:$0xff]
      %v2063 = vld [vmem:[%s165 + $0x54] sm:$0xff]
      %v2064 = vld [vmem:[%s165 + $0x5c] sm:$0xff]
      %v2065 = vld [vmem:[%s165 + $0x64] sm:$0xff]
      %v2066 = vld [vmem:[%s165 + $0x6c] sm:$0xff]
      %v2067 = vld [vmem:[%s165 + $0x74] sm:$0xff]
      %v2068 = vld [vmem:[%s165 + $0x7c] sm:$0xff]
      %v2069 = vld [vmem:[%s165 + $0x84] sm:$0xff]
      %v2070 = vld [vmem:[%s165 + $0x8c] sm:$0xff]
      %v2071 = vld [vmem:[%s165 + $0x94] sm:$0xff]
      %v2072 = vld [vmem:[%s165 + $0x9c] sm:$0xff]
      %v2073 = vld [vmem:[%s165 + $0xa4] sm:$0xff]
      %v2074 = vld [vmem:[%s165 + $0xac] sm:$0xff]
      %v2075 = vld [vmem:[%s165 + $0xb4] sm:$0xff]
      %v2076 = vld [vmem:[%s165 + $0xbc] sm:$0xff]
      %v2077 = vld [vmem:[%s165 + $0xc4] sm:$0xff]
      %v2078 = vld [vmem:[%s165 + $0xcc] sm:$0xff]
      %v2079 = vld [vmem:[%s165 + $0xd4] sm:$0xff]
      %v2080 = vld [vmem:[%s165 + $0xdc] sm:$0xff]
      %v2081 = vld [vmem:[%s165 + $0xe4] sm:$0xff]
      %v2082 = vld [vmem:[%s165 + $0xec] sm:$0xff]
      %v2083 = vld [vmem:[%s165 + $0xf4] sm:$0xff]
      %v2084 = vld [vmem:[%s165 + $0xfc] sm:$0xff]
      %v2085 = vld [vmem:[%s165 + $0x104] sm:$0xff]
      %v2086 = vld [vmem:[%s165 + $0x10c] sm:$0xff]
      %v2087 = vld [vmem:[%s165 + $0x114] sm:$0xff]
      %v2088 = vld [vmem:[%s165 + $0x11c] sm:$0xff]
      %v2089 = vld [vmem:[%s165 + $0x124] sm:$0xff]
      %v2090 = vld [vmem:[%s165 + $0x12c] sm:$0xff]
      %v2091 = vld [vmem:[%s165 + $0x134] sm:$0xff]
      %v2092 = vld [vmem:[%s165 + $0x13c] sm:$0x3f]
      %v2093 = vpack.c.bf16 %v2058, %v2057
      %v2094 = vpack.c.bf16 %v2060, %v2059
      %v2095 = vpack.c.bf16 %v2062, %v2061
      %v2096 = vpack.c.bf16 %v2064, %v2063
      %v2097 = vpack.c.bf16 %v2066, %v2065
      %v2098 = vpack.c.bf16 %v2068, %v2067
      %v2099 = vpack.c.bf16 %v2070, %v2069
      %v2100 = vpack.c.bf16 %v2072, %v2071
      %v2101 = vpack.c.bf16 %v2074, %v2073
      %v2102 = vpack.c.bf16 %v2076, %v2075
      %v2103 = vpack.c.bf16 %v2078, %v2077
      %v2104 = vpack.c.bf16 %v2080, %v2079
      %v2105 = vpack.c.bf16 %v2082, %v2081
      %v2106 = vpack.c.bf16 %v2084, %v2083
      %v2107 = vpack.c.bf16 %v2086, %v2085
      %v2108 = vpack.c.bf16 %v2088, %v2087
      %v2109 = vpack.c.bf16 %v2090, %v2089
      %v2110 = vpack.c.bf16 %v2092, %v2091
      %s2111 = scalar_lea.vmem %s1, 24
      %v2112 = vld [vmem:[%s2111] sm:$0xf]
      %v2114 = vsel %vm283, %v2093, 0
      %v2117 = vsel %vm283, %v2094, 0
      %v2120 = vsel %vm283, %v2095, 0
      %v2123 = vsel %vm283, %v2096, 0
      %v2126 = vsel %vm283, %v2097, 0
      %v2129 = vsel %vm283, %v2098, 0
      %v2132 = vsel %vm283, %v2099, 0
      %v2135 = vsel %vm283, %v2100, 0
      %v2138 = vsel %vm283, %v2101, 0
      %v2141 = vsel %vm283, %v2102, 0
      %v2144 = vsel %vm283, %v2103, 0
      %v2147 = vsel %vm283, %v2104, 0
      %v2150 = vsel %vm283, %v2105, 0
      %v2153 = vsel %vm283, %v2106, 0
      %v2156 = vsel %vm283, %v2107, 0
      %v2159 = vsel %vm283, %v2108, 0
      %v2162 = vsel %vm283, %v2109, 0
      %v2165 = vsel %vm283, %v2110, 0
      %v2168 = vsel %vm338, %v2112, 0
      %2170 = vmatprep.subr.bf16.mxu0 0
      %2171 = vmatpush1.bf16.msra.mxu0 %v2168
      %2172 = vmatprep.subr.bf16.mxu0 0
      %2173 = vmatpush1.bf16.msra.mxu0 0
      %2174 = vmatprep.subr.bf16.mxu0 0
      %2175 = vmatpush1.bf16.msra.mxu0 0
      %2176 = vmatprep.subr.bf16.mxu0 0
      %2177 = vmatpush1.bf16.msra.mxu0 0
      %2178 = vmatprep.subr.bf16.mxu0 0
      %2179 = vmatpush1.bf16.msra.mxu0 0
      %2180 = vmatprep.subr.bf16.mxu0 0
      %2181 = vmatpush1.bf16.msra.mxu0 0
      %2182 = vmatprep.subr.bf16.mxu0 0
      %2183 = vmatpush1.bf16.msra.mxu0 0
      %2184 = vmatprep.subr.bf16.mxu0 0
      %2185 = vmatpush1.bf16.msra.mxu0 0
      %2186 = vmatprep.subr.bf16.mxu0 0
      %2187 = vmatpush1.bf16.msra.mxu0 0
      %2188 = vmatprep.subr.bf16.mxu0 0
      %2189 = vmatpush1.bf16.msra.mxu0 0
      %2190 = vmatprep.subr.bf16.mxu0 0
      %2191 = vmatpush1.bf16.msra.mxu0 0
      %2192 = vmatprep.subr.bf16.mxu0 0
      %2193 = vmatpush1.bf16.msra.mxu0 0
      %2194 = vmatprep.subr.bf16.mxu0 0
      %2195 = vmatpush1.bf16.msra.mxu0 0
      %2196 = vmatprep.subr.bf16.mxu0 0
      %2197 = vmatpush1.bf16.msra.mxu0 0
      %2198 = vmatprep.subr.bf16.mxu0 0
      %2199 = vmatpush1.bf16.msra.mxu0 0
      %2200 = vmatprep.subr.bf16.mxu0 0
      %2201 = vmatpush1.bf16.msra.mxu0 0
      %2202 = vmatprep.mubr.bf16.mxu0 0
      %2203 = vmatmul.mubr.bf16.gmra.mrb[0].mxu0 %v2114
      %v2204 = vpop.f32.mrb[0].mxu0
      %v2205 = vadd.f32 0.0, %v2204
      %v2206 = vpop.f32.mrb[0].mxu0
      %v2207 = vpop.f32.mrb[0].mxu0
      %v2208 = vadd.f32 0.0, %v2207
      %v2209 = vpop.f32.mrb[0].mxu0
      %2210 = vmatprep.mubr.bf16.mxu0 0
      %2211 = vmatmul.mubr.bf16.gmra.mrb[0].mxu0 %v2117
      %v2212 = vpop.f32.mrb[0].mxu0
      %v2213 = vadd.f32 0.0, %v2212
      %v2214 = vpop.f32.mrb[0].mxu0
      %v2215 = vpop.f32.mrb[0].mxu0
      %v2216 = vadd.f32 0.0, %v2215
      %v2217 = vpop.f32.mrb[0].mxu0
      %2218 = vmatprep.mubr.bf16.mxu0 0
      %2219 = vmatmul.mubr.bf16.gmra.mrb[0].mxu0 %v2120
      %v2220 = vpop.f32.mrb[0].mxu0
      %v2221 = vadd.f32 0.0, %v2220
      %v2222 = vpop.f32.mrb[0].mxu0
      %v2223 = vpop.f32.mrb[0].mxu0
      %v2224 = vadd.f32 0.0, %v2223
      %v2225 = vpop.f32.mrb[0].mxu0
      %2226 = vmatprep.mubr.bf16.mxu0 0
      %2227 = vmatmul.mubr.bf16.gmra.mrb[0].mxu0 %v2123
      %v2228 = vpop.f32.mrb[0].mxu0
      %v2229 = vadd.f32 0.0, %v2228
      %v2230 = vpop.f32.mrb[0].mxu0
      %v2231 = vpop.f32.mrb[0].mxu0
      %v2232 = vadd.f32 0.0, %v2231
      %v2233 = vpop.f32.mrb[0].mxu0
      %2234 = vmatprep.mubr.bf16.mxu0 0
      %2235 = vmatmul.mubr.bf16.gmra.mrb[0].mxu0 %v2126
      %v2236 = vpop.f32.mrb[0].mxu0
      %v2237 = vadd.f32 0.0, %v2236
      %v2238 = vpop.f32.mrb[0].mxu0
      %v2239 = vpop.f32.mrb[0].mxu0
      %v2240 = vadd.f32 0.0, %v2239
      %v2241 = vpop.f32.mrb[0].mxu0
      %2242 = vmatprep.mubr.bf16.mxu0 0
      %2243 = vmatmul.mubr.bf16.gmra.mrb[0].mxu0 %v2129
      %v2244 = vpop.f32.mrb[0].mxu0
      %v2245 = vadd.f32 0.0, %v2244
      %v2246 = vpop.f32.mrb[0].mxu0
      %v2247 = vpop.f32.mrb[0].mxu0
      %v2248 = vadd.f32 0.0, %v2247
      %v2249 = vpop.f32.mrb[0].mxu0
      %2250 = vmatprep.mubr.bf16.mxu0 0
      %2251 = vmatmul.mubr.bf16.gmra.mrb[0].mxu0 %v2132
      %v2252 = vpop.f32.mrb[0].mxu0
      %v2253 = vadd.f32 0.0, %v2252
      %v2254 = vpop.f32.mrb[0].mxu0
      %v2255 = vpop.f32.mrb[0].mxu0
      %v2256 = vadd.f32 0.0, %v2255
      %v2257 = vpop.f32.mrb[0].mxu0
      %2258 = vmatprep.mubr.bf16.mxu0 0
      %2259 = vmatmul.mubr.bf16.gmra.mrb[0].mxu0 %v2135
      %v2260 = vpop.f32.mrb[0].mxu0
      %v2261 = vadd.f32 0.0, %v2260
      %v2262 = vpop.f32.mrb[0].mxu0
      %v2263 = vpop.f32.mrb[0].mxu0
      %v2264 = vadd.f32 0.0, %v2263
      %v2265 = vpop.f32.mrb[0].mxu0
      %2266 = vmatprep.mubr.bf16.mxu0 0
      %2267 = vmatmul.mubr.bf16.gmra.mrb[0].mxu0 %v2138
      %v2268 = vpop.f32.mrb[0].mxu0
      %v2269 = vadd.f32 0.0, %v2268
      %v2270 = vpop.f32.mrb[0].mxu0
      %v2271 = vpop.f32.mrb[0].mxu0
      %v2272 = vadd.f32 0.0, %v2271
      %v2273 = vpop.f32.mrb[0].mxu0
      %2274 = vmatprep.mubr.bf16.mxu0 0
      %2275 = vmatmul.mubr.bf16.gmra.mrb[0].mxu0 %v2141
      %v2276 = vpop.f32.mrb[0].mxu0
      %v2277 = vadd.f32 0.0, %v2276
      %v2278 = vpop.f32.mrb[0].mxu0
      %v2279 = vpop.f32.mrb[0].mxu0
      %v2280 = vadd.f32 0.0, %v2279
      %v2281 = vpop.f32.mrb[0].mxu0
      %2282 = vmatprep.mubr.bf16.mxu0 0
      %2283 = vmatmul.mubr.bf16.gmra.mrb[0].mxu0 %v2144
      %v2284 = vpop.f32.mrb[0].mxu0
      %v2285 = vadd.f32 0.0, %v2284
      %v2286 = vpop.f32.mrb[0].mxu0
      %v2287 = vpop.f32.mrb[0].mxu0
      %v2288 = vadd.f32 0.0, %v2287
      %v2289 = vpop.f32.mrb[0].mxu0
      %2290 = vmatprep.mubr.bf16.mxu0 0
      %2291 = vmatmul.mubr.bf16.gmra.mrb[0].mxu0 %v2147
      %v2292 = vpop.f32.mrb[0].mxu0
      %v2293 = vadd.f32 0.0, %v2292
      %v2294 = vpop.f32.mrb[0].mxu0
      %v2295 = vpop.f32.mrb[0].mxu0
      %v2296 = vadd.f32 0.0, %v2295
      %v2297 = vpop.f32.mrb[0].mxu0
      %2298 = vmatprep.mubr.bf16.mxu0 0
      %2299 = vmatmul.mubr.bf16.gmra.mrb[0].mxu0 %v2150
      %v2300 = vpop.f32.mrb[0].mxu0
      %v2301 = vadd.f32 0.0, %v2300
      %v2302 = vpop.f32.mrb[0].mxu0
      %v2303 = vpop.f32.mrb[0].mxu0
      %v2304 = vadd.f32 0.0, %v2303
      %v2305 = vpop.f32.mrb[0].mxu0
      %2306 = vmatprep.mubr.bf16.mxu0 0
      %2307 = vmatmul.mubr.bf16.gmra.mrb[0].mxu0 %v2153
      %v2308 = vpop.f32.mrb[0].mxu0
      %v2309 = vadd.f32 0.0, %v2308
      %v2310 = vpop.f32.mrb[0].mxu0
      %v2311 = vpop.f32.mrb[0].mxu0
      %v2312 = vadd.f32 0.0, %v2311
      %v2313 = vpop.f32.mrb[0].mxu0
      %2314 = vmatprep.mubr.bf16.mxu0 0
      %2315 = vmatmul.mubr.bf16.gmra.mrb[0].mxu0 %v2156
      %v2316 = vpop.f32.mrb[0].mxu0
      %v2317 = vadd.f32 0.0, %v2316
      %v2318 = vpop.f32.mrb[0].mxu0
      %v2319 = vpop.f32.mrb[0].mxu0
      %v2320 = vadd.f32 0.0, %v2319
      %v2321 = vpop.f32.mrb[0].mxu0
      %2322 = vmatprep.mubr.bf16.mxu0 0
      %2323 = vmatmul.mubr.bf16.gmra.mrb[0].mxu0 %v2159
      %v2324 = vpop.f32.mrb[0].mxu0
      %v2325 = vadd.f32 0.0, %v2324
      %v2326 = vpop.f32.mrb[0].mxu0
      %v2327 = vpop.f32.mrb[0].mxu0
      %v2328 = vadd.f32 0.0, %v2327
      %v2329 = vpop.f32.mrb[0].mxu0
      %2330 = vmatprep.mubr.bf16.mxu0 0
      %2331 = vmatmul.mubr.bf16.gmra.mrb[0].mxu0 %v2162
      %v2332 = vpop.f32.mrb[0].mxu0
      %v2333 = vadd.f32 0.0, %v2332
      %v2334 = vpop.f32.mrb[0].mxu0
      %v2335 = vpop.f32.mrb[0].mxu0
      %v2336 = vadd.f32 0.0, %v2335
      %v2337 = vpop.f32.mrb[0].mxu0
      %2338 = vmatprep.mubr.bf16.mxu0 0
      %2339 = vmatmul.mubr.bf16.gmra.mrb[0].mxu0 %v2165
      %v2340 = vpop.f32.mrb[0].mxu0
      %v2341 = vadd.f32 0.0, %v2340
      %v2342 = vpop.f32.mrb[0].mxu0
      %v2343 = vpop.f32.mrb[0].mxu0
      %v2344 = vadd.f32 0.0, %v2343
      %v2345 = vpop.f32.mrb[0].mxu0
      %2346 = vdwg.mxu0
      %v2347 = vadd.f32 %v2021, %v2205
      %v2348 = vadd.f32 %v2022, %v2208
      %v2349 = vadd.f32 %v2023, %v2213
      %v2350 = vadd.f32 %v2024, %v2216
      %v2351 = vadd.f32 %v2025, %v2221
      %v2352 = vadd.f32 %v2026, %v2224
      %v2353 = vadd.f32 %v2027, %v2229
      %v2354 = vadd.f32 %v2028, %v2232
      %v2355 = vadd.f32 %v2029, %v2237
      %v2356 = vadd.f32 %v2030, %v2240
      %v2357 = vadd.f32 %v2031, %v2245
      %v2358 = vadd.f32 %v2032, %v2248
      %v2359 = vadd.f32 %v2033, %v2253
      %v2360 = vadd.f32 %v2034, %v2256
      %v2361 = vadd.f32 %v2035, %v2261
      %v2362 = vadd.f32 %v2036, %v2264
      %v2363 = vadd.f32 %v2037, %v2269
      %v2364 = vadd.f32 %v2038, %v2272
      %v2365 = vadd.f32 %v2039, %v2277
      %v2366 = vadd.f32 %v2040, %v2280
      %v2367 = vadd.f32 %v2041, %v2285
      %v2368 = vadd.f32 %v2042, %v2288
      %v2369 = vadd.f32 %v2043, %v2293
      %v2370 = vadd.f32 %v2044, %v2296
      %v2371 = vadd.f32 %v2045, %v2301
      %v2372 = vadd.f32 %v2046, %v2304
      %v2373 = vadd.f32 %v2047, %v2309
      %v2374 = vadd.f32 %v2048, %v2312
      %v2375 = vadd.f32 %v2049, %v2317
      %v2376 = vadd.f32 %v2050, %v2320
      %v2377 = vadd.f32 %v2051, %v2325
      %v2378 = vadd.f32 %v2052, %v2328
      %v2379 = vadd.f32 %v2053, %v2333
      %v2380 = vadd.f32 %v2054, %v2336
      %v2381 = vadd.f32 %v2055, %v2341
      %v2382 = vadd.f32 %v2056, %v2344
      %v2383 = vld [vmem:[%s165 + $0x25] sm:$0xff]
      %v2384 = vld [vmem:[%s165 + $0x2d] sm:$0xff]
      %v2385 = vld [vmem:[%s165 + $0x35] sm:$0xff]
      %v2386 = vld [vmem:[%s165 + $0x3d] sm:$0xff]
      %v2387 = vld [vmem:[%s165 + $0x45] sm:$0xff]
      %v2388 = vld [vmem:[%s165 + $0x4d] sm:$0xff]
      %v2389 = vld [vmem:[%s165 + $0x55] sm:$0xff]
      %v2390 = vld [vmem:[%s165 + $0x5d] sm:$0xff]
      %v2391 = vld [vmem:[%s165 + $0x65] sm:$0xff]
      %v2392 = vld [vmem:[%s165 + $0x6d] sm:$0xff]
      %v2393 = vld [vmem:[%s165 + $0x75] sm:$0xff]
      %v2394 = vld [vmem:[%s165 + $0x7d] sm:$0xff]
      %v2395 = vld [vmem:[%s165 + $0x85] sm:$0xff]
      %v2396 = vld [vmem:[%s165 + $0x8d] sm:$0xff]
      %v2397 = vld [vmem:[%s165 + $0x95] sm:$0xff]
      %v2398 = vld [vmem:[%s165 + $0x9d] sm:$0xff]
      %v2399 = vld [vmem:[%s165 + $0xa5] sm:$0xff]
      %v2400 = vld [vmem:[%s165 + $0xad] sm:$0xff]
      %v2401 = vld [vmem:[%s165 + $0xb5] sm:$0xff]
      %v2402 = vld [vmem:[%s165 + $0xbd] sm:$0xff]
      %v2403 = vld [vmem:[%s165 + $0xc5] sm:$0xff]
      %v2404 = vld [vmem:[%s165 + $0xcd] sm:$0xff]
      %v2405 = vld [vmem:[%s165 + $0xd5] sm:$0xff]
      %v2406 = vld [vmem:[%s165 + $0xdd] sm:$0xff]
      %v2407 = vld [vmem:[%s165 + $0xe5] sm:$0xff]
      %v2408 = vld [vmem:[%s165 + $0xed] sm:$0xff]
      %v2409 = vld [vmem:[%s165 + $0xf5] sm:$0xff]
      %v2410 = vld [vmem:[%s165 + $0xfd] sm:$0xff]
      %v2411 = vld [vmem:[%s165 + $0x105] sm:$0xff]
      %v2412 = vld [vmem:[%s165 + $0x10d] sm:$0xff]
      %v2413 = vld [vmem:[%s165 + $0x115] sm:$0xff]
      %v2414 = vld [vmem:[%s165 + $0x11d] sm:$0xff]
      %v2415 = vld [vmem:[%s165 + $0x125] sm:$0xff]
      %v2416 = vld [vmem:[%s165 + $0x12d] sm:$0xff]
      %v2417 = vld [vmem:[%s165 + $0x135] sm:$0xff]
      %v2418 = vld [vmem:[%s165 + $0x13d] sm:$0x3f]
      %v2419 = vpack.c.bf16 %v2384, %v2383
      %v2420 = vpack.c.bf16 %v2386, %v2385
      %v2421 = vpack.c.bf16 %v2388, %v2387
      %v2422 = vpack.c.bf16 %v2390, %v2389
      %v2423 = vpack.c.bf16 %v2392, %v2391
      %v2424 = vpack.c.bf16 %v2394, %v2393
      %v2425 = vpack.c.bf16 %v2396, %v2395
      %v2426 = vpack.c.bf16 %v2398, %v2397
      %v2427 = vpack.c.bf16 %v2400, %v2399
      %v2428 = vpack.c.bf16 %v2402, %v2401
      %v2429 = vpack.c.bf16 %v2404, %v2403
      %v2430 = vpack.c.bf16 %v2406, %v2405
      %v2431 = vpack.c.bf16 %v2408, %v2407
      %v2432 = vpack.c.bf16 %v2410, %v2409
      %v2433 = vpack.c.bf16 %v2412, %v2411
      %v2434 = vpack.c.bf16 %v2414, %v2413
      %v2435 = vpack.c.bf16 %v2416, %v2415
      %v2436 = vpack.c.bf16 %v2418, %v2417
      %s2437 = scalar_lea.vmem %s1, 28
      %v2438 = vld [vmem:[%s2437] sm:$0xf]
      %v2440 = vsel %vm283, %v2419, 0
      %v2443 = vsel %vm283, %v2420, 0
      %v2446 = vsel %vm283, %v2421, 0
      %v2449 = vsel %vm283, %v2422, 0
      %v2452 = vsel %vm283, %v2423, 0
      %v2455 = vsel %vm283, %v2424, 0
      %v2458 = vsel %vm283, %v2425, 0
      %v2461 = vsel %vm283, %v2426, 0
      %v2464 = vsel %vm283, %v2427, 0
      %v2467 = vsel %vm283, %v2428, 0
      %v2470 = vsel %vm283, %v2429, 0
      %v2473 = vsel %vm283, %v2430, 0
      %v2476 = vsel %vm283, %v2431, 0
      %v2479 = vsel %vm283, %v2432, 0
      %v2482 = vsel %vm283, %v2433, 0
      %v2485 = vsel %vm283, %v2434, 0
      %v2488 = vsel %vm283, %v2435, 0
      %v2491 = vsel %vm283, %v2436, 0
      %v2494 = vsel %vm338, %v2438, 0
      %2496 = vmatprep.subr.bf16.mxu0 0
      %2497 = vmatpush1.bf16.msra.mxu0 %v2494
      %2498 = vmatprep.subr.bf16.mxu0 0
      %2499 = vmatpush1.bf16.msra.mxu0 0
      %2500 = vmatprep.subr.bf16.mxu0 0
      %2501 = vmatpush1.bf16.msra.mxu0 0
      %2502 = vmatprep.subr.bf16.mxu0 0
      %2503 = vmatpush1.bf16.msra.mxu0 0
      %2504 = vmatprep.subr.bf16.mxu0 0
      %2505 = vmatpush1.bf16.msra.mxu0 0
      %2506 = vmatprep.subr.bf16.mxu0 0
      %2507 = vmatpush1.bf16.msra.mxu0 0
      %2508 = vmatprep.subr.bf16.mxu0 0
      %2509 = vmatpush1.bf16.msra.mxu0 0
      %2510 = vmatprep.subr.bf16.mxu0 0
      %2511 = vmatpush1.bf16.msra.mxu0 0
      %2512 = vmatprep.subr.bf16.mxu0 0
      %2513 = vmatpush1.bf16.msra.mxu0 0
      %2514 = vmatprep.subr.bf16.mxu0 0
      %2515 = vmatpush1.bf16.msra.mxu0 0
      %2516 = vmatprep.subr.bf16.mxu0 0
      %2517 = vmatpush1.bf16.msra.mxu0 0
      %2518 = vmatprep.subr.bf16.mxu0 0
      %2519 = vmatpush1.bf16.msra.mxu0 0
      %2520 = vmatprep.subr.bf16.mxu0 0
      %2521 = vmatpush1.bf16.msra.mxu0 0
      %2522 = vmatprep.subr.bf16.mxu0 0
      %2523 = vmatpush1.bf16.msra.mxu0 0
      %2524 = vmatprep.subr.bf16.mxu0 0
      %2525 = vmatpush1.bf16.msra.mxu0 0
      %2526 = vmatprep.subr.bf16.mxu0 0
      %2527 = vmatpush1.bf16.msra.mxu0 0
      %2528 = vmatprep.mubr.bf16.mxu0 0
      %2529 = vmatmul.mubr.bf16.gmra.mrb[0].mxu0 %v2440
      %v2530 = vpop.f32.mrb[0].mxu0
      %v2531 = vadd.f32 0.0, %v2530
      %v2532 = vpop.f32.mrb[0].mxu0
      %v2533 = vpop.f32.mrb[0].mxu0
      %v2534 = vadd.f32 0.0, %v2533
      %v2535 = vpop.f32.mrb[0].mxu0
      %2536 = vmatprep.mubr.bf16.mxu0 0
      %2537 = vmatmul.mubr.bf16.gmra.mrb[0].mxu0 %v2443
      %v2538 = vpop.f32.mrb[0].mxu0
      %v2539 = vadd.f32 0.0, %v2538
      %v2540 = vpop.f32.mrb[0].mxu0
      %v2541 = vpop.f32.mrb[0].mxu0
      %v2542 = vadd.f32 0.0, %v2541
      %v2543 = vpop.f32.mrb[0].mxu0
      %2544 = vmatprep.mubr.bf16.mxu0 0
      %2545 = vmatmul.mubr.bf16.gmra.mrb[0].mxu0 %v2446
      %v2546 = vpop.f32.mrb[0].mxu0
      %v2547 = vadd.f32 0.0, %v2546
      %v2548 = vpop.f32.mrb[0].mxu0
      %v2549 = vpop.f32.mrb[0].mxu0
      %v2550 = vadd.f32 0.0, %v2549
      %v2551 = vpop.f32.mrb[0].mxu0
      %2552 = vmatprep.mubr.bf16.mxu0 0
      %2553 = vmatmul.mubr.bf16.gmra.mrb[0].mxu0 %v2449
      %v2554 = vpop.f32.mrb[0].mxu0
      %v2555 = vadd.f32 0.0, %v2554
      %v2556 = vpop.f32.mrb[0].mxu0
      %v2557 = vpop.f32.mrb[0].mxu0
      %v2558 = vadd.f32 0.0, %v2557
      %v2559 = vpop.f32.mrb[0].mxu0
      %2560 = vmatprep.mubr.bf16.mxu0 0
      %2561 = vmatmul.mubr.bf16.gmra.mrb[0].mxu0 %v2452
      %v2562 = vpop.f32.mrb[0].mxu0
      %v2563 = vadd.f32 0.0, %v2562
      %v2564 = vpop.f32.mrb[0].mxu0
      %v2565 = vpop.f32.mrb[0].mxu0
      %v2566 = vadd.f32 0.0, %v2565
      %v2567 = vpop.f32.mrb[0].mxu0
      %2568 = vmatprep.mubr.bf16.mxu0 0
      %2569 = vmatmul.mubr.bf16.gmra.mrb[0].mxu0 %v2455
      %v2570 = vpop.f32.mrb[0].mxu0
      %v2571 = vadd.f32 0.0, %v2570
      %v2572 = vpop.f32.mrb[0].mxu0
      %v2573 = vpop.f32.mrb[0].mxu0
      %v2574 = vadd.f32 0.0, %v2573
      %v2575 = vpop.f32.mrb[0].mxu0
      %2576 = vmatprep.mubr.bf16.mxu0 0
      %2577 = vmatmul.mubr.bf16.gmra.mrb[0].mxu0 %v2458
      %v2578 = vpop.f32.mrb[0].mxu0
      %v2579 = vadd.f32 0.0, %v2578
      %v2580 = vpop.f32.mrb[0].mxu0
      %v2581 = vpop.f32.mrb[0].mxu0
      %v2582 = vadd.f32 0.0, %v2581
      %v2583 = vpop.f32.mrb[0].mxu0
      %2584 = vmatprep.mubr.bf16.mxu0 0
      %2585 = vmatmul.mubr.bf16.gmra.mrb[0].mxu0 %v2461
      %v2586 = vpop.f32.mrb[0].mxu0
      %v2587 = vadd.f32 0.0, %v2586
      %v2588 = vpop.f32.mrb[0].mxu0
      %v2589 = vpop.f32.mrb[0].mxu0
      %v2590 = vadd.f32 0.0, %v2589
      %v2591 = vpop.f32.mrb[0].mxu0
      %2592 = vmatprep.mubr.bf16.mxu0 0
      %2593 = vmatmul.mubr.bf16.gmra.mrb[0].mxu0 %v2464
      %v2594 = vpop.f32.mrb[0].mxu0
      %v2595 = vadd.f32 0.0, %v2594
      %v2596 = vpop.f32.mrb[0].mxu0
      %v2597 = vpop.f32.mrb[0].mxu0
      %v2598 = vadd.f32 0.0, %v2597
      %v2599 = vpop.f32.mrb[0].mxu0
      %2600 = vmatprep.mubr.bf16.mxu0 0
      %2601 = vmatmul.mubr.bf16.gmra.mrb[0].mxu0 %v2467
      %v2602 = vpop.f32.mrb[0].mxu0
      %v2603 = vadd.f32 0.0, %v2602
      %v2604 = vpop.f32.mrb[0].mxu0
      %v2605 = vpop.f32.mrb[0].mxu0
      %v2606 = vadd.f32 0.0, %v2605
      %v2607 = vpop.f32.mrb[0].mxu0
      %2608 = vmatprep.mubr.bf16.mxu0 0
      %2609 = vmatmul.mubr.bf16.gmra.mrb[0].mxu0 %v2470
      %v2610 = vpop.f32.mrb[0].mxu0
      %v2611 = vadd.f32 0.0, %v2610
      %v2612 = vpop.f32.mrb[0].mxu0
      %v2613 = vpop.f32.mrb[0].mxu0
      %v2614 = vadd.f32 0.0, %v2613
      %v2615 = vpop.f32.mrb[0].mxu0
      %2616 = vmatprep.mubr.bf16.mxu0 0
      %2617 = vmatmul.mubr.bf16.gmra.mrb[0].mxu0 %v2473
      %v2618 = vpop.f32.mrb[0].mxu0
      %v2619 = vadd.f32 0.0, %v2618
      %v2620 = vpop.f32.mrb[0].mxu0
      %v2621 = vpop.f32.mrb[0].mxu0
      %v2622 = vadd.f32 0.0, %v2621
      %v2623 = vpop.f32.mrb[0].mxu0
      %2624 = vmatprep.mubr.bf16.mxu0 0
      %2625 = vmatmul.mubr.bf16.gmra.mrb[0].mxu0 %v2476
      %v2626 = vpop.f32.mrb[0].mxu0
      %v2627 = vadd.f32 0.0, %v2626
      %v2628 = vpop.f32.mrb[0].mxu0
      %v2629 = vpop.f32.mrb[0].mxu0
      %v2630 = vadd.f32 0.0, %v2629
      %v2631 = vpop.f32.mrb[0].mxu0
      %2632 = vmatprep.mubr.bf16.mxu0 0
      %2633 = vmatmul.mubr.bf16.gmra.mrb[0].mxu0 %v2479
      %v2634 = vpop.f32.mrb[0].mxu0
      %v2635 = vadd.f32 0.0, %v2634
      %v2636 = vpop.f32.mrb[0].mxu0
      %v2637 = vpop.f32.mrb[0].mxu0
      %v2638 = vadd.f32 0.0, %v2637
      %v2639 = vpop.f32.mrb[0].mxu0
      %2640 = vmatprep.mubr.bf16.mxu0 0
      %2641 = vmatmul.mubr.bf16.gmra.mrb[0].mxu0 %v2482
      %v2642 = vpop.f32.mrb[0].mxu0
      %v2643 = vadd.f32 0.0, %v2642
      %v2644 = vpop.f32.mrb[0].mxu0
      %v2645 = vpop.f32.mrb[0].mxu0
      %v2646 = vadd.f32 0.0, %v2645
      %v2647 = vpop.f32.mrb[0].mxu0
      %2648 = vmatprep.mubr.bf16.mxu0 0
      %2649 = vmatmul.mubr.bf16.gmra.mrb[0].mxu0 %v2485
      %v2650 = vpop.f32.mrb[0].mxu0
      %v2651 = vadd.f32 0.0, %v2650
      %v2652 = vpop.f32.mrb[0].mxu0
      %v2653 = vpop.f32.mrb[0].mxu0
      %v2654 = vadd.f32 0.0, %v2653
      %v2655 = vpop.f32.mrb[0].mxu0
      %2656 = vmatprep.mubr.bf16.mxu0 0
      %2657 = vmatmul.mubr.bf16.gmra.mrb[0].mxu0 %v2488
      %v2658 = vpop.f32.mrb[0].mxu0
      %v2659 = vadd.f32 0.0, %v2658
      %v2660 = vpop.f32.mrb[0].mxu0
      %v2661 = vpop.f32.mrb[0].mxu0
      %v2662 = vadd.f32 0.0, %v2661
      %v2663 = vpop.f32.mrb[0].mxu0
      %2664 = vmatprep.mubr.bf16.mxu0 0
      %2665 = vmatmul.mubr.bf16.gmra.mrb[0].mxu0 %v2491
      %v2666 = vpop.f32.mrb[0].mxu0
      %v2667 = vadd.f32 0.0, %v2666
      %v2668 = vpop.f32.mrb[0].mxu0
      %v2669 = vpop.f32.mrb[0].mxu0
      %v2670 = vadd.f32 0.0, %v2669
      %v2671 = vpop.f32.mrb[0].mxu0
      %2672 = vdwg.mxu0
      %v2673 = vadd.f32 %v2347, %v2531
      %v2674 = vadd.f32 %v2348, %v2534
      %v2675 = vadd.f32 %v2349, %v2539
      %v2676 = vadd.f32 %v2350, %v2542
      %v2677 = vadd.f32 %v2351, %v2547
      %v2678 = vadd.f32 %v2352, %v2550
      %v2679 = vadd.f32 %v2353, %v2555
      %v2680 = vadd.f32 %v2354, %v2558
      %v2681 = vadd.f32 %v2355, %v2563
      %v2682 = vadd.f32 %v2356, %v2566
      %v2683 = vadd.f32 %v2357, %v2571
      %v2684 = vadd.f32 %v2358, %v2574
      %v2685 = vadd.f32 %v2359, %v2579
      %v2686 = vadd.f32 %v2360, %v2582
      %v2687 = vadd.f32 %v2361, %v2587
      %v2688 = vadd.f32 %v2362, %v2590
      %v2689 = vadd.f32 %v2363, %v2595
      %v2690 = vadd.f32 %v2364, %v2598
      %v2691 = vadd.f32 %v2365, %v2603
      %v2692 = vadd.f32 %v2366, %v2606
      %v2693 = vadd.f32 %v2367, %v2611
      %v2694 = vadd.f32 %v2368, %v2614
      %v2695 = vadd.f32 %v2369, %v2619
      %v2696 = vadd.f32 %v2370, %v2622
      %v2697 = vadd.f32 %v2371, %v2627
      %v2698 = vadd.f32 %v2372, %v2630
      %v2699 = vadd.f32 %v2373, %v2635
      %v2700 = vadd.f32 %v2374, %v2638
      %v2701 = vadd.f32 %v2375, %v2643
      %v2702 = vadd.f32 %v2376, %v2646
      %v2703 = vadd.f32 %v2377, %v2651
      %v2704 = vadd.f32 %v2378, %v2654
      %v2705 = vadd.f32 %v2379, %v2659
      %v2706 = vadd.f32 %v2380, %v2662
      %v2707 = vadd.f32 %v2381, %v2667
      %v2708 = vadd.f32 %v2382, %v2670
      %v2709 = vld [vmem:[%s165 + $0x26] sm:$0xff]
      %v2710 = vld [vmem:[%s165 + $0x2e] sm:$0xff]
      %v2711 = vld [vmem:[%s165 + $0x36] sm:$0xff]
      %v2712 = vld [vmem:[%s165 + $0x3e] sm:$0xff]
      %v2713 = vld [vmem:[%s165 + $0x46] sm:$0xff]
      %v2714 = vld [vmem:[%s165 + $0x4e] sm:$0xff]
      %v2715 = vld [vmem:[%s165 + $0x56] sm:$0xff]
      %v2716 = vld [vmem:[%s165 + $0x5e] sm:$0xff]
      %v2717 = vld [vmem:[%s165 + $0x66] sm:$0xff]
      %v2718 = vld [vmem:[%s165 + $0x6e] sm:$0xff]
      %v2719 = vld [vmem:[%s165 + $0x76] sm:$0xff]
      %v2720 = vld [vmem:[%s165 + $0x7e] sm:$0xff]
      %v2721 = vld [vmem:[%s165 + $0x86] sm:$0xff]
      %v2722 = vld [vmem:[%s165 + $0x8e] sm:$0xff]
      %v2723 = vld [vmem:[%s165 + $0x96] sm:$0xff]
      %v2724 = vld [vmem:[%s165 + $0x9e] sm:$0xff]
      %v2725 = vld [vmem:[%s165 + $0xa6] sm:$0xff]
      %v2726 = vld [vmem:[%s165 + $0xae] sm:$0xff]
      %v2727 = vld [vmem:[%s165 + $0xb6] sm:$0xff]
      %v2728 = vld [vmem:[%s165 + $0xbe] sm:$0xff]
      %v2729 = vld [vmem:[%s165 + $0xc6] sm:$0xff]
      %v2730 = vld [vmem:[%s165 + $0xce] sm:$0xff]
      %v2731 = vld [vmem:[%s165 + $0xd6] sm:$0xff]
      %v2732 = vld [vmem:[%s165 + $0xde] sm:$0xff]
      %v2733 = vld [vmem:[%s165 + $0xe6] sm:$0xff]
      %v2734 = vld [vmem:[%s165 + $0xee] sm:$0xff]
      %v2735 = vld [vmem:[%s165 + $0xf6] sm:$0xff]
      %v2736 = vld [vmem:[%s165 + $0xfe] sm:$0xff]
      %v2737 = vld [vmem:[%s165 + $0x106] sm:$0xff]
      %v2738 = vld [vmem:[%s165 + $0x10e] sm:$0xff]
      %v2739 = vld [vmem:[%s165 + $0x116] sm:$0xff]
      %v2740 = vld [vmem:[%s165 + $0x11e] sm:$0xff]
      %v2741 = vld [vmem:[%s165 + $0x126] sm:$0xff]
      %v2742 = vld [vmem:[%s165 + $0x12e] sm:$0xff]
      %v2743 = vld [vmem:[%s165 + $0x136] sm:$0xff]
      %v2744 = vld [vmem:[%s165 + $0x13e] sm:$0x3f]
      %v2745 = vpack.c.bf16 %v2710, %v2709
      %v2746 = vpack.c.bf16 %v2712, %v2711
      %v2747 = vpack.c.bf16 %v2714, %v2713
      %v2748 = vpack.c.bf16 %v2716, %v2715
      %v2749 = vpack.c.bf16 %v2718, %v2717
      %v2750 = vpack.c.bf16 %v2720, %v2719
      %v2751 = vpack.c.bf16 %v2722, %v2721
      %v2752 = vpack.c.bf16 %v2724, %v2723
      %v2753 = vpack.c.bf16 %v2726, %v2725
      %v2754 = vpack.c.bf16 %v2728, %v2727
      %v2755 = vpack.c.bf16 %v2730, %v2729
      %v2756 = vpack.c.bf16 %v2732, %v2731
      %v2757 = vpack.c.bf16 %v2734, %v2733
      %v2758 = vpack.c.bf16 %v2736, %v2735
      %v2759 = vpack.c.bf16 %v2738, %v2737
      %v2760 = vpack.c.bf16 %v2740, %v2739
      %v2761 = vpack.c.bf16 %v2742, %v2741
      %v2762 = vpack.c.bf16 %v2744, %v2743
      %s2763 = scalar_lea.vmem %s1, 32
      %v2764 = vld [vmem:[%s2763] sm:$0xf]
      %v2766 = vsel %vm283, %v2745, 0
      %v2769 = vsel %vm283, %v2746, 0
      %v2772 = vsel %vm283, %v2747, 0
      %v2775 = vsel %vm283, %v2748, 0
      %v2778 = vsel %vm283, %v2749, 0
      %v2781 = vsel %vm283, %v2750, 0
      %v2784 = vsel %vm283, %v2751, 0
      %v2787 = vsel %vm283, %v2752, 0
      %v2790 = vsel %vm283, %v2753, 0
      %v2793 = vsel %vm283, %v2754, 0
      %v2796 = vsel %vm283, %v2755, 0
      %v2799 = vsel %vm283, %v2756, 0
      %v2802 = vsel %vm283, %v2757, 0
      %v2805 = vsel %vm283, %v2758, 0
      %v2808 = vsel %vm283, %v2759, 0
      %v2811 = vsel %vm283, %v2760, 0
      %v2814 = vsel %vm283, %v2761, 0
      %v2817 = vsel %vm283, %v2762, 0
      %v2820 = vsel %vm338, %v2764, 0
      %2822 = vmatprep.subr.bf16.mxu0 0
      %2823 = vmatpush1.bf16.msra.mxu0 %v2820
      %2824 = vmatprep.subr.bf16.mxu0 0
      %2825 = vmatpush1.bf16.msra.mxu0 0
      %2826 = vmatprep.subr.bf16.mxu0 0
      %2827 = vmatpush1.bf16.msra.mxu0 0
      %2828 = vmatprep.subr.bf16.mxu0 0
      %2829 = vmatpush1.bf16.msra.mxu0 0
      %2830 = vmatprep.subr.bf16.mxu0 0
      %2831 = vmatpush1.bf16.msra.mxu0 0
      %2832 = vmatprep.subr.bf16.mxu0 0
      %2833 = vmatpush1.bf16.msra.mxu0 0
      %2834 = vmatprep.subr.bf16.mxu0 0
      %2835 = vmatpush1.bf16.msra.mxu0 0
      %2836 = vmatprep.subr.bf16.mxu0 0
      %2837 = vmatpush1.bf16.msra.mxu0 0
      %2838 = vmatprep.subr.bf16.mxu0 0
      %2839 = vmatpush1.bf16.msra.mxu0 0
      %2840 = vmatprep.subr.bf16.mxu0 0
      %2841 = vmatpush1.bf16.msra.mxu0 0
      %2842 = vmatprep.subr.bf16.mxu0 0
      %2843 = vmatpush1.bf16.msra.mxu0 0
      %2844 = vmatprep.subr.bf16.mxu0 0
      %2845 = vmatpush1.bf16.msra.mxu0 0
      %2846 = vmatprep.subr.bf16.mxu0 0
      %2847 = vmatpush1.bf16.msra.mxu0 0
      %2848 = vmatprep.subr.bf16.mxu0 0
      %2849 = vmatpush1.bf16.msra.mxu0 0
      %2850 = vmatprep.subr.bf16.mxu0 0
      %2851 = vmatpush1.bf16.msra.mxu0 0
      %2852 = vmatprep.subr.bf16.mxu0 0
      %2853 = vmatpush1.bf16.msra.mxu0 0
      %2854 = vmatprep.mubr.bf16.mxu0 0
      %2855 = vmatmul.mubr.bf16.gmra.mrb[0].mxu0 %v2766
      %v2856 = vpop.f32.mrb[0].mxu0
      %v2857 = vadd.f32 0.0, %v2856
      %v2858 = vpop.f32.mrb[0].mxu0
      %v2859 = vpop.f32.mrb[0].mxu0
      %v2860 = vadd.f32 0.0, %v2859
      %v2861 = vpop.f32.mrb[0].mxu0
      %2862 = vmatprep.mubr.bf16.mxu0 0
      %2863 = vmatmul.mubr.bf16.gmra.mrb[0].mxu0 %v2769
      %v2864 = vpop.f32.mrb[0].mxu0
      %v2865 = vadd.f32 0.0, %v2864
      %v2866 = vpop.f32.mrb[0].mxu0
      %v2867 = vpop.f32.mrb[0].mxu0
      %v2868 = vadd.f32 0.0, %v2867
      %v2869 = vpop.f32.mrb[0].mxu0
      %2870 = vmatprep.mubr.bf16.mxu0 0
      %2871 = vmatmul.mubr.bf16.gmra.mrb[0].mxu0 %v2772
      %v2872 = vpop.f32.mrb[0].mxu0
      %v2873 = vadd.f32 0.0, %v2872
      %v2874 = vpop.f32.mrb[0].mxu0
      %v2875 = vpop.f32.mrb[0].mxu0
      %v2876 = vadd.f32 0.0, %v2875
      %v2877 = vpop.f32.mrb[0].mxu0
      %2878 = vmatprep.mubr.bf16.mxu0 0
      %2879 = vmatmul.mubr.bf16.gmra.mrb[0].mxu0 %v2775
      %v2880 = vpop.f32.mrb[0].mxu0
      %v2881 = vadd.f32 0.0, %v2880
      %v2882 = vpop.f32.mrb[0].mxu0
      %v2883 = vpop.f32.mrb[0].mxu0
      %v2884 = vadd.f32 0.0, %v2883
      %v2885 = vpop.f32.mrb[0].mxu0
      %2886 = vmatprep.mubr.bf16.mxu0 0
      %2887 = vmatmul.mubr.bf16.gmra.mrb[0].mxu0 %v2778
      %v2888 = vpop.f32.mrb[0].mxu0
      %v2889 = vadd.f32 0.0, %v2888
      %v2890 = vpop.f32.mrb[0].mxu0
      %v2891 = vpop.f32.mrb[0].mxu0
      %v2892 = vadd.f32 0.0, %v2891
      %v2893 = vpop.f32.mrb[0].mxu0
      %2894 = vmatprep.mubr.bf16.mxu0 0
      %2895 = vmatmul.mubr.bf16.gmra.mrb[0].mxu0 %v2781
      %v2896 = vpop.f32.mrb[0].mxu0
      %v2897 = vadd.f32 0.0, %v2896
      %v2898 = vpop.f32.mrb[0].mxu0
      %v2899 = vpop.f32.mrb[0].mxu0
      %v2900 = vadd.f32 0.0, %v2899
      %v2901 = vpop.f32.mrb[0].mxu0
      %2902 = vmatprep.mubr.bf16.mxu0 0
      %2903 = vmatmul.mubr.bf16.gmra.mrb[0].mxu0 %v2784
      %v2904 = vpop.f32.mrb[0].mxu0
      %v2905 = vadd.f32 0.0, %v2904
      %v2906 = vpop.f32.mrb[0].mxu0
      %v2907 = vpop.f32.mrb[0].mxu0
      %v2908 = vadd.f32 0.0, %v2907
      %v2909 = vpop.f32.mrb[0].mxu0
      %2910 = vmatprep.mubr.bf16.mxu0 0
      %2911 = vmatmul.mubr.bf16.gmra.mrb[0].mxu0 %v2787
      %v2912 = vpop.f32.mrb[0].mxu0
      %v2913 = vadd.f32 0.0, %v2912
      %v2914 = vpop.f32.mrb[0].mxu0
      %v2915 = vpop.f32.mrb[0].mxu0
      %v2916 = vadd.f32 0.0, %v2915
      %v2917 = vpop.f32.mrb[0].mxu0
      %2918 = vmatprep.mubr.bf16.mxu0 0
      %2919 = vmatmul.mubr.bf16.gmra.mrb[0].mxu0 %v2790
      %v2920 = vpop.f32.mrb[0].mxu0
      %v2921 = vadd.f32 0.0, %v2920
      %v2922 = vpop.f32.mrb[0].mxu0
      %v2923 = vpop.f32.mrb[0].mxu0
      %v2924 = vadd.f32 0.0, %v2923
      %v2925 = vpop.f32.mrb[0].mxu0
      %2926 = vmatprep.mubr.bf16.mxu0 0
      %2927 = vmatmul.mubr.bf16.gmra.mrb[0].mxu0 %v2793
      %v2928 = vpop.f32.mrb[0].mxu0
      %v2929 = vadd.f32 0.0, %v2928
      %v2930 = vpop.f32.mrb[0].mxu0
      %v2931 = vpop.f32.mrb[0].mxu0
      %v2932 = vadd.f32 0.0, %v2931
      %v2933 = vpop.f32.mrb[0].mxu0
      %2934 = vmatprep.mubr.bf16.mxu0 0
      %2935 = vmatmul.mubr.bf16.gmra.mrb[0].mxu0 %v2796
      %v2936 = vpop.f32.mrb[0].mxu0
      %v2937 = vadd.f32 0.0, %v2936
      %v2938 = vpop.f32.mrb[0].mxu0
      %v2939 = vpop.f32.mrb[0].mxu0
      %v2940 = vadd.f32 0.0, %v2939
      %v2941 = vpop.f32.mrb[0].mxu0
      %2942 = vmatprep.mubr.bf16.mxu0 0
      %2943 = vmatmul.mubr.bf16.gmra.mrb[0].mxu0 %v2799
      %v2944 = vpop.f32.mrb[0].mxu0
      %v2945 = vadd.f32 0.0, %v2944
      %v2946 = vpop.f32.mrb[0].mxu0
      %v2947 = vpop.f32.mrb[0].mxu0
      %v2948 = vadd.f32 0.0, %v2947
      %v2949 = vpop.f32.mrb[0].mxu0
      %2950 = vmatprep.mubr.bf16.mxu0 0
      %2951 = vmatmul.mubr.bf16.gmra.mrb[0].mxu0 %v2802
      %v2952 = vpop.f32.mrb[0].mxu0
      %v2953 = vadd.f32 0.0, %v2952
      %v2954 = vpop.f32.mrb[0].mxu0
      %v2955 = vpop.f32.mrb[0].mxu0
      %v2956 = vadd.f32 0.0, %v2955
      %v2957 = vpop.f32.mrb[0].mxu0
      %2958 = vmatprep.mubr.bf16.mxu0 0
      %2959 = vmatmul.mubr.bf16.gmra.mrb[0].mxu0 %v2805
      %v2960 = vpop.f32.mrb[0].mxu0
      %v2961 = vadd.f32 0.0, %v2960
      %v2962 = vpop.f32.mrb[0].mxu0
      %v2963 = vpop.f32.mrb[0].mxu0
      %v2964 = vadd.f32 0.0, %v2963
      %v2965 = vpop.f32.mrb[0].mxu0
      %2966 = vmatprep.mubr.bf16.mxu0 0
      %2967 = vmatmul.mubr.bf16.gmra.mrb[0].mxu0 %v2808
      %v2968 = vpop.f32.mrb[0].mxu0
      %v2969 = vadd.f32 0.0, %v2968
      %v2970 = vpop.f32.mrb[0].mxu0
      %v2971 = vpop.f32.mrb[0].mxu0
      %v2972 = vadd.f32 0.0, %v2971
      %v2973 = vpop.f32.mrb[0].mxu0
      %2974 = vmatprep.mubr.bf16.mxu0 0
      %2975 = vmatmul.mubr.bf16.gmra.mrb[0].mxu0 %v2811
      %v2976 = vpop.f32.mrb[0].mxu0
      %v2977 = vadd.f32 0.0, %v2976
      %v2978 = vpop.f32.mrb[0].mxu0
      %v2979 = vpop.f32.mrb[0].mxu0
      %v2980 = vadd.f32 0.0, %v2979
      %v2981 = vpop.f32.mrb[0].mxu0
      %2982 = vmatprep.mubr.bf16.mxu0 0
      %2983 = vmatmul.mubr.bf16.gmra.mrb[0].mxu0 %v2814
      %v2984 = vpop.f32.mrb[0].mxu0
      %v2985 = vadd.f32 0.0, %v2984
      %v2986 = vpop.f32.mrb[0].mxu0
      %v2987 = vpop.f32.mrb[0].mxu0
      %v2988 = vadd.f32 0.0, %v2987
      %v2989 = vpop.f32.mrb[0].mxu0
      %2990 = vmatprep.mubr.bf16.mxu0 0
      %2991 = vmatmul.mubr.bf16.gmra.mrb[0].mxu0 %v2817
      %v2992 = vpop.f32.mrb[0].mxu0
      %v2993 = vadd.f32 0.0, %v2992
      %v2994 = vpop.f32.mrb[0].mxu0
      %v2995 = vpop.f32.mrb[0].mxu0
      %v2996 = vadd.f32 0.0, %v2995
      %v2997 = vpop.f32.mrb[0].mxu0
      %2998 = vdwg.mxu0
      %v2999 = vadd.f32 %v2673, %v2857
      %v3000 = vadd.f32 %v2674, %v2860
      %v3001 = vadd.f32 %v2675, %v2865
      %v3002 = vadd.f32 %v2676, %v2868
      %v3003 = vadd.f32 %v2677, %v2873
      %v3004 = vadd.f32 %v2678, %v2876
      %v3005 = vadd.f32 %v2679, %v2881
      %v3006 = vadd.f32 %v2680, %v2884
      %v3007 = vadd.f32 %v2681, %v2889
      %v3008 = vadd.f32 %v2682, %v2892
      %v3009 = vadd.f32 %v2683, %v2897
      %v3010 = vadd.f32 %v2684, %v2900
      %v3011 = vadd.f32 %v2685, %v2905
      %v3012 = vadd.f32 %v2686, %v2908
      %v3013 = vadd.f32 %v2687, %v2913
      %v3014 = vadd.f32 %v2688, %v2916
      %v3015 = vadd.f32 %v2689, %v2921
      %v3016 = vadd.f32 %v2690, %v2924
      %v3017 = vadd.f32 %v2691, %v2929
      %v3018 = vadd.f32 %v2692, %v2932
      %v3019 = vadd.f32 %v2693, %v2937
      %v3020 = vadd.f32 %v2694, %v2940
      %v3021 = vadd.f32 %v2695, %v2945
      %v3022 = vadd.f32 %v2696, %v2948
      %v3023 = vadd.f32 %v2697, %v2953
      %v3024 = vadd.f32 %v2698, %v2956
      %v3025 = vadd.f32 %v2699, %v2961
      %v3026 = vadd.f32 %v2700, %v2964
      %v3027 = vadd.f32 %v2701, %v2969
      %v3028 = vadd.f32 %v2702, %v2972
      %v3029 = vadd.f32 %v2703, %v2977
      %v3030 = vadd.f32 %v2704, %v2980
      %v3031 = vadd.f32 %v2705, %v2985
      %v3032 = vadd.f32 %v2706, %v2988
      %v3033 = vadd.f32 %v2707, %v2993
      %v3034 = vadd.f32 %v2708, %v2996
      %v3035 = vld [vmem:[%s2] sm:$0x1]
      %v3037 = vlaneseq
      %v3038 = vshrl.u32 %v3037, 7
      %v3039 = vsub.s32 0, %v3038
      %v3040 = vrot.slane %v3035, %v3039
      %v3042 = vadd.f32 %v2999, %v3040
      %v3043 = vadd.f32 %v3000, %v3040
      %v3044 = vadd.f32 %v3001, %v3040
      %v3045 = vadd.f32 %v3002, %v3040
      %v3046 = vadd.f32 %v3003, %v3040
      %v3047 = vadd.f32 %v3004, %v3040
      %v3048 = vadd.f32 %v3005, %v3040
      %v3049 = vadd.f32 %v3006, %v3040
      %v3050 = vadd.f32 %v3007, %v3040
      %v3051 = vadd.f32 %v3008, %v3040
      %v3052 = vadd.f32 %v3009, %v3040
      %v3053 = vadd.f32 %v3010, %v3040
      %v3054 = vadd.f32 %v3011, %v3040
      %v3055 = vadd.f32 %v3012, %v3040
      %v3056 = vadd.f32 %v3013, %v3040
      %v3057 = vadd.f32 %v3014, %v3040
      %v3058 = vadd.f32 %v3015, %v3040
      %v3059 = vadd.f32 %v3016, %v3040
      %v3060 = vadd.f32 %v3017, %v3040
      %v3061 = vadd.f32 %v3018, %v3040
      %v3062 = vadd.f32 %v3019, %v3040
      %v3063 = vadd.f32 %v3020, %v3040
      %v3064 = vadd.f32 %v3021, %v3040
      %v3065 = vadd.f32 %v3022, %v3040
      %v3066 = vadd.f32 %v3023, %v3040
      %v3067 = vadd.f32 %v3024, %v3040
      %v3068 = vadd.f32 %v3025, %v3040
      %v3069 = vadd.f32 %v3026, %v3040
      %v3070 = vadd.f32 %v3027, %v3040
      %v3071 = vadd.f32 %v3028, %v3040
      %v3072 = vadd.f32 %v3029, %v3040
      %v3073 = vadd.f32 %v3030, %v3040
      %v3074 = vadd.f32 %v3031, %v3040
      %v3075 = vadd.f32 %v3032, %v3040
      %v3076 = vadd.f32 %v3033, %v3040
      %v3077 = vadd.f32 %v3034, %v3040
      %v3078 = vtanh.pop %v3042
      %v3079 = vtanh.pop %v3043
      %v3080 = vtanh.pop %v3044
      %v3081 = vtanh.pop %v3045
      %v3082 = vtanh.pop %v3046
      %v3083 = vtanh.pop %v3047
      %v3084 = vtanh.pop %v3048
      %v3085 = vtanh.pop %v3049
      %v3086 = vtanh.pop %v3050
      %v3087 = vtanh.pop %v3051
      %v3088 = vtanh.pop %v3052
      %v3089 = vtanh.pop %v3053
      %v3090 = vtanh.pop %v3054
      %v3091 = vtanh.pop %v3055
      %v3092 = vtanh.pop %v3056
      %v3093 = vtanh.pop %v3057
      %v3094 = vtanh.pop %v3058
      %v3095 = vtanh.pop %v3059
      %v3096 = vtanh.pop %v3060
      %v3097 = vtanh.pop %v3061
      %v3098 = vtanh.pop %v3062
      %v3099 = vtanh.pop %v3063
      %v3100 = vtanh.pop %v3064
      %v3101 = vtanh.pop %v3065
      %v3102 = vtanh.pop %v3066
      %v3103 = vtanh.pop %v3067
      %v3104 = vtanh.pop %v3068
      %v3105 = vtanh.pop %v3069
      %v3106 = vtanh.pop %v3070
      %v3107 = vtanh.pop %v3071
      %v3108 = vtanh.pop %v3072
      %v3109 = vtanh.pop %v3073
      %v3110 = vtanh.pop %v3074
      %v3111 = vtanh.pop %v3075
      %v3112 = vtanh.pop %v3076
      %v3113 = vtanh.pop %v3077
      %vm3114 = vcmask 23552
      %3115 = vst.msk [vmem:[%s170] sm:$0xff] %vm3114, %v3078
      %3116 = vst.msk [vmem:[%s170 + $0x8] sm:$0xff] %vm3114, %v3079
      %3117 = vst.msk [vmem:[%s170 + $0x10] sm:$0xff] %vm3114, %v3080
      %3118 = vst.msk [vmem:[%s170 + $0x18] sm:$0xff] %vm3114, %v3081
      %3119 = vst.msk [vmem:[%s170 + $0x20] sm:$0xff] %vm3114, %v3082
      %3120 = vst.msk [vmem:[%s170 + $0x28] sm:$0xff] %vm3114, %v3083
      %3121 = vst.msk [vmem:[%s170 + $0x30] sm:$0xff] %vm3114, %v3084
      %3122 = vst.msk [vmem:[%s170 + $0x38] sm:$0xff] %vm3114, %v3085
      %3123 = vst.msk [vmem:[%s170 + $0x40] sm:$0xff] %vm3114, %v3086
      %3124 = vst.msk [vmem:[%s170 + $0x48] sm:$0xff] %vm3114, %v3087
      %3125 = vst.msk [vmem:[%s170 + $0x50] sm:$0xff] %vm3114, %v3088
      %3126 = vst.msk [vmem:[%s170 + $0x58] sm:$0xff] %vm3114, %v3089
      %3127 = vst.msk [vmem:[%s170 + $0x60] sm:$0xff] %vm3114, %v3090
      %3128 = vst.msk [vmem:[%s170 + $0x68] sm:$0xff] %vm3114, %v3091
      %3129 = vst.msk [vmem:[%s170 + $0x70] sm:$0xff] %vm3114, %v3092
      %3130 = vst.msk [vmem:[%s170 + $0x78] sm:$0xff] %vm3114, %v3093
      %3131 = vst.msk [vmem:[%s170 + $0x80] sm:$0xff] %vm3114, %v3094
      %3132 = vst.msk [vmem:[%s170 + $0x88] sm:$0xff] %vm3114, %v3095
      %3133 = vst.msk [vmem:[%s170 + $0x90] sm:$0xff] %vm3114, %v3096
      %3134 = vst.msk [vmem:[%s170 + $0x98] sm:$0xff] %vm3114, %v3097
      %3135 = vst.msk [vmem:[%s170 + $0xa0] sm:$0xff] %vm3114, %v3098
      %3136 = vst.msk [vmem:[%s170 + $0xa8] sm:$0xff] %vm3114, %v3099
      %3137 = vst.msk [vmem:[%s170 + $0xb0] sm:$0xff] %vm3114, %v3100
      %3138 = vst.msk [vmem:[%s170 + $0xb8] sm:$0xff] %vm3114, %v3101
      %3139 = vst.msk [vmem:[%s170 + $0xc0] sm:$0xff] %vm3114, %v3102
      %3140 = vst.msk [vmem:[%s170 + $0xc8] sm:$0xff] %vm3114, %v3103
      %3141 = vst.msk [vmem:[%s170 + $0xd0] sm:$0xff] %vm3114, %v3104
      %3142 = vst.msk [vmem:[%s170 + $0xd8] sm:$0xff] %vm3114, %v3105
      %3143 = vst.msk [vmem:[%s170 + $0xe0] sm:$0xff] %vm3114, %v3106
      %3144 = vst.msk [vmem:[%s170 + $0xe8] sm:$0xff] %vm3114, %v3107
      %3145 = vst.msk [vmem:[%s170 + $0xf0] sm:$0xff] %vm3114, %v3108
      %3146 = vst.msk [vmem:[%s170 + $0xf8] sm:$0xff] %vm3114, %v3109
      %3147 = vst.msk [vmem:[%s170 + $0x100] sm:$0xff] %vm3114, %v3110
      %3148 = vst.msk [vmem:[%s170 + $0x108] sm:$0xff] %vm3114, %v3111
      %3149 = vst.msk [vmem:[%s170 + $0x110] sm:$0xff] %vm3114, %v3112
      %vm3150 = vcmask 21504
      %3151 = vst.msk [vmem:[%s170 + $0x118] sm:$0x3f] %vm3150, %v3113
      %p3152 = scmp.lt.s32.totalorder %s14, 1
      %s3153 = scalar_select %p3152, %s14, 1
      %s3154 = smul.addr %s3153, 36
      %s3155 = smul.addr %s3154, 8
      %s3156 = scalar_lea.vmem %s3, %s3155
      // Predicated region
      $region33: #{_lambda_.18} parent=31 // pred_check
        %p3157 = pneg %p100
      $region34: #{_lambda_.18} parent=31 // pred_check_branch
        %3159 = sbr.rel (%p3157) target = $region36
      $region35: #{_lambda_.18} parent=31 // pred_region
        _
      $region36: #{_lambda_.18} parent=31 // pred_fallthru
        _
    $region32: #{_lambda_.18} parent=5 // pred_fallthru
      _
    %p3160 = scmp.le.s32.totalorder 2, %s9
    // Predicated region
    $region37: #{_lambda_.18} parent=5 // pred_check
      %p3161 = pneg %p3160
    $region38: #{_lambda_.18} parent=5 // pred_check_branch
      %3163 = sbr.rel (%p3161) target = $region40
    $region39: #{_lambda_.18} parent=5 // pred_region
      %s3164 = ssub.s32 %s9, 2
      // Predicated region
      $region41: #{_lambda_.18} parent=39 // pred_check
        %p3165 = pneg %p106
      $region42: #{_lambda_.18} parent=39 // pred_check_branch
        %3167 = sbr.rel (%p3165) target = $region44
      $region43: #{_lambda_.18} parent=39 // pred_region
        %p3168 = scmp.lt.s32.totalorder %s15, 1
        %s3169 = scalar_select %p3168, %s15, 1
        %s3170 = smul.addr %s3169, 36
        %s3171 = smul.addr %s3170, 8
        %s3172 = scalar_lea.vmem %s3, %s3171
      $region44: #{_lambda_.18} parent=39 // pred_fallthru
        _
    $region40: #{_lambda_.18} parent=5 // pred_fallthru
      _
  $region6: #{_lambda_.18} parent=0 // loop_footer
    %s13 = sadd.s32 1, %s9
  $region7: #{_lambda_.18} parent=0 // loop_footer_branch
    %8 = sbr.rel target = $region3
  $region8: #{_lambda_.18} parent=0 // loop_exit
    _

</llo_original>
